<compile_context>
chip_gen: v5e
topology: v5e:2x2
jax: 0.10.0
libtpu: 0.0.40
codegen_flags: <defaults>
</compile_context>

<pallas_src>
import functools
import math

import jax
import jax.numpy as jnp
from jax.experimental import pallas as pl
from jax.experimental.pallas import tpu as pltpu


def _spatial_attention_kernel(w_ref, x_ref, o_ref, *, C, H, W, K):
    """One grid step.

    w_ref : SMEM (2*K*K,) f32 conv weight, flattened [c_in, kh, kw] row-major
            (c_in 0 = channel-mean map, c_in 1 = channel-max map).
    x_ref : VMEM (TN, C, H+K-1, W+K-1) spatially zero-padded input block.
    o_ref : VMEM (TN, C, H, W) output block.
    """
    pad = K // 2
    tn = x_ref.shape[0]

    # ---- channel statistics (mean & max over C) on the padded slabs.
    # Zero halo is preserved: mean(0)=0, max(0)=0 == Conv2d's zero padding of
    # the [avg; max] maps, so no extra padding work is needed in-kernel.
    s = x_ref[:, 0].astype(jnp.float32)            # (TN, Hp, Wp)
    m = s
    for c in range(1, C):
        v = x_ref[:, c].astype(jnp.float32)
        s = s + v
        m = jnp.maximum(m, v)
    avg_p = s * (1.0 / C)                          # padded mean map
    max_p = m                                      # padded max  map

    # ---- KxK, 2->1 channel conv (no bias): unrolled shift-and-accumulate over
    # the K*K taps using static value-level slices of the padded maps.
    acc = jnp.zeros((tn, H, W), jnp.float32)
    for kh in range(K):
        for kw in range(K):
            w_avg = w_ref[kh * K + kw]             # scalar from SMEM
            w_max = w_ref[K * K + kh * K + kw]
            acc = acc + w_avg * avg_p[:, kh:kh + H, kw:kw + W]
            acc = acc + w_max * max_p[:, kh:kh + H, kw:kw + W]

    # ---- sigmoid attention map (explicit formula: exp + divide, EUP-friendly).
    att = 1.0 / (1.0 + jnp.exp(-acc))              # (TN, H, W)

    # ---- apply the attention map to every channel of the (un-padded) input.
    for c in range(C):
        xc = x_ref[:, c].astype(jnp.float32)[:, pad:pad + H, pad:pad + W]
        o_ref[:, c] = (att * xc).astype(o_ref.dtype)


def time_distributed_spatial_attention(x, conv_weight, *,
                                        vmem_block_budget_bytes=4 << 20):
    """Pallas TPU forward of TimeDistributedSpatialAttention.

    x           : (..., C, H, W) with ndim >= 4 (canonically (B, T, C, H, W)).
    conv_weight : (1, 2, K, K)  == nn.Conv2d(2, 1, K, padding=K//2, bias=False).weight
    Returns an array with the same shape and dtype as x.
    """
    # TODO(synk): the PyTorch `len(x.size()) <= 2` branch calls self.conv2d,
    # which does not exist on the module; it is not implemented here either.
    assert x.ndim >= 4, "expected (..., C, H, W) with at least one leading dim"
    *lead, C, H, W = x.shape
    assert conv_weight.ndim == 4 and conv_weight.shape[:2] == (1, 2)
    K = conv_weight.shape[-1]
    assert conv_weight.shape[-2] == K and K % 2 == 1
    pad = K // 2
    Hp, Wp = H + 2 * pad, W + 2 * pad

    N = math.prod(lead)
    xr = x.reshape(N, C, H, W)
    # Zero-pad H and W once in the wrapper (cheap vs. x: ~(Hp*Wp/HW - 1) extra
    # bytes) so the kernel is pure dense loads / static slices / dense stores.
    xp = jnp.pad(xr, ((0, 0), (0, 0), (pad, pad), (pad, pad)))

    w_flat = conv_weight.reshape(-1).astype(jnp.float32)   # (2*K*K,)

    # Tile only over the independent flattened-leading axis N. Keep (C, Hp, Wp)
    # whole so the last two block dims equal the full array dims (satisfies the
    # (8,128) rule for any H, W). Pick the largest TN dividing N whose VMEM
    # footprint (with default double buffering) stays inside the block budget.
    def _round_up(a, b):
        return (a + b - 1) // b * b

    bytes_per_row = 4 * C * (
        _round_up(Hp, 8) * _round_up(Wp, 128)      # input tile (VMEM-padded)
        + _round_up(H, 8) * _round_up(W, 128))     # output tile (VMEM-padded)
    cap = max(1, vmem_block_budget_bytes // bytes_per_row)
    TN = 1
    for d in range(1, N + 1):
        if N % d == 0 and d <= cap:
            TN = d

    grid = (N // TN,)
    kernel = functools.partial(_spatial_attention_kernel, C=C, H=H, W=W, K=K)

    out = pl.pallas_call(
        kernel,
        out_shape=jax.ShapeDtypeStruct((N, C, H, W), x.dtype),
        grid_spec=pltpu.PrefetchScalarGridSpec(
            num_scalar_prefetch=0,
            grid=grid,
            in_specs=[
                # conv weights: small scalar table, whole array in SMEM
                pl.BlockSpec(memory_space=pltpu.MemorySpace.SMEM),
                # padded input: (TN, C, Hp, Wp) blocks over N
                pl.BlockSpec((TN, C, Hp, Wp), lambda i: (i, 0, 0, 0)),
            ],
            out_specs=pl.BlockSpec((TN, C, H, W), lambda i: (i, 0, 0, 0)),
        ),
        compiler_params=pltpu.CompilerParams(
            dimension_semantics=("parallel",),
        ),
    )(w_flat, xp)

    return out.reshape(x.shape)


if __name__ == "__main__":
    key = jax.random.PRNGKey(0)
    kx, kw = jax.random.split(key)

    # (batch, time, channels, H, W) — the 5-D case the PyTorch forward targets.
    B, T, C, H, W = 2, 3, 4, 16, 16
    K = 7
    x = jax.random.normal(kx, (B, T, C, H, W), dtype=jnp.float32)
    weight = jax.random.normal(kw, (1, 2, K, K), dtype=jnp.float32) * 0.1

    y = time_distributed_spatial_attention(x, weight)
    y = jax.block_until_ready(y)

    assert y.shape == x.shape, y.shape
    assert y.dtype == x.dtype

    # Pure-JAX reference (same math as the PyTorch module's forward).
    xr = x.reshape(-1, C, H, W)
    avg = jnp.mean(xr, axis=1, keepdims=True)
    mx = jnp.max(xr, axis=1, keepdims=True)
    stat = jnp.concatenate([avg, mx], axis=1)                  # (N, 2, H, W)
    conv = jax.lax.conv_general_dilated(
        stat, weight, window_strides=(1, 1),
        padding=((K // 2, K // 2), (K // 2, K // 2)),
        dimension_numbers=("NCHW", "OIHW", "NCHW"))
    att = jax.nn.sigmoid(conv)                                 # (N, 1, H, W)
    ref = (att * xr).reshape(x.shape)

    max_err = float(jnp.max(jnp.abs(y - ref)))
    assert jnp.allclose(y, ref, atol=1e-4, rtol=1e-4), max_err

    print("KERNEL_OK")
</pallas_src>

<mosaic_0001>
module attributes {stable_mosaic.version = 11 : i64} {
  func.func @_spatial_attention_kernel(%arg0: i32, %arg1: memref<98xf32, #tpu.memory_space<smem>>, %arg2: memref<6x4x22x22xf32, #tpu.memory_space<vmem>>, %arg3: memref<6x4x16x16xf32, #tpu.memory_space<vmem>>) attributes {dimension_semantics = [#tpu.dimension_semantics<parallel>], iteration_bounds = array<i64: 1>, scalar_prefetch = 0 : i64, scratch_operands = 0 : i64, tpu.core_type = #tpu.core_type<tc>, window_params = [{transform_indices = @transform_0, window_bounds = array<i64: 98>}, {transform_indices = @transform_1, window_bounds = array<i64: 6, 4, 22, 22>}, {transform_indices = @transform_2, window_bounds = array<i64: 6, 4, 16, 16>}]} {
    %c0 = arith.constant 0 : index
    %c0_0 = arith.constant 0 : index
    %c0_1 = arith.constant 0 : index
    %c0_2 = arith.constant 0 : index
    %0 = vector.load %arg2[%c0, %c0_0, %c0_1, %c0_2] : memref<6x4x22x22xf32, #tpu.memory_space<vmem>>, vector<6x1x22x22xf32>
    %1 = vector.shape_cast %0 : vector<6x1x22x22xf32> to vector<6x22x22xf32>
    %c0_3 = arith.constant 0 : index
    %c1 = arith.constant 1 : index
    %c0_4 = arith.constant 0 : index
    %c0_5 = arith.constant 0 : index
    %2 = vector.load %arg2[%c0_3, %c1, %c0_4, %c0_5] : memref<6x4x22x22xf32, #tpu.memory_space<vmem>>, vector<6x1x22x22xf32>
    %3 = vector.shape_cast %2 : vector<6x1x22x22xf32> to vector<6x22x22xf32>
    %4 = arith.addf %1, %3 : vector<6x22x22xf32>
    %5 = arith.maximumf %1, %3 : vector<6x22x22xf32>
    %c0_6 = arith.constant 0 : index
    %c2 = arith.constant 2 : index
    %c0_7 = arith.constant 0 : index
    %c0_8 = arith.constant 0 : index
    %6 = vector.load %arg2[%c0_6, %c2, %c0_7, %c0_8] : memref<6x4x22x22xf32, #tpu.memory_space<vmem>>, vector<6x1x22x22xf32>
    %7 = vector.shape_cast %6 : vector<6x1x22x22xf32> to vector<6x22x22xf32>
    %8 = arith.addf %4, %7 : vector<6x22x22xf32>
    %9 = arith.maximumf %5, %7 : vector<6x22x22xf32>
    %c0_9 = arith.constant 0 : index
    %c3 = arith.constant 3 : index
    %c0_10 = arith.constant 0 : index
    %c0_11 = arith.constant 0 : index
    %10 = vector.load %arg2[%c0_9, %c3, %c0_10, %c0_11] : memref<6x4x22x22xf32, #tpu.memory_space<vmem>>, vector<6x1x22x22xf32>
    %11 = vector.shape_cast %10 : vector<6x1x22x22xf32> to vector<6x22x22xf32>
    %12 = arith.addf %8, %11 : vector<6x22x22xf32>
    %13 = arith.maximumf %9, %11 : vector<6x22x22xf32>
    %cst = arith.constant 2.500000e-01 : f32
    %14 = vector.broadcast %cst : f32 to vector<6x22x22xf32>
    %15 = arith.mulf %12, %14 : vector<6x22x22xf32>
    %cst_12 = arith.constant 0.000000e+00 : f32
    %16 = vector.broadcast %cst_12 : f32 to vector<6x16x16xf32>
    %c0_13 = arith.constant 0 : index
    %17 = memref.load %arg1[%c0_13] : memref<98xf32, #tpu.memory_space<smem>>
    %c49 = arith.constant 49 : index
    %18 = memref.load %arg1[%c49] : memref<98xf32, #tpu.memory_space<smem>>
    %19 = vector.extract_strided_slice %15 {offsets = [0, 0, 0], sizes = [6, 16, 16], strides = [1, 1, 1]} : vector<6x22x22xf32> to vector<6x16x16xf32>
    %20 = vector.broadcast %17 : f32 to vector<6x16x16xf32>
    %21 = arith.mulf %20, %19 : vector<6x16x16xf32>
    %22 = arith.addf %16, %21 : vector<6x16x16xf32>
    %23 = vector.extract_strided_slice %13 {offsets = [0, 0, 0], sizes = [6, 16, 16], strides = [1, 1, 1]} : vector<6x22x22xf32> to vector<6x16x16xf32>
    %24 = vector.broadcast %18 : f32 to vector<6x16x16xf32>
    %25 = arith.mulf %24, %23 : vector<6x16x16xf32>
    %26 = arith.addf %22, %25 : vector<6x16x16xf32>
    %c1_14 = arith.constant 1 : index
    %27 = memref.load %arg1[%c1_14] : memref<98xf32, #tpu.memory_space<smem>>
    %c50 = arith.constant 50 : index
    %28 = memref.load %arg1[%c50] : memref<98xf32, #tpu.memory_space<smem>>
    %29 = vector.extract_strided_slice %15 {offsets = [0, 0, 1], sizes = [6, 16, 16], strides = [1, 1, 1]} : vector<6x22x22xf32> to vector<6x16x16xf32>
    %30 = vector.broadcast %27 : f32 to vector<6x16x16xf32>
    %31 = arith.mulf %30, %29 : vector<6x16x16xf32>
    %32 = arith.addf %26, %31 : vector<6x16x16xf32>
    %33 = vector.extract_strided_slice %13 {offsets = [0, 0, 1], sizes = [6, 16, 16], strides = [1, 1, 1]} : vector<6x22x22xf32> to vector<6x16x16xf32>
    %34 = vector.broadcast %28 : f32 to vector<6x16x16xf32>
    %35 = arith.mulf %34, %33 : vector<6x16x16xf32>
    %36 = arith.addf %32, %35 : vector<6x16x16xf32>
    %c2_15 = arith.constant 2 : index
    %37 = memref.load %arg1[%c2_15] : memref<98xf32, #tpu.memory_space<smem>>
    %c51 = arith.constant 51 : index
    %38 = memref.load %arg1[%c51] : memref<98xf32, #tpu.memory_space<smem>>
    %39 = vector.extract_strided_slice %15 {offsets = [0, 0, 2], sizes = [6, 16, 16], strides = [1, 1, 1]} : vector<6x22x22xf32> to vector<6x16x16xf32>
    %40 = vector.broadcast %37 : f32 to vector<6x16x16xf32>
    %41 = arith.mulf %40, %39 : vector<6x16x16xf32>
    %42 = arith.addf %36, %41 : vector<6x16x16xf32>
    %43 = vector.extract_strided_slice %13 {offsets = [0, 0, 2], sizes = [6, 16, 16], strides = [1, 1, 1]} : vector<6x22x22xf32> to vector<6x16x16xf32>
    %44 = vector.broadcast %38 : f32 to vector<6x16x16xf32>
    %45 = arith.mulf %44, %43 : vector<6x16x16xf32>
    %46 = arith.addf %42, %45 : vector<6x16x16xf32>
    %c3_16 = arith.constant 3 : index
    %47 = memref.load %arg1[%c3_16] : memref<98xf32, #tpu.memory_space<smem>>
    %c52 = arith.constant 52 : index
    %48 = memref.load %arg1[%c52] : memref<98xf32, #tpu.memory_space<smem>>
    %49 = vector.extract_strided_slice %15 {offsets = [0, 0, 3], sizes = [6, 16, 16], strides = [1, 1, 1]} : vector<6x22x22xf32> to vector<6x16x16xf32>
    %50 = vector.broadcast %47 : f32 to vector<6x16x16xf32>
    %51 = arith.mulf %50, %49 : vector<6x16x16xf32>
    %52 = arith.addf %46, %51 : vector<6x16x16xf32>
    %53 = vector.extract_strided_slice %13 {offsets = [0, 0, 3], sizes = [6, 16, 16], strides = [1, 1, 1]} : vector<6x22x22xf32> to vector<6x16x16xf32>
    %54 = vector.broadcast %48 : f32 to vector<6x16x16xf32>
    %55 = arith.mulf %54, %53 : vector<6x16x16xf32>
    %56 = arith.addf %52, %55 : vector<6x16x16xf32>
    %c4 = arith.constant 4 : index
    %57 = memref.load %arg1[%c4] : memref<98xf32, #tpu.memory_space<smem>>
    %c53 = arith.constant 53 : index
    %58 = memref.load %arg1[%c53] : memref<98xf32, #tpu.memory_space<smem>>
    %59 = vector.extract_strided_slice %15 {offsets = [0, 0, 4], sizes = [6, 16, 16], strides = [1, 1, 1]} : vector<6x22x22xf32> to vector<6x16x16xf32>
    %60 = vector.broadcast %57 : f32 to vector<6x16x16xf32>
    %61 = arith.mulf %60, %59 : vector<6x16x16xf32>
    %62 = arith.addf %56, %61 : vector<6x16x16xf32>
    %63 = vector.extract_strided_slice %13 {offsets = [0, 0, 4], sizes = [6, 16, 16], strides = [1, 1, 1]} : vector<6x22x22xf32> to vector<6x16x16xf32>
    %64 = vector.broadcast %58 : f32 to vector<6x16x16xf32>
    %65 = arith.mulf %64, %63 : vector<6x16x16xf32>
    %66 = arith.addf %62, %65 : vector<6x16x16xf32>
    %c5 = arith.constant 5 : index
    %67 = memref.load %arg1[%c5] : memref<98xf32, #tpu.memory_space<smem>>
    %c54 = arith.constant 54 : index
    %68 = memref.load %arg1[%c54] : memref<98xf32, #tpu.memory_space<smem>>
    %69 = vector.extract_strided_slice %15 {offsets = [0, 0, 5], sizes = [6, 16, 16], strides = [1, 1, 1]} : vector<6x22x22xf32> to vector<6x16x16xf32>
    %70 = vector.broadcast %67 : f32 to vector<6x16x16xf32>
    %71 = arith.mulf %70, %69 : vector<6x16x16xf32>
    %72 = arith.addf %66, %71 : vector<6x16x16xf32>
    %73 = vector.extract_strided_slice %13 {offsets = [0, 0, 5], sizes = [6, 16, 16], strides = [1, 1, 1]} : vector<6x22x22xf32> to vector<6x16x16xf32>
    %74 = vector.broadcast %68 : f32 to vector<6x16x16xf32>
    %75 = arith.mulf %74, %73 : vector<6x16x16xf32>
    %76 = arith.addf %72, %75 : vector<6x16x16xf32>
    %c6 = arith.constant 6 : index
    %77 = memref.load %arg1[%c6] : memref<98xf32, #tpu.memory_space<smem>>
    %c55 = arith.constant 55 : index
    %78 = memref.load %arg1[%c55] : memref<98xf32, #tpu.memory_space<smem>>
    %79 = vector.extract_strided_slice %15 {offsets = [0, 0, 6], sizes = [6, 16, 16], strides = [1, 1, 1]} : vector<6x22x22xf32> to vector<6x16x16xf32>
    %80 = vector.broadcast %77 : f32 to vector<6x16x16xf32>
    %81 = arith.mulf %80, %79 : vector<6x16x16xf32>
    %82 = arith.addf %76, %81 : vector<6x16x16xf32>
    %83 = vector.extract_strided_slice %13 {offsets = [0, 0, 6], sizes = [6, 16, 16], strides = [1, 1, 1]} : vector<6x22x22xf32> to vector<6x16x16xf32>
    %84 = vector.broadcast %78 : f32 to vector<6x16x16xf32>
    %85 = arith.mulf %84, %83 : vector<6x16x16xf32>
    %86 = arith.addf %82, %85 : vector<6x16x16xf32>
    %c7 = arith.constant 7 : index
    %87 = memref.load %arg1[%c7] : memref<98xf32, #tpu.memory_space<smem>>
    %c56 = arith.constant 56 : index
    %88 = memref.load %arg1[%c56] : memref<98xf32, #tpu.memory_space<smem>>
    %89 = vector.extract_strided_slice %15 {offsets = [0, 1, 0], sizes = [6, 16, 16], strides = [1, 1, 1]} : vector<6x22x22xf32> to vector<6x16x16xf32>
    %90 = vector.broadcast %87 : f32 to vector<6x16x16xf32>
    %91 = arith.mulf %90, %89 : vector<6x16x16xf32>
    %92 = arith.addf %86, %91 : vector<6x16x16xf32>
    %93 = vector.extract_strided_slice %13 {offsets = [0, 1, 0], sizes = [6, 16, 16], strides = [1, 1, 1]} : vector<6x22x22xf32> to vector<6x16x16xf32>
    %94 = vector.broadcast %88 : f32 to vector<6x16x16xf32>
    %95 = arith.mulf %94, %93 : vector<6x16x16xf32>
    %96 = arith.addf %92, %95 : vector<6x16x16xf32>
    %c8 = arith.constant 8 : index
    %97 = memref.load %arg1[%c8] : memref<98xf32, #tpu.memory_space<smem>>
    %c57 = arith.constant 57 : index
    %98 = memref.load %arg1[%c57] : memref<98xf32, #tpu.memory_space<smem>>
    %99 = vector.extract_strided_slice %15 {offsets = [0, 1, 1], sizes = [6, 16, 16], strides = [1, 1, 1]} : vector<6x22x22xf32> to vector<6x16x16xf32>
    %100 = vector.broadcast %97 : f32 to vector<6x16x16xf32>
    %101 = arith.mulf %100, %99 : vector<6x16x16xf32>
    %102 = arith.addf %96, %101 : vector<6x16x16xf32>
    %103 = vector.extract_strided_slice %13 {offsets = [0, 1, 1], sizes = [6, 16, 16], strides = [1, 1, 1]} : vector<6x22x22xf32> to vector<6x16x16xf32>
    %104 = vector.broadcast %98 : f32 to vector<6x16x16xf32>
    %105 = arith.mulf %104, %103 : vector<6x16x16xf32>
    %106 = arith.addf %102, %105 : vector<6x16x16xf32>
    %c9 = arith.constant 9 : index
    %107 = memref.load %arg1[%c9] : memref<98xf32, #tpu.memory_space<smem>>
    %c58 = arith.constant 58 : index
    %108 = memref.load %arg1[%c58] : memref<98xf32, #tpu.memory_space<smem>>
    %109 = vector.extract_strided_slice %15 {offsets = [0, 1, 2], sizes = [6, 16, 16], strides = [1, 1, 1]} : vector<6x22x22xf32> to vector<6x16x16xf32>
    %110 = vector.broadcast %107 : f32 to vector<6x16x16xf32>
    %111 = arith.mulf %110, %109 : vector<6x16x16xf32>
    %112 = arith.addf %106, %111 : vector<6x16x16xf32>
    %113 = vector.extract_strided_slice %13 {offsets = [0, 1, 2], sizes = [6, 16, 16], strides = [1, 1, 1]} : vector<6x22x22xf32> to vector<6x16x16xf32>
    %114 = vector.broadcast %108 : f32 to vector<6x16x16xf32>
    %115 = arith.mulf %114, %113 : vector<6x16x16xf32>
    %116 = arith.addf %112, %115 : vector<6x16x16xf32>
    %c10 = arith.constant 10 : index
    %117 = memref.load %arg1[%c10] : memref<98xf32, #tpu.memory_space<smem>>
    %c59 = arith.constant 59 : index
    %118 = memref.load %arg1[%c59] : memref<98xf32, #tpu.memory_space<smem>>
    %119 = vector.extract_strided_slice %15 {offsets = [0, 1, 3], sizes = [6, 16, 16], strides = [1, 1, 1]} : vector<6x22x22xf32> to vector<6x16x16xf32>
    %120 = vector.broadcast %117 : f32 to vector<6x16x16xf32>
    %121 = arith.mulf %120, %119 : vector<6x16x16xf32>
    %122 = arith.addf %116, %121 : vector<6x16x16xf32>
    %123 = vector.extract_strided_slice %13 {offsets = [0, 1, 3], sizes = [6, 16, 16], strides = [1, 1, 1]} : vector<6x22x22xf32> to vector<6x16x16xf32>
    %124 = vector.broadcast %118 : f32 to vector<6x16x16xf32>
    %125 = arith.mulf %124, %123 : vector<6x16x16xf32>
    %126 = arith.addf %122, %125 : vector<6x16x16xf32>
    %c11 = arith.constant 11 : index
    %127 = memref.load %arg1[%c11] : memref<98xf32, #tpu.memory_space<smem>>
    %c60 = arith.constant 60 : index
    %128 = memref.load %arg1[%c60] : memref<98xf32, #tpu.memory_space<smem>>
    %129 = vector.extract_strided_slice %15 {offsets = [0, 1, 4], sizes = [6, 16, 16], strides = [1, 1, 1]} : vector<6x22x22xf32> to vector<6x16x16xf32>
    %130 = vector.broadcast %127 : f32 to vector<6x16x16xf32>
    %131 = arith.mulf %130, %129 : vector<6x16x16xf32>
    %132 = arith.addf %126, %131 : vector<6x16x16xf32>
    %133 = vector.extract_strided_slice %13 {offsets = [0, 1, 4], sizes = [6, 16, 16], strides = [1, 1, 1]} : vector<6x22x22xf32> to vector<6x16x16xf32>
    %134 = vector.broadcast %128 : f32 to vector<6x16x16xf32>
    %135 = arith.mulf %134, %133 : vector<6x16x16xf32>
    %136 = arith.addf %132, %135 : vector<6x16x16xf32>
    %c12 = arith.constant 12 : index
    %137 = memref.load %arg1[%c12] : memref<98xf32, #tpu.memory_space<smem>>
    %c61 = arith.constant 61 : index
    %138 = memref.load %arg1[%c61] : memref<98xf32, #tpu.memory_space<smem>>
    %139 = vector.extract_strided_slice %15 {offsets = [0, 1, 5], sizes = [6, 16, 16], strides = [1, 1, 1]} : vector<6x22x22xf32> to vector<6x16x16xf32>
    %140 = vector.broadcast %137 : f32 to vector<6x16x16xf32>
    %141 = arith.mulf %140, %139 : vector<6x16x16xf32>
    %142 = arith.addf %136, %141 : vector<6x16x16xf32>
    %143 = vector.extract_strided_slice %13 {offsets = [0, 1, 5], sizes = [6, 16, 16], strides = [1, 1, 1]} : vector<6x22x22xf32> to vector<6x16x16xf32>
    %144 = vector.broadcast %138 : f32 to vector<6x16x16xf32>
    %145 = arith.mulf %144, %143 : vector<6x16x16xf32>
    %146 = arith.addf %142, %145 : vector<6x16x16xf32>
    %c13 = arith.constant 13 : index
    %147 = memref.load %arg1[%c13] : memref<98xf32, #tpu.memory_space<smem>>
    %c62 = arith.constant 62 : index
    %148 = memref.load %arg1[%c62] : memref<98xf32, #tpu.memory_space<smem>>
    %149 = vector.extract_strided_slice %15 {offsets = [0, 1, 6], sizes = [6, 16, 16], strides = [1, 1, 1]} : vector<6x22x22xf32> to vector<6x16x16xf32>
    %150 = vector.broadcast %147 : f32 to vector<6x16x16xf32>
    %151 = arith.mulf %150, %149 : vector<6x16x16xf32>
    %152 = arith.addf %146, %151 : vector<6x16x16xf32>
    %153 = vector.extract_strided_slice %13 {offsets = [0, 1, 6], sizes = [6, 16, 16], strides = [1, 1, 1]} : vector<6x22x22xf32> to vector<6x16x16xf32>
    %154 = vector.broadcast %148 : f32 to vector<6x16x16xf32>
    %155 = arith.mulf %154, %153 : vector<6x16x16xf32>
    %156 = arith.addf %152, %155 : vector<6x16x16xf32>
    %c14 = arith.constant 14 : index
    %157 = memref.load %arg1[%c14] : memref<98xf32, #tpu.memory_space<smem>>
    %c63 = arith.constant 63 : index
    %158 = memref.load %arg1[%c63] : memref<98xf32, #tpu.memory_space<smem>>
    %159 = vector.extract_strided_slice %15 {offsets = [0, 2, 0], sizes = [6, 16, 16], strides = [1, 1, 1]} : vector<6x22x22xf32> to vector<6x16x16xf32>
    %160 = vector.broadcast %157 : f32 to vector<6x16x16xf32>
    %161 = arith.mulf %160, %159 : vector<6x16x16xf32>
    %162 = arith.addf %156, %161 : vector<6x16x16xf32>
    %163 = vector.extract_strided_slice %13 {offsets = [0, 2, 0], sizes = [6, 16, 16], strides = [1, 1, 1]} : vector<6x22x22xf32> to vector<6x16x16xf32>
    %164 = vector.broadcast %158 : f32 to vector<6x16x16xf32>
    %165 = arith.mulf %164, %163 : vector<6x16x16xf32>
    %166 = arith.addf %162, %165 : vector<6x16x16xf32>
    %c15 = arith.constant 15 : index
    %167 = memref.load %arg1[%c15] : memref<98xf32, #tpu.memory_space<smem>>
    %c64 = arith.constant 64 : index
    %168 = memref.load %arg1[%c64] : memref<98xf32, #tpu.memory_space<smem>>
    %169 = vector.extract_strided_slice %15 {offsets = [0, 2, 1], sizes = [6, 16, 16], strides = [1, 1, 1]} : vector<6x22x22xf32> to vector<6x16x16xf32>
    %170 = vector.broadcast %167 : f32 to vector<6x16x16xf32>
    %171 = arith.mulf %170, %169 : vector<6x16x16xf32>
    %172 = arith.addf %166, %171 : vector<6x16x16xf32>
    %173 = vector.extract_strided_slice %13 {offsets = [0, 2, 1], sizes = [6, 16, 16], strides = [1, 1, 1]} : vector<6x22x22xf32> to vector<6x16x16xf32>
    %174 = vector.broadcast %168 : f32 to vector<6x16x16xf32>
    %175 = arith.mulf %174, %173 : vector<6x16x16xf32>
    %176 = arith.addf %172, %175 : vector<6x16x16xf32>
    %c16 = arith.constant 16 : index
    %177 = memref.load %arg1[%c16] : memref<98xf32, #tpu.memory_space<smem>>
    %c65 = arith.constant 65 : index
    %178 = memref.load %arg1[%c65] : memref<98xf32, #tpu.memory_space<smem>>
    %179 = vector.extract_strided_slice %15 {offsets = [0, 2, 2], sizes = [6, 16, 16], strides = [1, 1, 1]} : vector<6x22x22xf32> to vector<6x16x16xf32>
    %180 = vector.broadcast %177 : f32 to vector<6x16x16xf32>
    %181 = arith.mulf %180, %179 : vector<6x16x16xf32>
    %182 = arith.addf %176, %181 : vector<6x16x16xf32>
    %183 = vector.extract_strided_slice %13 {offsets = [0, 2, 2], sizes = [6, 16, 16], strides = [1, 1, 1]} : vector<6x22x22xf32> to vector<6x16x16xf32>
    %184 = vector.broadcast %178 : f32 to vector<6x16x16xf32>
    %185 = arith.mulf %184, %183 : vector<6x16x16xf32>
    %186 = arith.addf %182, %185 : vector<6x16x16xf32>
    %c17 = arith.constant 17 : index
    %187 = memref.load %arg1[%c17] : memref<98xf32, #tpu.memory_space<smem>>
    %c66 = arith.constant 66 : index
    %188 = memref.load %arg1[%c66] : memref<98xf32, #tpu.memory_space<smem>>
    %189 = vector.extract_strided_slice %15 {offsets = [0, 2, 3], sizes = [6, 16, 16], strides = [1, 1, 1]} : vector<6x22x22xf32> to vector<6x16x16xf32>
    %190 = vector.broadcast %187 : f32 to vector<6x16x16xf32>
    %191 = arith.mulf %190, %189 : vector<6x16x16xf32>
    %192 = arith.addf %186, %191 : vector<6x16x16xf32>
    %193 = vector.extract_strided_slice %13 {offsets = [0, 2, 3], sizes = [6, 16, 16], strides = [1, 1, 1]} : vector<6x22x22xf32> to vector<6x16x16xf32>
    %194 = vector.broadcast %188 : f32 to vector<6x16x16xf32>
    %195 = arith.mulf %194, %193 : vector<6x16x16xf32>
    %196 = arith.addf %192, %195 : vector<6x16x16xf32>
    %c18 = arith.constant 18 : index
    %197 = memref.load %arg1[%c18] : memref<98xf32, #tpu.memory_space<smem>>
    %c67 = arith.constant 67 : index
    %198 = memref.load %arg1[%c67] : memref<98xf32, #tpu.memory_space<smem>>
    %199 = vector.extract_strided_slice %15 {offsets = [0, 2, 4], sizes = [6, 16, 16], strides = [1, 1, 1]} : vector<6x22x22xf32> to vector<6x16x16xf32>
    %200 = vector.broadcast %197 : f32 to vector<6x16x16xf32>
    %201 = arith.mulf %200, %199 : vector<6x16x16xf32>
    %202 = arith.addf %196, %201 : vector<6x16x16xf32>
    %203 = vector.extract_strided_slice %13 {offsets = [0, 2, 4], sizes = [6, 16, 16], strides = [1, 1, 1]} : vector<6x22x22xf32> to vector<6x16x16xf32>
    %204 = vector.broadcast %198 : f32 to vector<6x16x16xf32>
    %205 = arith.mulf %204, %203 : vector<6x16x16xf32>
    %206 = arith.addf %202, %205 : vector<6x16x16xf32>
    %c19 = arith.constant 19 : index
    %207 = memref.load %arg1[%c19] : memref<98xf32, #tpu.memory_space<smem>>
    %c68 = arith.constant 68 : index
    %208 = memref.load %arg1[%c68] : memref<98xf32, #tpu.memory_space<smem>>
    %209 = vector.extract_strided_slice %15 {offsets = [0, 2, 5], sizes = [6, 16, 16], strides = [1, 1, 1]} : vector<6x22x22xf32> to vector<6x16x16xf32>
    %210 = vector.broadcast %207 : f32 to vector<6x16x16xf32>
    %211 = arith.mulf %210, %209 : vector<6x16x16xf32>
    %212 = arith.addf %206, %211 : vector<6x16x16xf32>
    %213 = vector.extract_strided_slice %13 {offsets = [0, 2, 5], sizes = [6, 16, 16], strides = [1, 1, 1]} : vector<6x22x22xf32> to vector<6x16x16xf32>
    %214 = vector.broadcast %208 : f32 to vector<6x16x16xf32>
    %215 = arith.mulf %214, %213 : vector<6x16x16xf32>
    %216 = arith.addf %212, %215 : vector<6x16x16xf32>
    %c20 = arith.constant 20 : index
    %217 = memref.load %arg1[%c20] : memref<98xf32, #tpu.memory_space<smem>>
    %c69 = arith.constant 69 : index
    %218 = memref.load %arg1[%c69] : memref<98xf32, #tpu.memory_space<smem>>
    %219 = vector.extract_strided_slice %15 {offsets = [0, 2, 6], sizes = [6, 16, 16], strides = [1, 1, 1]} : vector<6x22x22xf32> to vector<6x16x16xf32>
    %220 = vector.broadcast %217 : f32 to vector<6x16x16xf32>
    %221 = arith.mulf %220, %219 : vector<6x16x16xf32>
    %222 = arith.addf %216, %221 : vector<6x16x16xf32>
    %223 = vector.extract_strided_slice %13 {offsets = [0, 2, 6], sizes = [6, 16, 16], strides = [1, 1, 1]} : vector<6x22x22xf32> to vector<6x16x16xf32>
    %224 = vector.broadcast %218 : f32 to vector<6x16x16xf32>
    %225 = arith.mulf %224, %223 : vector<6x16x16xf32>
    %226 = arith.addf %222, %225 : vector<6x16x16xf32>
    %c21 = arith.constant 21 : index
    %227 = memref.load %arg1[%c21] : memref<98xf32, #tpu.memory_space<smem>>
    %c70 = arith.constant 70 : index
    %228 = memref.load %arg1[%c70] : memref<98xf32, #tpu.memory_space<smem>>
    %229 = vector.extract_strided_slice %15 {offsets = [0, 3, 0], sizes = [6, 16, 16], strides = [1, 1, 1]} : vector<6x22x22xf32> to vector<6x16x16xf32>
    %230 = vector.broadcast %227 : f32 to vector<6x16x16xf32>
    %231 = arith.mulf %230, %229 : vector<6x16x16xf32>
    %232 = arith.addf %226, %231 : vector<6x16x16xf32>
    %233 = vector.extract_strided_slice %13 {offsets = [0, 3, 0], sizes = [6, 16, 16], strides = [1, 1, 1]} : vector<6x22x22xf32> to vector<6x16x16xf32>
    %234 = vector.broadcast %228 : f32 to vector<6x16x16xf32>
    %235 = arith.mulf %234, %233 : vector<6x16x16xf32>
    %236 = arith.addf %232, %235 : vector<6x16x16xf32>
    %c22 = arith.constant 22 : index
    %237 = memref.load %arg1[%c22] : memref<98xf32, #tpu.memory_space<smem>>
    %c71 = arith.constant 71 : index
    %238 = memref.load %arg1[%c71] : memref<98xf32, #tpu.memory_space<smem>>
    %239 = vector.extract_strided_slice %15 {offsets = [0, 3, 1], sizes = [6, 16, 16], strides = [1, 1, 1]} : vector<6x22x22xf32> to vector<6x16x16xf32>
    %240 = vector.broadcast %237 : f32 to vector<6x16x16xf32>
    %241 = arith.mulf %240, %239 : vector<6x16x16xf32>
    %242 = arith.addf %236, %241 : vector<6x16x16xf32>
    %243 = vector.extract_strided_slice %13 {offsets = [0, 3, 1], sizes = [6, 16, 16], strides = [1, 1, 1]} : vector<6x22x22xf32> to vector<6x16x16xf32>
    %244 = vector.broadcast %238 : f32 to vector<6x16x16xf32>
    %245 = arith.mulf %244, %243 : vector<6x16x16xf32>
    %246 = arith.addf %242, %245 : vector<6x16x16xf32>
    %c23 = arith.constant 23 : index
    %247 = memref.load %arg1[%c23] : memref<98xf32, #tpu.memory_space<smem>>
    %c72 = arith.constant 72 : index
    %248 = memref.load %arg1[%c72] : memref<98xf32, #tpu.memory_space<smem>>
    %249 = vector.extract_strided_slice %15 {offsets = [0, 3, 2], sizes = [6, 16, 16], strides = [1, 1, 1]} : vector<6x22x22xf32> to vector<6x16x16xf32>
    %250 = vector.broadcast %247 : f32 to vector<6x16x16xf32>
    %251 = arith.mulf %250, %249 : vector<6x16x16xf32>
    %252 = arith.addf %246, %251 : vector<6x16x16xf32>
    %253 = vector.extract_strided_slice %13 {offsets = [0, 3, 2], sizes = [6, 16, 16], strides = [1, 1, 1]} : vector<6x22x22xf32> to vector<6x16x16xf32>
    %254 = vector.broadcast %248 : f32 to vector<6x16x16xf32>
    %255 = arith.mulf %254, %253 : vector<6x16x16xf32>
    %256 = arith.addf %252, %255 : vector<6x16x16xf32>
    %c24 = arith.constant 24 : index
    %257 = memref.load %arg1[%c24] : memref<98xf32, #tpu.memory_space<smem>>
    %c73 = arith.constant 73 : index
    %258 = memref.load %arg1[%c73] : memref<98xf32, #tpu.memory_space<smem>>
    %259 = vector.extract_strided_slice %15 {offsets = [0, 3, 3], sizes = [6, 16, 16], strides = [1, 1, 1]} : vector<6x22x22xf32> to vector<6x16x16xf32>
    %260 = vector.broadcast %257 : f32 to vector<6x16x16xf32>
    %261 = arith.mulf %260, %259 : vector<6x16x16xf32>
    %262 = arith.addf %256, %261 : vector<6x16x16xf32>
    %263 = vector.extract_strided_slice %13 {offsets = [0, 3, 3], sizes = [6, 16, 16], strides = [1, 1, 1]} : vector<6x22x22xf32> to vector<6x16x16xf32>
    %264 = vector.broadcast %258 : f32 to vector<6x16x16xf32>
    %265 = arith.mulf %264, %263 : vector<6x16x16xf32>
    %266 = arith.addf %262, %265 : vector<6x16x16xf32>
    %c25 = arith.constant 25 : index
    %267 = memref.load %arg1[%c25] : memref<98xf32, #tpu.memory_space<smem>>
    %c74 = arith.constant 74 : index
    %268 = memref.load %arg1[%c74] : memref<98xf32, #tpu.memory_space<smem>>
    %269 = vector.extract_strided_slice %15 {offsets = [0, 3, 4], sizes = [6, 16, 16], strides = [1, 1, 1]} : vector<6x22x22xf32> to vector<6x16x16xf32>
    %270 = vector.broadcast %267 : f32 to vector<6x16x16xf32>
    %271 = arith.mulf %270, %269 : vector<6x16x16xf32>
    %272 = arith.addf %266, %271 : vector<6x16x16xf32>
    %273 = vector.extract_strided_slice %13 {offsets = [0, 3, 4], sizes = [6, 16, 16], strides = [1, 1, 1]} : vector<6x22x22xf32> to vector<6x16x16xf32>
    %274 = vector.broadcast %268 : f32 to vector<6x16x16xf32>
    %275 = arith.mulf %274, %273 : vector<6x16x16xf32>
    %276 = arith.addf %272, %275 : vector<6x16x16xf32>
    %c26 = arith.constant 26 : index
    %277 = memref.load %arg1[%c26] : memref<98xf32, #tpu.memory_space<smem>>
    %c75 = arith.constant 75 : index
    %278 = memref.load %arg1[%c75] : memref<98xf32, #tpu.memory_space<smem>>
    %279 = vector.extract_strided_slice %15 {offsets = [0, 3, 5], sizes = [6, 16, 16], strides = [1, 1, 1]} : vector<6x22x22xf32> to vector<6x16x16xf32>
    %280 = vector.broadcast %277 : f32 to vector<6x16x16xf32>
    %281 = arith.mulf %280, %279 : vector<6x16x16xf32>
    %282 = arith.addf %276, %281 : vector<6x16x16xf32>
    %283 = vector.extract_strided_slice %13 {offsets = [0, 3, 5], sizes = [6, 16, 16], strides = [1, 1, 1]} : vector<6x22x22xf32> to vector<6x16x16xf32>
    %284 = vector.broadcast %278 : f32 to vector<6x16x16xf32>
    %285 = arith.mulf %284, %283 : vector<6x16x16xf32>
    %286 = arith.addf %282, %285 : vector<6x16x16xf32>
    %c27 = arith.constant 27 : index
    %287 = memref.load %arg1[%c27] : memref<98xf32, #tpu.memory_space<smem>>
    %c76 = arith.constant 76 : index
    %288 = memref.load %arg1[%c76] : memref<98xf32, #tpu.memory_space<smem>>
    %289 = vector.extract_strided_slice %15 {offsets = [0, 3, 6], sizes = [6, 16, 16], strides = [1, 1, 1]} : vector<6x22x22xf32> to vector<6x16x16xf32>
    %290 = vector.broadcast %287 : f32 to vector<6x16x16xf32>
    %291 = arith.mulf %290, %289 : vector<6x16x16xf32>
    %292 = arith.addf %286, %291 : vector<6x16x16xf32>
    %293 = vector.extract_strided_slice %13 {offsets = [0, 3, 6], sizes = [6, 16, 16], strides = [1, 1, 1]} : vector<6x22x22xf32> to vector<6x16x16xf32>
    %294 = vector.broadcast %288 : f32 to vector<6x16x16xf32>
    %295 = arith.mulf %294, %293 : vector<6x16x16xf32>
    %296 = arith.addf %292, %295 : vector<6x16x16xf32>
    %c28 = arith.constant 28 : index
    %297 = memref.load %arg1[%c28] : memref<98xf32, #tpu.memory_space<smem>>
    %c77 = arith.constant 77 : index
    %298 = memref.load %arg1[%c77] : memref<98xf32, #tpu.memory_space<smem>>
    %299 = vector.extract_strided_slice %15 {offsets = [0, 4, 0], sizes = [6, 16, 16], strides = [1, 1, 1]} : vector<6x22x22xf32> to vector<6x16x16xf32>
    %300 = vector.broadcast %297 : f32 to vector<6x16x16xf32>
    %301 = arith.mulf %300, %299 : vector<6x16x16xf32>
    %302 = arith.addf %296, %301 : vector<6x16x16xf32>
    %303 = vector.extract_strided_slice %13 {offsets = [0, 4, 0], sizes = [6, 16, 16], strides = [1, 1, 1]} : vector<6x22x22xf32> to vector<6x16x16xf32>
    %304 = vector.broadcast %298 : f32 to vector<6x16x16xf32>
    %305 = arith.mulf %304, %303 : vector<6x16x16xf32>
    %306 = arith.addf %302, %305 : vector<6x16x16xf32>
    %c29 = arith.constant 29 : index
    %307 = memref.load %arg1[%c29] : memref<98xf32, #tpu.memory_space<smem>>
    %c78 = arith.constant 78 : index
    %308 = memref.load %arg1[%c78] : memref<98xf32, #tpu.memory_space<smem>>
    %309 = vector.extract_strided_slice %15 {offsets = [0, 4, 1], sizes = [6, 16, 16], strides = [1, 1, 1]} : vector<6x22x22xf32> to vector<6x16x16xf32>
    %310 = vector.broadcast %307 : f32 to vector<6x16x16xf32>
    %311 = arith.mulf %310, %309 : vector<6x16x16xf32>
    %312 = arith.addf %306, %311 : vector<6x16x16xf32>
    %313 = vector.extract_strided_slice %13 {offsets = [0, 4, 1], sizes = [6, 16, 16], strides = [1, 1, 1]} : vector<6x22x22xf32> to vector<6x16x16xf32>
    %314 = vector.broadcast %308 : f32 to vector<6x16x16xf32>
    %315 = arith.mulf %314, %313 : vector<6x16x16xf32>
    %316 = arith.addf %312, %315 : vector<6x16x16xf32>
    %c30 = arith.constant 30 : index
    %317 = memref.load %arg1[%c30] : memref<98xf32, #tpu.memory_space<smem>>
    %c79 = arith.constant 79 : index
    %318 = memref.load %arg1[%c79] : memref<98xf32, #tpu.memory_space<smem>>
    %319 = vector.extract_strided_slice %15 {offsets = [0, 4, 2], sizes = [6, 16, 16], strides = [1, 1, 1]} : vector<6x22x22xf32> to vector<6x16x16xf32>
    %320 = vector.broadcast %317 : f32 to vector<6x16x16xf32>
    %321 = arith.mulf %320, %319 : vector<6x16x16xf32>
    %322 = arith.addf %316, %321 : vector<6x16x16xf32>
    %323 = vector.extract_strided_slice %13 {offsets = [0, 4, 2], sizes = [6, 16, 16], strides = [1, 1, 1]} : vector<6x22x22xf32> to vector<6x16x16xf32>
    %324 = vector.broadcast %318 : f32 to vector<6x16x16xf32>
    %325 = arith.mulf %324, %323 : vector<6x16x16xf32>
    %326 = arith.addf %322, %325 : vector<6x16x16xf32>
    %c31 = arith.constant 31 : index
    %327 = memref.load %arg1[%c31] : memref<98xf32, #tpu.memory_space<smem>>
    %c80 = arith.constant 80 : index
    %328 = memref.load %arg1[%c80] : memref<98xf32, #tpu.memory_space<smem>>
    %329 = vector.extract_strided_slice %15 {offsets = [0, 4, 3], sizes = [6, 16, 16], strides = [1, 1, 1]} : vector<6x22x22xf32> to vector<6x16x16xf32>
    %330 = vector.broadcast %327 : f32 to vector<6x16x16xf32>
    %331 = arith.mulf %330, %329 : vector<6x16x16xf32>
    %332 = arith.addf %326, %331 : vector<6x16x16xf32>
    %333 = vector.extract_strided_slice %13 {offsets = [0, 4, 3], sizes = [6, 16, 16], strides = [1, 1, 1]} : vector<6x22x22xf32> to vector<6x16x16xf32>
    %334 = vector.broadcast %328 : f32 to vector<6x16x16xf32>
    %335 = arith.mulf %334, %333 : vector<6x16x16xf32>
    %336 = arith.addf %332, %335 : vector<6x16x16xf32>
    %c32 = arith.constant 32 : index
    %337 = memref.load %arg1[%c32] : memref<98xf32, #tpu.memory_space<smem>>
    %c81 = arith.constant 81 : index
    %338 = memref.load %arg1[%c81] : memref<98xf32, #tpu.memory_space<smem>>
    %339 = vector.extract_strided_slice %15 {offsets = [0, 4, 4], sizes = [6, 16, 16], strides = [1, 1, 1]} : vector<6x22x22xf32> to vector<6x16x16xf32>
    %340 = vector.broadcast %337 : f32 to vector<6x16x16xf32>
    %341 = arith.mulf %340, %339 : vector<6x16x16xf32>
    %342 = arith.addf %336, %341 : vector<6x16x16xf32>
    %343 = vector.extract_strided_slice %13 {offsets = [0, 4, 4], sizes = [6, 16, 16], strides = [1, 1, 1]} : vector<6x22x22xf32> to vector<6x16x16xf32>
    %344 = vector.broadcast %338 : f32 to vector<6x16x16xf32>
    %345 = arith.mulf %344, %343 : vector<6x16x16xf32>
    %346 = arith.addf %342, %345 : vector<6x16x16xf32>
    %c33 = arith.constant 33 : index
    %347 = memref.load %arg1[%c33] : memref<98xf32, #tpu.memory_space<smem>>
    %c82 = arith.constant 82 : index
    %348 = memref.load %arg1[%c82] : memref<98xf32, #tpu.memory_space<smem>>
    %349 = vector.extract_strided_slice %15 {offsets = [0, 4, 5], sizes = [6, 16, 16], strides = [1, 1, 1]} : vector<6x22x22xf32> to vector<6x16x16xf32>
    %350 = vector.broadcast %347 : f32 to vector<6x16x16xf32>
    %351 = arith.mulf %350, %349 : vector<6x16x16xf32>
    %352 = arith.addf %346, %351 : vector<6x16x16xf32>
    %353 = vector.extract_strided_slice %13 {offsets = [0, 4, 5], sizes = [6, 16, 16], strides = [1, 1, 1]} : vector<6x22x22xf32> to vector<6x16x16xf32>
    %354 = vector.broadcast %348 : f32 to vector<6x16x16xf32>
    %355 = arith.mulf %354, %353 : vector<6x16x16xf32>
    %356 = arith.addf %352, %355 : vector<6x16x16xf32>
    %c34 = arith.constant 34 : index
    %357 = memref.load %arg1[%c34] : memref<98xf32, #tpu.memory_space<smem>>
    %c83 = arith.constant 83 : index
    %358 = memref.load %arg1[%c83] : memref<98xf32, #tpu.memory_space<smem>>
    %359 = vector.extract_strided_slice %15 {offsets = [0, 4, 6], sizes = [6, 16, 16], strides = [1, 1, 1]} : vector<6x22x22xf32> to vector<6x16x16xf32>
    %360 = vector.broadcast %357 : f32 to vector<6x16x16xf32>
    %361 = arith.mulf %360, %359 : vector<6x16x16xf32>
    %362 = arith.addf %356, %361 : vector<6x16x16xf32>
    %363 = vector.extract_strided_slice %13 {offsets = [0, 4, 6], sizes = [6, 16, 16], strides = [1, 1, 1]} : vector<6x22x22xf32> to vector<6x16x16xf32>
    %364 = vector.broadcast %358 : f32 to vector<6x16x16xf32>
    %365 = arith.mulf %364, %363 : vector<6x16x16xf32>
    %366 = arith.addf %362, %365 : vector<6x16x16xf32>
    %c35 = arith.constant 35 : index
    %367 = memref.load %arg1[%c35] : memref<98xf32, #tpu.memory_space<smem>>
    %c84 = arith.constant 84 : index
    %368 = memref.load %arg1[%c84] : memref<98xf32, #tpu.memory_space<smem>>
    %369 = vector.extract_strided_slice %15 {offsets = [0, 5, 0], sizes = [6, 16, 16], strides = [1, 1, 1]} : vector<6x22x22xf32> to vector<6x16x16xf32>
    %370 = vector.broadcast %367 : f32 to vector<6x16x16xf32>
    %371 = arith.mulf %370, %369 : vector<6x16x16xf32>
    %372 = arith.addf %366, %371 : vector<6x16x16xf32>
    %373 = vector.extract_strided_slice %13 {offsets = [0, 5, 0], sizes = [6, 16, 16], strides = [1, 1, 1]} : vector<6x22x22xf32> to vector<6x16x16xf32>
    %374 = vector.broadcast %368 : f32 to vector<6x16x16xf32>
    %375 = arith.mulf %374, %373 : vector<6x16x16xf32>
    %376 = arith.addf %372, %375 : vector<6x16x16xf32>
    %c36 = arith.constant 36 : index
    %377 = memref.load %arg1[%c36] : memref<98xf32, #tpu.memory_space<smem>>
    %c85 = arith.constant 85 : index
    %378 = memref.load %arg1[%c85] : memref<98xf32, #tpu.memory_space<smem>>
    %379 = vector.extract_strided_slice %15 {offsets = [0, 5, 1], sizes = [6, 16, 16], strides = [1, 1, 1]} : vector<6x22x22xf32> to vector<6x16x16xf32>
    %380 = vector.broadcast %377 : f32 to vector<6x16x16xf32>
    %381 = arith.mulf %380, %379 : vector<6x16x16xf32>
    %382 = arith.addf %376, %381 : vector<6x16x16xf32>
    %383 = vector.extract_strided_slice %13 {offsets = [0, 5, 1], sizes = [6, 16, 16], strides = [1, 1, 1]} : vector<6x22x22xf32> to vector<6x16x16xf32>
    %384 = vector.broadcast %378 : f32 to vector<6x16x16xf32>
    %385 = arith.mulf %384, %383 : vector<6x16x16xf32>
    %386 = arith.addf %382, %385 : vector<6x16x16xf32>
    %c37 = arith.constant 37 : index
    %387 = memref.load %arg1[%c37] : memref<98xf32, #tpu.memory_space<smem>>
    %c86 = arith.constant 86 : index
    %388 = memref.load %arg1[%c86] : memref<98xf32, #tpu.memory_space<smem>>
    %389 = vector.extract_strided_slice %15 {offsets = [0, 5, 2], sizes = [6, 16, 16], strides = [1, 1, 1]} : vector<6x22x22xf32> to vector<6x16x16xf32>
    %390 = vector.broadcast %387 : f32 to vector<6x16x16xf32>
    %391 = arith.mulf %390, %389 : vector<6x16x16xf32>
    %392 = arith.addf %386, %391 : vector<6x16x16xf32>
    %393 = vector.extract_strided_slice %13 {offsets = [0, 5, 2], sizes = [6, 16, 16], strides = [1, 1, 1]} : vector<6x22x22xf32> to vector<6x16x16xf32>
    %394 = vector.broadcast %388 : f32 to vector<6x16x16xf32>
    %395 = arith.mulf %394, %393 : vector<6x16x16xf32>
    %396 = arith.addf %392, %395 : vector<6x16x16xf32>
    %c38 = arith.constant 38 : index
    %397 = memref.load %arg1[%c38] : memref<98xf32, #tpu.memory_space<smem>>
    %c87 = arith.constant 87 : index
    %398 = memref.load %arg1[%c87] : memref<98xf32, #tpu.memory_space<smem>>
    %399 = vector.extract_strided_slice %15 {offsets = [0, 5, 3], sizes = [6, 16, 16], strides = [1, 1, 1]} : vector<6x22x22xf32> to vector<6x16x16xf32>
    %400 = vector.broadcast %397 : f32 to vector<6x16x16xf32>
    %401 = arith.mulf %400, %399 : vector<6x16x16xf32>
    %402 = arith.addf %396, %401 : vector<6x16x16xf32>
    %403 = vector.extract_strided_slice %13 {offsets = [0, 5, 3], sizes = [6, 16, 16], strides = [1, 1, 1]} : vector<6x22x22xf32> to vector<6x16x16xf32>
    %404 = vector.broadcast %398 : f32 to vector<6x16x16xf32>
    %405 = arith.mulf %404, %403 : vector<6x16x16xf32>
    %406 = arith.addf %402, %405 : vector<6x16x16xf32>
    %c39 = arith.constant 39 : index
    %407 = memref.load %arg1[%c39] : memref<98xf32, #tpu.memory_space<smem>>
    %c88 = arith.constant 88 : index
    %408 = memref.load %arg1[%c88] : memref<98xf32, #tpu.memory_space<smem>>
    %409 = vector.extract_strided_slice %15 {offsets = [0, 5, 4], sizes = [6, 16, 16], strides = [1, 1, 1]} : vector<6x22x22xf32> to vector<6x16x16xf32>
    %410 = vector.broadcast %407 : f32 to vector<6x16x16xf32>
    %411 = arith.mulf %410, %409 : vector<6x16x16xf32>
    %412 = arith.addf %406, %411 : vector<6x16x16xf32>
    %413 = vector.extract_strided_slice %13 {offsets = [0, 5, 4], sizes = [6, 16, 16], strides = [1, 1, 1]} : vector<6x22x22xf32> to vector<6x16x16xf32>
    %414 = vector.broadcast %408 : f32 to vector<6x16x16xf32>
    %415 = arith.mulf %414, %413 : vector<6x16x16xf32>
    %416 = arith.addf %412, %415 : vector<6x16x16xf32>
    %c40 = arith.constant 40 : index
    %417 = memref.load %arg1[%c40] : memref<98xf32, #tpu.memory_space<smem>>
    %c89 = arith.constant 89 : index
    %418 = memref.load %arg1[%c89] : memref<98xf32, #tpu.memory_space<smem>>
    %419 = vector.extract_strided_slice %15 {offsets = [0, 5, 5], sizes = [6, 16, 16], strides = [1, 1, 1]} : vector<6x22x22xf32> to vector<6x16x16xf32>
    %420 = vector.broadcast %417 : f32 to vector<6x16x16xf32>
    %421 = arith.mulf %420, %419 : vector<6x16x16xf32>
    %422 = arith.addf %416, %421 : vector<6x16x16xf32>
    %423 = vector.extract_strided_slice %13 {offsets = [0, 5, 5], sizes = [6, 16, 16], strides = [1, 1, 1]} : vector<6x22x22xf32> to vector<6x16x16xf32>
    %424 = vector.broadcast %418 : f32 to vector<6x16x16xf32>
    %425 = arith.mulf %424, %423 : vector<6x16x16xf32>
    %426 = arith.addf %422, %425 : vector<6x16x16xf32>
    %c41 = arith.constant 41 : index
    %427 = memref.load %arg1[%c41] : memref<98xf32, #tpu.memory_space<smem>>
    %c90 = arith.constant 90 : index
    %428 = memref.load %arg1[%c90] : memref<98xf32, #tpu.memory_space<smem>>
    %429 = vector.extract_strided_slice %15 {offsets = [0, 5, 6], sizes = [6, 16, 16], strides = [1, 1, 1]} : vector<6x22x22xf32> to vector<6x16x16xf32>
    %430 = vector.broadcast %427 : f32 to vector<6x16x16xf32>
    %431 = arith.mulf %430, %429 : vector<6x16x16xf32>
    %432 = arith.addf %426, %431 : vector<6x16x16xf32>
    %433 = vector.extract_strided_slice %13 {offsets = [0, 5, 6], sizes = [6, 16, 16], strides = [1, 1, 1]} : vector<6x22x22xf32> to vector<6x16x16xf32>
    %434 = vector.broadcast %428 : f32 to vector<6x16x16xf32>
    %435 = arith.mulf %434, %433 : vector<6x16x16xf32>
    %436 = arith.addf %432, %435 : vector<6x16x16xf32>
    %c42 = arith.constant 42 : index
    %437 = memref.load %arg1[%c42] : memref<98xf32, #tpu.memory_space<smem>>
    %c91 = arith.constant 91 : index
    %438 = memref.load %arg1[%c91] : memref<98xf32, #tpu.memory_space<smem>>
    %439 = vector.extract_strided_slice %15 {offsets = [0, 6, 0], sizes = [6, 16, 16], strides = [1, 1, 1]} : vector<6x22x22xf32> to vector<6x16x16xf32>
    %440 = vector.broadcast %437 : f32 to vector<6x16x16xf32>
    %441 = arith.mulf %440, %439 : vector<6x16x16xf32>
    %442 = arith.addf %436, %441 : vector<6x16x16xf32>
    %443 = vector.extract_strided_slice %13 {offsets = [0, 6, 0], sizes = [6, 16, 16], strides = [1, 1, 1]} : vector<6x22x22xf32> to vector<6x16x16xf32>
    %444 = vector.broadcast %438 : f32 to vector<6x16x16xf32>
    %445 = arith.mulf %444, %443 : vector<6x16x16xf32>
    %446 = arith.addf %442, %445 : vector<6x16x16xf32>
    %c43 = arith.constant 43 : index
    %447 = memref.load %arg1[%c43] : memref<98xf32, #tpu.memory_space<smem>>
    %c92 = arith.constant 92 : index
    %448 = memref.load %arg1[%c92] : memref<98xf32, #tpu.memory_space<smem>>
    %449 = vector.extract_strided_slice %15 {offsets = [0, 6, 1], sizes = [6, 16, 16], strides = [1, 1, 1]} : vector<6x22x22xf32> to vector<6x16x16xf32>
    %450 = vector.broadcast %447 : f32 to vector<6x16x16xf32>
    %451 = arith.mulf %450, %449 : vector<6x16x16xf32>
    %452 = arith.addf %446, %451 : vector<6x16x16xf32>
    %453 = vector.extract_strided_slice %13 {offsets = [0, 6, 1], sizes = [6, 16, 16], strides = [1, 1, 1]} : vector<6x22x22xf32> to vector<6x16x16xf32>
    %454 = vector.broadcast %448 : f32 to vector<6x16x16xf32>
    %455 = arith.mulf %454, %453 : vector<6x16x16xf32>
    %456 = arith.addf %452, %455 : vector<6x16x16xf32>
    %c44 = arith.constant 44 : index
    %457 = memref.load %arg1[%c44] : memref<98xf32, #tpu.memory_space<smem>>
    %c93 = arith.constant 93 : index
    %458 = memref.load %arg1[%c93] : memref<98xf32, #tpu.memory_space<smem>>
    %459 = vector.extract_strided_slice %15 {offsets = [0, 6, 2], sizes = [6, 16, 16], strides = [1, 1, 1]} : vector<6x22x22xf32> to vector<6x16x16xf32>
    %460 = vector.broadcast %457 : f32 to vector<6x16x16xf32>
    %461 = arith.mulf %460, %459 : vector<6x16x16xf32>
    %462 = arith.addf %456, %461 : vector<6x16x16xf32>
    %463 = vector.extract_strided_slice %13 {offsets = [0, 6, 2], sizes = [6, 16, 16], strides = [1, 1, 1]} : vector<6x22x22xf32> to vector<6x16x16xf32>
    %464 = vector.broadcast %458 : f32 to vector<6x16x16xf32>
    %465 = arith.mulf %464, %463 : vector<6x16x16xf32>
    %466 = arith.addf %462, %465 : vector<6x16x16xf32>
    %c45 = arith.constant 45 : index
    %467 = memref.load %arg1[%c45] : memref<98xf32, #tpu.memory_space<smem>>
    %c94 = arith.constant 94 : index
    %468 = memref.load %arg1[%c94] : memref<98xf32, #tpu.memory_space<smem>>
    %469 = vector.extract_strided_slice %15 {offsets = [0, 6, 3], sizes = [6, 16, 16], strides = [1, 1, 1]} : vector<6x22x22xf32> to vector<6x16x16xf32>
    %470 = vector.broadcast %467 : f32 to vector<6x16x16xf32>
    %471 = arith.mulf %470, %469 : vector<6x16x16xf32>
    %472 = arith.addf %466, %471 : vector<6x16x16xf32>
    %473 = vector.extract_strided_slice %13 {offsets = [0, 6, 3], sizes = [6, 16, 16], strides = [1, 1, 1]} : vector<6x22x22xf32> to vector<6x16x16xf32>
    %474 = vector.broadcast %468 : f32 to vector<6x16x16xf32>
    %475 = arith.mulf %474, %473 : vector<6x16x16xf32>
    %476 = arith.addf %472, %475 : vector<6x16x16xf32>
    %c46 = arith.constant 46 : index
    %477 = memref.load %arg1[%c46] : memref<98xf32, #tpu.memory_space<smem>>
    %c95 = arith.constant 95 : index
    %478 = memref.load %arg1[%c95] : memref<98xf32, #tpu.memory_space<smem>>
    %479 = vector.extract_strided_slice %15 {offsets = [0, 6, 4], sizes = [6, 16, 16], strides = [1, 1, 1]} : vector<6x22x22xf32> to vector<6x16x16xf32>
    %480 = vector.broadcast %477 : f32 to vector<6x16x16xf32>
    %481 = arith.mulf %480, %479 : vector<6x16x16xf32>
    %482 = arith.addf %476, %481 : vector<6x16x16xf32>
    %483 = vector.extract_strided_slice %13 {offsets = [0, 6, 4], sizes = [6, 16, 16], strides = [1, 1, 1]} : vector<6x22x22xf32> to vector<6x16x16xf32>
    %484 = vector.broadcast %478 : f32 to vector<6x16x16xf32>
    %485 = arith.mulf %484, %483 : vector<6x16x16xf32>
    %486 = arith.addf %482, %485 : vector<6x16x16xf32>
    %c47 = arith.constant 47 : index
    %487 = memref.load %arg1[%c47] : memref<98xf32, #tpu.memory_space<smem>>
    %c96 = arith.constant 96 : index
    %488 = memref.load %arg1[%c96] : memref<98xf32, #tpu.memory_space<smem>>
    %489 = vector.extract_strided_slice %15 {offsets = [0, 6, 5], sizes = [6, 16, 16], strides = [1, 1, 1]} : vector<6x22x22xf32> to vector<6x16x16xf32>
    %490 = vector.broadcast %487 : f32 to vector<6x16x16xf32>
    %491 = arith.mulf %490, %489 : vector<6x16x16xf32>
    %492 = arith.addf %486, %491 : vector<6x16x16xf32>
    %493 = vector.extract_strided_slice %13 {offsets = [0, 6, 5], sizes = [6, 16, 16], strides = [1, 1, 1]} : vector<6x22x22xf32> to vector<6x16x16xf32>
    %494 = vector.broadcast %488 : f32 to vector<6x16x16xf32>
    %495 = arith.mulf %494, %493 : vector<6x16x16xf32>
    %496 = arith.addf %492, %495 : vector<6x16x16xf32>
    %c48 = arith.constant 48 : index
    %497 = memref.load %arg1[%c48] : memref<98xf32, #tpu.memory_space<smem>>
    %c97 = arith.constant 97 : index
    %498 = memref.load %arg1[%c97] : memref<98xf32, #tpu.memory_space<smem>>
    %499 = vector.extract_strided_slice %15 {offsets = [0, 6, 6], sizes = [6, 16, 16], strides = [1, 1, 1]} : vector<6x22x22xf32> to vector<6x16x16xf32>
    %500 = vector.broadcast %497 : f32 to vector<6x16x16xf32>
    %501 = arith.mulf %500, %499 : vector<6x16x16xf32>
    %502 = arith.addf %496, %501 : vector<6x16x16xf32>
    %503 = vector.extract_strided_slice %13 {offsets = [0, 6, 6], sizes = [6, 16, 16], strides = [1, 1, 1]} : vector<6x22x22xf32> to vector<6x16x16xf32>
    %504 = vector.broadcast %498 : f32 to vector<6x16x16xf32>
    %505 = arith.mulf %504, %503 : vector<6x16x16xf32>
    %506 = arith.addf %502, %505 : vector<6x16x16xf32>
    %cst_17 = arith.constant 0.000000e+00 : f32
    %507 = vector.broadcast %cst_17 : f32 to vector<6x16x16xf32>
    %508 = arith.subf %507, %506 : vector<6x16x16xf32>
    %509 = math.exp %508 : vector<6x16x16xf32>
    %cst_18 = arith.constant 1.000000e+00 : f32
    %510 = vector.broadcast %cst_18 : f32 to vector<6x16x16xf32>
    %511 = arith.addf %510, %509 : vector<6x16x16xf32>
    %cst_19 = arith.constant 1.000000e+00 : f32
    %512 = vector.broadcast %cst_19 : f32 to vector<6x16x16xf32>
    %513 = arith.divf %512, %511 : vector<6x16x16xf32>
    %c0_20 = arith.constant 0 : index
    %c0_21 = arith.constant 0 : index
    %c0_22 = arith.constant 0 : index
    %c0_23 = arith.constant 0 : index
    %514 = vector.load %arg2[%c0_20, %c0_21, %c0_22, %c0_23] : memref<6x4x22x22xf32, #tpu.memory_space<vmem>>, vector<6x1x22x22xf32>
    %515 = vector.shape_cast %514 : vector<6x1x22x22xf32> to vector<6x22x22xf32>
    %516 = vector.extract_strided_slice %515 {offsets = [0, 3, 3], sizes = [6, 16, 16], strides = [1, 1, 1]} : vector<6x22x22xf32> to vector<6x16x16xf32>
    %517 = arith.mulf %513, %516 : vector<6x16x16xf32>
    %c0_24 = arith.constant 0 : index
    %c0_25 = arith.constant 0 : index
    %c0_26 = arith.constant 0 : index
    %c0_27 = arith.constant 0 : index
    %518 = vector.load %arg3[%c0_24, %c0_25, %c0_26, %c0_27] : memref<6x4x16x16xf32, #tpu.memory_space<vmem>>, vector<6x1x16x16xf32>
    %519 = vector.shape_cast %518 : vector<6x1x16x16xf32> to vector<6x16x16xf32>
    %520 = vector.shape_cast %517 : vector<6x16x16xf32> to vector<6x1x16x16xf32>
    tpu.vector_store %arg3[%c0_24, %c0_25, %c0_26, %c0_27], %520 {strides = array<i32>} : memref<6x4x16x16xf32, #tpu.memory_space<vmem>>, vector<6x1x16x16xf32>,
    %c0_28 = arith.constant 0 : index
    %c1_29 = arith.constant 1 : index
    %c0_30 = arith.constant 0 : index
    %c0_31 = arith.constant 0 : index
    %521 = vector.load %arg2[%c0_28, %c1_29, %c0_30, %c0_31] : memref<6x4x22x22xf32, #tpu.memory_space<vmem>>, vector<6x1x22x22xf32>
    %522 = vector.shape_cast %521 : vector<6x1x22x22xf32> to vector<6x22x22xf32>
    %523 = vector.extract_strided_slice %522 {offsets = [0, 3, 3], sizes = [6, 16, 16], strides = [1, 1, 1]} : vector<6x22x22xf32> to vector<6x16x16xf32>
    %524 = arith.mulf %513, %523 : vector<6x16x16xf32>
    %c0_32 = arith.constant 0 : index
    %c1_33 = arith.constant 1 : index
    %c0_34 = arith.constant 0 : index
    %c0_35 = arith.constant 0 : index
    %525 = vector.load %arg3[%c0_32, %c1_33, %c0_34, %c0_35] : memref<6x4x16x16xf32, #tpu.memory_space<vmem>>, vector<6x1x16x16xf32>
    %526 = vector.shape_cast %525 : vector<6x1x16x16xf32> to vector<6x16x16xf32>
    %527 = vector.shape_cast %524 : vector<6x16x16xf32> to vector<6x1x16x16xf32>
    tpu.vector_store %arg3[%c0_32, %c1_33, %c0_34, %c0_35], %527 {strides = array<i32>} : memref<6x4x16x16xf32, #tpu.memory_space<vmem>>, vector<6x1x16x16xf32>,
    %c0_36 = arith.constant 0 : index
    %c2_37 = arith.constant 2 : index
    %c0_38 = arith.constant 0 : index
    %c0_39 = arith.constant 0 : index
    %528 = vector.load %arg2[%c0_36, %c2_37, %c0_38, %c0_39] : memref<6x4x22x22xf32, #tpu.memory_space<vmem>>, vector<6x1x22x22xf32>
    %529 = vector.shape_cast %528 : vector<6x1x22x22xf32> to vector<6x22x22xf32>
    %530 = vector.extract_strided_slice %529 {offsets = [0, 3, 3], sizes = [6, 16, 16], strides = [1, 1, 1]} : vector<6x22x22xf32> to vector<6x16x16xf32>
    %531 = arith.mulf %513, %530 : vector<6x16x16xf32>
    %c0_40 = arith.constant 0 : index
    %c2_41 = arith.constant 2 : index
    %c0_42 = arith.constant 0 : index
    %c0_43 = arith.constant 0 : index
    %532 = vector.load %arg3[%c0_40, %c2_41, %c0_42, %c0_43] : memref<6x4x16x16xf32, #tpu.memory_space<vmem>>, vector<6x1x16x16xf32>
    %533 = vector.shape_cast %532 : vector<6x1x16x16xf32> to vector<6x16x16xf32>
    %534 = vector.shape_cast %531 : vector<6x16x16xf32> to vector<6x1x16x16xf32>
    tpu.vector_store %arg3[%c0_40, %c2_41, %c0_42, %c0_43], %534 {strides = array<i32>} : memref<6x4x16x16xf32, #tpu.memory_space<vmem>>, vector<6x1x16x16xf32>,
    %c0_44 = arith.constant 0 : index
    %c3_45 = arith.constant 3 : index
    %c0_46 = arith.constant 0 : index
    %c0_47 = arith.constant 0 : index
    %535 = vector.load %arg2[%c0_44, %c3_45, %c0_46, %c0_47] : memref<6x4x22x22xf32, #tpu.memory_space<vmem>>, vector<6x1x22x22xf32>
    %536 = vector.shape_cast %535 : vector<6x1x22x22xf32> to vector<6x22x22xf32>
    %537 = vector.extract_strided_slice %536 {offsets = [0, 3, 3], sizes = [6, 16, 16], strides = [1, 1, 1]} : vector<6x22x22xf32> to vector<6x16x16xf32>
    %538 = arith.mulf %513, %537 : vector<6x16x16xf32>
    %c0_48 = arith.constant 0 : index
    %c3_49 = arith.constant 3 : index
    %c0_50 = arith.constant 0 : index
    %c0_51 = arith.constant 0 : index
    %539 = vector.load %arg3[%c0_48, %c3_49, %c0_50, %c0_51] : memref<6x4x16x16xf32, #tpu.memory_space<vmem>>, vector<6x1x16x16xf32>
    %540 = vector.shape_cast %539 : vector<6x1x16x16xf32> to vector<6x16x16xf32>
    %541 = vector.shape_cast %538 : vector<6x16x16xf32> to vector<6x1x16x16xf32>
    tpu.vector_store %arg3[%c0_48, %c3_49, %c0_50, %c0_51], %541 {strides = array<i32>} : memref<6x4x16x16xf32, #tpu.memory_space<vmem>>, vector<6x1x16x16xf32>,
    return
  }
  func.func @transform_0(%arg0: i32) -> i32 {
    %c0_i32 = arith.constant 0 : i32
    %c0_i32_0 = arith.constant 0 : i32
    return %c0_i32 : i32
  }
  func.func @transform_1(%arg0: i32) -> (i32, i32, i32, i32) {
    %c0_i32 = arith.constant 0 : i32
    %c0_i32_0 = arith.constant 0 : i32
    %c0_i32_1 = arith.constant 0 : i32
    %c0_i32_2 = arith.constant 0 : i32
    return %arg0, %c0_i32, %c0_i32_0, %c0_i32_1 : i32, i32, i32, i32
  }
  func.func @transform_2(%arg0: i32) -> (i32, i32, i32, i32) {
    %c0_i32 = arith.constant 0 : i32
    %c0_i32_0 = arith.constant 0 : i32
    %c0_i32_1 = arith.constant 0 : i32
    %c0_i32_2 = arith.constant 0 : i32
    return %arg0, %c0_i32, %c0_i32_0, %c0_i32_1 : i32, i32, i32, i32
  }
}

</mosaic_0001>

<llo_original>
// kernel: tpu_custom_call.1
$region0: #{tpu_custom_call.1}
  #allocation0 [shape = 'u32[]', space=smem, size = 0x4, offset = 0x4, fixed_abs, tag = 'smem constant byte address 0x4 - core index']
  #allocation1 [shape = 'u32[72,128]{1,0:T(1,128)}', space=vmem, size = 0x9000, scoped, tag = 'internal scratch']
  %s0 = inlined_call_operand.vmem [shape: f32[98], index: 0, kind: input, shape index: {}]
  %s1 = inlined_call_operand.vmem [shape: f32[6,4,22,22], index: 1, kind: input, shape index: {}]
  %s2 = inlined_call_operand.hbm [shape: f32[6,4,16,16], index: 2, kind: output, shape index: {}]
  %s3 = sld [smem:[#allocation0]]
  $region22: #{tpu_custom_call.1} parent=0
    _
  %s5 = ssub.s32 1, %s3
  %s6 = scalar_select 0, %s5, %s3
  $region1: #{tpu_custom_call.1} parent=0
    #allocation2 [shape = 'u8[512]{0}', space=smem, size = 0x200, scoped, tag = 'input window, operand 0, single buffered']
    #allocation3 [shape = 's32[1]{0}', space=sflag, size = 0x4, scoped, tag = 'scoped memory for tpu_custom_call.1']
    #allocation4 [shape = 's32[1]{0}', space=sflag, size = 0x4, scoped, tag = 'scoped memory for tpu_custom_call.1']
    #allocation5 [shape = 'u8[196608]{0}', space=vmem, size = 0x30000, scoped, tag = 'output window, operand 0, single buffered']
    %7 = vsyncpa [#allocation4], 0
    %8 = vsyncpa [#allocation3], 0
    // Predicated region
    $region2: #{tpu_custom_call.1} parent=1 // pred_check
      _
    $region3: #{tpu_custom_call.1} parent=1 // pred_check_branch
      %10 = sbr.rel (0) target = $region5
    $region4: #{tpu_custom_call.1} parent=1 // pred_region
      %12 = vsyncadd [#allocation4], 0
      %s14 = sshll.u32 %s0, 4
      %s15 = int_to_ptr.vmem [resolvable:$true] %s14
      %17 = dma.vmem_to_smem %s15, 16, [#allocation2], [#allocation4]
    $region5: #{tpu_custom_call.1} parent=1 // pred_fallthru
      _
    // Predicated region
    $region6: #{tpu_custom_call.1} parent=1 // pred_check
      _
    $region7: #{tpu_custom_call.1} parent=1 // pred_check_branch
      %19 = sbr.rel (0) target = $region9
    $region8: #{tpu_custom_call.1} parent=1 // pred_region
      _
    $region9: #{tpu_custom_call.1} parent=1 // pred_fallthru
      _
    // Predicated region
    $region10: #{tpu_custom_call.1} parent=1 // pred_check
      _
    $region11: #{tpu_custom_call.1} parent=1 // pred_check_branch
      %21 = sbr.rel (0) target = $region13
    $region12: #{tpu_custom_call.1} parent=1 // pred_region
      %23 = dma.done [#allocation4], 16
    $region13: #{tpu_custom_call.1} parent=1 // pred_fallthru
      _
    %24 = sfence
    %v25 = vld [vmem:[%s1] sm:$0xff]
    %v26 = vld [vmem:[%s1 + $0x8] sm:$0xff]
    %v27 = vld [vmem:[%s1 + $0x10] sm:$0x3f]
    %v28 = vld [vmem:[%s1 + $0x60] sm:$0xff]
    %v29 = vld [vmem:[%s1 + $0x68] sm:$0xff]
    %v30 = vld [vmem:[%s1 + $0x70] sm:$0x3f]
    %v31 = vld [vmem:[%s1 + $0xc0] sm:$0xff]
    %v32 = vld [vmem:[%s1 + $0xc8] sm:$0xff]
    %v33 = vld [vmem:[%s1 + $0xd0] sm:$0x3f]
    %v34 = vld [vmem:[%s1 + $0x120] sm:$0xff]
    %v35 = vld [vmem:[%s1 + $0x128] sm:$0xff]
    %v36 = vld [vmem:[%s1 + $0x130] sm:$0x3f]
    %v37 = vld [vmem:[%s1 + $0x180] sm:$0xff]
    %v38 = vld [vmem:[%s1 + $0x188] sm:$0xff]
    %v39 = vld [vmem:[%s1 + $0x190] sm:$0x3f]
    %v40 = vld [vmem:[%s1 + $0x1e0] sm:$0xff]
    %v41 = vld [vmem:[%s1 + $0x1e8] sm:$0xff]
    %v42 = vld [vmem:[%s1 + $0x1f0] sm:$0x3f]
    %s43 = scalar_lea.vmem %s1, 24
    %v44 = vld [vmem:[%s43] sm:$0xff]
    %v45 = vld [vmem:[%s43 + $0x8] sm:$0xff]
    %v46 = vld [vmem:[%s43 + $0x10] sm:$0x3f]
    %v47 = vld [vmem:[%s43 + $0x60] sm:$0xff]
    %v48 = vld [vmem:[%s43 + $0x68] sm:$0xff]
    %v49 = vld [vmem:[%s43 + $0x70] sm:$0x3f]
    %v50 = vld [vmem:[%s43 + $0xc0] sm:$0xff]
    %v51 = vld [vmem:[%s43 + $0xc8] sm:$0xff]
    %v52 = vld [vmem:[%s43 + $0xd0] sm:$0x3f]
    %v53 = vld [vmem:[%s43 + $0x120] sm:$0xff]
    %v54 = vld [vmem:[%s43 + $0x128] sm:$0xff]
    %v55 = vld [vmem:[%s43 + $0x130] sm:$0x3f]
    %v56 = vld [vmem:[%s43 + $0x180] sm:$0xff]
    %v57 = vld [vmem:[%s43 + $0x188] sm:$0xff]
    %v58 = vld [vmem:[%s43 + $0x190] sm:$0x3f]
    %v59 = vld [vmem:[%s43 + $0x1e0] sm:$0xff]
    %v60 = vld [vmem:[%s43 + $0x1e8] sm:$0xff]
    %v61 = vld [vmem:[%s43 + $0x1f0] sm:$0x3f]
    %v62 = vadd.f32 %v25, %v44
    %v63 = vadd.f32 %v26, %v45
    %v64 = vadd.f32 %v27, %v46
    %v65 = vadd.f32 %v28, %v47
    %v66 = vadd.f32 %v29, %v48
    %v67 = vadd.f32 %v30, %v49
    %v68 = vadd.f32 %v31, %v50
    %v69 = vadd.f32 %v32, %v51
    %v70 = vadd.f32 %v33, %v52
    %v71 = vadd.f32 %v34, %v53
    %v72 = vadd.f32 %v35, %v54
    %v73 = vadd.f32 %v36, %v55
    %v74 = vadd.f32 %v37, %v56
    %v75 = vadd.f32 %v38, %v57
    %v76 = vadd.f32 %v39, %v58
    %v77 = vadd.f32 %v40, %v59
    %v78 = vadd.f32 %v41, %v60
    %v79 = vadd.f32 %v42, %v61
    %v80 = vmax.f32 %v25, %v44
    %v81 = vmax.f32 %v26, %v45
    %v82 = vmax.f32 %v27, %v46
    %v83 = vmax.f32 %v28, %v47
    %v84 = vmax.f32 %v29, %v48
    %v85 = vmax.f32 %v30, %v49
    %v86 = vmax.f32 %v31, %v50
    %v87 = vmax.f32 %v32, %v51
    %v88 = vmax.f32 %v33, %v52
    %v89 = vmax.f32 %v34, %v53
    %v90 = vmax.f32 %v35, %v54
    %v91 = vmax.f32 %v36, %v55
    %v92 = vmax.f32 %v37, %v56
    %v93 = vmax.f32 %v38, %v57
    %v94 = vmax.f32 %v39, %v58
    %v95 = vmax.f32 %v40, %v59
    %v96 = vmax.f32 %v41, %v60
    %v97 = vmax.f32 %v42, %v61
    %s98 = scalar_lea.vmem %s1, 48
    %v99 = vld [vmem:[%s98] sm:$0xff]
    %v100 = vld [vmem:[%s98 + $0x8] sm:$0xff]
    %v101 = vld [vmem:[%s98 + $0x10] sm:$0x3f]
    %v102 = vld [vmem:[%s98 + $0x60] sm:$0xff]
    %v103 = vld [vmem:[%s98 + $0x68] sm:$0xff]
    %v104 = vld [vmem:[%s98 + $0x70] sm:$0x3f]
    %v105 = vld [vmem:[%s98 + $0xc0] sm:$0xff]
    %v106 = vld [vmem:[%s98 + $0xc8] sm:$0xff]
    %v107 = vld [vmem:[%s98 + $0xd0] sm:$0x3f]
    %v108 = vld [vmem:[%s98 + $0x120] sm:$0xff]
    %v109 = vld [vmem:[%s98 + $0x128] sm:$0xff]
    %v110 = vld [vmem:[%s98 + $0x130] sm:$0x3f]
    %v111 = vld [vmem:[%s98 + $0x180] sm:$0xff]
    %v112 = vld [vmem:[%s98 + $0x188] sm:$0xff]
    %v113 = vld [vmem:[%s98 + $0x190] sm:$0x3f]
    %v114 = vld [vmem:[%s98 + $0x1e0] sm:$0xff]
    %v115 = vld [vmem:[%s98 + $0x1e8] sm:$0xff]
    %v116 = vld [vmem:[%s98 + $0x1f0] sm:$0x3f]
    %v117 = vadd.f32 %v62, %v99
    %v118 = vadd.f32 %v63, %v100
    %v119 = vadd.f32 %v64, %v101
    %v120 = vadd.f32 %v65, %v102
    %v121 = vadd.f32 %v66, %v103
    %v122 = vadd.f32 %v67, %v104
    %v123 = vadd.f32 %v68, %v105
    %v124 = vadd.f32 %v69, %v106
    %v125 = vadd.f32 %v70, %v107
    %v126 = vadd.f32 %v71, %v108
    %v127 = vadd.f32 %v72, %v109
    %v128 = vadd.f32 %v73, %v110
    %v129 = vadd.f32 %v74, %v111
    %v130 = vadd.f32 %v75, %v112
    %v131 = vadd.f32 %v76, %v113
    %v132 = vadd.f32 %v77, %v114
    %v133 = vadd.f32 %v78, %v115
    %v134 = vadd.f32 %v79, %v116
    %v135 = vmax.f32 %v80, %v99
    %v136 = vmax.f32 %v81, %v100
    %v137 = vmax.f32 %v82, %v101
    %v138 = vmax.f32 %v83, %v102
    %v139 = vmax.f32 %v84, %v103
    %v140 = vmax.f32 %v85, %v104
    %v141 = vmax.f32 %v86, %v105
    %v142 = vmax.f32 %v87, %v106
    %v143 = vmax.f32 %v88, %v107
    %v144 = vmax.f32 %v89, %v108
    %v145 = vmax.f32 %v90, %v109
    %v146 = vmax.f32 %v91, %v110
    %v147 = vmax.f32 %v92, %v111
    %v148 = vmax.f32 %v93, %v112
    %v149 = vmax.f32 %v94, %v113
    %v150 = vmax.f32 %v95, %v114
    %v151 = vmax.f32 %v96, %v115
    %v152 = vmax.f32 %v97, %v116
    %s153 = scalar_lea.vmem %s1, 72
    %v154 = vld [vmem:[%s153] sm:$0xff]
    %v155 = vld [vmem:[%s153 + $0x8] sm:$0xff]
    %v156 = vld [vmem:[%s153 + $0x10] sm:$0x3f]
    %v157 = vld [vmem:[%s153 + $0x60] sm:$0xff]
    %v158 = vld [vmem:[%s153 + $0x68] sm:$0xff]
    %v159 = vld [vmem:[%s153 + $0x70] sm:$0x3f]
    %v160 = vld [vmem:[%s153 + $0xc0] sm:$0xff]
    %v161 = vld [vmem:[%s153 + $0xc8] sm:$0xff]
    %v162 = vld [vmem:[%s153 + $0xd0] sm:$0x3f]
    %v163 = vld [vmem:[%s153 + $0x120] sm:$0xff]
    %v164 = vld [vmem:[%s153 + $0x128] sm:$0xff]
    %v165 = vld [vmem:[%s153 + $0x130] sm:$0x3f]
    %v166 = vld [vmem:[%s153 + $0x180] sm:$0xff]
    %v167 = vld [vmem:[%s153 + $0x188] sm:$0xff]
    %v168 = vld [vmem:[%s153 + $0x190] sm:$0x3f]
    %v169 = vld [vmem:[%s153 + $0x1e0] sm:$0xff]
    %v170 = vld [vmem:[%s153 + $0x1e8] sm:$0xff]
    %v171 = vld [vmem:[%s153 + $0x1f0] sm:$0x3f]
    %v172 = vadd.f32 %v117, %v154
    %v173 = vadd.f32 %v118, %v155
    %v174 = vadd.f32 %v119, %v156
    %v175 = vadd.f32 %v120, %v157
    %v176 = vadd.f32 %v121, %v158
    %v177 = vadd.f32 %v122, %v159
    %v178 = vadd.f32 %v123, %v160
    %v179 = vadd.f32 %v124, %v161
    %v180 = vadd.f32 %v125, %v162
    %v181 = vadd.f32 %v126, %v163
    %v182 = vadd.f32 %v127, %v164
    %v183 = vadd.f32 %v128, %v165
    %v184 = vadd.f32 %v129, %v166
    %v185 = vadd.f32 %v130, %v167
    %v186 = vadd.f32 %v131, %v168
    %v187 = vadd.f32 %v132, %v169
    %v188 = vadd.f32 %v133, %v170
    %v189 = vadd.f32 %v134, %v171
    %v190 = vmax.f32 %v135, %v154
    %v191 = vmax.f32 %v136, %v155
    %v192 = vmax.f32 %v137, %v156
    %v193 = vmax.f32 %v138, %v157
    %v194 = vmax.f32 %v139, %v158
    %v195 = vmax.f32 %v140, %v159
    %v196 = vmax.f32 %v141, %v160
    %v197 = vmax.f32 %v142, %v161
    %v198 = vmax.f32 %v143, %v162
    %v199 = vmax.f32 %v144, %v163
    %v200 = vmax.f32 %v145, %v164
    %v201 = vmax.f32 %v146, %v165
    %v202 = vmax.f32 %v147, %v166
    %v203 = vmax.f32 %v148, %v167
    %v204 = vmax.f32 %v149, %v168
    %v205 = vmax.f32 %v150, %v169
    %v206 = vmax.f32 %v151, %v170
    %v207 = vmax.f32 %v152, %v171
    %v208 = vmul.f32 %v172, 0.25
    %v209 = vmul.f32 %v173, 0.25
    %v210 = vmul.f32 %v174, 0.25
    %v211 = vmul.f32 %v175, 0.25
    %v212 = vmul.f32 %v176, 0.25
    %v213 = vmul.f32 %v177, 0.25
    %v214 = vmul.f32 %v178, 0.25
    %v215 = vmul.f32 %v179, 0.25
    %v216 = vmul.f32 %v180, 0.25
    %v217 = vmul.f32 %v181, 0.25
    %v218 = vmul.f32 %v182, 0.25
    %v219 = vmul.f32 %v183, 0.25
    %v220 = vmul.f32 %v184, 0.25
    %v221 = vmul.f32 %v185, 0.25
    %v222 = vmul.f32 %v186, 0.25
    %v223 = vmul.f32 %v187, 0.25
    %v224 = vmul.f32 %v188, 0.25
    %v225 = vmul.f32 %v189, 0.25
    %s226 = sld [smem:[#allocation2]]
    %s227 = sld [smem:[#allocation2 + $0x31]]
    %v228 = vstv %s226
    %v229 = vmul.f32 %v228, %v208
    %v230 = vmul.f32 %v228, %v209
    %v231 = vmul.f32 %v228, %v211
    %v232 = vmul.f32 %v228, %v212
    %v233 = vmul.f32 %v228, %v214
    %v234 = vmul.f32 %v228, %v215
    %v235 = vmul.f32 %v228, %v217
    %v236 = vmul.f32 %v228, %v218
    %v237 = vmul.f32 %v228, %v220
    %v238 = vmul.f32 %v228, %v221
    %v239 = vmul.f32 %v228, %v223
    %v240 = vmul.f32 %v228, %v224
    %v241 = vadd.f32 %v229, 0.0
    %v242 = vadd.f32 %v230, 0.0
    %v243 = vadd.f32 %v231, 0.0
    %v244 = vadd.f32 %v232, 0.0
    %v245 = vadd.f32 %v233, 0.0
    %v246 = vadd.f32 %v234, 0.0
    %v247 = vadd.f32 %v235, 0.0
    %v248 = vadd.f32 %v236, 0.0
    %v249 = vadd.f32 %v237, 0.0
    %v250 = vadd.f32 %v238, 0.0
    %v251 = vadd.f32 %v239, 0.0
    %v252 = vadd.f32 %v240, 0.0
    %v253 = vstv %s227
    %v254 = vmul.f32 %v253, %v190
    %v255 = vmul.f32 %v253, %v191
    %v256 = vmul.f32 %v253, %v193
    %v257 = vmul.f32 %v253, %v194
    %v258 = vmul.f32 %v253, %v196
    %v259 = vmul.f32 %v253, %v197
    %v260 = vmul.f32 %v253, %v199
    %v261 = vmul.f32 %v253, %v200
    %v262 = vmul.f32 %v253, %v202
    %v263 = vmul.f32 %v253, %v203
    %v264 = vmul.f32 %v253, %v205
    %v265 = vmul.f32 %v253, %v206
    %v266 = vadd.f32 %v241, %v254
    %v267 = vadd.f32 %v242, %v255
    %v268 = vadd.f32 %v243, %v256
    %v269 = vadd.f32 %v244, %v257
    %v270 = vadd.f32 %v245, %v258
    %v271 = vadd.f32 %v246, %v259
    %v272 = vadd.f32 %v247, %v260
    %v273 = vadd.f32 %v248, %v261
    %v274 = vadd.f32 %v249, %v262
    %v275 = vadd.f32 %v250, %v263
    %v276 = vadd.f32 %v251, %v264
    %v277 = vadd.f32 %v252, %v265
    %s278 = sld [smem:[#allocation2 + $0x1]]
    %s279 = sld [smem:[#allocation2 + $0x32]]
    %v280 = vstv %s278
    %v281 = vmul.f32 %v280, %v208
    %v282 = vmul.f32 %v280, %v209
    %v283 = vmul.f32 %v280, %v211
    %v284 = vmul.f32 %v280, %v212
    %v285 = vmul.f32 %v280, %v214
    %v286 = vmul.f32 %v280, %v215
    %v287 = vmul.f32 %v280, %v217
    %v288 = vmul.f32 %v280, %v218
    %v289 = vmul.f32 %v280, %v220
    %v290 = vmul.f32 %v280, %v221
    %v291 = vmul.f32 %v280, %v223
    %v292 = vmul.f32 %v280, %v224
    %305 = vrot.lane.b32.xlu0 %v281, 127
    %v306 = vpop.permute.xlu0 %305
    %307 = vrot.lane.b32.xlu0 %v282, 127
    %v308 = vpop.permute.xlu0 %307
    %309 = vrot.lane.b32.xlu0 %v283, 127
    %v310 = vpop.permute.xlu0 %309
    %311 = vrot.lane.b32.xlu0 %v284, 127
    %v312 = vpop.permute.xlu0 %311
    %313 = vrot.lane.b32.xlu0 %v285, 127
    %v314 = vpop.permute.xlu0 %313
    %315 = vrot.lane.b32.xlu0 %v286, 127
    %v316 = vpop.permute.xlu0 %315
    %317 = vrot.lane.b32.xlu0 %v287, 127
    %v318 = vpop.permute.xlu0 %317
    %319 = vrot.lane.b32.xlu0 %v288, 127
    %v320 = vpop.permute.xlu0 %319
    %321 = vrot.lane.b32.xlu0 %v289, 127
    %v322 = vpop.permute.xlu0 %321
    %323 = vrot.lane.b32.xlu0 %v290, 127
    %v324 = vpop.permute.xlu0 %323
    %325 = vrot.lane.b32.xlu0 %v291, 127
    %v326 = vpop.permute.xlu0 %325
    %327 = vrot.lane.b32.xlu0 %v292, 127
    %v328 = vpop.permute.xlu0 %327
    %v341 = vadd.f32 %v266, %v306
    %v342 = vadd.f32 %v267, %v308
    %v343 = vadd.f32 %v268, %v310
    %v344 = vadd.f32 %v269, %v312
    %v345 = vadd.f32 %v270, %v314
    %v346 = vadd.f32 %v271, %v316
    %v347 = vadd.f32 %v272, %v318
    %v348 = vadd.f32 %v273, %v320
    %v349 = vadd.f32 %v274, %v322
    %v350 = vadd.f32 %v275, %v324
    %v351 = vadd.f32 %v276, %v326
    %v352 = vadd.f32 %v277, %v328
    %v353 = vstv %s279
    %v354 = vmul.f32 %v353, %v190
    %v355 = vmul.f32 %v353, %v191
    %v356 = vmul.f32 %v353, %v193
    %v357 = vmul.f32 %v353, %v194
    %v358 = vmul.f32 %v353, %v196
    %v359 = vmul.f32 %v353, %v197
    %v360 = vmul.f32 %v353, %v199
    %v361 = vmul.f32 %v353, %v200
    %v362 = vmul.f32 %v353, %v202
    %v363 = vmul.f32 %v353, %v203
    %v364 = vmul.f32 %v353, %v205
    %v365 = vmul.f32 %v353, %v206
    %378 = vrot.lane.b32.xlu0 %v354, 127
    %v379 = vpop.permute.xlu0 %378
    %380 = vrot.lane.b32.xlu0 %v355, 127
    %v381 = vpop.permute.xlu0 %380
    %382 = vrot.lane.b32.xlu0 %v356, 127
    %v383 = vpop.permute.xlu0 %382
    %384 = vrot.lane.b32.xlu0 %v357, 127
    %v385 = vpop.permute.xlu0 %384
    %386 = vrot.lane.b32.xlu0 %v358, 127
    %v387 = vpop.permute.xlu0 %386
    %388 = vrot.lane.b32.xlu0 %v359, 127
    %v389 = vpop.permute.xlu0 %388
    %390 = vrot.lane.b32.xlu0 %v360, 127
    %v391 = vpop.permute.xlu0 %390
    %392 = vrot.lane.b32.xlu0 %v361, 127
    %v393 = vpop.permute.xlu0 %392
    %394 = vrot.lane.b32.xlu0 %v362, 127
    %v395 = vpop.permute.xlu0 %394
    %396 = vrot.lane.b32.xlu0 %v363, 127
    %v397 = vpop.permute.xlu0 %396
    %398 = vrot.lane.b32.xlu0 %v364, 127
    %v399 = vpop.permute.xlu0 %398
    %400 = vrot.lane.b32.xlu0 %v365, 127
    %v401 = vpop.permute.xlu0 %400
    %v414 = vadd.f32 %v341, %v379
    %v415 = vadd.f32 %v342, %v381
    %v416 = vadd.f32 %v343, %v383
    %v417 = vadd.f32 %v344, %v385
    %v418 = vadd.f32 %v345, %v387
    %v419 = vadd.f32 %v346, %v389
    %v420 = vadd.f32 %v347, %v391
    %v421 = vadd.f32 %v348, %v393
    %v422 = vadd.f32 %v349, %v395
    %v423 = vadd.f32 %v350, %v397
    %v424 = vadd.f32 %v351, %v399
    %v425 = vadd.f32 %v352, %v401
    %s426 = sld [smem:[#allocation2 + $0x2]]
    %s427 = sld [smem:[#allocation2 + $0x33]]
    %v428 = vstv %s426
    %v429 = vmul.f32 %v428, %v208
    %v430 = vmul.f32 %v428, %v209
    %v431 = vmul.f32 %v428, %v211
    %v432 = vmul.f32 %v428, %v212
    %v433 = vmul.f32 %v428, %v214
    %v434 = vmul.f32 %v428, %v215
    %v435 = vmul.f32 %v428, %v217
    %v436 = vmul.f32 %v428, %v218
    %v437 = vmul.f32 %v428, %v220
    %v438 = vmul.f32 %v428, %v221
    %v439 = vmul.f32 %v428, %v223
    %v440 = vmul.f32 %v428, %v224
    %453 = vrot.lane.b32.xlu0 %v429, 126
    %v454 = vpop.permute.xlu0 %453
    %455 = vrot.lane.b32.xlu0 %v430, 126
    %v456 = vpop.permute.xlu0 %455
    %457 = vrot.lane.b32.xlu0 %v431, 126
    %v458 = vpop.permute.xlu0 %457
    %459 = vrot.lane.b32.xlu0 %v432, 126
    %v460 = vpop.permute.xlu0 %459
    %461 = vrot.lane.b32.xlu0 %v433, 126
    %v462 = vpop.permute.xlu0 %461
    %463 = vrot.lane.b32.xlu0 %v434, 126
    %v464 = vpop.permute.xlu0 %463
    %465 = vrot.lane.b32.xlu0 %v435, 126
    %v466 = vpop.permute.xlu0 %465
    %467 = vrot.lane.b32.xlu0 %v436, 126
    %v468 = vpop.permute.xlu0 %467
    %469 = vrot.lane.b32.xlu0 %v437, 126
    %v470 = vpop.permute.xlu0 %469
    %471 = vrot.lane.b32.xlu0 %v438, 126
    %v472 = vpop.permute.xlu0 %471
    %473 = vrot.lane.b32.xlu0 %v439, 126
    %v474 = vpop.permute.xlu0 %473
    %475 = vrot.lane.b32.xlu0 %v440, 126
    %v476 = vpop.permute.xlu0 %475
    %v489 = vadd.f32 %v414, %v454
    %v490 = vadd.f32 %v415, %v456
    %v491 = vadd.f32 %v416, %v458
    %v492 = vadd.f32 %v417, %v460
    %v493 = vadd.f32 %v418, %v462
    %v494 = vadd.f32 %v419, %v464
    %v495 = vadd.f32 %v420, %v466
    %v496 = vadd.f32 %v421, %v468
    %v497 = vadd.f32 %v422, %v470
    %v498 = vadd.f32 %v423, %v472
    %v499 = vadd.f32 %v424, %v474
    %v500 = vadd.f32 %v425, %v476
    %v501 = vstv %s427
    %v502 = vmul.f32 %v501, %v190
    %v503 = vmul.f32 %v501, %v191
    %v504 = vmul.f32 %v501, %v193
    %v505 = vmul.f32 %v501, %v194
    %v506 = vmul.f32 %v501, %v196
    %v507 = vmul.f32 %v501, %v197
    %v508 = vmul.f32 %v501, %v199
    %v509 = vmul.f32 %v501, %v200
    %v510 = vmul.f32 %v501, %v202
    %v511 = vmul.f32 %v501, %v203
    %v512 = vmul.f32 %v501, %v205
    %v513 = vmul.f32 %v501, %v206
    %526 = vrot.lane.b32.xlu0 %v502, 126
    %v527 = vpop.permute.xlu0 %526
    %528 = vrot.lane.b32.xlu0 %v503, 126
    %v529 = vpop.permute.xlu0 %528
    %530 = vrot.lane.b32.xlu0 %v504, 126
    %v531 = vpop.permute.xlu0 %530
    %532 = vrot.lane.b32.xlu0 %v505, 126
    %v533 = vpop.permute.xlu0 %532
    %534 = vrot.lane.b32.xlu0 %v506, 126
    %v535 = vpop.permute.xlu0 %534
    %536 = vrot.lane.b32.xlu0 %v507, 126
    %v537 = vpop.permute.xlu0 %536
    %538 = vrot.lane.b32.xlu0 %v508, 126
    %v539 = vpop.permute.xlu0 %538
    %540 = vrot.lane.b32.xlu0 %v509, 126
    %v541 = vpop.permute.xlu0 %540
    %542 = vrot.lane.b32.xlu0 %v510, 126
    %v543 = vpop.permute.xlu0 %542
    %544 = vrot.lane.b32.xlu0 %v511, 126
    %v545 = vpop.permute.xlu0 %544
    %546 = vrot.lane.b32.xlu0 %v512, 126
    %v547 = vpop.permute.xlu0 %546
    %548 = vrot.lane.b32.xlu0 %v513, 126
    %v549 = vpop.permute.xlu0 %548
    %v562 = vadd.f32 %v489, %v527
    %v563 = vadd.f32 %v490, %v529
    %v564 = vadd.f32 %v491, %v531
    %v565 = vadd.f32 %v492, %v533
    %v566 = vadd.f32 %v493, %v535
    %v567 = vadd.f32 %v494, %v537
    %v568 = vadd.f32 %v495, %v539
    %v569 = vadd.f32 %v496, %v541
    %v570 = vadd.f32 %v497, %v543
    %v571 = vadd.f32 %v498, %v545
    %v572 = vadd.f32 %v499, %v547
    %v573 = vadd.f32 %v500, %v549
    %s574 = sld [smem:[#allocation2 + $0x3]]
    %s575 = sld [smem:[#allocation2 + $0x34]]
    %v576 = vstv %s574
    %v577 = vmul.f32 %v576, %v208
    %v578 = vmul.f32 %v576, %v209
    %v579 = vmul.f32 %v576, %v211
    %v580 = vmul.f32 %v576, %v212
    %v581 = vmul.f32 %v576, %v214
    %v582 = vmul.f32 %v576, %v215
    %v583 = vmul.f32 %v576, %v217
    %v584 = vmul.f32 %v576, %v218
    %v585 = vmul.f32 %v576, %v220
    %v586 = vmul.f32 %v576, %v221
    %v587 = vmul.f32 %v576, %v223
    %v588 = vmul.f32 %v576, %v224
    %601 = vrot.lane.b32.xlu0 %v577, 125
    %v602 = vpop.permute.xlu0 %601
    %603 = vrot.lane.b32.xlu0 %v578, 125
    %v604 = vpop.permute.xlu0 %603
    %605 = vrot.lane.b32.xlu0 %v579, 125
    %v606 = vpop.permute.xlu0 %605
    %607 = vrot.lane.b32.xlu0 %v580, 125
    %v608 = vpop.permute.xlu0 %607
    %609 = vrot.lane.b32.xlu0 %v581, 125
    %v610 = vpop.permute.xlu0 %609
    %611 = vrot.lane.b32.xlu0 %v582, 125
    %v612 = vpop.permute.xlu0 %611
    %613 = vrot.lane.b32.xlu0 %v583, 125
    %v614 = vpop.permute.xlu0 %613
    %615 = vrot.lane.b32.xlu0 %v584, 125
    %v616 = vpop.permute.xlu0 %615
    %617 = vrot.lane.b32.xlu0 %v585, 125
    %v618 = vpop.permute.xlu0 %617
    %619 = vrot.lane.b32.xlu0 %v586, 125
    %v620 = vpop.permute.xlu0 %619
    %621 = vrot.lane.b32.xlu0 %v587, 125
    %v622 = vpop.permute.xlu0 %621
    %623 = vrot.lane.b32.xlu0 %v588, 125
    %v624 = vpop.permute.xlu0 %623
    %v637 = vadd.f32 %v562, %v602
    %v638 = vadd.f32 %v563, %v604
    %v639 = vadd.f32 %v564, %v606
    %v640 = vadd.f32 %v565, %v608
    %v641 = vadd.f32 %v566, %v610
    %v642 = vadd.f32 %v567, %v612
    %v643 = vadd.f32 %v568, %v614
    %v644 = vadd.f32 %v569, %v616
    %v645 = vadd.f32 %v570, %v618
    %v646 = vadd.f32 %v571, %v620
    %v647 = vadd.f32 %v572, %v622
    %v648 = vadd.f32 %v573, %v624
    %v649 = vstv %s575
    %v650 = vmul.f32 %v649, %v190
    %v651 = vmul.f32 %v649, %v191
    %v652 = vmul.f32 %v649, %v193
    %v653 = vmul.f32 %v649, %v194
    %v654 = vmul.f32 %v649, %v196
    %v655 = vmul.f32 %v649, %v197
    %v656 = vmul.f32 %v649, %v199
    %v657 = vmul.f32 %v649, %v200
    %v658 = vmul.f32 %v649, %v202
    %v659 = vmul.f32 %v649, %v203
    %v660 = vmul.f32 %v649, %v205
    %v661 = vmul.f32 %v649, %v206
    %674 = vrot.lane.b32.xlu0 %v650, 125
    %v675 = vpop.permute.xlu0 %674
    %676 = vrot.lane.b32.xlu0 %v651, 125
    %v677 = vpop.permute.xlu0 %676
    %678 = vrot.lane.b32.xlu0 %v652, 125
    %v679 = vpop.permute.xlu0 %678
    %680 = vrot.lane.b32.xlu0 %v653, 125
    %v681 = vpop.permute.xlu0 %680
    %682 = vrot.lane.b32.xlu0 %v654, 125
    %v683 = vpop.permute.xlu0 %682
    %684 = vrot.lane.b32.xlu0 %v655, 125
    %v685 = vpop.permute.xlu0 %684
    %686 = vrot.lane.b32.xlu0 %v656, 125
    %v687 = vpop.permute.xlu0 %686
    %688 = vrot.lane.b32.xlu0 %v657, 125
    %v689 = vpop.permute.xlu0 %688
    %690 = vrot.lane.b32.xlu0 %v658, 125
    %v691 = vpop.permute.xlu0 %690
    %692 = vrot.lane.b32.xlu0 %v659, 125
    %v693 = vpop.permute.xlu0 %692
    %694 = vrot.lane.b32.xlu0 %v660, 125
    %v695 = vpop.permute.xlu0 %694
    %696 = vrot.lane.b32.xlu0 %v661, 125
    %v697 = vpop.permute.xlu0 %696
    %v710 = vadd.f32 %v637, %v675
    %v711 = vadd.f32 %v638, %v677
    %v712 = vadd.f32 %v639, %v679
    %v713 = vadd.f32 %v640, %v681
    %v714 = vadd.f32 %v641, %v683
    %v715 = vadd.f32 %v642, %v685
    %v716 = vadd.f32 %v643, %v687
    %v717 = vadd.f32 %v644, %v689
    %v718 = vadd.f32 %v645, %v691
    %v719 = vadd.f32 %v646, %v693
    %v720 = vadd.f32 %v647, %v695
    %v721 = vadd.f32 %v648, %v697
    %s722 = sld [smem:[#allocation2 + $0x4]]
    %s723 = sld [smem:[#allocation2 + $0x35]]
    %v724 = vstv %s722
    %v725 = vmul.f32 %v724, %v208
    %v726 = vmul.f32 %v724, %v209
    %v727 = vmul.f32 %v724, %v211
    %v728 = vmul.f32 %v724, %v212
    %v729 = vmul.f32 %v724, %v214
    %v730 = vmul.f32 %v724, %v215
    %v731 = vmul.f32 %v724, %v217
    %v732 = vmul.f32 %v724, %v218
    %v733 = vmul.f32 %v724, %v220
    %v734 = vmul.f32 %v724, %v221
    %v735 = vmul.f32 %v724, %v223
    %v736 = vmul.f32 %v724, %v224
    %749 = vrot.lane.b32.xlu0 %v725, 124
    %v750 = vpop.permute.xlu0 %749
    %751 = vrot.lane.b32.xlu0 %v726, 124
    %v752 = vpop.permute.xlu0 %751
    %753 = vrot.lane.b32.xlu0 %v727, 124
    %v754 = vpop.permute.xlu0 %753
    %755 = vrot.lane.b32.xlu0 %v728, 124
    %v756 = vpop.permute.xlu0 %755
    %757 = vrot.lane.b32.xlu0 %v729, 124
    %v758 = vpop.permute.xlu0 %757
    %759 = vrot.lane.b32.xlu0 %v730, 124
    %v760 = vpop.permute.xlu0 %759
    %761 = vrot.lane.b32.xlu0 %v731, 124
    %v762 = vpop.permute.xlu0 %761
    %763 = vrot.lane.b32.xlu0 %v732, 124
    %v764 = vpop.permute.xlu0 %763
    %765 = vrot.lane.b32.xlu0 %v733, 124
    %v766 = vpop.permute.xlu0 %765
    %767 = vrot.lane.b32.xlu0 %v734, 124
    %v768 = vpop.permute.xlu0 %767
    %769 = vrot.lane.b32.xlu0 %v735, 124
    %v770 = vpop.permute.xlu0 %769
    %771 = vrot.lane.b32.xlu0 %v736, 124
    %v772 = vpop.permute.xlu0 %771
    %v785 = vadd.f32 %v710, %v750
    %v786 = vadd.f32 %v711, %v752
    %v787 = vadd.f32 %v712, %v754
    %v788 = vadd.f32 %v713, %v756
    %v789 = vadd.f32 %v714, %v758
    %v790 = vadd.f32 %v715, %v760
    %v791 = vadd.f32 %v716, %v762
    %v792 = vadd.f32 %v717, %v764
    %v793 = vadd.f32 %v718, %v766
    %v794 = vadd.f32 %v719, %v768
    %v795 = vadd.f32 %v720, %v770
    %v796 = vadd.f32 %v721, %v772
    %v797 = vstv %s723
    %v798 = vmul.f32 %v797, %v190
    %v799 = vmul.f32 %v797, %v191
    %v800 = vmul.f32 %v797, %v193
    %v801 = vmul.f32 %v797, %v194
    %v802 = vmul.f32 %v797, %v196
    %v803 = vmul.f32 %v797, %v197
    %v804 = vmul.f32 %v797, %v199
    %v805 = vmul.f32 %v797, %v200
    %v806 = vmul.f32 %v797, %v202
    %v807 = vmul.f32 %v797, %v203
    %v808 = vmul.f32 %v797, %v205
    %v809 = vmul.f32 %v797, %v206
    %822 = vrot.lane.b32.xlu0 %v798, 124
    %v823 = vpop.permute.xlu0 %822
    %824 = vrot.lane.b32.xlu0 %v799, 124
    %v825 = vpop.permute.xlu0 %824
    %826 = vrot.lane.b32.xlu0 %v800, 124
    %v827 = vpop.permute.xlu0 %826
    %828 = vrot.lane.b32.xlu0 %v801, 124
    %v829 = vpop.permute.xlu0 %828
    %830 = vrot.lane.b32.xlu0 %v802, 124
    %v831 = vpop.permute.xlu0 %830
    %832 = vrot.lane.b32.xlu0 %v803, 124
    %v833 = vpop.permute.xlu0 %832
    %834 = vrot.lane.b32.xlu0 %v804, 124
    %v835 = vpop.permute.xlu0 %834
    %836 = vrot.lane.b32.xlu0 %v805, 124
    %v837 = vpop.permute.xlu0 %836
    %838 = vrot.lane.b32.xlu0 %v806, 124
    %v839 = vpop.permute.xlu0 %838
    %840 = vrot.lane.b32.xlu0 %v807, 124
    %v841 = vpop.permute.xlu0 %840
    %842 = vrot.lane.b32.xlu0 %v808, 124
    %v843 = vpop.permute.xlu0 %842
    %844 = vrot.lane.b32.xlu0 %v809, 124
    %v845 = vpop.permute.xlu0 %844
    %v858 = vadd.f32 %v785, %v823
    %v859 = vadd.f32 %v786, %v825
    %v860 = vadd.f32 %v787, %v827
    %v861 = vadd.f32 %v788, %v829
    %v862 = vadd.f32 %v789, %v831
    %v863 = vadd.f32 %v790, %v833
    %v864 = vadd.f32 %v791, %v835
    %v865 = vadd.f32 %v792, %v837
    %v866 = vadd.f32 %v793, %v839
    %v867 = vadd.f32 %v794, %v841
    %v868 = vadd.f32 %v795, %v843
    %v869 = vadd.f32 %v796, %v845
    %s870 = sld [smem:[#allocation2 + $0x5]]
    %s871 = sld [smem:[#allocation2 + $0x36]]
    %v872 = vstv %s870
    %v873 = vmul.f32 %v872, %v208
    %v874 = vmul.f32 %v872, %v209
    %v875 = vmul.f32 %v872, %v211
    %v876 = vmul.f32 %v872, %v212
    %v877 = vmul.f32 %v872, %v214
    %v878 = vmul.f32 %v872, %v215
    %v879 = vmul.f32 %v872, %v217
    %v880 = vmul.f32 %v872, %v218
    %v881 = vmul.f32 %v872, %v220
    %v882 = vmul.f32 %v872, %v221
    %v883 = vmul.f32 %v872, %v223
    %v884 = vmul.f32 %v872, %v224
    %897 = vrot.lane.b32.xlu0 %v873, 123
    %v898 = vpop.permute.xlu0 %897
    %899 = vrot.lane.b32.xlu0 %v874, 123
    %v900 = vpop.permute.xlu0 %899
    %901 = vrot.lane.b32.xlu0 %v875, 123
    %v902 = vpop.permute.xlu0 %901
    %903 = vrot.lane.b32.xlu0 %v876, 123
    %v904 = vpop.permute.xlu0 %903
    %905 = vrot.lane.b32.xlu0 %v877, 123
    %v906 = vpop.permute.xlu0 %905
    %907 = vrot.lane.b32.xlu0 %v878, 123
    %v908 = vpop.permute.xlu0 %907
    %909 = vrot.lane.b32.xlu0 %v879, 123
    %v910 = vpop.permute.xlu0 %909
    %911 = vrot.lane.b32.xlu0 %v880, 123
    %v912 = vpop.permute.xlu0 %911
    %913 = vrot.lane.b32.xlu0 %v881, 123
    %v914 = vpop.permute.xlu0 %913
    %915 = vrot.lane.b32.xlu0 %v882, 123
    %v916 = vpop.permute.xlu0 %915
    %917 = vrot.lane.b32.xlu0 %v883, 123
    %v918 = vpop.permute.xlu0 %917
    %919 = vrot.lane.b32.xlu0 %v884, 123
    %v920 = vpop.permute.xlu0 %919
    %v933 = vadd.f32 %v858, %v898
    %v934 = vadd.f32 %v859, %v900
    %v935 = vadd.f32 %v860, %v902
    %v936 = vadd.f32 %v861, %v904
    %v937 = vadd.f32 %v862, %v906
    %v938 = vadd.f32 %v863, %v908
    %v939 = vadd.f32 %v864, %v910
    %v940 = vadd.f32 %v865, %v912
    %v941 = vadd.f32 %v866, %v914
    %v942 = vadd.f32 %v867, %v916
    %v943 = vadd.f32 %v868, %v918
    %v944 = vadd.f32 %v869, %v920
    %v945 = vstv %s871
    %v946 = vmul.f32 %v945, %v190
    %v947 = vmul.f32 %v945, %v191
    %v948 = vmul.f32 %v945, %v193
    %v949 = vmul.f32 %v945, %v194
    %v950 = vmul.f32 %v945, %v196
    %v951 = vmul.f32 %v945, %v197
    %v952 = vmul.f32 %v945, %v199
    %v953 = vmul.f32 %v945, %v200
    %v954 = vmul.f32 %v945, %v202
    %v955 = vmul.f32 %v945, %v203
    %v956 = vmul.f32 %v945, %v205
    %v957 = vmul.f32 %v945, %v206
    %970 = vrot.lane.b32.xlu0 %v946, 123
    %v971 = vpop.permute.xlu0 %970
    %972 = vrot.lane.b32.xlu0 %v947, 123
    %v973 = vpop.permute.xlu0 %972
    %974 = vrot.lane.b32.xlu0 %v948, 123
    %v975 = vpop.permute.xlu0 %974
    %976 = vrot.lane.b32.xlu0 %v949, 123
    %v977 = vpop.permute.xlu0 %976
    %978 = vrot.lane.b32.xlu0 %v950, 123
    %v979 = vpop.permute.xlu0 %978
    %980 = vrot.lane.b32.xlu0 %v951, 123
    %v981 = vpop.permute.xlu0 %980
    %982 = vrot.lane.b32.xlu0 %v952, 123
    %v983 = vpop.permute.xlu0 %982
    %984 = vrot.lane.b32.xlu0 %v953, 123
    %v985 = vpop.permute.xlu0 %984
    %986 = vrot.lane.b32.xlu0 %v954, 123
    %v987 = vpop.permute.xlu0 %986
    %988 = vrot.lane.b32.xlu0 %v955, 123
    %v989 = vpop.permute.xlu0 %988
    %990 = vrot.lane.b32.xlu0 %v956, 123
    %v991 = vpop.permute.xlu0 %990
    %992 = vrot.lane.b32.xlu0 %v957, 123
    %v993 = vpop.permute.xlu0 %992
    %v1006 = vadd.f32 %v933, %v971
    %v1007 = vadd.f32 %v934, %v973
    %v1008 = vadd.f32 %v935, %v975
    %v1009 = vadd.f32 %v936, %v977
    %v1010 = vadd.f32 %v937, %v979
    %v1011 = vadd.f32 %v938, %v981
    %v1012 = vadd.f32 %v939, %v983
    %v1013 = vadd.f32 %v940, %v985
    %v1014 = vadd.f32 %v941, %v987
    %v1015 = vadd.f32 %v942, %v989
    %v1016 = vadd.f32 %v943, %v991
    %v1017 = vadd.f32 %v944, %v993
    %s1018 = sld [smem:[#allocation2 + $0x6]]
    %s1019 = sld [smem:[#allocation2 + $0x37]]
    %v1020 = vstv %s1018
    %v1021 = vmul.f32 %v1020, %v208
    %v1022 = vmul.f32 %v1020, %v209
    %v1023 = vmul.f32 %v1020, %v211
    %v1024 = vmul.f32 %v1020, %v212
    %v1025 = vmul.f32 %v1020, %v214
    %v1026 = vmul.f32 %v1020, %v215
    %v1027 = vmul.f32 %v1020, %v217
    %v1028 = vmul.f32 %v1020, %v218
    %v1029 = vmul.f32 %v1020, %v220
    %v1030 = vmul.f32 %v1020, %v221
    %v1031 = vmul.f32 %v1020, %v223
    %v1032 = vmul.f32 %v1020, %v224
    %1045 = vrot.lane.b32.xlu0 %v1021, 122
    %v1046 = vpop.permute.xlu0 %1045
    %1047 = vrot.lane.b32.xlu0 %v1022, 122
    %v1048 = vpop.permute.xlu0 %1047
    %1049 = vrot.lane.b32.xlu0 %v1023, 122
    %v1050 = vpop.permute.xlu0 %1049
    %1051 = vrot.lane.b32.xlu0 %v1024, 122
    %v1052 = vpop.permute.xlu0 %1051
    %1053 = vrot.lane.b32.xlu0 %v1025, 122
    %v1054 = vpop.permute.xlu0 %1053
    %1055 = vrot.lane.b32.xlu0 %v1026, 122
    %v1056 = vpop.permute.xlu0 %1055
    %1057 = vrot.lane.b32.xlu0 %v1027, 122
    %v1058 = vpop.permute.xlu0 %1057
    %1059 = vrot.lane.b32.xlu0 %v1028, 122
    %v1060 = vpop.permute.xlu0 %1059
    %1061 = vrot.lane.b32.xlu0 %v1029, 122
    %v1062 = vpop.permute.xlu0 %1061
    %1063 = vrot.lane.b32.xlu0 %v1030, 122
    %v1064 = vpop.permute.xlu0 %1063
    %1065 = vrot.lane.b32.xlu0 %v1031, 122
    %v1066 = vpop.permute.xlu0 %1065
    %1067 = vrot.lane.b32.xlu0 %v1032, 122
    %v1068 = vpop.permute.xlu0 %1067
    %v1081 = vadd.f32 %v1006, %v1046
    %v1082 = vadd.f32 %v1007, %v1048
    %v1083 = vadd.f32 %v1008, %v1050
    %v1084 = vadd.f32 %v1009, %v1052
    %v1085 = vadd.f32 %v1010, %v1054
    %v1086 = vadd.f32 %v1011, %v1056
    %v1087 = vadd.f32 %v1012, %v1058
    %v1088 = vadd.f32 %v1013, %v1060
    %v1089 = vadd.f32 %v1014, %v1062
    %v1090 = vadd.f32 %v1015, %v1064
    %v1091 = vadd.f32 %v1016, %v1066
    %v1092 = vadd.f32 %v1017, %v1068
    %v1093 = vstv %s1019
    %v1094 = vmul.f32 %v1093, %v190
    %v1095 = vmul.f32 %v1093, %v191
    %v1096 = vmul.f32 %v1093, %v193
    %v1097 = vmul.f32 %v1093, %v194
    %v1098 = vmul.f32 %v1093, %v196
    %v1099 = vmul.f32 %v1093, %v197
    %v1100 = vmul.f32 %v1093, %v199
    %v1101 = vmul.f32 %v1093, %v200
    %v1102 = vmul.f32 %v1093, %v202
    %v1103 = vmul.f32 %v1093, %v203
    %v1104 = vmul.f32 %v1093, %v205
    %v1105 = vmul.f32 %v1093, %v206
    %1118 = vrot.lane.b32.xlu0 %v1094, 122
    %v1119 = vpop.permute.xlu0 %1118
    %1120 = vrot.lane.b32.xlu0 %v1095, 122
    %v1121 = vpop.permute.xlu0 %1120
    %1122 = vrot.lane.b32.xlu0 %v1096, 122
    %v1123 = vpop.permute.xlu0 %1122
    %1124 = vrot.lane.b32.xlu0 %v1097, 122
    %v1125 = vpop.permute.xlu0 %1124
    %1126 = vrot.lane.b32.xlu0 %v1098, 122
    %v1127 = vpop.permute.xlu0 %1126
    %1128 = vrot.lane.b32.xlu0 %v1099, 122
    %v1129 = vpop.permute.xlu0 %1128
    %1130 = vrot.lane.b32.xlu0 %v1100, 122
    %v1131 = vpop.permute.xlu0 %1130
    %1132 = vrot.lane.b32.xlu0 %v1101, 122
    %v1133 = vpop.permute.xlu0 %1132
    %1134 = vrot.lane.b32.xlu0 %v1102, 122
    %v1135 = vpop.permute.xlu0 %1134
    %1136 = vrot.lane.b32.xlu0 %v1103, 122
    %v1137 = vpop.permute.xlu0 %1136
    %1138 = vrot.lane.b32.xlu0 %v1104, 122
    %v1139 = vpop.permute.xlu0 %1138
    %1140 = vrot.lane.b32.xlu0 %v1105, 122
    %v1141 = vpop.permute.xlu0 %1140
    %v1154 = vadd.f32 %v1081, %v1119
    %v1155 = vadd.f32 %v1082, %v1121
    %v1156 = vadd.f32 %v1083, %v1123
    %v1157 = vadd.f32 %v1084, %v1125
    %v1158 = vadd.f32 %v1085, %v1127
    %v1159 = vadd.f32 %v1086, %v1129
    %v1160 = vadd.f32 %v1087, %v1131
    %v1161 = vadd.f32 %v1088, %v1133
    %v1162 = vadd.f32 %v1089, %v1135
    %v1163 = vadd.f32 %v1090, %v1137
    %v1164 = vadd.f32 %v1091, %v1139
    %v1165 = vadd.f32 %v1092, %v1141
    %s1166 = sld [smem:[#allocation2 + $0x7]]
    %s1167 = sld [smem:[#allocation2 + $0x38]]
    %v1168 = vstv %s1166
    %v1169 = vmul.f32 %v1168, %v208
    %v1170 = vmul.f32 %v1168, %v209
    %v1171 = vmul.f32 %v1168, %v210
    %v1172 = vmul.f32 %v1168, %v211
    %v1173 = vmul.f32 %v1168, %v212
    %v1174 = vmul.f32 %v1168, %v213
    %v1175 = vmul.f32 %v1168, %v214
    %v1176 = vmul.f32 %v1168, %v215
    %v1177 = vmul.f32 %v1168, %v216
    %v1178 = vmul.f32 %v1168, %v217
    %v1179 = vmul.f32 %v1168, %v218
    %v1180 = vmul.f32 %v1168, %v219
    %v1181 = vmul.f32 %v1168, %v220
    %v1182 = vmul.f32 %v1168, %v221
    %v1183 = vmul.f32 %v1168, %v222
    %v1184 = vmul.f32 %v1168, %v223
    %v1185 = vmul.f32 %v1168, %v224
    %v1186 = vmul.f32 %v1168, %v225
    %vm1205 = vcmask 1046528
    %v1206 = vrot.slane %v1169, 1
    %v1207 = vrot.slane %v1170, 1
    %v1208 = vsel %vm1205, %v1206, %v1207
    %v1209 = vrot.slane %v1171, 1
    %v1210 = vsel %vm1205, %v1207, %v1209
    %v1211 = vrot.slane %v1172, 1
    %v1212 = vrot.slane %v1173, 1
    %v1213 = vsel %vm1205, %v1211, %v1212
    %v1214 = vrot.slane %v1174, 1
    %v1215 = vsel %vm1205, %v1212, %v1214
    %v1216 = vrot.slane %v1175, 1
    %v1217 = vrot.slane %v1176, 1
    %v1218 = vsel %vm1205, %v1216, %v1217
    %v1219 = vrot.slane %v1177, 1
    %v1220 = vsel %vm1205, %v1217, %v1219
    %v1221 = vrot.slane %v1178, 1
    %v1222 = vrot.slane %v1179, 1
    %v1223 = vsel %vm1205, %v1221, %v1222
    %v1224 = vrot.slane %v1180, 1
    %v1225 = vsel %vm1205, %v1222, %v1224
    %v1226 = vrot.slane %v1181, 1
    %v1227 = vrot.slane %v1182, 1
    %v1228 = vsel %vm1205, %v1226, %v1227
    %v1229 = vrot.slane %v1183, 1
    %v1230 = vsel %vm1205, %v1227, %v1229
    %v1231 = vrot.slane %v1184, 1
    %v1232 = vrot.slane %v1185, 1
    %v1233 = vsel %vm1205, %v1231, %v1232
    %v1234 = vrot.slane %v1186, 1
    %v1235 = vsel %vm1205, %v1232, %v1234
    %v1248 = vadd.f32 %v1154, %v1208
    %v1249 = vadd.f32 %v1155, %v1210
    %v1250 = vadd.f32 %v1156, %v1213
    %v1251 = vadd.f32 %v1157, %v1215
    %v1252 = vadd.f32 %v1158, %v1218
    %v1253 = vadd.f32 %v1159, %v1220
    %v1254 = vadd.f32 %v1160, %v1223
    %v1255 = vadd.f32 %v1161, %v1225
    %v1256 = vadd.f32 %v1162, %v1228
    %v1257 = vadd.f32 %v1163, %v1230
    %v1258 = vadd.f32 %v1164, %v1233
    %v1259 = vadd.f32 %v1165, %v1235
    %v1260 = vstv %s1167
    %v1261 = vmul.f32 %v1260, %v190
    %v1262 = vmul.f32 %v1260, %v191
    %v1263 = vmul.f32 %v1260, %v192
    %v1264 = vmul.f32 %v1260, %v193
    %v1265 = vmul.f32 %v1260, %v194
    %v1266 = vmul.f32 %v1260, %v195
    %v1267 = vmul.f32 %v1260, %v196
    %v1268 = vmul.f32 %v1260, %v197
    %v1269 = vmul.f32 %v1260, %v198
    %v1270 = vmul.f32 %v1260, %v199
    %v1271 = vmul.f32 %v1260, %v200
    %v1272 = vmul.f32 %v1260, %v201
    %v1273 = vmul.f32 %v1260, %v202
    %v1274 = vmul.f32 %v1260, %v203
    %v1275 = vmul.f32 %v1260, %v204
    %v1276 = vmul.f32 %v1260, %v205
    %v1277 = vmul.f32 %v1260, %v206
    %v1278 = vmul.f32 %v1260, %v207
    %v1297 = vrot.slane %v1261, 1
    %v1298 = vrot.slane %v1262, 1
    %v1299 = vsel %vm1205, %v1297, %v1298
    %v1300 = vrot.slane %v1263, 1
    %v1301 = vsel %vm1205, %v1298, %v1300
    %v1302 = vrot.slane %v1264, 1
    %v1303 = vrot.slane %v1265, 1
    %v1304 = vsel %vm1205, %v1302, %v1303
    %v1305 = vrot.slane %v1266, 1
    %v1306 = vsel %vm1205, %v1303, %v1305
    %v1307 = vrot.slane %v1267, 1
    %v1308 = vrot.slane %v1268, 1
    %v1309 = vsel %vm1205, %v1307, %v1308
    %v1310 = vrot.slane %v1269, 1
    %v1311 = vsel %vm1205, %v1308, %v1310
    %v1312 = vrot.slane %v1270, 1
    %v1313 = vrot.slane %v1271, 1
    %v1314 = vsel %vm1205, %v1312, %v1313
    %v1315 = vrot.slane %v1272, 1
    %v1316 = vsel %vm1205, %v1313, %v1315
    %v1317 = vrot.slane %v1273, 1
    %v1318 = vrot.slane %v1274, 1
    %v1319 = vsel %vm1205, %v1317, %v1318
    %v1320 = vrot.slane %v1275, 1
    %v1321 = vsel %vm1205, %v1318, %v1320
    %v1322 = vrot.slane %v1276, 1
    %v1323 = vrot.slane %v1277, 1
    %v1324 = vsel %vm1205, %v1322, %v1323
    %v1325 = vrot.slane %v1278, 1
    %v1326 = vsel %vm1205, %v1323, %v1325
    %v1339 = vadd.f32 %v1248, %v1299
    %v1340 = vadd.f32 %v1249, %v1301
    %v1341 = vadd.f32 %v1250, %v1304
    %v1342 = vadd.f32 %v1251, %v1306
    %v1343 = vadd.f32 %v1252, %v1309
    %v1344 = vadd.f32 %v1253, %v1311
    %v1345 = vadd.f32 %v1254, %v1314
    %v1346 = vadd.f32 %v1255, %v1316
    %v1347 = vadd.f32 %v1256, %v1319
    %v1348 = vadd.f32 %v1257, %v1321
    %v1349 = vadd.f32 %v1258, %v1324
    %v1350 = vadd.f32 %v1259, %v1326
    %s1351 = sld [smem:[#allocation2 + $0x8]]
    %s1352 = sld [smem:[#allocation2 + $0x39]]
    %v1353 = vstv %s1351
    %v1354 = vmul.f32 %v1353, %v208
    %v1355 = vmul.f32 %v1353, %v209
    %v1356 = vmul.f32 %v1353, %v210
    %v1357 = vmul.f32 %v1353, %v211
    %v1358 = vmul.f32 %v1353, %v212
    %v1359 = vmul.f32 %v1353, %v213
    %v1360 = vmul.f32 %v1353, %v214
    %v1361 = vmul.f32 %v1353, %v215
    %v1362 = vmul.f32 %v1353, %v216
    %v1363 = vmul.f32 %v1353, %v217
    %v1364 = vmul.f32 %v1353, %v218
    %v1365 = vmul.f32 %v1353, %v219
    %v1366 = vmul.f32 %v1353, %v220
    %v1367 = vmul.f32 %v1353, %v221
    %v1368 = vmul.f32 %v1353, %v222
    %v1369 = vmul.f32 %v1353, %v223
    %v1370 = vmul.f32 %v1353, %v224
    %v1371 = vmul.f32 %v1353, %v225
    %v1390 = vrot.slane %v1354, 1
    %v1391 = vrot.slane %v1355, 1
    %v1392 = vsel %vm1205, %v1390, %v1391
    %v1393 = vrot.slane %v1356, 1
    %v1394 = vsel %vm1205, %v1391, %v1393
    %v1395 = vrot.slane %v1357, 1
    %v1396 = vrot.slane %v1358, 1
    %v1397 = vsel %vm1205, %v1395, %v1396
    %v1398 = vrot.slane %v1359, 1
    %v1399 = vsel %vm1205, %v1396, %v1398
    %v1400 = vrot.slane %v1360, 1
    %v1401 = vrot.slane %v1361, 1
    %v1402 = vsel %vm1205, %v1400, %v1401
    %v1403 = vrot.slane %v1362, 1
    %v1404 = vsel %vm1205, %v1401, %v1403
    %v1405 = vrot.slane %v1363, 1
    %v1406 = vrot.slane %v1364, 1
    %v1407 = vsel %vm1205, %v1405, %v1406
    %v1408 = vrot.slane %v1365, 1
    %v1409 = vsel %vm1205, %v1406, %v1408
    %v1410 = vrot.slane %v1366, 1
    %v1411 = vrot.slane %v1367, 1
    %v1412 = vsel %vm1205, %v1410, %v1411
    %v1413 = vrot.slane %v1368, 1
    %v1414 = vsel %vm1205, %v1411, %v1413
    %v1415 = vrot.slane %v1369, 1
    %v1416 = vrot.slane %v1370, 1
    %v1417 = vsel %vm1205, %v1415, %v1416
    %v1418 = vrot.slane %v1371, 1
    %v1419 = vsel %vm1205, %v1416, %v1418
    %1420 = vrot.lane.b32.xlu0 %v1392, 127
    %v1421 = vpop.permute.xlu0 %1420
    %1422 = vrot.lane.b32.xlu0 %v1394, 127
    %v1423 = vpop.permute.xlu0 %1422
    %1424 = vrot.lane.b32.xlu0 %v1397, 127
    %v1425 = vpop.permute.xlu0 %1424
    %1426 = vrot.lane.b32.xlu0 %v1399, 127
    %v1427 = vpop.permute.xlu0 %1426
    %1428 = vrot.lane.b32.xlu0 %v1402, 127
    %v1429 = vpop.permute.xlu0 %1428
    %1430 = vrot.lane.b32.xlu0 %v1404, 127
    %v1431 = vpop.permute.xlu0 %1430
    %1432 = vrot.lane.b32.xlu0 %v1407, 127
    %v1433 = vpop.permute.xlu0 %1432
    %1434 = vrot.lane.b32.xlu0 %v1409, 127
    %v1435 = vpop.permute.xlu0 %1434
    %1436 = vrot.lane.b32.xlu0 %v1412, 127
    %v1437 = vpop.permute.xlu0 %1436
    %1438 = vrot.lane.b32.xlu0 %v1414, 127
    %v1439 = vpop.permute.xlu0 %1438
    %1440 = vrot.lane.b32.xlu0 %v1417, 127
    %v1441 = vpop.permute.xlu0 %1440
    %1442 = vrot.lane.b32.xlu0 %v1419, 127
    %v1443 = vpop.permute.xlu0 %1442
    %v1456 = vadd.f32 %v1339, %v1421
    %v1457 = vadd.f32 %v1340, %v1423
    %v1458 = vadd.f32 %v1341, %v1425
    %v1459 = vadd.f32 %v1342, %v1427
    %v1460 = vadd.f32 %v1343, %v1429
    %v1461 = vadd.f32 %v1344, %v1431
    %v1462 = vadd.f32 %v1345, %v1433
    %v1463 = vadd.f32 %v1346, %v1435
    %v1464 = vadd.f32 %v1347, %v1437
    %v1465 = vadd.f32 %v1348, %v1439
    %v1466 = vadd.f32 %v1349, %v1441
    %v1467 = vadd.f32 %v1350, %v1443
    %v1468 = vstv %s1352
    %v1469 = vmul.f32 %v1468, %v190
    %v1470 = vmul.f32 %v1468, %v191
    %v1471 = vmul.f32 %v1468, %v192
    %v1472 = vmul.f32 %v1468, %v193
    %v1473 = vmul.f32 %v1468, %v194
    %v1474 = vmul.f32 %v1468, %v195
    %v1475 = vmul.f32 %v1468, %v196
    %v1476 = vmul.f32 %v1468, %v197
    %v1477 = vmul.f32 %v1468, %v198
    %v1478 = vmul.f32 %v1468, %v199
    %v1479 = vmul.f32 %v1468, %v200
    %v1480 = vmul.f32 %v1468, %v201
    %v1481 = vmul.f32 %v1468, %v202
    %v1482 = vmul.f32 %v1468, %v203
    %v1483 = vmul.f32 %v1468, %v204
    %v1484 = vmul.f32 %v1468, %v205
    %v1485 = vmul.f32 %v1468, %v206
    %v1486 = vmul.f32 %v1468, %v207
    %v1505 = vrot.slane %v1469, 1
    %v1506 = vrot.slane %v1470, 1
    %v1507 = vsel %vm1205, %v1505, %v1506
    %v1508 = vrot.slane %v1471, 1
    %v1509 = vsel %vm1205, %v1506, %v1508
    %v1510 = vrot.slane %v1472, 1
    %v1511 = vrot.slane %v1473, 1
    %v1512 = vsel %vm1205, %v1510, %v1511
    %v1513 = vrot.slane %v1474, 1
    %v1514 = vsel %vm1205, %v1511, %v1513
    %v1515 = vrot.slane %v1475, 1
    %v1516 = vrot.slane %v1476, 1
    %v1517 = vsel %vm1205, %v1515, %v1516
    %v1518 = vrot.slane %v1477, 1
    %v1519 = vsel %vm1205, %v1516, %v1518
    %v1520 = vrot.slane %v1478, 1
    %v1521 = vrot.slane %v1479, 1
    %v1522 = vsel %vm1205, %v1520, %v1521
    %v1523 = vrot.slane %v1480, 1
    %v1524 = vsel %vm1205, %v1521, %v1523
    %v1525 = vrot.slane %v1481, 1
    %v1526 = vrot.slane %v1482, 1
    %v1527 = vsel %vm1205, %v1525, %v1526
    %v1528 = vrot.slane %v1483, 1
    %v1529 = vsel %vm1205, %v1526, %v1528
    %v1530 = vrot.slane %v1484, 1
    %v1531 = vrot.slane %v1485, 1
    %v1532 = vsel %vm1205, %v1530, %v1531
    %v1533 = vrot.slane %v1486, 1
    %v1534 = vsel %vm1205, %v1531, %v1533
    %1535 = vrot.lane.b32.xlu0 %v1507, 127
    %v1536 = vpop.permute.xlu0 %1535
    %1537 = vrot.lane.b32.xlu0 %v1509, 127
    %v1538 = vpop.permute.xlu0 %1537
    %1539 = vrot.lane.b32.xlu0 %v1512, 127
    %v1540 = vpop.permute.xlu0 %1539
    %1541 = vrot.lane.b32.xlu0 %v1514, 127
    %v1542 = vpop.permute.xlu0 %1541
    %1543 = vrot.lane.b32.xlu0 %v1517, 127
    %v1544 = vpop.permute.xlu0 %1543
    %1545 = vrot.lane.b32.xlu0 %v1519, 127
    %v1546 = vpop.permute.xlu0 %1545
    %1547 = vrot.lane.b32.xlu0 %v1522, 127
    %v1548 = vpop.permute.xlu0 %1547
    %1549 = vrot.lane.b32.xlu0 %v1524, 127
    %v1550 = vpop.permute.xlu0 %1549
    %1551 = vrot.lane.b32.xlu0 %v1527, 127
    %v1552 = vpop.permute.xlu0 %1551
    %1553 = vrot.lane.b32.xlu0 %v1529, 127
    %v1554 = vpop.permute.xlu0 %1553
    %1555 = vrot.lane.b32.xlu0 %v1532, 127
    %v1556 = vpop.permute.xlu0 %1555
    %1557 = vrot.lane.b32.xlu0 %v1534, 127
    %v1558 = vpop.permute.xlu0 %1557
    %v1571 = vadd.f32 %v1456, %v1536
    %v1572 = vadd.f32 %v1457, %v1538
    %v1573 = vadd.f32 %v1458, %v1540
    %v1574 = vadd.f32 %v1459, %v1542
    %v1575 = vadd.f32 %v1460, %v1544
    %v1576 = vadd.f32 %v1461, %v1546
    %v1577 = vadd.f32 %v1462, %v1548
    %v1578 = vadd.f32 %v1463, %v1550
    %v1579 = vadd.f32 %v1464, %v1552
    %v1580 = vadd.f32 %v1465, %v1554
    %v1581 = vadd.f32 %v1466, %v1556
    %v1582 = vadd.f32 %v1467, %v1558
    %s1583 = sld [smem:[#allocation2 + $0x9]]
    %s1584 = sld [smem:[#allocation2 + $0x3a]]
    %v1585 = vstv %s1583
    %v1586 = vmul.f32 %v1585, %v208
    %v1587 = vmul.f32 %v1585, %v209
    %v1588 = vmul.f32 %v1585, %v210
    %v1589 = vmul.f32 %v1585, %v211
    %v1590 = vmul.f32 %v1585, %v212
    %v1591 = vmul.f32 %v1585, %v213
    %v1592 = vmul.f32 %v1585, %v214
    %v1593 = vmul.f32 %v1585, %v215
    %v1594 = vmul.f32 %v1585, %v216
    %v1595 = vmul.f32 %v1585, %v217
    %v1596 = vmul.f32 %v1585, %v218
    %v1597 = vmul.f32 %v1585, %v219
    %v1598 = vmul.f32 %v1585, %v220
    %v1599 = vmul.f32 %v1585, %v221
    %v1600 = vmul.f32 %v1585, %v222
    %v1601 = vmul.f32 %v1585, %v223
    %v1602 = vmul.f32 %v1585, %v224
    %v1603 = vmul.f32 %v1585, %v225
    %v1622 = vrot.slane %v1586, 1
    %v1623 = vrot.slane %v1587, 1
    %v1624 = vsel %vm1205, %v1622, %v1623
    %v1625 = vrot.slane %v1588, 1
    %v1626 = vsel %vm1205, %v1623, %v1625
    %v1627 = vrot.slane %v1589, 1
    %v1628 = vrot.slane %v1590, 1
    %v1629 = vsel %vm1205, %v1627, %v1628
    %v1630 = vrot.slane %v1591, 1
    %v1631 = vsel %vm1205, %v1628, %v1630
    %v1632 = vrot.slane %v1592, 1
    %v1633 = vrot.slane %v1593, 1
    %v1634 = vsel %vm1205, %v1632, %v1633
    %v1635 = vrot.slane %v1594, 1
    %v1636 = vsel %vm1205, %v1633, %v1635
    %v1637 = vrot.slane %v1595, 1
    %v1638 = vrot.slane %v1596, 1
    %v1639 = vsel %vm1205, %v1637, %v1638
    %v1640 = vrot.slane %v1597, 1
    %v1641 = vsel %vm1205, %v1638, %v1640
    %v1642 = vrot.slane %v1598, 1
    %v1643 = vrot.slane %v1599, 1
    %v1644 = vsel %vm1205, %v1642, %v1643
    %v1645 = vrot.slane %v1600, 1
    %v1646 = vsel %vm1205, %v1643, %v1645
    %v1647 = vrot.slane %v1601, 1
    %v1648 = vrot.slane %v1602, 1
    %v1649 = vsel %vm1205, %v1647, %v1648
    %v1650 = vrot.slane %v1603, 1
    %v1651 = vsel %vm1205, %v1648, %v1650
    %1652 = vrot.lane.b32.xlu0 %v1624, 126
    %v1653 = vpop.permute.xlu0 %1652
    %1654 = vrot.lane.b32.xlu0 %v1626, 126
    %v1655 = vpop.permute.xlu0 %1654
    %1656 = vrot.lane.b32.xlu0 %v1629, 126
    %v1657 = vpop.permute.xlu0 %1656
    %1658 = vrot.lane.b32.xlu0 %v1631, 126
    %v1659 = vpop.permute.xlu0 %1658
    %1660 = vrot.lane.b32.xlu0 %v1634, 126
    %v1661 = vpop.permute.xlu0 %1660
    %1662 = vrot.lane.b32.xlu0 %v1636, 126
    %v1663 = vpop.permute.xlu0 %1662
    %1664 = vrot.lane.b32.xlu0 %v1639, 126
    %v1665 = vpop.permute.xlu0 %1664
    %1666 = vrot.lane.b32.xlu0 %v1641, 126
    %v1667 = vpop.permute.xlu0 %1666
    %1668 = vrot.lane.b32.xlu0 %v1644, 126
    %v1669 = vpop.permute.xlu0 %1668
    %1670 = vrot.lane.b32.xlu0 %v1646, 126
    %v1671 = vpop.permute.xlu0 %1670
    %1672 = vrot.lane.b32.xlu0 %v1649, 126
    %v1673 = vpop.permute.xlu0 %1672
    %1674 = vrot.lane.b32.xlu0 %v1651, 126
    %v1675 = vpop.permute.xlu0 %1674
    %v1688 = vadd.f32 %v1571, %v1653
    %v1689 = vadd.f32 %v1572, %v1655
    %v1690 = vadd.f32 %v1573, %v1657
    %v1691 = vadd.f32 %v1574, %v1659
    %v1692 = vadd.f32 %v1575, %v1661
    %v1693 = vadd.f32 %v1576, %v1663
    %v1694 = vadd.f32 %v1577, %v1665
    %v1695 = vadd.f32 %v1578, %v1667
    %v1696 = vadd.f32 %v1579, %v1669
    %v1697 = vadd.f32 %v1580, %v1671
    %v1698 = vadd.f32 %v1581, %v1673
    %v1699 = vadd.f32 %v1582, %v1675
    %v1700 = vstv %s1584
    %v1701 = vmul.f32 %v1700, %v190
    %v1702 = vmul.f32 %v1700, %v191
    %v1703 = vmul.f32 %v1700, %v192
    %v1704 = vmul.f32 %v1700, %v193
    %v1705 = vmul.f32 %v1700, %v194
    %v1706 = vmul.f32 %v1700, %v195
    %v1707 = vmul.f32 %v1700, %v196
    %v1708 = vmul.f32 %v1700, %v197
    %v1709 = vmul.f32 %v1700, %v198
    %v1710 = vmul.f32 %v1700, %v199
    %v1711 = vmul.f32 %v1700, %v200
    %v1712 = vmul.f32 %v1700, %v201
    %v1713 = vmul.f32 %v1700, %v202
    %v1714 = vmul.f32 %v1700, %v203
    %v1715 = vmul.f32 %v1700, %v204
    %v1716 = vmul.f32 %v1700, %v205
    %v1717 = vmul.f32 %v1700, %v206
    %v1718 = vmul.f32 %v1700, %v207
    %v1737 = vrot.slane %v1701, 1
    %v1738 = vrot.slane %v1702, 1
    %v1739 = vsel %vm1205, %v1737, %v1738
    %v1740 = vrot.slane %v1703, 1
    %v1741 = vsel %vm1205, %v1738, %v1740
    %v1742 = vrot.slane %v1704, 1
    %v1743 = vrot.slane %v1705, 1
    %v1744 = vsel %vm1205, %v1742, %v1743
    %v1745 = vrot.slane %v1706, 1
    %v1746 = vsel %vm1205, %v1743, %v1745
    %v1747 = vrot.slane %v1707, 1
    %v1748 = vrot.slane %v1708, 1
    %v1749 = vsel %vm1205, %v1747, %v1748
    %v1750 = vrot.slane %v1709, 1
    %v1751 = vsel %vm1205, %v1748, %v1750
    %v1752 = vrot.slane %v1710, 1
    %v1753 = vrot.slane %v1711, 1
    %v1754 = vsel %vm1205, %v1752, %v1753
    %v1755 = vrot.slane %v1712, 1
    %v1756 = vsel %vm1205, %v1753, %v1755
    %v1757 = vrot.slane %v1713, 1
    %v1758 = vrot.slane %v1714, 1
    %v1759 = vsel %vm1205, %v1757, %v1758
    %v1760 = vrot.slane %v1715, 1
    %v1761 = vsel %vm1205, %v1758, %v1760
    %v1762 = vrot.slane %v1716, 1
    %v1763 = vrot.slane %v1717, 1
    %v1764 = vsel %vm1205, %v1762, %v1763
    %v1765 = vrot.slane %v1718, 1
    %v1766 = vsel %vm1205, %v1763, %v1765
    %1767 = vrot.lane.b32.xlu0 %v1739, 126
    %v1768 = vpop.permute.xlu0 %1767
    %1769 = vrot.lane.b32.xlu0 %v1741, 126
    %v1770 = vpop.permute.xlu0 %1769
    %1771 = vrot.lane.b32.xlu0 %v1744, 126
    %v1772 = vpop.permute.xlu0 %1771
    %1773 = vrot.lane.b32.xlu0 %v1746, 126
    %v1774 = vpop.permute.xlu0 %1773
    %1775 = vrot.lane.b32.xlu0 %v1749, 126
    %v1776 = vpop.permute.xlu0 %1775
    %1777 = vrot.lane.b32.xlu0 %v1751, 126
    %v1778 = vpop.permute.xlu0 %1777
    %1779 = vrot.lane.b32.xlu0 %v1754, 126
    %v1780 = vpop.permute.xlu0 %1779
    %1781 = vrot.lane.b32.xlu0 %v1756, 126
    %v1782 = vpop.permute.xlu0 %1781
    %1783 = vrot.lane.b32.xlu0 %v1759, 126
    %v1784 = vpop.permute.xlu0 %1783
    %1785 = vrot.lane.b32.xlu0 %v1761, 126
    %v1786 = vpop.permute.xlu0 %1785
    %1787 = vrot.lane.b32.xlu0 %v1764, 126
    %v1788 = vpop.permute.xlu0 %1787
    %1789 = vrot.lane.b32.xlu0 %v1766, 126
    %v1790 = vpop.permute.xlu0 %1789
    %v1803 = vadd.f32 %v1688, %v1768
    %v1804 = vadd.f32 %v1689, %v1770
    %v1805 = vadd.f32 %v1690, %v1772
    %v1806 = vadd.f32 %v1691, %v1774
    %v1807 = vadd.f32 %v1692, %v1776
    %v1808 = vadd.f32 %v1693, %v1778
    %v1809 = vadd.f32 %v1694, %v1780
    %v1810 = vadd.f32 %v1695, %v1782
    %v1811 = vadd.f32 %v1696, %v1784
    %v1812 = vadd.f32 %v1697, %v1786
    %v1813 = vadd.f32 %v1698, %v1788
    %v1814 = vadd.f32 %v1699, %v1790
    %s1815 = sld [smem:[#allocation2 + $0xa]]
    %s1816 = sld [smem:[#allocation2 + $0x3b]]
    %v1817 = vstv %s1815
    %v1818 = vmul.f32 %v1817, %v208
    %v1819 = vmul.f32 %v1817, %v209
    %v1820 = vmul.f32 %v1817, %v210
    %v1821 = vmul.f32 %v1817, %v211
    %v1822 = vmul.f32 %v1817, %v212
    %v1823 = vmul.f32 %v1817, %v213
    %v1824 = vmul.f32 %v1817, %v214
    %v1825 = vmul.f32 %v1817, %v215
    %v1826 = vmul.f32 %v1817, %v216
    %v1827 = vmul.f32 %v1817, %v217
    %v1828 = vmul.f32 %v1817, %v218
    %v1829 = vmul.f32 %v1817, %v219
    %v1830 = vmul.f32 %v1817, %v220
    %v1831 = vmul.f32 %v1817, %v221
    %v1832 = vmul.f32 %v1817, %v222
    %v1833 = vmul.f32 %v1817, %v223
    %v1834 = vmul.f32 %v1817, %v224
    %v1835 = vmul.f32 %v1817, %v225
    %v1854 = vrot.slane %v1818, 1
    %v1855 = vrot.slane %v1819, 1
    %v1856 = vsel %vm1205, %v1854, %v1855
    %v1857 = vrot.slane %v1820, 1
    %v1858 = vsel %vm1205, %v1855, %v1857
    %v1859 = vrot.slane %v1821, 1
    %v1860 = vrot.slane %v1822, 1
    %v1861 = vsel %vm1205, %v1859, %v1860
    %v1862 = vrot.slane %v1823, 1
    %v1863 = vsel %vm1205, %v1860, %v1862
    %v1864 = vrot.slane %v1824, 1
    %v1865 = vrot.slane %v1825, 1
    %v1866 = vsel %vm1205, %v1864, %v1865
    %v1867 = vrot.slane %v1826, 1
    %v1868 = vsel %vm1205, %v1865, %v1867
    %v1869 = vrot.slane %v1827, 1
    %v1870 = vrot.slane %v1828, 1
    %v1871 = vsel %vm1205, %v1869, %v1870
    %v1872 = vrot.slane %v1829, 1
    %v1873 = vsel %vm1205, %v1870, %v1872
    %v1874 = vrot.slane %v1830, 1
    %v1875 = vrot.slane %v1831, 1
    %v1876 = vsel %vm1205, %v1874, %v1875
    %v1877 = vrot.slane %v1832, 1
    %v1878 = vsel %vm1205, %v1875, %v1877
    %v1879 = vrot.slane %v1833, 1
    %v1880 = vrot.slane %v1834, 1
    %v1881 = vsel %vm1205, %v1879, %v1880
    %v1882 = vrot.slane %v1835, 1
    %v1883 = vsel %vm1205, %v1880, %v1882
    %1884 = vrot.lane.b32.xlu0 %v1856, 125
    %v1885 = vpop.permute.xlu0 %1884
    %1886 = vrot.lane.b32.xlu0 %v1858, 125
    %v1887 = vpop.permute.xlu0 %1886
    %1888 = vrot.lane.b32.xlu0 %v1861, 125
    %v1889 = vpop.permute.xlu0 %1888
    %1890 = vrot.lane.b32.xlu0 %v1863, 125
    %v1891 = vpop.permute.xlu0 %1890
    %1892 = vrot.lane.b32.xlu0 %v1866, 125
    %v1893 = vpop.permute.xlu0 %1892
    %1894 = vrot.lane.b32.xlu0 %v1868, 125
    %v1895 = vpop.permute.xlu0 %1894
    %1896 = vrot.lane.b32.xlu0 %v1871, 125
    %v1897 = vpop.permute.xlu0 %1896
    %1898 = vrot.lane.b32.xlu0 %v1873, 125
    %v1899 = vpop.permute.xlu0 %1898
    %1900 = vrot.lane.b32.xlu0 %v1876, 125
    %v1901 = vpop.permute.xlu0 %1900
    %1902 = vrot.lane.b32.xlu0 %v1878, 125
    %v1903 = vpop.permute.xlu0 %1902
    %1904 = vrot.lane.b32.xlu0 %v1881, 125
    %v1905 = vpop.permute.xlu0 %1904
    %1906 = vrot.lane.b32.xlu0 %v1883, 125
    %v1907 = vpop.permute.xlu0 %1906
    %v1920 = vadd.f32 %v1803, %v1885
    %v1921 = vadd.f32 %v1804, %v1887
    %v1922 = vadd.f32 %v1805, %v1889
    %v1923 = vadd.f32 %v1806, %v1891
    %v1924 = vadd.f32 %v1807, %v1893
    %v1925 = vadd.f32 %v1808, %v1895
    %v1926 = vadd.f32 %v1809, %v1897
    %v1927 = vadd.f32 %v1810, %v1899
    %v1928 = vadd.f32 %v1811, %v1901
    %v1929 = vadd.f32 %v1812, %v1903
    %v1930 = vadd.f32 %v1813, %v1905
    %v1931 = vadd.f32 %v1814, %v1907
    %v1932 = vstv %s1816
    %v1933 = vmul.f32 %v1932, %v190
    %v1934 = vmul.f32 %v1932, %v191
    %v1935 = vmul.f32 %v1932, %v192
    %v1936 = vmul.f32 %v1932, %v193
    %v1937 = vmul.f32 %v1932, %v194
    %v1938 = vmul.f32 %v1932, %v195
    %v1939 = vmul.f32 %v1932, %v196
    %v1940 = vmul.f32 %v1932, %v197
    %v1941 = vmul.f32 %v1932, %v198
    %v1942 = vmul.f32 %v1932, %v199
    %v1943 = vmul.f32 %v1932, %v200
    %v1944 = vmul.f32 %v1932, %v201
    %v1945 = vmul.f32 %v1932, %v202
    %v1946 = vmul.f32 %v1932, %v203
    %v1947 = vmul.f32 %v1932, %v204
    %v1948 = vmul.f32 %v1932, %v205
    %v1949 = vmul.f32 %v1932, %v206
    %v1950 = vmul.f32 %v1932, %v207
    %v1969 = vrot.slane %v1933, 1
    %v1970 = vrot.slane %v1934, 1
    %v1971 = vsel %vm1205, %v1969, %v1970
    %v1972 = vrot.slane %v1935, 1
    %v1973 = vsel %vm1205, %v1970, %v1972
    %v1974 = vrot.slane %v1936, 1
    %v1975 = vrot.slane %v1937, 1
    %v1976 = vsel %vm1205, %v1974, %v1975
    %v1977 = vrot.slane %v1938, 1
    %v1978 = vsel %vm1205, %v1975, %v1977
    %v1979 = vrot.slane %v1939, 1
    %v1980 = vrot.slane %v1940, 1
    %v1981 = vsel %vm1205, %v1979, %v1980
    %v1982 = vrot.slane %v1941, 1
    %v1983 = vsel %vm1205, %v1980, %v1982
    %v1984 = vrot.slane %v1942, 1
    %v1985 = vrot.slane %v1943, 1
    %v1986 = vsel %vm1205, %v1984, %v1985
    %v1987 = vrot.slane %v1944, 1
    %v1988 = vsel %vm1205, %v1985, %v1987
    %v1989 = vrot.slane %v1945, 1
    %v1990 = vrot.slane %v1946, 1
    %v1991 = vsel %vm1205, %v1989, %v1990
    %v1992 = vrot.slane %v1947, 1
    %v1993 = vsel %vm1205, %v1990, %v1992
    %v1994 = vrot.slane %v1948, 1
    %v1995 = vrot.slane %v1949, 1
    %v1996 = vsel %vm1205, %v1994, %v1995
    %v1997 = vrot.slane %v1950, 1
    %v1998 = vsel %vm1205, %v1995, %v1997
    %1999 = vrot.lane.b32.xlu0 %v1971, 125
    %v2000 = vpop.permute.xlu0 %1999
    %2001 = vrot.lane.b32.xlu0 %v1973, 125
    %v2002 = vpop.permute.xlu0 %2001
    %2003 = vrot.lane.b32.xlu0 %v1976, 125
    %v2004 = vpop.permute.xlu0 %2003
    %2005 = vrot.lane.b32.xlu0 %v1978, 125
    %v2006 = vpop.permute.xlu0 %2005
    %2007 = vrot.lane.b32.xlu0 %v1981, 125
    %v2008 = vpop.permute.xlu0 %2007
    %2009 = vrot.lane.b32.xlu0 %v1983, 125
    %v2010 = vpop.permute.xlu0 %2009
    %2011 = vrot.lane.b32.xlu0 %v1986, 125
    %v2012 = vpop.permute.xlu0 %2011
    %2013 = vrot.lane.b32.xlu0 %v1988, 125
    %v2014 = vpop.permute.xlu0 %2013
    %2015 = vrot.lane.b32.xlu0 %v1991, 125
    %v2016 = vpop.permute.xlu0 %2015
    %2017 = vrot.lane.b32.xlu0 %v1993, 125
    %v2018 = vpop.permute.xlu0 %2017
    %2019 = vrot.lane.b32.xlu0 %v1996, 125
    %v2020 = vpop.permute.xlu0 %2019
    %2021 = vrot.lane.b32.xlu0 %v1998, 125
    %v2022 = vpop.permute.xlu0 %2021
    %v2035 = vadd.f32 %v1920, %v2000
    %v2036 = vadd.f32 %v1921, %v2002
    %v2037 = vadd.f32 %v1922, %v2004
    %v2038 = vadd.f32 %v1923, %v2006
    %v2039 = vadd.f32 %v1924, %v2008
    %v2040 = vadd.f32 %v1925, %v2010
    %v2041 = vadd.f32 %v1926, %v2012
    %v2042 = vadd.f32 %v1927, %v2014
    %v2043 = vadd.f32 %v1928, %v2016
    %v2044 = vadd.f32 %v1929, %v2018
    %v2045 = vadd.f32 %v1930, %v2020
    %v2046 = vadd.f32 %v1931, %v2022
    %s2047 = sld [smem:[#allocation2 + $0xb]]
    %s2048 = sld [smem:[#allocation2 + $0x3c]]
    %v2049 = vstv %s2047
    %v2050 = vmul.f32 %v2049, %v208
    %v2051 = vmul.f32 %v2049, %v209
    %v2052 = vmul.f32 %v2049, %v210
    %v2053 = vmul.f32 %v2049, %v211
    %v2054 = vmul.f32 %v2049, %v212
    %v2055 = vmul.f32 %v2049, %v213
    %v2056 = vmul.f32 %v2049, %v214
    %v2057 = vmul.f32 %v2049, %v215
    %v2058 = vmul.f32 %v2049, %v216
    %v2059 = vmul.f32 %v2049, %v217
    %v2060 = vmul.f32 %v2049, %v218
    %v2061 = vmul.f32 %v2049, %v219
    %v2062 = vmul.f32 %v2049, %v220
    %v2063 = vmul.f32 %v2049, %v221
    %v2064 = vmul.f32 %v2049, %v222
    %v2065 = vmul.f32 %v2049, %v223
    %v2066 = vmul.f32 %v2049, %v224
    %v2067 = vmul.f32 %v2049, %v225
    %v2086 = vrot.slane %v2050, 1
    %v2087 = vrot.slane %v2051, 1
    %v2088 = vsel %vm1205, %v2086, %v2087
    %v2089 = vrot.slane %v2052, 1
    %v2090 = vsel %vm1205, %v2087, %v2089
    %v2091 = vrot.slane %v2053, 1
    %v2092 = vrot.slane %v2054, 1
    %v2093 = vsel %vm1205, %v2091, %v2092
    %v2094 = vrot.slane %v2055, 1
    %v2095 = vsel %vm1205, %v2092, %v2094
    %v2096 = vrot.slane %v2056, 1
    %v2097 = vrot.slane %v2057, 1
    %v2098 = vsel %vm1205, %v2096, %v2097
    %v2099 = vrot.slane %v2058, 1
    %v2100 = vsel %vm1205, %v2097, %v2099
    %v2101 = vrot.slane %v2059, 1
    %v2102 = vrot.slane %v2060, 1
    %v2103 = vsel %vm1205, %v2101, %v2102
    %v2104 = vrot.slane %v2061, 1
    %v2105 = vsel %vm1205, %v2102, %v2104
    %v2106 = vrot.slane %v2062, 1
    %v2107 = vrot.slane %v2063, 1
    %v2108 = vsel %vm1205, %v2106, %v2107
    %v2109 = vrot.slane %v2064, 1
    %v2110 = vsel %vm1205, %v2107, %v2109
    %v2111 = vrot.slane %v2065, 1
    %v2112 = vrot.slane %v2066, 1
    %v2113 = vsel %vm1205, %v2111, %v2112
    %v2114 = vrot.slane %v2067, 1
    %v2115 = vsel %vm1205, %v2112, %v2114
    %2116 = vrot.lane.b32.xlu0 %v2088, 124
    %v2117 = vpop.permute.xlu0 %2116
    %2118 = vrot.lane.b32.xlu0 %v2090, 124
    %v2119 = vpop.permute.xlu0 %2118
    %2120 = vrot.lane.b32.xlu0 %v2093, 124
    %v2121 = vpop.permute.xlu0 %2120
    %2122 = vrot.lane.b32.xlu0 %v2095, 124
    %v2123 = vpop.permute.xlu0 %2122
    %2124 = vrot.lane.b32.xlu0 %v2098, 124
    %v2125 = vpop.permute.xlu0 %2124
    %2126 = vrot.lane.b32.xlu0 %v2100, 124
    %v2127 = vpop.permute.xlu0 %2126
    %2128 = vrot.lane.b32.xlu0 %v2103, 124
    %v2129 = vpop.permute.xlu0 %2128
    %2130 = vrot.lane.b32.xlu0 %v2105, 124
    %v2131 = vpop.permute.xlu0 %2130
    %2132 = vrot.lane.b32.xlu0 %v2108, 124
    %v2133 = vpop.permute.xlu0 %2132
    %2134 = vrot.lane.b32.xlu0 %v2110, 124
    %v2135 = vpop.permute.xlu0 %2134
    %2136 = vrot.lane.b32.xlu0 %v2113, 124
    %v2137 = vpop.permute.xlu0 %2136
    %2138 = vrot.lane.b32.xlu0 %v2115, 124
    %v2139 = vpop.permute.xlu0 %2138
    %v2152 = vadd.f32 %v2035, %v2117
    %v2153 = vadd.f32 %v2036, %v2119
    %v2154 = vadd.f32 %v2037, %v2121
    %v2155 = vadd.f32 %v2038, %v2123
    %v2156 = vadd.f32 %v2039, %v2125
    %v2157 = vadd.f32 %v2040, %v2127
    %v2158 = vadd.f32 %v2041, %v2129
    %v2159 = vadd.f32 %v2042, %v2131
    %v2160 = vadd.f32 %v2043, %v2133
    %v2161 = vadd.f32 %v2044, %v2135
    %v2162 = vadd.f32 %v2045, %v2137
    %v2163 = vadd.f32 %v2046, %v2139
    %v2164 = vstv %s2048
    %v2165 = vmul.f32 %v2164, %v190
    %v2166 = vmul.f32 %v2164, %v191
    %v2167 = vmul.f32 %v2164, %v192
    %v2168 = vmul.f32 %v2164, %v193
    %v2169 = vmul.f32 %v2164, %v194
    %v2170 = vmul.f32 %v2164, %v195
    %v2171 = vmul.f32 %v2164, %v196
    %v2172 = vmul.f32 %v2164, %v197
    %v2173 = vmul.f32 %v2164, %v198
    %v2174 = vmul.f32 %v2164, %v199
    %v2175 = vmul.f32 %v2164, %v200
    %v2176 = vmul.f32 %v2164, %v201
    %v2177 = vmul.f32 %v2164, %v202
    %v2178 = vmul.f32 %v2164, %v203
    %v2179 = vmul.f32 %v2164, %v204
    %v2180 = vmul.f32 %v2164, %v205
    %v2181 = vmul.f32 %v2164, %v206
    %v2182 = vmul.f32 %v2164, %v207
    %v2201 = vrot.slane %v2165, 1
    %v2202 = vrot.slane %v2166, 1
    %v2203 = vsel %vm1205, %v2201, %v2202
    %v2204 = vrot.slane %v2167, 1
    %v2205 = vsel %vm1205, %v2202, %v2204
    %v2206 = vrot.slane %v2168, 1
    %v2207 = vrot.slane %v2169, 1
    %v2208 = vsel %vm1205, %v2206, %v2207
    %v2209 = vrot.slane %v2170, 1
    %v2210 = vsel %vm1205, %v2207, %v2209
    %v2211 = vrot.slane %v2171, 1
    %v2212 = vrot.slane %v2172, 1
    %v2213 = vsel %vm1205, %v2211, %v2212
    %v2214 = vrot.slane %v2173, 1
    %v2215 = vsel %vm1205, %v2212, %v2214
    %v2216 = vrot.slane %v2174, 1
    %v2217 = vrot.slane %v2175, 1
    %v2218 = vsel %vm1205, %v2216, %v2217
    %v2219 = vrot.slane %v2176, 1
    %v2220 = vsel %vm1205, %v2217, %v2219
    %v2221 = vrot.slane %v2177, 1
    %v2222 = vrot.slane %v2178, 1
    %v2223 = vsel %vm1205, %v2221, %v2222
    %v2224 = vrot.slane %v2179, 1
    %v2225 = vsel %vm1205, %v2222, %v2224
    %v2226 = vrot.slane %v2180, 1
    %v2227 = vrot.slane %v2181, 1
    %v2228 = vsel %vm1205, %v2226, %v2227
    %v2229 = vrot.slane %v2182, 1
    %v2230 = vsel %vm1205, %v2227, %v2229
    %2231 = vrot.lane.b32.xlu0 %v2203, 124
    %v2232 = vpop.permute.xlu0 %2231
    %2233 = vrot.lane.b32.xlu0 %v2205, 124
    %v2234 = vpop.permute.xlu0 %2233
    %2235 = vrot.lane.b32.xlu0 %v2208, 124
    %v2236 = vpop.permute.xlu0 %2235
    %2237 = vrot.lane.b32.xlu0 %v2210, 124
    %v2238 = vpop.permute.xlu0 %2237
    %2239 = vrot.lane.b32.xlu0 %v2213, 124
    %v2240 = vpop.permute.xlu0 %2239
    %2241 = vrot.lane.b32.xlu0 %v2215, 124
    %v2242 = vpop.permute.xlu0 %2241
    %2243 = vrot.lane.b32.xlu0 %v2218, 124
    %v2244 = vpop.permute.xlu0 %2243
    %2245 = vrot.lane.b32.xlu0 %v2220, 124
    %v2246 = vpop.permute.xlu0 %2245
    %2247 = vrot.lane.b32.xlu0 %v2223, 124
    %v2248 = vpop.permute.xlu0 %2247
    %2249 = vrot.lane.b32.xlu0 %v2225, 124
    %v2250 = vpop.permute.xlu0 %2249
    %2251 = vrot.lane.b32.xlu0 %v2228, 124
    %v2252 = vpop.permute.xlu0 %2251
    %2253 = vrot.lane.b32.xlu0 %v2230, 124
    %v2254 = vpop.permute.xlu0 %2253
    %v2267 = vadd.f32 %v2152, %v2232
    %v2268 = vadd.f32 %v2153, %v2234
    %v2269 = vadd.f32 %v2154, %v2236
    %v2270 = vadd.f32 %v2155, %v2238
    %v2271 = vadd.f32 %v2156, %v2240
    %v2272 = vadd.f32 %v2157, %v2242
    %v2273 = vadd.f32 %v2158, %v2244
    %v2274 = vadd.f32 %v2159, %v2246
    %v2275 = vadd.f32 %v2160, %v2248
    %v2276 = vadd.f32 %v2161, %v2250
    %v2277 = vadd.f32 %v2162, %v2252
    %v2278 = vadd.f32 %v2163, %v2254
    %s2279 = sld [smem:[#allocation2 + $0xc]]
    %s2280 = sld [smem:[#allocation2 + $0x3d]]
    %v2281 = vstv %s2279
    %v2282 = vmul.f32 %v2281, %v208
    %v2283 = vmul.f32 %v2281, %v209
    %v2284 = vmul.f32 %v2281, %v210
    %v2285 = vmul.f32 %v2281, %v211
    %v2286 = vmul.f32 %v2281, %v212
    %v2287 = vmul.f32 %v2281, %v213
    %v2288 = vmul.f32 %v2281, %v214
    %v2289 = vmul.f32 %v2281, %v215
    %v2290 = vmul.f32 %v2281, %v216
    %v2291 = vmul.f32 %v2281, %v217
    %v2292 = vmul.f32 %v2281, %v218
    %v2293 = vmul.f32 %v2281, %v219
    %v2294 = vmul.f32 %v2281, %v220
    %v2295 = vmul.f32 %v2281, %v221
    %v2296 = vmul.f32 %v2281, %v222
    %v2297 = vmul.f32 %v2281, %v223
    %v2298 = vmul.f32 %v2281, %v224
    %v2299 = vmul.f32 %v2281, %v225
    %v2318 = vrot.slane %v2282, 1
    %v2319 = vrot.slane %v2283, 1
    %v2320 = vsel %vm1205, %v2318, %v2319
    %v2321 = vrot.slane %v2284, 1
    %v2322 = vsel %vm1205, %v2319, %v2321
    %v2323 = vrot.slane %v2285, 1
    %v2324 = vrot.slane %v2286, 1
    %v2325 = vsel %vm1205, %v2323, %v2324
    %v2326 = vrot.slane %v2287, 1
    %v2327 = vsel %vm1205, %v2324, %v2326
    %v2328 = vrot.slane %v2288, 1
    %v2329 = vrot.slane %v2289, 1
    %v2330 = vsel %vm1205, %v2328, %v2329
    %v2331 = vrot.slane %v2290, 1
    %v2332 = vsel %vm1205, %v2329, %v2331
    %v2333 = vrot.slane %v2291, 1
    %v2334 = vrot.slane %v2292, 1
    %v2335 = vsel %vm1205, %v2333, %v2334
    %v2336 = vrot.slane %v2293, 1
    %v2337 = vsel %vm1205, %v2334, %v2336
    %v2338 = vrot.slane %v2294, 1
    %v2339 = vrot.slane %v2295, 1
    %v2340 = vsel %vm1205, %v2338, %v2339
    %v2341 = vrot.slane %v2296, 1
    %v2342 = vsel %vm1205, %v2339, %v2341
    %v2343 = vrot.slane %v2297, 1
    %v2344 = vrot.slane %v2298, 1
    %v2345 = vsel %vm1205, %v2343, %v2344
    %v2346 = vrot.slane %v2299, 1
    %v2347 = vsel %vm1205, %v2344, %v2346
    %2348 = vrot.lane.b32.xlu0 %v2320, 123
    %v2349 = vpop.permute.xlu0 %2348
    %2350 = vrot.lane.b32.xlu0 %v2322, 123
    %v2351 = vpop.permute.xlu0 %2350
    %2352 = vrot.lane.b32.xlu0 %v2325, 123
    %v2353 = vpop.permute.xlu0 %2352
    %2354 = vrot.lane.b32.xlu0 %v2327, 123
    %v2355 = vpop.permute.xlu0 %2354
    %2356 = vrot.lane.b32.xlu0 %v2330, 123
    %v2357 = vpop.permute.xlu0 %2356
    %2358 = vrot.lane.b32.xlu0 %v2332, 123
    %v2359 = vpop.permute.xlu0 %2358
    %2360 = vrot.lane.b32.xlu0 %v2335, 123
    %v2361 = vpop.permute.xlu0 %2360
    %2362 = vrot.lane.b32.xlu0 %v2337, 123
    %v2363 = vpop.permute.xlu0 %2362
    %2364 = vrot.lane.b32.xlu0 %v2340, 123
    %v2365 = vpop.permute.xlu0 %2364
    %2366 = vrot.lane.b32.xlu0 %v2342, 123
    %v2367 = vpop.permute.xlu0 %2366
    %2368 = vrot.lane.b32.xlu0 %v2345, 123
    %v2369 = vpop.permute.xlu0 %2368
    %2370 = vrot.lane.b32.xlu0 %v2347, 123
    %v2371 = vpop.permute.xlu0 %2370
    %v2384 = vadd.f32 %v2267, %v2349
    %v2385 = vadd.f32 %v2268, %v2351
    %v2386 = vadd.f32 %v2269, %v2353
    %v2387 = vadd.f32 %v2270, %v2355
    %v2388 = vadd.f32 %v2271, %v2357
    %v2389 = vadd.f32 %v2272, %v2359
    %v2390 = vadd.f32 %v2273, %v2361
    %v2391 = vadd.f32 %v2274, %v2363
    %v2392 = vadd.f32 %v2275, %v2365
    %v2393 = vadd.f32 %v2276, %v2367
    %v2394 = vadd.f32 %v2277, %v2369
    %v2395 = vadd.f32 %v2278, %v2371
    %v2396 = vstv %s2280
    %v2397 = vmul.f32 %v2396, %v190
    %v2398 = vmul.f32 %v2396, %v191
    %v2399 = vmul.f32 %v2396, %v192
    %v2400 = vmul.f32 %v2396, %v193
    %v2401 = vmul.f32 %v2396, %v194
    %v2402 = vmul.f32 %v2396, %v195
    %v2403 = vmul.f32 %v2396, %v196
    %v2404 = vmul.f32 %v2396, %v197
    %v2405 = vmul.f32 %v2396, %v198
    %v2406 = vmul.f32 %v2396, %v199
    %v2407 = vmul.f32 %v2396, %v200
    %v2408 = vmul.f32 %v2396, %v201
    %v2409 = vmul.f32 %v2396, %v202
    %v2410 = vmul.f32 %v2396, %v203
    %v2411 = vmul.f32 %v2396, %v204
    %v2412 = vmul.f32 %v2396, %v205
    %v2413 = vmul.f32 %v2396, %v206
    %v2414 = vmul.f32 %v2396, %v207
    %v2433 = vrot.slane %v2397, 1
    %v2434 = vrot.slane %v2398, 1
    %v2435 = vsel %vm1205, %v2433, %v2434
    %v2436 = vrot.slane %v2399, 1
    %v2437 = vsel %vm1205, %v2434, %v2436
    %v2438 = vrot.slane %v2400, 1
    %v2439 = vrot.slane %v2401, 1
    %v2440 = vsel %vm1205, %v2438, %v2439
    %v2441 = vrot.slane %v2402, 1
    %v2442 = vsel %vm1205, %v2439, %v2441
    %v2443 = vrot.slane %v2403, 1
    %v2444 = vrot.slane %v2404, 1
    %v2445 = vsel %vm1205, %v2443, %v2444
    %v2446 = vrot.slane %v2405, 1
    %v2447 = vsel %vm1205, %v2444, %v2446
    %v2448 = vrot.slane %v2406, 1
    %v2449 = vrot.slane %v2407, 1
    %v2450 = vsel %vm1205, %v2448, %v2449
    %v2451 = vrot.slane %v2408, 1
    %v2452 = vsel %vm1205, %v2449, %v2451
    %v2453 = vrot.slane %v2409, 1
    %v2454 = vrot.slane %v2410, 1
    %v2455 = vsel %vm1205, %v2453, %v2454
    %v2456 = vrot.slane %v2411, 1
    %v2457 = vsel %vm1205, %v2454, %v2456
    %v2458 = vrot.slane %v2412, 1
    %v2459 = vrot.slane %v2413, 1
    %v2460 = vsel %vm1205, %v2458, %v2459
    %v2461 = vrot.slane %v2414, 1
    %v2462 = vsel %vm1205, %v2459, %v2461
    %2463 = vrot.lane.b32.xlu0 %v2435, 123
    %v2464 = vpop.permute.xlu0 %2463
    %2465 = vrot.lane.b32.xlu0 %v2437, 123
    %v2466 = vpop.permute.xlu0 %2465
    %2467 = vrot.lane.b32.xlu0 %v2440, 123
    %v2468 = vpop.permute.xlu0 %2467
    %2469 = vrot.lane.b32.xlu0 %v2442, 123
    %v2470 = vpop.permute.xlu0 %2469
    %2471 = vrot.lane.b32.xlu0 %v2445, 123
    %v2472 = vpop.permute.xlu0 %2471
    %2473 = vrot.lane.b32.xlu0 %v2447, 123
    %v2474 = vpop.permute.xlu0 %2473
    %2475 = vrot.lane.b32.xlu0 %v2450, 123
    %v2476 = vpop.permute.xlu0 %2475
    %2477 = vrot.lane.b32.xlu0 %v2452, 123
    %v2478 = vpop.permute.xlu0 %2477
    %2479 = vrot.lane.b32.xlu0 %v2455, 123
    %v2480 = vpop.permute.xlu0 %2479
    %2481 = vrot.lane.b32.xlu0 %v2457, 123
    %v2482 = vpop.permute.xlu0 %2481
    %2483 = vrot.lane.b32.xlu0 %v2460, 123
    %v2484 = vpop.permute.xlu0 %2483
    %2485 = vrot.lane.b32.xlu0 %v2462, 123
    %v2486 = vpop.permute.xlu0 %2485
    %v2499 = vadd.f32 %v2384, %v2464
    %v2500 = vadd.f32 %v2385, %v2466
    %v2501 = vadd.f32 %v2386, %v2468
    %v2502 = vadd.f32 %v2387, %v2470
    %v2503 = vadd.f32 %v2388, %v2472
    %v2504 = vadd.f32 %v2389, %v2474
    %v2505 = vadd.f32 %v2390, %v2476
    %v2506 = vadd.f32 %v2391, %v2478
    %v2507 = vadd.f32 %v2392, %v2480
    %v2508 = vadd.f32 %v2393, %v2482
    %v2509 = vadd.f32 %v2394, %v2484
    %v2510 = vadd.f32 %v2395, %v2486
    %s2511 = sld [smem:[#allocation2 + $0xd]]
    %s2512 = sld [smem:[#allocation2 + $0x3e]]
    %v2513 = vstv %s2511
    %v2514 = vmul.f32 %v2513, %v208
    %v2515 = vmul.f32 %v2513, %v209
    %v2516 = vmul.f32 %v2513, %v210
    %v2517 = vmul.f32 %v2513, %v211
    %v2518 = vmul.f32 %v2513, %v212
    %v2519 = vmul.f32 %v2513, %v213
    %v2520 = vmul.f32 %v2513, %v214
    %v2521 = vmul.f32 %v2513, %v215
    %v2522 = vmul.f32 %v2513, %v216
    %v2523 = vmul.f32 %v2513, %v217
    %v2524 = vmul.f32 %v2513, %v218
    %v2525 = vmul.f32 %v2513, %v219
    %v2526 = vmul.f32 %v2513, %v220
    %v2527 = vmul.f32 %v2513, %v221
    %v2528 = vmul.f32 %v2513, %v222
    %v2529 = vmul.f32 %v2513, %v223
    %v2530 = vmul.f32 %v2513, %v224
    %v2531 = vmul.f32 %v2513, %v225
    %v2550 = vrot.slane %v2514, 1
    %v2551 = vrot.slane %v2515, 1
    %v2552 = vsel %vm1205, %v2550, %v2551
    %v2553 = vrot.slane %v2516, 1
    %v2554 = vsel %vm1205, %v2551, %v2553
    %v2555 = vrot.slane %v2517, 1
    %v2556 = vrot.slane %v2518, 1
    %v2557 = vsel %vm1205, %v2555, %v2556
    %v2558 = vrot.slane %v2519, 1
    %v2559 = vsel %vm1205, %v2556, %v2558
    %v2560 = vrot.slane %v2520, 1
    %v2561 = vrot.slane %v2521, 1
    %v2562 = vsel %vm1205, %v2560, %v2561
    %v2563 = vrot.slane %v2522, 1
    %v2564 = vsel %vm1205, %v2561, %v2563
    %v2565 = vrot.slane %v2523, 1
    %v2566 = vrot.slane %v2524, 1
    %v2567 = vsel %vm1205, %v2565, %v2566
    %v2568 = vrot.slane %v2525, 1
    %v2569 = vsel %vm1205, %v2566, %v2568
    %v2570 = vrot.slane %v2526, 1
    %v2571 = vrot.slane %v2527, 1
    %v2572 = vsel %vm1205, %v2570, %v2571
    %v2573 = vrot.slane %v2528, 1
    %v2574 = vsel %vm1205, %v2571, %v2573
    %v2575 = vrot.slane %v2529, 1
    %v2576 = vrot.slane %v2530, 1
    %v2577 = vsel %vm1205, %v2575, %v2576
    %v2578 = vrot.slane %v2531, 1
    %v2579 = vsel %vm1205, %v2576, %v2578
    %2580 = vrot.lane.b32.xlu0 %v2552, 122
    %v2581 = vpop.permute.xlu0 %2580
    %2582 = vrot.lane.b32.xlu0 %v2554, 122
    %v2583 = vpop.permute.xlu0 %2582
    %2584 = vrot.lane.b32.xlu0 %v2557, 122
    %v2585 = vpop.permute.xlu0 %2584
    %2586 = vrot.lane.b32.xlu0 %v2559, 122
    %v2587 = vpop.permute.xlu0 %2586
    %2588 = vrot.lane.b32.xlu0 %v2562, 122
    %v2589 = vpop.permute.xlu0 %2588
    %2590 = vrot.lane.b32.xlu0 %v2564, 122
    %v2591 = vpop.permute.xlu0 %2590
    %2592 = vrot.lane.b32.xlu0 %v2567, 122
    %v2593 = vpop.permute.xlu0 %2592
    %2594 = vrot.lane.b32.xlu0 %v2569, 122
    %v2595 = vpop.permute.xlu0 %2594
    %2596 = vrot.lane.b32.xlu0 %v2572, 122
    %v2597 = vpop.permute.xlu0 %2596
    %2598 = vrot.lane.b32.xlu0 %v2574, 122
    %v2599 = vpop.permute.xlu0 %2598
    %2600 = vrot.lane.b32.xlu0 %v2577, 122
    %v2601 = vpop.permute.xlu0 %2600
    %2602 = vrot.lane.b32.xlu0 %v2579, 122
    %v2603 = vpop.permute.xlu0 %2602
    %v2616 = vadd.f32 %v2499, %v2581
    %v2617 = vadd.f32 %v2500, %v2583
    %v2618 = vadd.f32 %v2501, %v2585
    %v2619 = vadd.f32 %v2502, %v2587
    %v2620 = vadd.f32 %v2503, %v2589
    %v2621 = vadd.f32 %v2504, %v2591
    %v2622 = vadd.f32 %v2505, %v2593
    %v2623 = vadd.f32 %v2506, %v2595
    %v2624 = vadd.f32 %v2507, %v2597
    %v2625 = vadd.f32 %v2508, %v2599
    %v2626 = vadd.f32 %v2509, %v2601
    %v2627 = vadd.f32 %v2510, %v2603
    %v2628 = vstv %s2512
    %v2629 = vmul.f32 %v2628, %v190
    %v2630 = vmul.f32 %v2628, %v191
    %v2631 = vmul.f32 %v2628, %v192
    %v2632 = vmul.f32 %v2628, %v193
    %v2633 = vmul.f32 %v2628, %v194
    %v2634 = vmul.f32 %v2628, %v195
    %v2635 = vmul.f32 %v2628, %v196
    %v2636 = vmul.f32 %v2628, %v197
    %v2637 = vmul.f32 %v2628, %v198
    %v2638 = vmul.f32 %v2628, %v199
    %v2639 = vmul.f32 %v2628, %v200
    %v2640 = vmul.f32 %v2628, %v201
    %v2641 = vmul.f32 %v2628, %v202
    %v2642 = vmul.f32 %v2628, %v203
    %v2643 = vmul.f32 %v2628, %v204
    %v2644 = vmul.f32 %v2628, %v205
    %v2645 = vmul.f32 %v2628, %v206
    %v2646 = vmul.f32 %v2628, %v207
    %v2665 = vrot.slane %v2629, 1
    %v2666 = vrot.slane %v2630, 1
    %v2667 = vsel %vm1205, %v2665, %v2666
    %v2668 = vrot.slane %v2631, 1
    %v2669 = vsel %vm1205, %v2666, %v2668
    %v2670 = vrot.slane %v2632, 1
    %v2671 = vrot.slane %v2633, 1
    %v2672 = vsel %vm1205, %v2670, %v2671
    %v2673 = vrot.slane %v2634, 1
    %v2674 = vsel %vm1205, %v2671, %v2673
    %v2675 = vrot.slane %v2635, 1
    %v2676 = vrot.slane %v2636, 1
    %v2677 = vsel %vm1205, %v2675, %v2676
    %v2678 = vrot.slane %v2637, 1
    %v2679 = vsel %vm1205, %v2676, %v2678
    %v2680 = vrot.slane %v2638, 1
    %v2681 = vrot.slane %v2639, 1
    %v2682 = vsel %vm1205, %v2680, %v2681
    %v2683 = vrot.slane %v2640, 1
    %v2684 = vsel %vm1205, %v2681, %v2683
    %v2685 = vrot.slane %v2641, 1
    %v2686 = vrot.slane %v2642, 1
    %v2687 = vsel %vm1205, %v2685, %v2686
    %v2688 = vrot.slane %v2643, 1
    %v2689 = vsel %vm1205, %v2686, %v2688
    %v2690 = vrot.slane %v2644, 1
    %v2691 = vrot.slane %v2645, 1
    %v2692 = vsel %vm1205, %v2690, %v2691
    %v2693 = vrot.slane %v2646, 1
    %v2694 = vsel %vm1205, %v2691, %v2693
    %2695 = vrot.lane.b32.xlu0 %v2667, 122
    %v2696 = vpop.permute.xlu0 %2695
    %2697 = vrot.lane.b32.xlu0 %v2669, 122
    %v2698 = vpop.permute.xlu0 %2697
    %2699 = vrot.lane.b32.xlu0 %v2672, 122
    %v2700 = vpop.permute.xlu0 %2699
    %2701 = vrot.lane.b32.xlu0 %v2674, 122
    %v2702 = vpop.permute.xlu0 %2701
    %2703 = vrot.lane.b32.xlu0 %v2677, 122
    %v2704 = vpop.permute.xlu0 %2703
    %2705 = vrot.lane.b32.xlu0 %v2679, 122
    %v2706 = vpop.permute.xlu0 %2705
    %2707 = vrot.lane.b32.xlu0 %v2682, 122
    %v2708 = vpop.permute.xlu0 %2707
    %2709 = vrot.lane.b32.xlu0 %v2684, 122
    %v2710 = vpop.permute.xlu0 %2709
    %2711 = vrot.lane.b32.xlu0 %v2687, 122
    %v2712 = vpop.permute.xlu0 %2711
    %2713 = vrot.lane.b32.xlu0 %v2689, 122
    %v2714 = vpop.permute.xlu0 %2713
    %2715 = vrot.lane.b32.xlu0 %v2692, 122
    %v2716 = vpop.permute.xlu0 %2715
    %2717 = vrot.lane.b32.xlu0 %v2694, 122
    %v2718 = vpop.permute.xlu0 %2717
    %v2731 = vadd.f32 %v2616, %v2696
    %v2732 = vadd.f32 %v2617, %v2698
    %v2733 = vadd.f32 %v2618, %v2700
    %v2734 = vadd.f32 %v2619, %v2702
    %v2735 = vadd.f32 %v2620, %v2704
    %v2736 = vadd.f32 %v2621, %v2706
    %v2737 = vadd.f32 %v2622, %v2708
    %v2738 = vadd.f32 %v2623, %v2710
    %v2739 = vadd.f32 %v2624, %v2712
    %v2740 = vadd.f32 %v2625, %v2714
    %v2741 = vadd.f32 %v2626, %v2716
    %v2742 = vadd.f32 %v2627, %v2718
    %s2743 = sld [smem:[#allocation2 + $0xe]]
    %s2744 = sld [smem:[#allocation2 + $0x3f]]
    %v2745 = vstv %s2743
    %v2746 = vmul.f32 %v2745, %v208
    %v2747 = vmul.f32 %v2745, %v209
    %v2748 = vmul.f32 %v2745, %v210
    %v2749 = vmul.f32 %v2745, %v211
    %v2750 = vmul.f32 %v2745, %v212
    %v2751 = vmul.f32 %v2745, %v213
    %v2752 = vmul.f32 %v2745, %v214
    %v2753 = vmul.f32 %v2745, %v215
    %v2754 = vmul.f32 %v2745, %v216
    %v2755 = vmul.f32 %v2745, %v217
    %v2756 = vmul.f32 %v2745, %v218
    %v2757 = vmul.f32 %v2745, %v219
    %v2758 = vmul.f32 %v2745, %v220
    %v2759 = vmul.f32 %v2745, %v221
    %v2760 = vmul.f32 %v2745, %v222
    %v2761 = vmul.f32 %v2745, %v223
    %v2762 = vmul.f32 %v2745, %v224
    %v2763 = vmul.f32 %v2745, %v225
    %vm2782 = vcmask 1045504
    %v2783 = vrot.slane %v2746, 2
    %v2784 = vrot.slane %v2747, 2
    %v2785 = vsel %vm2782, %v2783, %v2784
    %v2786 = vrot.slane %v2748, 2
    %v2787 = vsel %vm2782, %v2784, %v2786
    %v2788 = vrot.slane %v2749, 2
    %v2789 = vrot.slane %v2750, 2
    %v2790 = vsel %vm2782, %v2788, %v2789
    %v2791 = vrot.slane %v2751, 2
    %v2792 = vsel %vm2782, %v2789, %v2791
    %v2793 = vrot.slane %v2752, 2
    %v2794 = vrot.slane %v2753, 2
    %v2795 = vsel %vm2782, %v2793, %v2794
    %v2796 = vrot.slane %v2754, 2
    %v2797 = vsel %vm2782, %v2794, %v2796
    %v2798 = vrot.slane %v2755, 2
    %v2799 = vrot.slane %v2756, 2
    %v2800 = vsel %vm2782, %v2798, %v2799
    %v2801 = vrot.slane %v2757, 2
    %v2802 = vsel %vm2782, %v2799, %v2801
    %v2803 = vrot.slane %v2758, 2
    %v2804 = vrot.slane %v2759, 2
    %v2805 = vsel %vm2782, %v2803, %v2804
    %v2806 = vrot.slane %v2760, 2
    %v2807 = vsel %vm2782, %v2804, %v2806
    %v2808 = vrot.slane %v2761, 2
    %v2809 = vrot.slane %v2762, 2
    %v2810 = vsel %vm2782, %v2808, %v2809
    %v2811 = vrot.slane %v2763, 2
    %v2812 = vsel %vm2782, %v2809, %v2811
    %v2825 = vadd.f32 %v2731, %v2785
    %v2826 = vadd.f32 %v2732, %v2787
    %v2827 = vadd.f32 %v2733, %v2790
    %v2828 = vadd.f32 %v2734, %v2792
    %v2829 = vadd.f32 %v2735, %v2795
    %v2830 = vadd.f32 %v2736, %v2797
    %v2831 = vadd.f32 %v2737, %v2800
    %v2832 = vadd.f32 %v2738, %v2802
    %v2833 = vadd.f32 %v2739, %v2805
    %v2834 = vadd.f32 %v2740, %v2807
    %v2835 = vadd.f32 %v2741, %v2810
    %v2836 = vadd.f32 %v2742, %v2812
    %v2837 = vstv %s2744
    %v2838 = vmul.f32 %v2837, %v190
    %v2839 = vmul.f32 %v2837, %v191
    %v2840 = vmul.f32 %v2837, %v192
    %v2841 = vmul.f32 %v2837, %v193
    %v2842 = vmul.f32 %v2837, %v194
    %v2843 = vmul.f32 %v2837, %v195
    %v2844 = vmul.f32 %v2837, %v196
    %v2845 = vmul.f32 %v2837, %v197
    %v2846 = vmul.f32 %v2837, %v198
    %v2847 = vmul.f32 %v2837, %v199
    %v2848 = vmul.f32 %v2837, %v200
    %v2849 = vmul.f32 %v2837, %v201
    %v2850 = vmul.f32 %v2837, %v202
    %v2851 = vmul.f32 %v2837, %v203
    %v2852 = vmul.f32 %v2837, %v204
    %v2853 = vmul.f32 %v2837, %v205
    %v2854 = vmul.f32 %v2837, %v206
    %v2855 = vmul.f32 %v2837, %v207
    %v2874 = vrot.slane %v2838, 2
    %v2875 = vrot.slane %v2839, 2
    %v2876 = vsel %vm2782, %v2874, %v2875
    %v2877 = vrot.slane %v2840, 2
    %v2878 = vsel %vm2782, %v2875, %v2877
    %v2879 = vrot.slane %v2841, 2
    %v2880 = vrot.slane %v2842, 2
    %v2881 = vsel %vm2782, %v2879, %v2880
    %v2882 = vrot.slane %v2843, 2
    %v2883 = vsel %vm2782, %v2880, %v2882
    %v2884 = vrot.slane %v2844, 2
    %v2885 = vrot.slane %v2845, 2
    %v2886 = vsel %vm2782, %v2884, %v2885
    %v2887 = vrot.slane %v2846, 2
    %v2888 = vsel %vm2782, %v2885, %v2887
    %v2889 = vrot.slane %v2847, 2
    %v2890 = vrot.slane %v2848, 2
    %v2891 = vsel %vm2782, %v2889, %v2890
    %v2892 = vrot.slane %v2849, 2
    %v2893 = vsel %vm2782, %v2890, %v2892
    %v2894 = vrot.slane %v2850, 2
    %v2895 = vrot.slane %v2851, 2
    %v2896 = vsel %vm2782, %v2894, %v2895
    %v2897 = vrot.slane %v2852, 2
    %v2898 = vsel %vm2782, %v2895, %v2897
    %v2899 = vrot.slane %v2853, 2
    %v2900 = vrot.slane %v2854, 2
    %v2901 = vsel %vm2782, %v2899, %v2900
    %v2902 = vrot.slane %v2855, 2
    %v2903 = vsel %vm2782, %v2900, %v2902
    %v2916 = vadd.f32 %v2825, %v2876
    %v2917 = vadd.f32 %v2826, %v2878
    %v2918 = vadd.f32 %v2827, %v2881
    %v2919 = vadd.f32 %v2828, %v2883
    %v2920 = vadd.f32 %v2829, %v2886
    %v2921 = vadd.f32 %v2830, %v2888
    %v2922 = vadd.f32 %v2831, %v2891
    %v2923 = vadd.f32 %v2832, %v2893
    %v2924 = vadd.f32 %v2833, %v2896
    %v2925 = vadd.f32 %v2834, %v2898
    %v2926 = vadd.f32 %v2835, %v2901
    %v2927 = vadd.f32 %v2836, %v2903
    %s2928 = sld [smem:[#allocation2 + $0xf]]
    %s2929 = sld [smem:[#allocation2 + $0x40]]
    %v2930 = vstv %s2928
    %v2931 = vmul.f32 %v2930, %v208
    %v2932 = vmul.f32 %v2930, %v209
    %v2933 = vmul.f32 %v2930, %v210
    %v2934 = vmul.f32 %v2930, %v211
    %v2935 = vmul.f32 %v2930, %v212
    %v2936 = vmul.f32 %v2930, %v213
    %v2937 = vmul.f32 %v2930, %v214
    %v2938 = vmul.f32 %v2930, %v215
    %v2939 = vmul.f32 %v2930, %v216
    %v2940 = vmul.f32 %v2930, %v217
    %v2941 = vmul.f32 %v2930, %v218
    %v2942 = vmul.f32 %v2930, %v219
    %v2943 = vmul.f32 %v2930, %v220
    %v2944 = vmul.f32 %v2930, %v221
    %v2945 = vmul.f32 %v2930, %v222
    %v2946 = vmul.f32 %v2930, %v223
    %v2947 = vmul.f32 %v2930, %v224
    %v2948 = vmul.f32 %v2930, %v225
    %v2967 = vrot.slane %v2931, 2
    %v2968 = vrot.slane %v2932, 2
    %v2969 = vsel %vm2782, %v2967, %v2968
    %v2970 = vrot.slane %v2933, 2
    %v2971 = vsel %vm2782, %v2968, %v2970
    %v2972 = vrot.slane %v2934, 2
    %v2973 = vrot.slane %v2935, 2
    %v2974 = vsel %vm2782, %v2972, %v2973
    %v2975 = vrot.slane %v2936, 2
    %v2976 = vsel %vm2782, %v2973, %v2975
    %v2977 = vrot.slane %v2937, 2
    %v2978 = vrot.slane %v2938, 2
    %v2979 = vsel %vm2782, %v2977, %v2978
    %v2980 = vrot.slane %v2939, 2
    %v2981 = vsel %vm2782, %v2978, %v2980
    %v2982 = vrot.slane %v2940, 2
    %v2983 = vrot.slane %v2941, 2
    %v2984 = vsel %vm2782, %v2982, %v2983
    %v2985 = vrot.slane %v2942, 2
    %v2986 = vsel %vm2782, %v2983, %v2985
    %v2987 = vrot.slane %v2943, 2
    %v2988 = vrot.slane %v2944, 2
    %v2989 = vsel %vm2782, %v2987, %v2988
    %v2990 = vrot.slane %v2945, 2
    %v2991 = vsel %vm2782, %v2988, %v2990
    %v2992 = vrot.slane %v2946, 2
    %v2993 = vrot.slane %v2947, 2
    %v2994 = vsel %vm2782, %v2992, %v2993
    %v2995 = vrot.slane %v2948, 2
    %v2996 = vsel %vm2782, %v2993, %v2995
    %2997 = vrot.lane.b32.xlu0 %v2969, 127
    %v2998 = vpop.permute.xlu0 %2997
    %2999 = vrot.lane.b32.xlu0 %v2971, 127
    %v3000 = vpop.permute.xlu0 %2999
    %3001 = vrot.lane.b32.xlu0 %v2974, 127
    %v3002 = vpop.permute.xlu0 %3001
    %3003 = vrot.lane.b32.xlu0 %v2976, 127
    %v3004 = vpop.permute.xlu0 %3003
    %3005 = vrot.lane.b32.xlu0 %v2979, 127
    %v3006 = vpop.permute.xlu0 %3005
    %3007 = vrot.lane.b32.xlu0 %v2981, 127
    %v3008 = vpop.permute.xlu0 %3007
    %3009 = vrot.lane.b32.xlu0 %v2984, 127
    %v3010 = vpop.permute.xlu0 %3009
    %3011 = vrot.lane.b32.xlu0 %v2986, 127
    %v3012 = vpop.permute.xlu0 %3011
    %3013 = vrot.lane.b32.xlu0 %v2989, 127
    %v3014 = vpop.permute.xlu0 %3013
    %3015 = vrot.lane.b32.xlu0 %v2991, 127
    %v3016 = vpop.permute.xlu0 %3015
    %3017 = vrot.lane.b32.xlu0 %v2994, 127
    %v3018 = vpop.permute.xlu0 %3017
    %3019 = vrot.lane.b32.xlu0 %v2996, 127
    %v3020 = vpop.permute.xlu0 %3019
    %v3033 = vadd.f32 %v2916, %v2998
    %v3034 = vadd.f32 %v2917, %v3000
    %v3035 = vadd.f32 %v2918, %v3002
    %v3036 = vadd.f32 %v2919, %v3004
    %v3037 = vadd.f32 %v2920, %v3006
    %v3038 = vadd.f32 %v2921, %v3008
    %v3039 = vadd.f32 %v2922, %v3010
    %v3040 = vadd.f32 %v2923, %v3012
    %v3041 = vadd.f32 %v2924, %v3014
    %v3042 = vadd.f32 %v2925, %v3016
    %v3043 = vadd.f32 %v2926, %v3018
    %v3044 = vadd.f32 %v2927, %v3020
    %v3045 = vstv %s2929
    %v3046 = vmul.f32 %v3045, %v190
    %v3047 = vmul.f32 %v3045, %v191
    %v3048 = vmul.f32 %v3045, %v192
    %v3049 = vmul.f32 %v3045, %v193
    %v3050 = vmul.f32 %v3045, %v194
    %v3051 = vmul.f32 %v3045, %v195
    %v3052 = vmul.f32 %v3045, %v196
    %v3053 = vmul.f32 %v3045, %v197
    %v3054 = vmul.f32 %v3045, %v198
    %v3055 = vmul.f32 %v3045, %v199
    %v3056 = vmul.f32 %v3045, %v200
    %v3057 = vmul.f32 %v3045, %v201
    %v3058 = vmul.f32 %v3045, %v202
    %v3059 = vmul.f32 %v3045, %v203
    %v3060 = vmul.f32 %v3045, %v204
    %v3061 = vmul.f32 %v3045, %v205
    %v3062 = vmul.f32 %v3045, %v206
    %v3063 = vmul.f32 %v3045, %v207
    %v3082 = vrot.slane %v3046, 2
    %v3083 = vrot.slane %v3047, 2
    %v3084 = vsel %vm2782, %v3082, %v3083
    %v3085 = vrot.slane %v3048, 2
    %v3086 = vsel %vm2782, %v3083, %v3085
    %v3087 = vrot.slane %v3049, 2
    %v3088 = vrot.slane %v3050, 2
    %v3089 = vsel %vm2782, %v3087, %v3088
    %v3090 = vrot.slane %v3051, 2
    %v3091 = vsel %vm2782, %v3088, %v3090
    %v3092 = vrot.slane %v3052, 2
    %v3093 = vrot.slane %v3053, 2
    %v3094 = vsel %vm2782, %v3092, %v3093
    %v3095 = vrot.slane %v3054, 2
    %v3096 = vsel %vm2782, %v3093, %v3095
    %v3097 = vrot.slane %v3055, 2
    %v3098 = vrot.slane %v3056, 2
    %v3099 = vsel %vm2782, %v3097, %v3098
    %v3100 = vrot.slane %v3057, 2
    %v3101 = vsel %vm2782, %v3098, %v3100
    %v3102 = vrot.slane %v3058, 2
    %v3103 = vrot.slane %v3059, 2
    %v3104 = vsel %vm2782, %v3102, %v3103
    %v3105 = vrot.slane %v3060, 2
    %v3106 = vsel %vm2782, %v3103, %v3105
    %v3107 = vrot.slane %v3061, 2
    %v3108 = vrot.slane %v3062, 2
    %v3109 = vsel %vm2782, %v3107, %v3108
    %v3110 = vrot.slane %v3063, 2
    %v3111 = vsel %vm2782, %v3108, %v3110
    %3112 = vrot.lane.b32.xlu0 %v3084, 127
    %v3113 = vpop.permute.xlu0 %3112
    %3114 = vrot.lane.b32.xlu0 %v3086, 127
    %v3115 = vpop.permute.xlu0 %3114
    %3116 = vrot.lane.b32.xlu0 %v3089, 127
    %v3117 = vpop.permute.xlu0 %3116
    %3118 = vrot.lane.b32.xlu0 %v3091, 127
    %v3119 = vpop.permute.xlu0 %3118
    %3120 = vrot.lane.b32.xlu0 %v3094, 127
    %v3121 = vpop.permute.xlu0 %3120
    %3122 = vrot.lane.b32.xlu0 %v3096, 127
    %v3123 = vpop.permute.xlu0 %3122
    %3124 = vrot.lane.b32.xlu0 %v3099, 127
    %v3125 = vpop.permute.xlu0 %3124
    %3126 = vrot.lane.b32.xlu0 %v3101, 127
    %v3127 = vpop.permute.xlu0 %3126
    %3128 = vrot.lane.b32.xlu0 %v3104, 127
    %v3129 = vpop.permute.xlu0 %3128
    %3130 = vrot.lane.b32.xlu0 %v3106, 127
    %v3131 = vpop.permute.xlu0 %3130
    %3132 = vrot.lane.b32.xlu0 %v3109, 127
    %v3133 = vpop.permute.xlu0 %3132
    %3134 = vrot.lane.b32.xlu0 %v3111, 127
    %v3135 = vpop.permute.xlu0 %3134
    %v3148 = vadd.f32 %v3033, %v3113
    %v3149 = vadd.f32 %v3034, %v3115
    %v3150 = vadd.f32 %v3035, %v3117
    %v3151 = vadd.f32 %v3036, %v3119
    %v3152 = vadd.f32 %v3037, %v3121
    %v3153 = vadd.f32 %v3038, %v3123
    %v3154 = vadd.f32 %v3039, %v3125
    %v3155 = vadd.f32 %v3040, %v3127
    %v3156 = vadd.f32 %v3041, %v3129
    %v3157 = vadd.f32 %v3042, %v3131
    %v3158 = vadd.f32 %v3043, %v3133
    %v3159 = vadd.f32 %v3044, %v3135
    %s3160 = sld [smem:[#allocation2 + $0x10]]
    %s3161 = sld [smem:[#allocation2 + $0x41]]
    %v3162 = vstv %s3160
    %v3163 = vmul.f32 %v3162, %v208
    %v3164 = vmul.f32 %v3162, %v209
    %v3165 = vmul.f32 %v3162, %v210
    %v3166 = vmul.f32 %v3162, %v211
    %v3167 = vmul.f32 %v3162, %v212
    %v3168 = vmul.f32 %v3162, %v213
    %v3169 = vmul.f32 %v3162, %v214
    %v3170 = vmul.f32 %v3162, %v215
    %v3171 = vmul.f32 %v3162, %v216
    %v3172 = vmul.f32 %v3162, %v217
    %v3173 = vmul.f32 %v3162, %v218
    %v3174 = vmul.f32 %v3162, %v219
    %v3175 = vmul.f32 %v3162, %v220
    %v3176 = vmul.f32 %v3162, %v221
    %v3177 = vmul.f32 %v3162, %v222
    %v3178 = vmul.f32 %v3162, %v223
    %v3179 = vmul.f32 %v3162, %v224
    %v3180 = vmul.f32 %v3162, %v225
    %v3199 = vrot.slane %v3163, 2
    %v3200 = vrot.slane %v3164, 2
    %v3201 = vsel %vm2782, %v3199, %v3200
    %v3202 = vrot.slane %v3165, 2
    %v3203 = vsel %vm2782, %v3200, %v3202
    %v3204 = vrot.slane %v3166, 2
    %v3205 = vrot.slane %v3167, 2
    %v3206 = vsel %vm2782, %v3204, %v3205
    %v3207 = vrot.slane %v3168, 2
    %v3208 = vsel %vm2782, %v3205, %v3207
    %v3209 = vrot.slane %v3169, 2
    %v3210 = vrot.slane %v3170, 2
    %v3211 = vsel %vm2782, %v3209, %v3210
    %v3212 = vrot.slane %v3171, 2
    %v3213 = vsel %vm2782, %v3210, %v3212
    %v3214 = vrot.slane %v3172, 2
    %v3215 = vrot.slane %v3173, 2
    %v3216 = vsel %vm2782, %v3214, %v3215
    %v3217 = vrot.slane %v3174, 2
    %v3218 = vsel %vm2782, %v3215, %v3217
    %v3219 = vrot.slane %v3175, 2
    %v3220 = vrot.slane %v3176, 2
    %v3221 = vsel %vm2782, %v3219, %v3220
    %v3222 = vrot.slane %v3177, 2
    %v3223 = vsel %vm2782, %v3220, %v3222
    %v3224 = vrot.slane %v3178, 2
    %v3225 = vrot.slane %v3179, 2
    %v3226 = vsel %vm2782, %v3224, %v3225
    %v3227 = vrot.slane %v3180, 2
    %v3228 = vsel %vm2782, %v3225, %v3227
    %3229 = vrot.lane.b32.xlu0 %v3201, 126
    %v3230 = vpop.permute.xlu0 %3229
    %3231 = vrot.lane.b32.xlu0 %v3203, 126
    %v3232 = vpop.permute.xlu0 %3231
    %3233 = vrot.lane.b32.xlu0 %v3206, 126
    %v3234 = vpop.permute.xlu0 %3233
    %3235 = vrot.lane.b32.xlu0 %v3208, 126
    %v3236 = vpop.permute.xlu0 %3235
    %3237 = vrot.lane.b32.xlu0 %v3211, 126
    %v3238 = vpop.permute.xlu0 %3237
    %3239 = vrot.lane.b32.xlu0 %v3213, 126
    %v3240 = vpop.permute.xlu0 %3239
    %3241 = vrot.lane.b32.xlu0 %v3216, 126
    %v3242 = vpop.permute.xlu0 %3241
    %3243 = vrot.lane.b32.xlu0 %v3218, 126
    %v3244 = vpop.permute.xlu0 %3243
    %3245 = vrot.lane.b32.xlu0 %v3221, 126
    %v3246 = vpop.permute.xlu0 %3245
    %3247 = vrot.lane.b32.xlu0 %v3223, 126
    %v3248 = vpop.permute.xlu0 %3247
    %3249 = vrot.lane.b32.xlu0 %v3226, 126
    %v3250 = vpop.permute.xlu0 %3249
    %3251 = vrot.lane.b32.xlu0 %v3228, 126
    %v3252 = vpop.permute.xlu0 %3251
    %v3265 = vadd.f32 %v3148, %v3230
    %v3266 = vadd.f32 %v3149, %v3232
    %v3267 = vadd.f32 %v3150, %v3234
    %v3268 = vadd.f32 %v3151, %v3236
    %v3269 = vadd.f32 %v3152, %v3238
    %v3270 = vadd.f32 %v3153, %v3240
    %v3271 = vadd.f32 %v3154, %v3242
    %v3272 = vadd.f32 %v3155, %v3244
    %v3273 = vadd.f32 %v3156, %v3246
    %v3274 = vadd.f32 %v3157, %v3248
    %v3275 = vadd.f32 %v3158, %v3250
    %v3276 = vadd.f32 %v3159, %v3252
    %v3277 = vstv %s3161
    %v3278 = vmul.f32 %v3277, %v190
    %v3279 = vmul.f32 %v3277, %v191
    %v3280 = vmul.f32 %v3277, %v192
    %v3281 = vmul.f32 %v3277, %v193
    %v3282 = vmul.f32 %v3277, %v194
    %v3283 = vmul.f32 %v3277, %v195
    %v3284 = vmul.f32 %v3277, %v196
    %v3285 = vmul.f32 %v3277, %v197
    %v3286 = vmul.f32 %v3277, %v198
    %v3287 = vmul.f32 %v3277, %v199
    %v3288 = vmul.f32 %v3277, %v200
    %v3289 = vmul.f32 %v3277, %v201
    %v3290 = vmul.f32 %v3277, %v202
    %v3291 = vmul.f32 %v3277, %v203
    %v3292 = vmul.f32 %v3277, %v204
    %v3293 = vmul.f32 %v3277, %v205
    %v3294 = vmul.f32 %v3277, %v206
    %v3295 = vmul.f32 %v3277, %v207
    %v3314 = vrot.slane %v3278, 2
    %v3315 = vrot.slane %v3279, 2
    %v3316 = vsel %vm2782, %v3314, %v3315
    %v3317 = vrot.slane %v3280, 2
    %v3318 = vsel %vm2782, %v3315, %v3317
    %v3319 = vrot.slane %v3281, 2
    %v3320 = vrot.slane %v3282, 2
    %v3321 = vsel %vm2782, %v3319, %v3320
    %v3322 = vrot.slane %v3283, 2
    %v3323 = vsel %vm2782, %v3320, %v3322
    %v3324 = vrot.slane %v3284, 2
    %v3325 = vrot.slane %v3285, 2
    %v3326 = vsel %vm2782, %v3324, %v3325
    %v3327 = vrot.slane %v3286, 2
    %v3328 = vsel %vm2782, %v3325, %v3327
    %v3329 = vrot.slane %v3287, 2
    %v3330 = vrot.slane %v3288, 2
    %v3331 = vsel %vm2782, %v3329, %v3330
    %v3332 = vrot.slane %v3289, 2
    %v3333 = vsel %vm2782, %v3330, %v3332
    %v3334 = vrot.slane %v3290, 2
    %v3335 = vrot.slane %v3291, 2
    %v3336 = vsel %vm2782, %v3334, %v3335
    %v3337 = vrot.slane %v3292, 2
    %v3338 = vsel %vm2782, %v3335, %v3337
    %v3339 = vrot.slane %v3293, 2
    %v3340 = vrot.slane %v3294, 2
    %v3341 = vsel %vm2782, %v3339, %v3340
    %v3342 = vrot.slane %v3295, 2
    %v3343 = vsel %vm2782, %v3340, %v3342
    %3344 = vrot.lane.b32.xlu0 %v3316, 126
    %v3345 = vpop.permute.xlu0 %3344
    %3346 = vrot.lane.b32.xlu0 %v3318, 126
    %v3347 = vpop.permute.xlu0 %3346
    %3348 = vrot.lane.b32.xlu0 %v3321, 126
    %v3349 = vpop.permute.xlu0 %3348
    %3350 = vrot.lane.b32.xlu0 %v3323, 126
    %v3351 = vpop.permute.xlu0 %3350
    %3352 = vrot.lane.b32.xlu0 %v3326, 126
    %v3353 = vpop.permute.xlu0 %3352
    %3354 = vrot.lane.b32.xlu0 %v3328, 126
    %v3355 = vpop.permute.xlu0 %3354
    %3356 = vrot.lane.b32.xlu0 %v3331, 126
    %v3357 = vpop.permute.xlu0 %3356
    %3358 = vrot.lane.b32.xlu0 %v3333, 126
    %v3359 = vpop.permute.xlu0 %3358
    %3360 = vrot.lane.b32.xlu0 %v3336, 126
    %v3361 = vpop.permute.xlu0 %3360
    %3362 = vrot.lane.b32.xlu0 %v3338, 126
    %v3363 = vpop.permute.xlu0 %3362
    %3364 = vrot.lane.b32.xlu0 %v3341, 126
    %v3365 = vpop.permute.xlu0 %3364
    %3366 = vrot.lane.b32.xlu0 %v3343, 126
    %v3367 = vpop.permute.xlu0 %3366
    %v3380 = vadd.f32 %v3265, %v3345
    %v3381 = vadd.f32 %v3266, %v3347
    %v3382 = vadd.f32 %v3267, %v3349
    %v3383 = vadd.f32 %v3268, %v3351
    %v3384 = vadd.f32 %v3269, %v3353
    %v3385 = vadd.f32 %v3270, %v3355
    %v3386 = vadd.f32 %v3271, %v3357
    %v3387 = vadd.f32 %v3272, %v3359
    %v3388 = vadd.f32 %v3273, %v3361
    %v3389 = vadd.f32 %v3274, %v3363
    %v3390 = vadd.f32 %v3275, %v3365
    %v3391 = vadd.f32 %v3276, %v3367
    %s3392 = sld [smem:[#allocation2 + $0x11]]
    %s3393 = sld [smem:[#allocation2 + $0x42]]
    %v3394 = vstv %s3392
    %v3395 = vmul.f32 %v3394, %v208
    %v3396 = vmul.f32 %v3394, %v209
    %v3397 = vmul.f32 %v3394, %v210
    %v3398 = vmul.f32 %v3394, %v211
    %v3399 = vmul.f32 %v3394, %v212
    %v3400 = vmul.f32 %v3394, %v213
    %v3401 = vmul.f32 %v3394, %v214
    %v3402 = vmul.f32 %v3394, %v215
    %v3403 = vmul.f32 %v3394, %v216
    %v3404 = vmul.f32 %v3394, %v217
    %v3405 = vmul.f32 %v3394, %v218
    %v3406 = vmul.f32 %v3394, %v219
    %v3407 = vmul.f32 %v3394, %v220
    %v3408 = vmul.f32 %v3394, %v221
    %v3409 = vmul.f32 %v3394, %v222
    %v3410 = vmul.f32 %v3394, %v223
    %v3411 = vmul.f32 %v3394, %v224
    %v3412 = vmul.f32 %v3394, %v225
    %v3431 = vrot.slane %v3395, 2
    %v3432 = vrot.slane %v3396, 2
    %v3433 = vsel %vm2782, %v3431, %v3432
    %v3434 = vrot.slane %v3397, 2
    %v3435 = vsel %vm2782, %v3432, %v3434
    %v3436 = vrot.slane %v3398, 2
    %v3437 = vrot.slane %v3399, 2
    %v3438 = vsel %vm2782, %v3436, %v3437
    %v3439 = vrot.slane %v3400, 2
    %v3440 = vsel %vm2782, %v3437, %v3439
    %v3441 = vrot.slane %v3401, 2
    %v3442 = vrot.slane %v3402, 2
    %v3443 = vsel %vm2782, %v3441, %v3442
    %v3444 = vrot.slane %v3403, 2
    %v3445 = vsel %vm2782, %v3442, %v3444
    %v3446 = vrot.slane %v3404, 2
    %v3447 = vrot.slane %v3405, 2
    %v3448 = vsel %vm2782, %v3446, %v3447
    %v3449 = vrot.slane %v3406, 2
    %v3450 = vsel %vm2782, %v3447, %v3449
    %v3451 = vrot.slane %v3407, 2
    %v3452 = vrot.slane %v3408, 2
    %v3453 = vsel %vm2782, %v3451, %v3452
    %v3454 = vrot.slane %v3409, 2
    %v3455 = vsel %vm2782, %v3452, %v3454
    %v3456 = vrot.slane %v3410, 2
    %v3457 = vrot.slane %v3411, 2
    %v3458 = vsel %vm2782, %v3456, %v3457
    %v3459 = vrot.slane %v3412, 2
    %v3460 = vsel %vm2782, %v3457, %v3459
    %3461 = vrot.lane.b32.xlu0 %v3433, 125
    %v3462 = vpop.permute.xlu0 %3461
    %3463 = vrot.lane.b32.xlu0 %v3435, 125
    %v3464 = vpop.permute.xlu0 %3463
    %3465 = vrot.lane.b32.xlu0 %v3438, 125
    %v3466 = vpop.permute.xlu0 %3465
    %3467 = vrot.lane.b32.xlu0 %v3440, 125
    %v3468 = vpop.permute.xlu0 %3467
    %3469 = vrot.lane.b32.xlu0 %v3443, 125
    %v3470 = vpop.permute.xlu0 %3469
    %3471 = vrot.lane.b32.xlu0 %v3445, 125
    %v3472 = vpop.permute.xlu0 %3471
    %3473 = vrot.lane.b32.xlu0 %v3448, 125
    %v3474 = vpop.permute.xlu0 %3473
    %3475 = vrot.lane.b32.xlu0 %v3450, 125
    %v3476 = vpop.permute.xlu0 %3475
    %3477 = vrot.lane.b32.xlu0 %v3453, 125
    %v3478 = vpop.permute.xlu0 %3477
    %3479 = vrot.lane.b32.xlu0 %v3455, 125
    %v3480 = vpop.permute.xlu0 %3479
    %3481 = vrot.lane.b32.xlu0 %v3458, 125
    %v3482 = vpop.permute.xlu0 %3481
    %3483 = vrot.lane.b32.xlu0 %v3460, 125
    %v3484 = vpop.permute.xlu0 %3483
    %v3497 = vadd.f32 %v3380, %v3462
    %v3498 = vadd.f32 %v3381, %v3464
    %v3499 = vadd.f32 %v3382, %v3466
    %v3500 = vadd.f32 %v3383, %v3468
    %v3501 = vadd.f32 %v3384, %v3470
    %v3502 = vadd.f32 %v3385, %v3472
    %v3503 = vadd.f32 %v3386, %v3474
    %v3504 = vadd.f32 %v3387, %v3476
    %v3505 = vadd.f32 %v3388, %v3478
    %v3506 = vadd.f32 %v3389, %v3480
    %v3507 = vadd.f32 %v3390, %v3482
    %v3508 = vadd.f32 %v3391, %v3484
    %v3509 = vstv %s3393
    %v3510 = vmul.f32 %v3509, %v190
    %v3511 = vmul.f32 %v3509, %v191
    %v3512 = vmul.f32 %v3509, %v192
    %v3513 = vmul.f32 %v3509, %v193
    %v3514 = vmul.f32 %v3509, %v194
    %v3515 = vmul.f32 %v3509, %v195
    %v3516 = vmul.f32 %v3509, %v196
    %v3517 = vmul.f32 %v3509, %v197
    %v3518 = vmul.f32 %v3509, %v198
    %v3519 = vmul.f32 %v3509, %v199
    %v3520 = vmul.f32 %v3509, %v200
    %v3521 = vmul.f32 %v3509, %v201
    %v3522 = vmul.f32 %v3509, %v202
    %v3523 = vmul.f32 %v3509, %v203
    %v3524 = vmul.f32 %v3509, %v204
    %v3525 = vmul.f32 %v3509, %v205
    %v3526 = vmul.f32 %v3509, %v206
    %v3527 = vmul.f32 %v3509, %v207
    %v3546 = vrot.slane %v3510, 2
    %v3547 = vrot.slane %v3511, 2
    %v3548 = vsel %vm2782, %v3546, %v3547
    %v3549 = vrot.slane %v3512, 2
    %v3550 = vsel %vm2782, %v3547, %v3549
    %v3551 = vrot.slane %v3513, 2
    %v3552 = vrot.slane %v3514, 2
    %v3553 = vsel %vm2782, %v3551, %v3552
    %v3554 = vrot.slane %v3515, 2
    %v3555 = vsel %vm2782, %v3552, %v3554
    %v3556 = vrot.slane %v3516, 2
    %v3557 = vrot.slane %v3517, 2
    %v3558 = vsel %vm2782, %v3556, %v3557
    %v3559 = vrot.slane %v3518, 2
    %v3560 = vsel %vm2782, %v3557, %v3559
    %v3561 = vrot.slane %v3519, 2
    %v3562 = vrot.slane %v3520, 2
    %v3563 = vsel %vm2782, %v3561, %v3562
    %v3564 = vrot.slane %v3521, 2
    %v3565 = vsel %vm2782, %v3562, %v3564
    %v3566 = vrot.slane %v3522, 2
    %v3567 = vrot.slane %v3523, 2
    %v3568 = vsel %vm2782, %v3566, %v3567
    %v3569 = vrot.slane %v3524, 2
    %v3570 = vsel %vm2782, %v3567, %v3569
    %v3571 = vrot.slane %v3525, 2
    %v3572 = vrot.slane %v3526, 2
    %v3573 = vsel %vm2782, %v3571, %v3572
    %v3574 = vrot.slane %v3527, 2
    %v3575 = vsel %vm2782, %v3572, %v3574
    %3576 = vrot.lane.b32.xlu0 %v3548, 125
    %v3577 = vpop.permute.xlu0 %3576
    %3578 = vrot.lane.b32.xlu0 %v3550, 125
    %v3579 = vpop.permute.xlu0 %3578
    %3580 = vrot.lane.b32.xlu0 %v3553, 125
    %v3581 = vpop.permute.xlu0 %3580
    %3582 = vrot.lane.b32.xlu0 %v3555, 125
    %v3583 = vpop.permute.xlu0 %3582
    %3584 = vrot.lane.b32.xlu0 %v3558, 125
    %v3585 = vpop.permute.xlu0 %3584
    %3586 = vrot.lane.b32.xlu0 %v3560, 125
    %v3587 = vpop.permute.xlu0 %3586
    %3588 = vrot.lane.b32.xlu0 %v3563, 125
    %v3589 = vpop.permute.xlu0 %3588
    %3590 = vrot.lane.b32.xlu0 %v3565, 125
    %v3591 = vpop.permute.xlu0 %3590
    %3592 = vrot.lane.b32.xlu0 %v3568, 125
    %v3593 = vpop.permute.xlu0 %3592
    %3594 = vrot.lane.b32.xlu0 %v3570, 125
    %v3595 = vpop.permute.xlu0 %3594
    %3596 = vrot.lane.b32.xlu0 %v3573, 125
    %v3597 = vpop.permute.xlu0 %3596
    %3598 = vrot.lane.b32.xlu0 %v3575, 125
    %v3599 = vpop.permute.xlu0 %3598
    %v3612 = vadd.f32 %v3497, %v3577
    %v3613 = vadd.f32 %v3498, %v3579
    %v3614 = vadd.f32 %v3499, %v3581
    %v3615 = vadd.f32 %v3500, %v3583
    %v3616 = vadd.f32 %v3501, %v3585
    %v3617 = vadd.f32 %v3502, %v3587
    %v3618 = vadd.f32 %v3503, %v3589
    %v3619 = vadd.f32 %v3504, %v3591
    %v3620 = vadd.f32 %v3505, %v3593
    %v3621 = vadd.f32 %v3506, %v3595
    %v3622 = vadd.f32 %v3507, %v3597
    %v3623 = vadd.f32 %v3508, %v3599
    %s3624 = sld [smem:[#allocation2 + $0x12]]
    %s3625 = sld [smem:[#allocation2 + $0x43]]
    %v3626 = vstv %s3624
    %v3627 = vmul.f32 %v3626, %v208
    %v3628 = vmul.f32 %v3626, %v209
    %v3629 = vmul.f32 %v3626, %v210
    %v3630 = vmul.f32 %v3626, %v211
    %v3631 = vmul.f32 %v3626, %v212
    %v3632 = vmul.f32 %v3626, %v213
    %v3633 = vmul.f32 %v3626, %v214
    %v3634 = vmul.f32 %v3626, %v215
    %v3635 = vmul.f32 %v3626, %v216
    %v3636 = vmul.f32 %v3626, %v217
    %v3637 = vmul.f32 %v3626, %v218
    %v3638 = vmul.f32 %v3626, %v219
    %v3639 = vmul.f32 %v3626, %v220
    %v3640 = vmul.f32 %v3626, %v221
    %v3641 = vmul.f32 %v3626, %v222
    %v3642 = vmul.f32 %v3626, %v223
    %v3643 = vmul.f32 %v3626, %v224
    %v3644 = vmul.f32 %v3626, %v225
    %v3663 = vrot.slane %v3627, 2
    %v3664 = vrot.slane %v3628, 2
    %v3665 = vsel %vm2782, %v3663, %v3664
    %v3666 = vrot.slane %v3629, 2
    %v3667 = vsel %vm2782, %v3664, %v3666
    %v3668 = vrot.slane %v3630, 2
    %v3669 = vrot.slane %v3631, 2
    %v3670 = vsel %vm2782, %v3668, %v3669
    %v3671 = vrot.slane %v3632, 2
    %v3672 = vsel %vm2782, %v3669, %v3671
    %v3673 = vrot.slane %v3633, 2
    %v3674 = vrot.slane %v3634, 2
    %v3675 = vsel %vm2782, %v3673, %v3674
    %v3676 = vrot.slane %v3635, 2
    %v3677 = vsel %vm2782, %v3674, %v3676
    %v3678 = vrot.slane %v3636, 2
    %v3679 = vrot.slane %v3637, 2
    %v3680 = vsel %vm2782, %v3678, %v3679
    %v3681 = vrot.slane %v3638, 2
    %v3682 = vsel %vm2782, %v3679, %v3681
    %v3683 = vrot.slane %v3639, 2
    %v3684 = vrot.slane %v3640, 2
    %v3685 = vsel %vm2782, %v3683, %v3684
    %v3686 = vrot.slane %v3641, 2
    %v3687 = vsel %vm2782, %v3684, %v3686
    %v3688 = vrot.slane %v3642, 2
    %v3689 = vrot.slane %v3643, 2
    %v3690 = vsel %vm2782, %v3688, %v3689
    %v3691 = vrot.slane %v3644, 2
    %v3692 = vsel %vm2782, %v3689, %v3691
    %3693 = vrot.lane.b32.xlu0 %v3665, 124
    %v3694 = vpop.permute.xlu0 %3693
    %3695 = vrot.lane.b32.xlu0 %v3667, 124
    %v3696 = vpop.permute.xlu0 %3695
    %3697 = vrot.lane.b32.xlu0 %v3670, 124
    %v3698 = vpop.permute.xlu0 %3697
    %3699 = vrot.lane.b32.xlu0 %v3672, 124
    %v3700 = vpop.permute.xlu0 %3699
    %3701 = vrot.lane.b32.xlu0 %v3675, 124
    %v3702 = vpop.permute.xlu0 %3701
    %3703 = vrot.lane.b32.xlu0 %v3677, 124
    %v3704 = vpop.permute.xlu0 %3703
    %3705 = vrot.lane.b32.xlu0 %v3680, 124
    %v3706 = vpop.permute.xlu0 %3705
    %3707 = vrot.lane.b32.xlu0 %v3682, 124
    %v3708 = vpop.permute.xlu0 %3707
    %3709 = vrot.lane.b32.xlu0 %v3685, 124
    %v3710 = vpop.permute.xlu0 %3709
    %3711 = vrot.lane.b32.xlu0 %v3687, 124
    %v3712 = vpop.permute.xlu0 %3711
    %3713 = vrot.lane.b32.xlu0 %v3690, 124
    %v3714 = vpop.permute.xlu0 %3713
    %3715 = vrot.lane.b32.xlu0 %v3692, 124
    %v3716 = vpop.permute.xlu0 %3715
    %v3729 = vadd.f32 %v3612, %v3694
    %v3730 = vadd.f32 %v3613, %v3696
    %v3731 = vadd.f32 %v3614, %v3698
    %v3732 = vadd.f32 %v3615, %v3700
    %v3733 = vadd.f32 %v3616, %v3702
    %v3734 = vadd.f32 %v3617, %v3704
    %v3735 = vadd.f32 %v3618, %v3706
    %v3736 = vadd.f32 %v3619, %v3708
    %v3737 = vadd.f32 %v3620, %v3710
    %v3738 = vadd.f32 %v3621, %v3712
    %v3739 = vadd.f32 %v3622, %v3714
    %v3740 = vadd.f32 %v3623, %v3716
    %v3741 = vstv %s3625
    %v3742 = vmul.f32 %v3741, %v190
    %v3743 = vmul.f32 %v3741, %v191
    %v3744 = vmul.f32 %v3741, %v192
    %v3745 = vmul.f32 %v3741, %v193
    %v3746 = vmul.f32 %v3741, %v194
    %v3747 = vmul.f32 %v3741, %v195
    %v3748 = vmul.f32 %v3741, %v196
    %v3749 = vmul.f32 %v3741, %v197
    %v3750 = vmul.f32 %v3741, %v198
    %v3751 = vmul.f32 %v3741, %v199
    %v3752 = vmul.f32 %v3741, %v200
    %v3753 = vmul.f32 %v3741, %v201
    %v3754 = vmul.f32 %v3741, %v202
    %v3755 = vmul.f32 %v3741, %v203
    %v3756 = vmul.f32 %v3741, %v204
    %v3757 = vmul.f32 %v3741, %v205
    %v3758 = vmul.f32 %v3741, %v206
    %v3759 = vmul.f32 %v3741, %v207
    %v3778 = vrot.slane %v3742, 2
    %v3779 = vrot.slane %v3743, 2
    %v3780 = vsel %vm2782, %v3778, %v3779
    %v3781 = vrot.slane %v3744, 2
    %v3782 = vsel %vm2782, %v3779, %v3781
    %v3783 = vrot.slane %v3745, 2
    %v3784 = vrot.slane %v3746, 2
    %v3785 = vsel %vm2782, %v3783, %v3784
    %v3786 = vrot.slane %v3747, 2
    %v3787 = vsel %vm2782, %v3784, %v3786
    %v3788 = vrot.slane %v3748, 2
    %v3789 = vrot.slane %v3749, 2
    %v3790 = vsel %vm2782, %v3788, %v3789
    %v3791 = vrot.slane %v3750, 2
    %v3792 = vsel %vm2782, %v3789, %v3791
    %v3793 = vrot.slane %v3751, 2
    %v3794 = vrot.slane %v3752, 2
    %v3795 = vsel %vm2782, %v3793, %v3794
    %v3796 = vrot.slane %v3753, 2
    %v3797 = vsel %vm2782, %v3794, %v3796
    %v3798 = vrot.slane %v3754, 2
    %v3799 = vrot.slane %v3755, 2
    %v3800 = vsel %vm2782, %v3798, %v3799
    %v3801 = vrot.slane %v3756, 2
    %v3802 = vsel %vm2782, %v3799, %v3801
    %v3803 = vrot.slane %v3757, 2
    %v3804 = vrot.slane %v3758, 2
    %v3805 = vsel %vm2782, %v3803, %v3804
    %v3806 = vrot.slane %v3759, 2
    %v3807 = vsel %vm2782, %v3804, %v3806
    %3808 = vrot.lane.b32.xlu0 %v3780, 124
    %v3809 = vpop.permute.xlu0 %3808
    %3810 = vrot.lane.b32.xlu0 %v3782, 124
    %v3811 = vpop.permute.xlu0 %3810
    %3812 = vrot.lane.b32.xlu0 %v3785, 124
    %v3813 = vpop.permute.xlu0 %3812
    %3814 = vrot.lane.b32.xlu0 %v3787, 124
    %v3815 = vpop.permute.xlu0 %3814
    %3816 = vrot.lane.b32.xlu0 %v3790, 124
    %v3817 = vpop.permute.xlu0 %3816
    %3818 = vrot.lane.b32.xlu0 %v3792, 124
    %v3819 = vpop.permute.xlu0 %3818
    %3820 = vrot.lane.b32.xlu0 %v3795, 124
    %v3821 = vpop.permute.xlu0 %3820
    %3822 = vrot.lane.b32.xlu0 %v3797, 124
    %v3823 = vpop.permute.xlu0 %3822
    %3824 = vrot.lane.b32.xlu0 %v3800, 124
    %v3825 = vpop.permute.xlu0 %3824
    %3826 = vrot.lane.b32.xlu0 %v3802, 124
    %v3827 = vpop.permute.xlu0 %3826
    %3828 = vrot.lane.b32.xlu0 %v3805, 124
    %v3829 = vpop.permute.xlu0 %3828
    %3830 = vrot.lane.b32.xlu0 %v3807, 124
    %v3831 = vpop.permute.xlu0 %3830
    %v3844 = vadd.f32 %v3729, %v3809
    %v3845 = vadd.f32 %v3730, %v3811
    %v3846 = vadd.f32 %v3731, %v3813
    %v3847 = vadd.f32 %v3732, %v3815
    %v3848 = vadd.f32 %v3733, %v3817
    %v3849 = vadd.f32 %v3734, %v3819
    %v3850 = vadd.f32 %v3735, %v3821
    %v3851 = vadd.f32 %v3736, %v3823
    %v3852 = vadd.f32 %v3737, %v3825
    %v3853 = vadd.f32 %v3738, %v3827
    %v3854 = vadd.f32 %v3739, %v3829
    %v3855 = vadd.f32 %v3740, %v3831
    %s3856 = sld [smem:[#allocation2 + $0x13]]
    %s3857 = sld [smem:[#allocation2 + $0x44]]
    %v3858 = vstv %s3856
    %v3859 = vmul.f32 %v3858, %v208
    %v3860 = vmul.f32 %v3858, %v209
    %v3861 = vmul.f32 %v3858, %v210
    %v3862 = vmul.f32 %v3858, %v211
    %v3863 = vmul.f32 %v3858, %v212
    %v3864 = vmul.f32 %v3858, %v213
    %v3865 = vmul.f32 %v3858, %v214
    %v3866 = vmul.f32 %v3858, %v215
    %v3867 = vmul.f32 %v3858, %v216
    %v3868 = vmul.f32 %v3858, %v217
    %v3869 = vmul.f32 %v3858, %v218
    %v3870 = vmul.f32 %v3858, %v219
    %v3871 = vmul.f32 %v3858, %v220
    %v3872 = vmul.f32 %v3858, %v221
    %v3873 = vmul.f32 %v3858, %v222
    %v3874 = vmul.f32 %v3858, %v223
    %v3875 = vmul.f32 %v3858, %v224
    %v3876 = vmul.f32 %v3858, %v225
    %v3895 = vrot.slane %v3859, 2
    %v3896 = vrot.slane %v3860, 2
    %v3897 = vsel %vm2782, %v3895, %v3896
    %v3898 = vrot.slane %v3861, 2
    %v3899 = vsel %vm2782, %v3896, %v3898
    %v3900 = vrot.slane %v3862, 2
    %v3901 = vrot.slane %v3863, 2
    %v3902 = vsel %vm2782, %v3900, %v3901
    %v3903 = vrot.slane %v3864, 2
    %v3904 = vsel %vm2782, %v3901, %v3903
    %v3905 = vrot.slane %v3865, 2
    %v3906 = vrot.slane %v3866, 2
    %v3907 = vsel %vm2782, %v3905, %v3906
    %v3908 = vrot.slane %v3867, 2
    %v3909 = vsel %vm2782, %v3906, %v3908
    %v3910 = vrot.slane %v3868, 2
    %v3911 = vrot.slane %v3869, 2
    %v3912 = vsel %vm2782, %v3910, %v3911
    %v3913 = vrot.slane %v3870, 2
    %v3914 = vsel %vm2782, %v3911, %v3913
    %v3915 = vrot.slane %v3871, 2
    %v3916 = vrot.slane %v3872, 2
    %v3917 = vsel %vm2782, %v3915, %v3916
    %v3918 = vrot.slane %v3873, 2
    %v3919 = vsel %vm2782, %v3916, %v3918
    %v3920 = vrot.slane %v3874, 2
    %v3921 = vrot.slane %v3875, 2
    %v3922 = vsel %vm2782, %v3920, %v3921
    %v3923 = vrot.slane %v3876, 2
    %v3924 = vsel %vm2782, %v3921, %v3923
    %3925 = vrot.lane.b32.xlu0 %v3897, 123
    %v3926 = vpop.permute.xlu0 %3925
    %3927 = vrot.lane.b32.xlu0 %v3899, 123
    %v3928 = vpop.permute.xlu0 %3927
    %3929 = vrot.lane.b32.xlu0 %v3902, 123
    %v3930 = vpop.permute.xlu0 %3929
    %3931 = vrot.lane.b32.xlu0 %v3904, 123
    %v3932 = vpop.permute.xlu0 %3931
    %3933 = vrot.lane.b32.xlu0 %v3907, 123
    %v3934 = vpop.permute.xlu0 %3933
    %3935 = vrot.lane.b32.xlu0 %v3909, 123
    %v3936 = vpop.permute.xlu0 %3935
    %3937 = vrot.lane.b32.xlu0 %v3912, 123
    %v3938 = vpop.permute.xlu0 %3937
    %3939 = vrot.lane.b32.xlu0 %v3914, 123
    %v3940 = vpop.permute.xlu0 %3939
    %3941 = vrot.lane.b32.xlu0 %v3917, 123
    %v3942 = vpop.permute.xlu0 %3941
    %3943 = vrot.lane.b32.xlu0 %v3919, 123
    %v3944 = vpop.permute.xlu0 %3943
    %3945 = vrot.lane.b32.xlu0 %v3922, 123
    %v3946 = vpop.permute.xlu0 %3945
    %3947 = vrot.lane.b32.xlu0 %v3924, 123
    %v3948 = vpop.permute.xlu0 %3947
    %v3961 = vadd.f32 %v3844, %v3926
    %v3962 = vadd.f32 %v3845, %v3928
    %v3963 = vadd.f32 %v3846, %v3930
    %v3964 = vadd.f32 %v3847, %v3932
    %v3965 = vadd.f32 %v3848, %v3934
    %v3966 = vadd.f32 %v3849, %v3936
    %v3967 = vadd.f32 %v3850, %v3938
    %v3968 = vadd.f32 %v3851, %v3940
    %v3969 = vadd.f32 %v3852, %v3942
    %v3970 = vadd.f32 %v3853, %v3944
    %v3971 = vadd.f32 %v3854, %v3946
    %v3972 = vadd.f32 %v3855, %v3948
    %v3973 = vstv %s3857
    %v3974 = vmul.f32 %v3973, %v190
    %v3975 = vmul.f32 %v3973, %v191
    %v3976 = vmul.f32 %v3973, %v192
    %v3977 = vmul.f32 %v3973, %v193
    %v3978 = vmul.f32 %v3973, %v194
    %v3979 = vmul.f32 %v3973, %v195
    %v3980 = vmul.f32 %v3973, %v196
    %v3981 = vmul.f32 %v3973, %v197
    %v3982 = vmul.f32 %v3973, %v198
    %v3983 = vmul.f32 %v3973, %v199
    %v3984 = vmul.f32 %v3973, %v200
    %v3985 = vmul.f32 %v3973, %v201
    %v3986 = vmul.f32 %v3973, %v202
    %v3987 = vmul.f32 %v3973, %v203
    %v3988 = vmul.f32 %v3973, %v204
    %v3989 = vmul.f32 %v3973, %v205
    %v3990 = vmul.f32 %v3973, %v206
    %v3991 = vmul.f32 %v3973, %v207
    %v4010 = vrot.slane %v3974, 2
    %v4011 = vrot.slane %v3975, 2
    %v4012 = vsel %vm2782, %v4010, %v4011
    %v4013 = vrot.slane %v3976, 2
    %v4014 = vsel %vm2782, %v4011, %v4013
    %v4015 = vrot.slane %v3977, 2
    %v4016 = vrot.slane %v3978, 2
    %v4017 = vsel %vm2782, %v4015, %v4016
    %v4018 = vrot.slane %v3979, 2
    %v4019 = vsel %vm2782, %v4016, %v4018
    %v4020 = vrot.slane %v3980, 2
    %v4021 = vrot.slane %v3981, 2
    %v4022 = vsel %vm2782, %v4020, %v4021
    %v4023 = vrot.slane %v3982, 2
    %v4024 = vsel %vm2782, %v4021, %v4023
    %v4025 = vrot.slane %v3983, 2
    %v4026 = vrot.slane %v3984, 2
    %v4027 = vsel %vm2782, %v4025, %v4026
    %v4028 = vrot.slane %v3985, 2
    %v4029 = vsel %vm2782, %v4026, %v4028
    %v4030 = vrot.slane %v3986, 2
    %v4031 = vrot.slane %v3987, 2
    %v4032 = vsel %vm2782, %v4030, %v4031
    %v4033 = vrot.slane %v3988, 2
    %v4034 = vsel %vm2782, %v4031, %v4033
    %v4035 = vrot.slane %v3989, 2
    %v4036 = vrot.slane %v3990, 2
    %v4037 = vsel %vm2782, %v4035, %v4036
    %v4038 = vrot.slane %v3991, 2
    %v4039 = vsel %vm2782, %v4036, %v4038
    %4040 = vrot.lane.b32.xlu0 %v4012, 123
    %v4041 = vpop.permute.xlu0 %4040
    %4042 = vrot.lane.b32.xlu0 %v4014, 123
    %v4043 = vpop.permute.xlu0 %4042
    %4044 = vrot.lane.b32.xlu0 %v4017, 123
    %v4045 = vpop.permute.xlu0 %4044
    %4046 = vrot.lane.b32.xlu0 %v4019, 123
    %v4047 = vpop.permute.xlu0 %4046
    %4048 = vrot.lane.b32.xlu0 %v4022, 123
    %v4049 = vpop.permute.xlu0 %4048
    %4050 = vrot.lane.b32.xlu0 %v4024, 123
    %v4051 = vpop.permute.xlu0 %4050
    %4052 = vrot.lane.b32.xlu0 %v4027, 123
    %v4053 = vpop.permute.xlu0 %4052
    %4054 = vrot.lane.b32.xlu0 %v4029, 123
    %v4055 = vpop.permute.xlu0 %4054
    %4056 = vrot.lane.b32.xlu0 %v4032, 123
    %v4057 = vpop.permute.xlu0 %4056
    %4058 = vrot.lane.b32.xlu0 %v4034, 123
    %v4059 = vpop.permute.xlu0 %4058
    %4060 = vrot.lane.b32.xlu0 %v4037, 123
    %v4061 = vpop.permute.xlu0 %4060
    %4062 = vrot.lane.b32.xlu0 %v4039, 123
    %v4063 = vpop.permute.xlu0 %4062
    %v4076 = vadd.f32 %v3961, %v4041
    %v4077 = vadd.f32 %v3962, %v4043
    %v4078 = vadd.f32 %v3963, %v4045
    %v4079 = vadd.f32 %v3964, %v4047
    %v4080 = vadd.f32 %v3965, %v4049
    %v4081 = vadd.f32 %v3966, %v4051
    %v4082 = vadd.f32 %v3967, %v4053
    %v4083 = vadd.f32 %v3968, %v4055
    %v4084 = vadd.f32 %v3969, %v4057
    %v4085 = vadd.f32 %v3970, %v4059
    %v4086 = vadd.f32 %v3971, %v4061
    %v4087 = vadd.f32 %v3972, %v4063
    %s4088 = sld [smem:[#allocation2 + $0x14]]
    %s4089 = sld [smem:[#allocation2 + $0x45]]
    %v4090 = vstv %s4088
    %v4091 = vmul.f32 %v4090, %v208
    %v4092 = vmul.f32 %v4090, %v209
    %v4093 = vmul.f32 %v4090, %v210
    %v4094 = vmul.f32 %v4090, %v211
    %v4095 = vmul.f32 %v4090, %v212
    %v4096 = vmul.f32 %v4090, %v213
    %v4097 = vmul.f32 %v4090, %v214
    %v4098 = vmul.f32 %v4090, %v215
    %v4099 = vmul.f32 %v4090, %v216
    %v4100 = vmul.f32 %v4090, %v217
    %v4101 = vmul.f32 %v4090, %v218
    %v4102 = vmul.f32 %v4090, %v219
    %v4103 = vmul.f32 %v4090, %v220
    %v4104 = vmul.f32 %v4090, %v221
    %v4105 = vmul.f32 %v4090, %v222
    %v4106 = vmul.f32 %v4090, %v223
    %v4107 = vmul.f32 %v4090, %v224
    %v4108 = vmul.f32 %v4090, %v225
    %v4127 = vrot.slane %v4091, 2
    %v4128 = vrot.slane %v4092, 2
    %v4129 = vsel %vm2782, %v4127, %v4128
    %v4130 = vrot.slane %v4093, 2
    %v4131 = vsel %vm2782, %v4128, %v4130
    %v4132 = vrot.slane %v4094, 2
    %v4133 = vrot.slane %v4095, 2
    %v4134 = vsel %vm2782, %v4132, %v4133
    %v4135 = vrot.slane %v4096, 2
    %v4136 = vsel %vm2782, %v4133, %v4135
    %v4137 = vrot.slane %v4097, 2
    %v4138 = vrot.slane %v4098, 2
    %v4139 = vsel %vm2782, %v4137, %v4138
    %v4140 = vrot.slane %v4099, 2
    %v4141 = vsel %vm2782, %v4138, %v4140
    %v4142 = vrot.slane %v4100, 2
    %v4143 = vrot.slane %v4101, 2
    %v4144 = vsel %vm2782, %v4142, %v4143
    %v4145 = vrot.slane %v4102, 2
    %v4146 = vsel %vm2782, %v4143, %v4145
    %v4147 = vrot.slane %v4103, 2
    %v4148 = vrot.slane %v4104, 2
    %v4149 = vsel %vm2782, %v4147, %v4148
    %v4150 = vrot.slane %v4105, 2
    %v4151 = vsel %vm2782, %v4148, %v4150
    %v4152 = vrot.slane %v4106, 2
    %v4153 = vrot.slane %v4107, 2
    %v4154 = vsel %vm2782, %v4152, %v4153
    %v4155 = vrot.slane %v4108, 2
    %v4156 = vsel %vm2782, %v4153, %v4155
    %4157 = vrot.lane.b32.xlu0 %v4129, 122
    %v4158 = vpop.permute.xlu0 %4157
    %4159 = vrot.lane.b32.xlu0 %v4131, 122
    %v4160 = vpop.permute.xlu0 %4159
    %4161 = vrot.lane.b32.xlu0 %v4134, 122
    %v4162 = vpop.permute.xlu0 %4161
    %4163 = vrot.lane.b32.xlu0 %v4136, 122
    %v4164 = vpop.permute.xlu0 %4163
    %4165 = vrot.lane.b32.xlu0 %v4139, 122
    %v4166 = vpop.permute.xlu0 %4165
    %4167 = vrot.lane.b32.xlu0 %v4141, 122
    %v4168 = vpop.permute.xlu0 %4167
    %4169 = vrot.lane.b32.xlu0 %v4144, 122
    %v4170 = vpop.permute.xlu0 %4169
    %4171 = vrot.lane.b32.xlu0 %v4146, 122
    %v4172 = vpop.permute.xlu0 %4171
    %4173 = vrot.lane.b32.xlu0 %v4149, 122
    %v4174 = vpop.permute.xlu0 %4173
    %4175 = vrot.lane.b32.xlu0 %v4151, 122
    %v4176 = vpop.permute.xlu0 %4175
    %4177 = vrot.lane.b32.xlu0 %v4154, 122
    %v4178 = vpop.permute.xlu0 %4177
    %4179 = vrot.lane.b32.xlu0 %v4156, 122
    %v4180 = vpop.permute.xlu0 %4179
    %v4193 = vadd.f32 %v4076, %v4158
    %v4194 = vadd.f32 %v4077, %v4160
    %v4195 = vadd.f32 %v4078, %v4162
    %v4196 = vadd.f32 %v4079, %v4164
    %v4197 = vadd.f32 %v4080, %v4166
    %v4198 = vadd.f32 %v4081, %v4168
    %v4199 = vadd.f32 %v4082, %v4170
    %v4200 = vadd.f32 %v4083, %v4172
    %v4201 = vadd.f32 %v4084, %v4174
    %v4202 = vadd.f32 %v4085, %v4176
    %v4203 = vadd.f32 %v4086, %v4178
    %v4204 = vadd.f32 %v4087, %v4180
    %v4205 = vstv %s4089
    %v4206 = vmul.f32 %v4205, %v190
    %v4207 = vmul.f32 %v4205, %v191
    %v4208 = vmul.f32 %v4205, %v192
    %v4209 = vmul.f32 %v4205, %v193
    %v4210 = vmul.f32 %v4205, %v194
    %v4211 = vmul.f32 %v4205, %v195
    %v4212 = vmul.f32 %v4205, %v196
    %v4213 = vmul.f32 %v4205, %v197
    %v4214 = vmul.f32 %v4205, %v198
    %v4215 = vmul.f32 %v4205, %v199
    %v4216 = vmul.f32 %v4205, %v200
    %v4217 = vmul.f32 %v4205, %v201
    %v4218 = vmul.f32 %v4205, %v202
    %v4219 = vmul.f32 %v4205, %v203
    %v4220 = vmul.f32 %v4205, %v204
    %v4221 = vmul.f32 %v4205, %v205
    %v4222 = vmul.f32 %v4205, %v206
    %v4223 = vmul.f32 %v4205, %v207
    %v4242 = vrot.slane %v4206, 2
    %v4243 = vrot.slane %v4207, 2
    %v4244 = vsel %vm2782, %v4242, %v4243
    %v4245 = vrot.slane %v4208, 2
    %v4246 = vsel %vm2782, %v4243, %v4245
    %v4247 = vrot.slane %v4209, 2
    %v4248 = vrot.slane %v4210, 2
    %v4249 = vsel %vm2782, %v4247, %v4248
    %v4250 = vrot.slane %v4211, 2
    %v4251 = vsel %vm2782, %v4248, %v4250
    %v4252 = vrot.slane %v4212, 2
    %v4253 = vrot.slane %v4213, 2
    %v4254 = vsel %vm2782, %v4252, %v4253
    %v4255 = vrot.slane %v4214, 2
    %v4256 = vsel %vm2782, %v4253, %v4255
    %v4257 = vrot.slane %v4215, 2
    %v4258 = vrot.slane %v4216, 2
    %v4259 = vsel %vm2782, %v4257, %v4258
    %v4260 = vrot.slane %v4217, 2
    %v4261 = vsel %vm2782, %v4258, %v4260
    %v4262 = vrot.slane %v4218, 2
    %v4263 = vrot.slane %v4219, 2
    %v4264 = vsel %vm2782, %v4262, %v4263
    %v4265 = vrot.slane %v4220, 2
    %v4266 = vsel %vm2782, %v4263, %v4265
    %v4267 = vrot.slane %v4221, 2
    %v4268 = vrot.slane %v4222, 2
    %v4269 = vsel %vm2782, %v4267, %v4268
    %v4270 = vrot.slane %v4223, 2
    %v4271 = vsel %vm2782, %v4268, %v4270
    %4272 = vrot.lane.b32.xlu0 %v4244, 122
    %v4273 = vpop.permute.xlu0 %4272
    %4274 = vrot.lane.b32.xlu0 %v4246, 122
    %v4275 = vpop.permute.xlu0 %4274
    %4276 = vrot.lane.b32.xlu0 %v4249, 122
    %v4277 = vpop.permute.xlu0 %4276
    %4278 = vrot.lane.b32.xlu0 %v4251, 122
    %v4279 = vpop.permute.xlu0 %4278
    %4280 = vrot.lane.b32.xlu0 %v4254, 122
    %v4281 = vpop.permute.xlu0 %4280
    %4282 = vrot.lane.b32.xlu0 %v4256, 122
    %v4283 = vpop.permute.xlu0 %4282
    %4284 = vrot.lane.b32.xlu0 %v4259, 122
    %v4285 = vpop.permute.xlu0 %4284
    %4286 = vrot.lane.b32.xlu0 %v4261, 122
    %v4287 = vpop.permute.xlu0 %4286
    %4288 = vrot.lane.b32.xlu0 %v4264, 122
    %v4289 = vpop.permute.xlu0 %4288
    %4290 = vrot.lane.b32.xlu0 %v4266, 122
    %v4291 = vpop.permute.xlu0 %4290
    %4292 = vrot.lane.b32.xlu0 %v4269, 122
    %v4293 = vpop.permute.xlu0 %4292
    %4294 = vrot.lane.b32.xlu0 %v4271, 122
    %v4295 = vpop.permute.xlu0 %4294
    %v4308 = vadd.f32 %v4193, %v4273
    %v4309 = vadd.f32 %v4194, %v4275
    %v4310 = vadd.f32 %v4195, %v4277
    %v4311 = vadd.f32 %v4196, %v4279
    %v4312 = vadd.f32 %v4197, %v4281
    %v4313 = vadd.f32 %v4198, %v4283
    %v4314 = vadd.f32 %v4199, %v4285
    %v4315 = vadd.f32 %v4200, %v4287
    %v4316 = vadd.f32 %v4201, %v4289
    %v4317 = vadd.f32 %v4202, %v4291
    %v4318 = vadd.f32 %v4203, %v4293
    %v4319 = vadd.f32 %v4204, %v4295
    %s4320 = sld [smem:[#allocation2 + $0x15]]
    %s4321 = sld [smem:[#allocation2 + $0x46]]
    %v4322 = vstv %s4320
    %v4323 = vmul.f32 %v4322, %v208
    %v4324 = vmul.f32 %v4322, %v209
    %v4325 = vmul.f32 %v4322, %v210
    %v4326 = vmul.f32 %v4322, %v211
    %v4327 = vmul.f32 %v4322, %v212
    %v4328 = vmul.f32 %v4322, %v213
    %v4329 = vmul.f32 %v4322, %v214
    %v4330 = vmul.f32 %v4322, %v215
    %v4331 = vmul.f32 %v4322, %v216
    %v4332 = vmul.f32 %v4322, %v217
    %v4333 = vmul.f32 %v4322, %v218
    %v4334 = vmul.f32 %v4322, %v219
    %v4335 = vmul.f32 %v4322, %v220
    %v4336 = vmul.f32 %v4322, %v221
    %v4337 = vmul.f32 %v4322, %v222
    %v4338 = vmul.f32 %v4322, %v223
    %v4339 = vmul.f32 %v4322, %v224
    %v4340 = vmul.f32 %v4322, %v225
    %vm4359 = vcmask 1044480
    %v4360 = vrot.slane %v4323, 3
    %v4361 = vrot.slane %v4324, 3
    %v4362 = vsel %vm4359, %v4360, %v4361
    %v4363 = vrot.slane %v4325, 3
    %v4364 = vsel %vm4359, %v4361, %v4363
    %v4365 = vrot.slane %v4326, 3
    %v4366 = vrot.slane %v4327, 3
    %v4367 = vsel %vm4359, %v4365, %v4366
    %v4368 = vrot.slane %v4328, 3
    %v4369 = vsel %vm4359, %v4366, %v4368
    %v4370 = vrot.slane %v4329, 3
    %v4371 = vrot.slane %v4330, 3
    %v4372 = vsel %vm4359, %v4370, %v4371
    %v4373 = vrot.slane %v4331, 3
    %v4374 = vsel %vm4359, %v4371, %v4373
    %v4375 = vrot.slane %v4332, 3
    %v4376 = vrot.slane %v4333, 3
    %v4377 = vsel %vm4359, %v4375, %v4376
    %v4378 = vrot.slane %v4334, 3
    %v4379 = vsel %vm4359, %v4376, %v4378
    %v4380 = vrot.slane %v4335, 3
    %v4381 = vrot.slane %v4336, 3
    %v4382 = vsel %vm4359, %v4380, %v4381
    %v4383 = vrot.slane %v4337, 3
    %v4384 = vsel %vm4359, %v4381, %v4383
    %v4385 = vrot.slane %v4338, 3
    %v4386 = vrot.slane %v4339, 3
    %v4387 = vsel %vm4359, %v4385, %v4386
    %v4388 = vrot.slane %v4340, 3
    %v4389 = vsel %vm4359, %v4386, %v4388
    %v4402 = vadd.f32 %v4308, %v4362
    %v4403 = vadd.f32 %v4309, %v4364
    %v4404 = vadd.f32 %v4310, %v4367
    %v4405 = vadd.f32 %v4311, %v4369
    %v4406 = vadd.f32 %v4312, %v4372
    %v4407 = vadd.f32 %v4313, %v4374
    %v4408 = vadd.f32 %v4314, %v4377
    %v4409 = vadd.f32 %v4315, %v4379
    %v4410 = vadd.f32 %v4316, %v4382
    %v4411 = vadd.f32 %v4317, %v4384
    %v4412 = vadd.f32 %v4318, %v4387
    %v4413 = vadd.f32 %v4319, %v4389
    %v4414 = vstv %s4321
    %v4415 = vmul.f32 %v4414, %v190
    %v4416 = vmul.f32 %v4414, %v191
    %v4417 = vmul.f32 %v4414, %v192
    %v4418 = vmul.f32 %v4414, %v193
    %v4419 = vmul.f32 %v4414, %v194
    %v4420 = vmul.f32 %v4414, %v195
    %v4421 = vmul.f32 %v4414, %v196
    %v4422 = vmul.f32 %v4414, %v197
    %v4423 = vmul.f32 %v4414, %v198
    %v4424 = vmul.f32 %v4414, %v199
    %v4425 = vmul.f32 %v4414, %v200
    %v4426 = vmul.f32 %v4414, %v201
    %v4427 = vmul.f32 %v4414, %v202
    %v4428 = vmul.f32 %v4414, %v203
    %v4429 = vmul.f32 %v4414, %v204
    %v4430 = vmul.f32 %v4414, %v205
    %v4431 = vmul.f32 %v4414, %v206
    %v4432 = vmul.f32 %v4414, %v207
    %v4451 = vrot.slane %v4415, 3
    %v4452 = vrot.slane %v4416, 3
    %v4453 = vsel %vm4359, %v4451, %v4452
    %v4454 = vrot.slane %v4417, 3
    %v4455 = vsel %vm4359, %v4452, %v4454
    %v4456 = vrot.slane %v4418, 3
    %v4457 = vrot.slane %v4419, 3
    %v4458 = vsel %vm4359, %v4456, %v4457
    %v4459 = vrot.slane %v4420, 3
    %v4460 = vsel %vm4359, %v4457, %v4459
    %v4461 = vrot.slane %v4421, 3
    %v4462 = vrot.slane %v4422, 3
    %v4463 = vsel %vm4359, %v4461, %v4462
    %v4464 = vrot.slane %v4423, 3
    %v4465 = vsel %vm4359, %v4462, %v4464
    %v4466 = vrot.slane %v4424, 3
    %v4467 = vrot.slane %v4425, 3
    %v4468 = vsel %vm4359, %v4466, %v4467
    %v4469 = vrot.slane %v4426, 3
    %v4470 = vsel %vm4359, %v4467, %v4469
    %v4471 = vrot.slane %v4427, 3
    %v4472 = vrot.slane %v4428, 3
    %v4473 = vsel %vm4359, %v4471, %v4472
    %v4474 = vrot.slane %v4429, 3
    %v4475 = vsel %vm4359, %v4472, %v4474
    %v4476 = vrot.slane %v4430, 3
    %v4477 = vrot.slane %v4431, 3
    %v4478 = vsel %vm4359, %v4476, %v4477
    %v4479 = vrot.slane %v4432, 3
    %v4480 = vsel %vm4359, %v4477, %v4479
    %v4493 = vadd.f32 %v4402, %v4453
    %v4494 = vadd.f32 %v4403, %v4455
    %v4495 = vadd.f32 %v4404, %v4458
    %v4496 = vadd.f32 %v4405, %v4460
    %v4497 = vadd.f32 %v4406, %v4463
    %v4498 = vadd.f32 %v4407, %v4465
    %v4499 = vadd.f32 %v4408, %v4468
    %v4500 = vadd.f32 %v4409, %v4470
    %v4501 = vadd.f32 %v4410, %v4473
    %v4502 = vadd.f32 %v4411, %v4475
    %v4503 = vadd.f32 %v4412, %v4478
    %v4504 = vadd.f32 %v4413, %v4480
    %s4505 = sld [smem:[#allocation2 + $0x16]]
    %s4506 = sld [smem:[#allocation2 + $0x47]]
    %v4507 = vstv %s4505
    %v4508 = vmul.f32 %v4507, %v208
    %v4509 = vmul.f32 %v4507, %v209
    %v4510 = vmul.f32 %v4507, %v210
    %v4511 = vmul.f32 %v4507, %v211
    %v4512 = vmul.f32 %v4507, %v212
    %v4513 = vmul.f32 %v4507, %v213
    %v4514 = vmul.f32 %v4507, %v214
    %v4515 = vmul.f32 %v4507, %v215
    %v4516 = vmul.f32 %v4507, %v216
    %v4517 = vmul.f32 %v4507, %v217
    %v4518 = vmul.f32 %v4507, %v218
    %v4519 = vmul.f32 %v4507, %v219
    %v4520 = vmul.f32 %v4507, %v220
    %v4521 = vmul.f32 %v4507, %v221
    %v4522 = vmul.f32 %v4507, %v222
    %v4523 = vmul.f32 %v4507, %v223
    %v4524 = vmul.f32 %v4507, %v224
    %v4525 = vmul.f32 %v4507, %v225
    %v4544 = vrot.slane %v4508, 3
    %v4545 = vrot.slane %v4509, 3
    %v4546 = vsel %vm4359, %v4544, %v4545
    %v4547 = vrot.slane %v4510, 3
    %v4548 = vsel %vm4359, %v4545, %v4547
    %v4549 = vrot.slane %v4511, 3
    %v4550 = vrot.slane %v4512, 3
    %v4551 = vsel %vm4359, %v4549, %v4550
    %v4552 = vrot.slane %v4513, 3
    %v4553 = vsel %vm4359, %v4550, %v4552
    %v4554 = vrot.slane %v4514, 3
    %v4555 = vrot.slane %v4515, 3
    %v4556 = vsel %vm4359, %v4554, %v4555
    %v4557 = vrot.slane %v4516, 3
    %v4558 = vsel %vm4359, %v4555, %v4557
    %v4559 = vrot.slane %v4517, 3
    %v4560 = vrot.slane %v4518, 3
    %v4561 = vsel %vm4359, %v4559, %v4560
    %v4562 = vrot.slane %v4519, 3
    %v4563 = vsel %vm4359, %v4560, %v4562
    %v4564 = vrot.slane %v4520, 3
    %v4565 = vrot.slane %v4521, 3
    %v4566 = vsel %vm4359, %v4564, %v4565
    %v4567 = vrot.slane %v4522, 3
    %v4568 = vsel %vm4359, %v4565, %v4567
    %v4569 = vrot.slane %v4523, 3
    %v4570 = vrot.slane %v4524, 3
    %v4571 = vsel %vm4359, %v4569, %v4570
    %v4572 = vrot.slane %v4525, 3
    %v4573 = vsel %vm4359, %v4570, %v4572
    %4574 = vrot.lane.b32.xlu0 %v4546, 127
    %v4575 = vpop.permute.xlu0 %4574
    %4576 = vrot.lane.b32.xlu0 %v4548, 127
    %v4577 = vpop.permute.xlu0 %4576
    %4578 = vrot.lane.b32.xlu0 %v4551, 127
    %v4579 = vpop.permute.xlu0 %4578
    %4580 = vrot.lane.b32.xlu0 %v4553, 127
    %v4581 = vpop.permute.xlu0 %4580
    %4582 = vrot.lane.b32.xlu0 %v4556, 127
    %v4583 = vpop.permute.xlu0 %4582
    %4584 = vrot.lane.b32.xlu0 %v4558, 127
    %v4585 = vpop.permute.xlu0 %4584
    %4586 = vrot.lane.b32.xlu0 %v4561, 127
    %v4587 = vpop.permute.xlu0 %4586
    %4588 = vrot.lane.b32.xlu0 %v4563, 127
    %v4589 = vpop.permute.xlu0 %4588
    %4590 = vrot.lane.b32.xlu0 %v4566, 127
    %v4591 = vpop.permute.xlu0 %4590
    %4592 = vrot.lane.b32.xlu0 %v4568, 127
    %v4593 = vpop.permute.xlu0 %4592
    %4594 = vrot.lane.b32.xlu0 %v4571, 127
    %v4595 = vpop.permute.xlu0 %4594
    %4596 = vrot.lane.b32.xlu0 %v4573, 127
    %v4597 = vpop.permute.xlu0 %4596
    %v4610 = vadd.f32 %v4493, %v4575
    %v4611 = vadd.f32 %v4494, %v4577
    %v4612 = vadd.f32 %v4495, %v4579
    %v4613 = vadd.f32 %v4496, %v4581
    %v4614 = vadd.f32 %v4497, %v4583
    %v4615 = vadd.f32 %v4498, %v4585
    %v4616 = vadd.f32 %v4499, %v4587
    %v4617 = vadd.f32 %v4500, %v4589
    %v4618 = vadd.f32 %v4501, %v4591
    %v4619 = vadd.f32 %v4502, %v4593
    %v4620 = vadd.f32 %v4503, %v4595
    %v4621 = vadd.f32 %v4504, %v4597
    %v4622 = vstv %s4506
    %v4623 = vmul.f32 %v4622, %v190
    %v4624 = vmul.f32 %v4622, %v191
    %v4625 = vmul.f32 %v4622, %v192
    %v4626 = vmul.f32 %v4622, %v193
    %v4627 = vmul.f32 %v4622, %v194
    %v4628 = vmul.f32 %v4622, %v195
    %v4629 = vmul.f32 %v4622, %v196
    %v4630 = vmul.f32 %v4622, %v197
    %v4631 = vmul.f32 %v4622, %v198
    %v4632 = vmul.f32 %v4622, %v199
    %v4633 = vmul.f32 %v4622, %v200
    %v4634 = vmul.f32 %v4622, %v201
    %v4635 = vmul.f32 %v4622, %v202
    %v4636 = vmul.f32 %v4622, %v203
    %v4637 = vmul.f32 %v4622, %v204
    %v4638 = vmul.f32 %v4622, %v205
    %v4639 = vmul.f32 %v4622, %v206
    %v4640 = vmul.f32 %v4622, %v207
    %v4659 = vrot.slane %v4623, 3
    %v4660 = vrot.slane %v4624, 3
    %v4661 = vsel %vm4359, %v4659, %v4660
    %v4662 = vrot.slane %v4625, 3
    %v4663 = vsel %vm4359, %v4660, %v4662
    %v4664 = vrot.slane %v4626, 3
    %v4665 = vrot.slane %v4627, 3
    %v4666 = vsel %vm4359, %v4664, %v4665
    %v4667 = vrot.slane %v4628, 3
    %v4668 = vsel %vm4359, %v4665, %v4667
    %v4669 = vrot.slane %v4629, 3
    %v4670 = vrot.slane %v4630, 3
    %v4671 = vsel %vm4359, %v4669, %v4670
    %v4672 = vrot.slane %v4631, 3
    %v4673 = vsel %vm4359, %v4670, %v4672
    %v4674 = vrot.slane %v4632, 3
    %v4675 = vrot.slane %v4633, 3
    %v4676 = vsel %vm4359, %v4674, %v4675
    %v4677 = vrot.slane %v4634, 3
    %v4678 = vsel %vm4359, %v4675, %v4677
    %v4679 = vrot.slane %v4635, 3
    %v4680 = vrot.slane %v4636, 3
    %v4681 = vsel %vm4359, %v4679, %v4680
    %v4682 = vrot.slane %v4637, 3
    %v4683 = vsel %vm4359, %v4680, %v4682
    %v4684 = vrot.slane %v4638, 3
    %v4685 = vrot.slane %v4639, 3
    %v4686 = vsel %vm4359, %v4684, %v4685
    %v4687 = vrot.slane %v4640, 3
    %v4688 = vsel %vm4359, %v4685, %v4687
    %4689 = vrot.lane.b32.xlu0 %v4661, 127
    %v4690 = vpop.permute.xlu0 %4689
    %4691 = vrot.lane.b32.xlu0 %v4663, 127
    %v4692 = vpop.permute.xlu0 %4691
    %4693 = vrot.lane.b32.xlu0 %v4666, 127
    %v4694 = vpop.permute.xlu0 %4693
    %4695 = vrot.lane.b32.xlu0 %v4668, 127
    %v4696 = vpop.permute.xlu0 %4695
    %4697 = vrot.lane.b32.xlu0 %v4671, 127
    %v4698 = vpop.permute.xlu0 %4697
    %4699 = vrot.lane.b32.xlu0 %v4673, 127
    %v4700 = vpop.permute.xlu0 %4699
    %4701 = vrot.lane.b32.xlu0 %v4676, 127
    %v4702 = vpop.permute.xlu0 %4701
    %4703 = vrot.lane.b32.xlu0 %v4678, 127
    %v4704 = vpop.permute.xlu0 %4703
    %4705 = vrot.lane.b32.xlu0 %v4681, 127
    %v4706 = vpop.permute.xlu0 %4705
    %4707 = vrot.lane.b32.xlu0 %v4683, 127
    %v4708 = vpop.permute.xlu0 %4707
    %4709 = vrot.lane.b32.xlu0 %v4686, 127
    %v4710 = vpop.permute.xlu0 %4709
    %4711 = vrot.lane.b32.xlu0 %v4688, 127
    %v4712 = vpop.permute.xlu0 %4711
    %v4725 = vadd.f32 %v4610, %v4690
    %v4726 = vadd.f32 %v4611, %v4692
    %v4727 = vadd.f32 %v4612, %v4694
    %v4728 = vadd.f32 %v4613, %v4696
    %v4729 = vadd.f32 %v4614, %v4698
    %v4730 = vadd.f32 %v4615, %v4700
    %v4731 = vadd.f32 %v4616, %v4702
    %v4732 = vadd.f32 %v4617, %v4704
    %v4733 = vadd.f32 %v4618, %v4706
    %v4734 = vadd.f32 %v4619, %v4708
    %v4735 = vadd.f32 %v4620, %v4710
    %v4736 = vadd.f32 %v4621, %v4712
    %s4737 = sld [smem:[#allocation2 + $0x17]]
    %s4738 = sld [smem:[#allocation2 + $0x48]]
    %v4739 = vstv %s4737
    %v4740 = vmul.f32 %v4739, %v208
    %v4741 = vmul.f32 %v4739, %v209
    %v4742 = vmul.f32 %v4739, %v210
    %v4743 = vmul.f32 %v4739, %v211
    %v4744 = vmul.f32 %v4739, %v212
    %v4745 = vmul.f32 %v4739, %v213
    %v4746 = vmul.f32 %v4739, %v214
    %v4747 = vmul.f32 %v4739, %v215
    %v4748 = vmul.f32 %v4739, %v216
    %v4749 = vmul.f32 %v4739, %v217
    %v4750 = vmul.f32 %v4739, %v218
    %v4751 = vmul.f32 %v4739, %v219
    %v4752 = vmul.f32 %v4739, %v220
    %v4753 = vmul.f32 %v4739, %v221
    %v4754 = vmul.f32 %v4739, %v222
    %v4755 = vmul.f32 %v4739, %v223
    %v4756 = vmul.f32 %v4739, %v224
    %v4757 = vmul.f32 %v4739, %v225
    %v4776 = vrot.slane %v4740, 3
    %v4777 = vrot.slane %v4741, 3
    %v4778 = vsel %vm4359, %v4776, %v4777
    %v4779 = vrot.slane %v4742, 3
    %v4780 = vsel %vm4359, %v4777, %v4779
    %v4781 = vrot.slane %v4743, 3
    %v4782 = vrot.slane %v4744, 3
    %v4783 = vsel %vm4359, %v4781, %v4782
    %v4784 = vrot.slane %v4745, 3
    %v4785 = vsel %vm4359, %v4782, %v4784
    %v4786 = vrot.slane %v4746, 3
    %v4787 = vrot.slane %v4747, 3
    %v4788 = vsel %vm4359, %v4786, %v4787
    %v4789 = vrot.slane %v4748, 3
    %v4790 = vsel %vm4359, %v4787, %v4789
    %v4791 = vrot.slane %v4749, 3
    %v4792 = vrot.slane %v4750, 3
    %v4793 = vsel %vm4359, %v4791, %v4792
    %v4794 = vrot.slane %v4751, 3
    %v4795 = vsel %vm4359, %v4792, %v4794
    %v4796 = vrot.slane %v4752, 3
    %v4797 = vrot.slane %v4753, 3
    %v4798 = vsel %vm4359, %v4796, %v4797
    %v4799 = vrot.slane %v4754, 3
    %v4800 = vsel %vm4359, %v4797, %v4799
    %v4801 = vrot.slane %v4755, 3
    %v4802 = vrot.slane %v4756, 3
    %v4803 = vsel %vm4359, %v4801, %v4802
    %v4804 = vrot.slane %v4757, 3
    %v4805 = vsel %vm4359, %v4802, %v4804
    %4806 = vrot.lane.b32.xlu0 %v4778, 126
    %v4807 = vpop.permute.xlu0 %4806
    %4808 = vrot.lane.b32.xlu0 %v4780, 126
    %v4809 = vpop.permute.xlu0 %4808
    %4810 = vrot.lane.b32.xlu0 %v4783, 126
    %v4811 = vpop.permute.xlu0 %4810
    %4812 = vrot.lane.b32.xlu0 %v4785, 126
    %v4813 = vpop.permute.xlu0 %4812
    %4814 = vrot.lane.b32.xlu0 %v4788, 126
    %v4815 = vpop.permute.xlu0 %4814
    %4816 = vrot.lane.b32.xlu0 %v4790, 126
    %v4817 = vpop.permute.xlu0 %4816
    %4818 = vrot.lane.b32.xlu0 %v4793, 126
    %v4819 = vpop.permute.xlu0 %4818
    %4820 = vrot.lane.b32.xlu0 %v4795, 126
    %v4821 = vpop.permute.xlu0 %4820
    %4822 = vrot.lane.b32.xlu0 %v4798, 126
    %v4823 = vpop.permute.xlu0 %4822
    %4824 = vrot.lane.b32.xlu0 %v4800, 126
    %v4825 = vpop.permute.xlu0 %4824
    %4826 = vrot.lane.b32.xlu0 %v4803, 126
    %v4827 = vpop.permute.xlu0 %4826
    %4828 = vrot.lane.b32.xlu0 %v4805, 126
    %v4829 = vpop.permute.xlu0 %4828
    %v4842 = vadd.f32 %v4725, %v4807
    %v4843 = vadd.f32 %v4726, %v4809
    %v4844 = vadd.f32 %v4727, %v4811
    %v4845 = vadd.f32 %v4728, %v4813
    %v4846 = vadd.f32 %v4729, %v4815
    %v4847 = vadd.f32 %v4730, %v4817
    %v4848 = vadd.f32 %v4731, %v4819
    %v4849 = vadd.f32 %v4732, %v4821
    %v4850 = vadd.f32 %v4733, %v4823
    %v4851 = vadd.f32 %v4734, %v4825
    %v4852 = vadd.f32 %v4735, %v4827
    %v4853 = vadd.f32 %v4736, %v4829
    %v4854 = vstv %s4738
    %v4855 = vmul.f32 %v4854, %v190
    %v4856 = vmul.f32 %v4854, %v191
    %v4857 = vmul.f32 %v4854, %v192
    %v4858 = vmul.f32 %v4854, %v193
    %v4859 = vmul.f32 %v4854, %v194
    %v4860 = vmul.f32 %v4854, %v195
    %v4861 = vmul.f32 %v4854, %v196
    %v4862 = vmul.f32 %v4854, %v197
    %v4863 = vmul.f32 %v4854, %v198
    %v4864 = vmul.f32 %v4854, %v199
    %v4865 = vmul.f32 %v4854, %v200
    %v4866 = vmul.f32 %v4854, %v201
    %v4867 = vmul.f32 %v4854, %v202
    %v4868 = vmul.f32 %v4854, %v203
    %v4869 = vmul.f32 %v4854, %v204
    %v4870 = vmul.f32 %v4854, %v205
    %v4871 = vmul.f32 %v4854, %v206
    %v4872 = vmul.f32 %v4854, %v207
    %v4891 = vrot.slane %v4855, 3
    %v4892 = vrot.slane %v4856, 3
    %v4893 = vsel %vm4359, %v4891, %v4892
    %v4894 = vrot.slane %v4857, 3
    %v4895 = vsel %vm4359, %v4892, %v4894
    %v4896 = vrot.slane %v4858, 3
    %v4897 = vrot.slane %v4859, 3
    %v4898 = vsel %vm4359, %v4896, %v4897
    %v4899 = vrot.slane %v4860, 3
    %v4900 = vsel %vm4359, %v4897, %v4899
    %v4901 = vrot.slane %v4861, 3
    %v4902 = vrot.slane %v4862, 3
    %v4903 = vsel %vm4359, %v4901, %v4902
    %v4904 = vrot.slane %v4863, 3
    %v4905 = vsel %vm4359, %v4902, %v4904
    %v4906 = vrot.slane %v4864, 3
    %v4907 = vrot.slane %v4865, 3
    %v4908 = vsel %vm4359, %v4906, %v4907
    %v4909 = vrot.slane %v4866, 3
    %v4910 = vsel %vm4359, %v4907, %v4909
    %v4911 = vrot.slane %v4867, 3
    %v4912 = vrot.slane %v4868, 3
    %v4913 = vsel %vm4359, %v4911, %v4912
    %v4914 = vrot.slane %v4869, 3
    %v4915 = vsel %vm4359, %v4912, %v4914
    %v4916 = vrot.slane %v4870, 3
    %v4917 = vrot.slane %v4871, 3
    %v4918 = vsel %vm4359, %v4916, %v4917
    %v4919 = vrot.slane %v4872, 3
    %v4920 = vsel %vm4359, %v4917, %v4919
    %4921 = vrot.lane.b32.xlu0 %v4893, 126
    %v4922 = vpop.permute.xlu0 %4921
    %4923 = vrot.lane.b32.xlu0 %v4895, 126
    %v4924 = vpop.permute.xlu0 %4923
    %4925 = vrot.lane.b32.xlu0 %v4898, 126
    %v4926 = vpop.permute.xlu0 %4925
    %4927 = vrot.lane.b32.xlu0 %v4900, 126
    %v4928 = vpop.permute.xlu0 %4927
    %4929 = vrot.lane.b32.xlu0 %v4903, 126
    %v4930 = vpop.permute.xlu0 %4929
    %4931 = vrot.lane.b32.xlu0 %v4905, 126
    %v4932 = vpop.permute.xlu0 %4931
    %4933 = vrot.lane.b32.xlu0 %v4908, 126
    %v4934 = vpop.permute.xlu0 %4933
    %4935 = vrot.lane.b32.xlu0 %v4910, 126
    %v4936 = vpop.permute.xlu0 %4935
    %4937 = vrot.lane.b32.xlu0 %v4913, 126
    %v4938 = vpop.permute.xlu0 %4937
    %4939 = vrot.lane.b32.xlu0 %v4915, 126
    %v4940 = vpop.permute.xlu0 %4939
    %4941 = vrot.lane.b32.xlu0 %v4918, 126
    %v4942 = vpop.permute.xlu0 %4941
    %4943 = vrot.lane.b32.xlu0 %v4920, 126
    %v4944 = vpop.permute.xlu0 %4943
    %v4957 = vadd.f32 %v4842, %v4922
    %v4958 = vadd.f32 %v4843, %v4924
    %v4959 = vadd.f32 %v4844, %v4926
    %v4960 = vadd.f32 %v4845, %v4928
    %v4961 = vadd.f32 %v4846, %v4930
    %v4962 = vadd.f32 %v4847, %v4932
    %v4963 = vadd.f32 %v4848, %v4934
    %v4964 = vadd.f32 %v4849, %v4936
    %v4965 = vadd.f32 %v4850, %v4938
    %v4966 = vadd.f32 %v4851, %v4940
    %v4967 = vadd.f32 %v4852, %v4942
    %v4968 = vadd.f32 %v4853, %v4944
    %s4969 = sld [smem:[#allocation2 + $0x18]]
    %s4970 = sld [smem:[#allocation2 + $0x49]]
    %v4971 = vstv %s4969
    %v4972 = vmul.f32 %v4971, %v208
    %v4973 = vmul.f32 %v4971, %v209
    %v4974 = vmul.f32 %v4971, %v210
    %v4975 = vmul.f32 %v4971, %v211
    %v4976 = vmul.f32 %v4971, %v212
    %v4977 = vmul.f32 %v4971, %v213
    %v4978 = vmul.f32 %v4971, %v214
    %v4979 = vmul.f32 %v4971, %v215
    %v4980 = vmul.f32 %v4971, %v216
    %v4981 = vmul.f32 %v4971, %v217
    %v4982 = vmul.f32 %v4971, %v218
    %v4983 = vmul.f32 %v4971, %v219
    %v4984 = vmul.f32 %v4971, %v220
    %v4985 = vmul.f32 %v4971, %v221
    %v4986 = vmul.f32 %v4971, %v222
    %v4987 = vmul.f32 %v4971, %v223
    %v4988 = vmul.f32 %v4971, %v224
    %v4989 = vmul.f32 %v4971, %v225
    %v5008 = vrot.slane %v4972, 3
    %v5009 = vrot.slane %v4973, 3
    %v5010 = vsel %vm4359, %v5008, %v5009
    %v5011 = vrot.slane %v4974, 3
    %v5012 = vsel %vm4359, %v5009, %v5011
    %v5013 = vrot.slane %v4975, 3
    %v5014 = vrot.slane %v4976, 3
    %v5015 = vsel %vm4359, %v5013, %v5014
    %v5016 = vrot.slane %v4977, 3
    %v5017 = vsel %vm4359, %v5014, %v5016
    %v5018 = vrot.slane %v4978, 3
    %v5019 = vrot.slane %v4979, 3
    %v5020 = vsel %vm4359, %v5018, %v5019
    %v5021 = vrot.slane %v4980, 3
    %v5022 = vsel %vm4359, %v5019, %v5021
    %v5023 = vrot.slane %v4981, 3
    %v5024 = vrot.slane %v4982, 3
    %v5025 = vsel %vm4359, %v5023, %v5024
    %v5026 = vrot.slane %v4983, 3
    %v5027 = vsel %vm4359, %v5024, %v5026
    %v5028 = vrot.slane %v4984, 3
    %v5029 = vrot.slane %v4985, 3
    %v5030 = vsel %vm4359, %v5028, %v5029
    %v5031 = vrot.slane %v4986, 3
    %v5032 = vsel %vm4359, %v5029, %v5031
    %v5033 = vrot.slane %v4987, 3
    %v5034 = vrot.slane %v4988, 3
    %v5035 = vsel %vm4359, %v5033, %v5034
    %v5036 = vrot.slane %v4989, 3
    %v5037 = vsel %vm4359, %v5034, %v5036
    %5038 = vrot.lane.b32.xlu0 %v5010, 125
    %v5039 = vpop.permute.xlu0 %5038
    %5040 = vrot.lane.b32.xlu0 %v5012, 125
    %v5041 = vpop.permute.xlu0 %5040
    %5042 = vrot.lane.b32.xlu0 %v5015, 125
    %v5043 = vpop.permute.xlu0 %5042
    %5044 = vrot.lane.b32.xlu0 %v5017, 125
    %v5045 = vpop.permute.xlu0 %5044
    %5046 = vrot.lane.b32.xlu0 %v5020, 125
    %v5047 = vpop.permute.xlu0 %5046
    %5048 = vrot.lane.b32.xlu0 %v5022, 125
    %v5049 = vpop.permute.xlu0 %5048
    %5050 = vrot.lane.b32.xlu0 %v5025, 125
    %v5051 = vpop.permute.xlu0 %5050
    %5052 = vrot.lane.b32.xlu0 %v5027, 125
    %v5053 = vpop.permute.xlu0 %5052
    %5054 = vrot.lane.b32.xlu0 %v5030, 125
    %v5055 = vpop.permute.xlu0 %5054
    %5056 = vrot.lane.b32.xlu0 %v5032, 125
    %v5057 = vpop.permute.xlu0 %5056
    %5058 = vrot.lane.b32.xlu0 %v5035, 125
    %v5059 = vpop.permute.xlu0 %5058
    %5060 = vrot.lane.b32.xlu0 %v5037, 125
    %v5061 = vpop.permute.xlu0 %5060
    %v5074 = vadd.f32 %v4957, %v5039
    %v5075 = vadd.f32 %v4958, %v5041
    %v5076 = vadd.f32 %v4959, %v5043
    %v5077 = vadd.f32 %v4960, %v5045
    %v5078 = vadd.f32 %v4961, %v5047
    %v5079 = vadd.f32 %v4962, %v5049
    %v5080 = vadd.f32 %v4963, %v5051
    %v5081 = vadd.f32 %v4964, %v5053
    %v5082 = vadd.f32 %v4965, %v5055
    %v5083 = vadd.f32 %v4966, %v5057
    %v5084 = vadd.f32 %v4967, %v5059
    %v5085 = vadd.f32 %v4968, %v5061
    %v5086 = vstv %s4970
    %v5087 = vmul.f32 %v5086, %v190
    %v5088 = vmul.f32 %v5086, %v191
    %v5089 = vmul.f32 %v5086, %v192
    %v5090 = vmul.f32 %v5086, %v193
    %v5091 = vmul.f32 %v5086, %v194
    %v5092 = vmul.f32 %v5086, %v195
    %v5093 = vmul.f32 %v5086, %v196
    %v5094 = vmul.f32 %v5086, %v197
    %v5095 = vmul.f32 %v5086, %v198
    %v5096 = vmul.f32 %v5086, %v199
    %v5097 = vmul.f32 %v5086, %v200
    %v5098 = vmul.f32 %v5086, %v201
    %v5099 = vmul.f32 %v5086, %v202
    %v5100 = vmul.f32 %v5086, %v203
    %v5101 = vmul.f32 %v5086, %v204
    %v5102 = vmul.f32 %v5086, %v205
    %v5103 = vmul.f32 %v5086, %v206
    %v5104 = vmul.f32 %v5086, %v207
    %v5123 = vrot.slane %v5087, 3
    %v5124 = vrot.slane %v5088, 3
    %v5125 = vsel %vm4359, %v5123, %v5124
    %v5126 = vrot.slane %v5089, 3
    %v5127 = vsel %vm4359, %v5124, %v5126
    %v5128 = vrot.slane %v5090, 3
    %v5129 = vrot.slane %v5091, 3
    %v5130 = vsel %vm4359, %v5128, %v5129
    %v5131 = vrot.slane %v5092, 3
    %v5132 = vsel %vm4359, %v5129, %v5131
    %v5133 = vrot.slane %v5093, 3
    %v5134 = vrot.slane %v5094, 3
    %v5135 = vsel %vm4359, %v5133, %v5134
    %v5136 = vrot.slane %v5095, 3
    %v5137 = vsel %vm4359, %v5134, %v5136
    %v5138 = vrot.slane %v5096, 3
    %v5139 = vrot.slane %v5097, 3
    %v5140 = vsel %vm4359, %v5138, %v5139
    %v5141 = vrot.slane %v5098, 3
    %v5142 = vsel %vm4359, %v5139, %v5141
    %v5143 = vrot.slane %v5099, 3
    %v5144 = vrot.slane %v5100, 3
    %v5145 = vsel %vm4359, %v5143, %v5144
    %v5146 = vrot.slane %v5101, 3
    %v5147 = vsel %vm4359, %v5144, %v5146
    %v5148 = vrot.slane %v5102, 3
    %v5149 = vrot.slane %v5103, 3
    %v5150 = vsel %vm4359, %v5148, %v5149
    %v5151 = vrot.slane %v5104, 3
    %v5152 = vsel %vm4359, %v5149, %v5151
    %5153 = vrot.lane.b32.xlu0 %v5125, 125
    %v5154 = vpop.permute.xlu0 %5153
    %5155 = vrot.lane.b32.xlu0 %v5127, 125
    %v5156 = vpop.permute.xlu0 %5155
    %5157 = vrot.lane.b32.xlu0 %v5130, 125
    %v5158 = vpop.permute.xlu0 %5157
    %5159 = vrot.lane.b32.xlu0 %v5132, 125
    %v5160 = vpop.permute.xlu0 %5159
    %5161 = vrot.lane.b32.xlu0 %v5135, 125
    %v5162 = vpop.permute.xlu0 %5161
    %5163 = vrot.lane.b32.xlu0 %v5137, 125
    %v5164 = vpop.permute.xlu0 %5163
    %5165 = vrot.lane.b32.xlu0 %v5140, 125
    %v5166 = vpop.permute.xlu0 %5165
    %5167 = vrot.lane.b32.xlu0 %v5142, 125
    %v5168 = vpop.permute.xlu0 %5167
    %5169 = vrot.lane.b32.xlu0 %v5145, 125
    %v5170 = vpop.permute.xlu0 %5169
    %5171 = vrot.lane.b32.xlu0 %v5147, 125
    %v5172 = vpop.permute.xlu0 %5171
    %5173 = vrot.lane.b32.xlu0 %v5150, 125
    %v5174 = vpop.permute.xlu0 %5173
    %5175 = vrot.lane.b32.xlu0 %v5152, 125
    %v5176 = vpop.permute.xlu0 %5175
    %v5189 = vadd.f32 %v5074, %v5154
    %v5190 = vadd.f32 %v5075, %v5156
    %v5191 = vadd.f32 %v5076, %v5158
    %v5192 = vadd.f32 %v5077, %v5160
    %v5193 = vadd.f32 %v5078, %v5162
    %v5194 = vadd.f32 %v5079, %v5164
    %v5195 = vadd.f32 %v5080, %v5166
    %v5196 = vadd.f32 %v5081, %v5168
    %v5197 = vadd.f32 %v5082, %v5170
    %v5198 = vadd.f32 %v5083, %v5172
    %v5199 = vadd.f32 %v5084, %v5174
    %v5200 = vadd.f32 %v5085, %v5176
    %s5201 = sld [smem:[#allocation2 + $0x19]]
    %s5202 = sld [smem:[#allocation2 + $0x4a]]
    %v5203 = vstv %s5201
    %v5204 = vmul.f32 %v5203, %v208
    %v5205 = vmul.f32 %v5203, %v209
    %v5206 = vmul.f32 %v5203, %v210
    %v5207 = vmul.f32 %v5203, %v211
    %v5208 = vmul.f32 %v5203, %v212
    %v5209 = vmul.f32 %v5203, %v213
    %v5210 = vmul.f32 %v5203, %v214
    %v5211 = vmul.f32 %v5203, %v215
    %v5212 = vmul.f32 %v5203, %v216
    %v5213 = vmul.f32 %v5203, %v217
    %v5214 = vmul.f32 %v5203, %v218
    %v5215 = vmul.f32 %v5203, %v219
    %v5216 = vmul.f32 %v5203, %v220
    %v5217 = vmul.f32 %v5203, %v221
    %v5218 = vmul.f32 %v5203, %v222
    %v5219 = vmul.f32 %v5203, %v223
    %v5220 = vmul.f32 %v5203, %v224
    %v5221 = vmul.f32 %v5203, %v225
    %v5240 = vrot.slane %v5204, 3
    %v5241 = vrot.slane %v5205, 3
    %v5242 = vsel %vm4359, %v5240, %v5241
    %v5243 = vrot.slane %v5206, 3
    %v5244 = vsel %vm4359, %v5241, %v5243
    %v5245 = vrot.slane %v5207, 3
    %v5246 = vrot.slane %v5208, 3
    %v5247 = vsel %vm4359, %v5245, %v5246
    %v5248 = vrot.slane %v5209, 3
    %v5249 = vsel %vm4359, %v5246, %v5248
    %v5250 = vrot.slane %v5210, 3
    %v5251 = vrot.slane %v5211, 3
    %v5252 = vsel %vm4359, %v5250, %v5251
    %v5253 = vrot.slane %v5212, 3
    %v5254 = vsel %vm4359, %v5251, %v5253
    %v5255 = vrot.slane %v5213, 3
    %v5256 = vrot.slane %v5214, 3
    %v5257 = vsel %vm4359, %v5255, %v5256
    %v5258 = vrot.slane %v5215, 3
    %v5259 = vsel %vm4359, %v5256, %v5258
    %v5260 = vrot.slane %v5216, 3
    %v5261 = vrot.slane %v5217, 3
    %v5262 = vsel %vm4359, %v5260, %v5261
    %v5263 = vrot.slane %v5218, 3
    %v5264 = vsel %vm4359, %v5261, %v5263
    %v5265 = vrot.slane %v5219, 3
    %v5266 = vrot.slane %v5220, 3
    %v5267 = vsel %vm4359, %v5265, %v5266
    %v5268 = vrot.slane %v5221, 3
    %v5269 = vsel %vm4359, %v5266, %v5268
    %5270 = vrot.lane.b32.xlu0 %v5242, 124
    %v5271 = vpop.permute.xlu0 %5270
    %5272 = vrot.lane.b32.xlu0 %v5244, 124
    %v5273 = vpop.permute.xlu0 %5272
    %5274 = vrot.lane.b32.xlu0 %v5247, 124
    %v5275 = vpop.permute.xlu0 %5274
    %5276 = vrot.lane.b32.xlu0 %v5249, 124
    %v5277 = vpop.permute.xlu0 %5276
    %5278 = vrot.lane.b32.xlu0 %v5252, 124
    %v5279 = vpop.permute.xlu0 %5278
    %5280 = vrot.lane.b32.xlu0 %v5254, 124
    %v5281 = vpop.permute.xlu0 %5280
    %5282 = vrot.lane.b32.xlu0 %v5257, 124
    %v5283 = vpop.permute.xlu0 %5282
    %5284 = vrot.lane.b32.xlu0 %v5259, 124
    %v5285 = vpop.permute.xlu0 %5284
    %5286 = vrot.lane.b32.xlu0 %v5262, 124
    %v5287 = vpop.permute.xlu0 %5286
    %5288 = vrot.lane.b32.xlu0 %v5264, 124
    %v5289 = vpop.permute.xlu0 %5288
    %5290 = vrot.lane.b32.xlu0 %v5267, 124
    %v5291 = vpop.permute.xlu0 %5290
    %5292 = vrot.lane.b32.xlu0 %v5269, 124
    %v5293 = vpop.permute.xlu0 %5292
    %v5306 = vadd.f32 %v5189, %v5271
    %v5307 = vadd.f32 %v5190, %v5273
    %v5308 = vadd.f32 %v5191, %v5275
    %v5309 = vadd.f32 %v5192, %v5277
    %v5310 = vadd.f32 %v5193, %v5279
    %v5311 = vadd.f32 %v5194, %v5281
    %v5312 = vadd.f32 %v5195, %v5283
    %v5313 = vadd.f32 %v5196, %v5285
    %v5314 = vadd.f32 %v5197, %v5287
    %v5315 = vadd.f32 %v5198, %v5289
    %v5316 = vadd.f32 %v5199, %v5291
    %v5317 = vadd.f32 %v5200, %v5293
    %v5318 = vstv %s5202
    %v5319 = vmul.f32 %v5318, %v190
    %v5320 = vmul.f32 %v5318, %v191
    %v5321 = vmul.f32 %v5318, %v192
    %v5322 = vmul.f32 %v5318, %v193
    %v5323 = vmul.f32 %v5318, %v194
    %v5324 = vmul.f32 %v5318, %v195
    %v5325 = vmul.f32 %v5318, %v196
    %v5326 = vmul.f32 %v5318, %v197
    %v5327 = vmul.f32 %v5318, %v198
    %v5328 = vmul.f32 %v5318, %v199
    %v5329 = vmul.f32 %v5318, %v200
    %v5330 = vmul.f32 %v5318, %v201
    %v5331 = vmul.f32 %v5318, %v202
    %v5332 = vmul.f32 %v5318, %v203
    %v5333 = vmul.f32 %v5318, %v204
    %v5334 = vmul.f32 %v5318, %v205
    %v5335 = vmul.f32 %v5318, %v206
    %v5336 = vmul.f32 %v5318, %v207
    %v5355 = vrot.slane %v5319, 3
    %v5356 = vrot.slane %v5320, 3
    %v5357 = vsel %vm4359, %v5355, %v5356
    %v5358 = vrot.slane %v5321, 3
    %v5359 = vsel %vm4359, %v5356, %v5358
    %v5360 = vrot.slane %v5322, 3
    %v5361 = vrot.slane %v5323, 3
    %v5362 = vsel %vm4359, %v5360, %v5361
    %v5363 = vrot.slane %v5324, 3
    %v5364 = vsel %vm4359, %v5361, %v5363
    %v5365 = vrot.slane %v5325, 3
    %v5366 = vrot.slane %v5326, 3
    %v5367 = vsel %vm4359, %v5365, %v5366
    %v5368 = vrot.slane %v5327, 3
    %v5369 = vsel %vm4359, %v5366, %v5368
    %v5370 = vrot.slane %v5328, 3
    %v5371 = vrot.slane %v5329, 3
    %v5372 = vsel %vm4359, %v5370, %v5371
    %v5373 = vrot.slane %v5330, 3
    %v5374 = vsel %vm4359, %v5371, %v5373
    %v5375 = vrot.slane %v5331, 3
    %v5376 = vrot.slane %v5332, 3
    %v5377 = vsel %vm4359, %v5375, %v5376
    %v5378 = vrot.slane %v5333, 3
    %v5379 = vsel %vm4359, %v5376, %v5378
    %v5380 = vrot.slane %v5334, 3
    %v5381 = vrot.slane %v5335, 3
    %v5382 = vsel %vm4359, %v5380, %v5381
    %v5383 = vrot.slane %v5336, 3
    %v5384 = vsel %vm4359, %v5381, %v5383
    %5385 = vrot.lane.b32.xlu0 %v5357, 124
    %v5386 = vpop.permute.xlu0 %5385
    %5387 = vrot.lane.b32.xlu0 %v5359, 124
    %v5388 = vpop.permute.xlu0 %5387
    %5389 = vrot.lane.b32.xlu0 %v5362, 124
    %v5390 = vpop.permute.xlu0 %5389
    %5391 = vrot.lane.b32.xlu0 %v5364, 124
    %v5392 = vpop.permute.xlu0 %5391
    %5393 = vrot.lane.b32.xlu0 %v5367, 124
    %v5394 = vpop.permute.xlu0 %5393
    %5395 = vrot.lane.b32.xlu0 %v5369, 124
    %v5396 = vpop.permute.xlu0 %5395
    %5397 = vrot.lane.b32.xlu0 %v5372, 124
    %v5398 = vpop.permute.xlu0 %5397
    %5399 = vrot.lane.b32.xlu0 %v5374, 124
    %v5400 = vpop.permute.xlu0 %5399
    %5401 = vrot.lane.b32.xlu0 %v5377, 124
    %v5402 = vpop.permute.xlu0 %5401
    %5403 = vrot.lane.b32.xlu0 %v5379, 124
    %v5404 = vpop.permute.xlu0 %5403
    %5405 = vrot.lane.b32.xlu0 %v5382, 124
    %v5406 = vpop.permute.xlu0 %5405
    %5407 = vrot.lane.b32.xlu0 %v5384, 124
    %v5408 = vpop.permute.xlu0 %5407
    %v5421 = vadd.f32 %v5306, %v5386
    %v5422 = vadd.f32 %v5307, %v5388
    %v5423 = vadd.f32 %v5308, %v5390
    %v5424 = vadd.f32 %v5309, %v5392
    %v5425 = vadd.f32 %v5310, %v5394
    %v5426 = vadd.f32 %v5311, %v5396
    %v5427 = vadd.f32 %v5312, %v5398
    %v5428 = vadd.f32 %v5313, %v5400
    %v5429 = vadd.f32 %v5314, %v5402
    %v5430 = vadd.f32 %v5315, %v5404
    %v5431 = vadd.f32 %v5316, %v5406
    %v5432 = vadd.f32 %v5317, %v5408
    %s5433 = sld [smem:[#allocation2 + $0x1a]]
    %s5434 = sld [smem:[#allocation2 + $0x4b]]
    %v5435 = vstv %s5433
    %v5436 = vmul.f32 %v5435, %v208
    %v5437 = vmul.f32 %v5435, %v209
    %v5438 = vmul.f32 %v5435, %v210
    %v5439 = vmul.f32 %v5435, %v211
    %v5440 = vmul.f32 %v5435, %v212
    %v5441 = vmul.f32 %v5435, %v213
    %v5442 = vmul.f32 %v5435, %v214
    %v5443 = vmul.f32 %v5435, %v215
    %v5444 = vmul.f32 %v5435, %v216
    %v5445 = vmul.f32 %v5435, %v217
    %v5446 = vmul.f32 %v5435, %v218
    %v5447 = vmul.f32 %v5435, %v219
    %v5448 = vmul.f32 %v5435, %v220
    %v5449 = vmul.f32 %v5435, %v221
    %v5450 = vmul.f32 %v5435, %v222
    %v5451 = vmul.f32 %v5435, %v223
    %v5452 = vmul.f32 %v5435, %v224
    %v5453 = vmul.f32 %v5435, %v225
    %v5472 = vrot.slane %v5436, 3
    %v5473 = vrot.slane %v5437, 3
    %v5474 = vsel %vm4359, %v5472, %v5473
    %v5475 = vrot.slane %v5438, 3
    %v5476 = vsel %vm4359, %v5473, %v5475
    %v5477 = vrot.slane %v5439, 3
    %v5478 = vrot.slane %v5440, 3
    %v5479 = vsel %vm4359, %v5477, %v5478
    %v5480 = vrot.slane %v5441, 3
    %v5481 = vsel %vm4359, %v5478, %v5480
    %v5482 = vrot.slane %v5442, 3
    %v5483 = vrot.slane %v5443, 3
    %v5484 = vsel %vm4359, %v5482, %v5483
    %v5485 = vrot.slane %v5444, 3
    %v5486 = vsel %vm4359, %v5483, %v5485
    %v5487 = vrot.slane %v5445, 3
    %v5488 = vrot.slane %v5446, 3
    %v5489 = vsel %vm4359, %v5487, %v5488
    %v5490 = vrot.slane %v5447, 3
    %v5491 = vsel %vm4359, %v5488, %v5490
    %v5492 = vrot.slane %v5448, 3
    %v5493 = vrot.slane %v5449, 3
    %v5494 = vsel %vm4359, %v5492, %v5493
    %v5495 = vrot.slane %v5450, 3
    %v5496 = vsel %vm4359, %v5493, %v5495
    %v5497 = vrot.slane %v5451, 3
    %v5498 = vrot.slane %v5452, 3
    %v5499 = vsel %vm4359, %v5497, %v5498
    %v5500 = vrot.slane %v5453, 3
    %v5501 = vsel %vm4359, %v5498, %v5500
    %5502 = vrot.lane.b32.xlu0 %v5474, 123
    %v5503 = vpop.permute.xlu0 %5502
    %5504 = vrot.lane.b32.xlu0 %v5476, 123
    %v5505 = vpop.permute.xlu0 %5504
    %5506 = vrot.lane.b32.xlu0 %v5479, 123
    %v5507 = vpop.permute.xlu0 %5506
    %5508 = vrot.lane.b32.xlu0 %v5481, 123
    %v5509 = vpop.permute.xlu0 %5508
    %5510 = vrot.lane.b32.xlu0 %v5484, 123
    %v5511 = vpop.permute.xlu0 %5510
    %5512 = vrot.lane.b32.xlu0 %v5486, 123
    %v5513 = vpop.permute.xlu0 %5512
    %5514 = vrot.lane.b32.xlu0 %v5489, 123
    %v5515 = vpop.permute.xlu0 %5514
    %5516 = vrot.lane.b32.xlu0 %v5491, 123
    %v5517 = vpop.permute.xlu0 %5516
    %5518 = vrot.lane.b32.xlu0 %v5494, 123
    %v5519 = vpop.permute.xlu0 %5518
    %5520 = vrot.lane.b32.xlu0 %v5496, 123
    %v5521 = vpop.permute.xlu0 %5520
    %5522 = vrot.lane.b32.xlu0 %v5499, 123
    %v5523 = vpop.permute.xlu0 %5522
    %5524 = vrot.lane.b32.xlu0 %v5501, 123
    %v5525 = vpop.permute.xlu0 %5524
    %v5538 = vadd.f32 %v5421, %v5503
    %v5539 = vadd.f32 %v5422, %v5505
    %v5540 = vadd.f32 %v5423, %v5507
    %v5541 = vadd.f32 %v5424, %v5509
    %v5542 = vadd.f32 %v5425, %v5511
    %v5543 = vadd.f32 %v5426, %v5513
    %v5544 = vadd.f32 %v5427, %v5515
    %v5545 = vadd.f32 %v5428, %v5517
    %v5546 = vadd.f32 %v5429, %v5519
    %v5547 = vadd.f32 %v5430, %v5521
    %v5548 = vadd.f32 %v5431, %v5523
    %v5549 = vadd.f32 %v5432, %v5525
    %v5550 = vstv %s5434
    %v5551 = vmul.f32 %v5550, %v190
    %v5552 = vmul.f32 %v5550, %v191
    %v5553 = vmul.f32 %v5550, %v192
    %v5554 = vmul.f32 %v5550, %v193
    %v5555 = vmul.f32 %v5550, %v194
    %v5556 = vmul.f32 %v5550, %v195
    %v5557 = vmul.f32 %v5550, %v196
    %v5558 = vmul.f32 %v5550, %v197
    %v5559 = vmul.f32 %v5550, %v198
    %v5560 = vmul.f32 %v5550, %v199
    %v5561 = vmul.f32 %v5550, %v200
    %v5562 = vmul.f32 %v5550, %v201
    %v5563 = vmul.f32 %v5550, %v202
    %v5564 = vmul.f32 %v5550, %v203
    %v5565 = vmul.f32 %v5550, %v204
    %v5566 = vmul.f32 %v5550, %v205
    %v5567 = vmul.f32 %v5550, %v206
    %v5568 = vmul.f32 %v5550, %v207
    %v5587 = vrot.slane %v5551, 3
    %v5588 = vrot.slane %v5552, 3
    %v5589 = vsel %vm4359, %v5587, %v5588
    %v5590 = vrot.slane %v5553, 3
    %v5591 = vsel %vm4359, %v5588, %v5590
    %v5592 = vrot.slane %v5554, 3
    %v5593 = vrot.slane %v5555, 3
    %v5594 = vsel %vm4359, %v5592, %v5593
    %v5595 = vrot.slane %v5556, 3
    %v5596 = vsel %vm4359, %v5593, %v5595
    %v5597 = vrot.slane %v5557, 3
    %v5598 = vrot.slane %v5558, 3
    %v5599 = vsel %vm4359, %v5597, %v5598
    %v5600 = vrot.slane %v5559, 3
    %v5601 = vsel %vm4359, %v5598, %v5600
    %v5602 = vrot.slane %v5560, 3
    %v5603 = vrot.slane %v5561, 3
    %v5604 = vsel %vm4359, %v5602, %v5603
    %v5605 = vrot.slane %v5562, 3
    %v5606 = vsel %vm4359, %v5603, %v5605
    %v5607 = vrot.slane %v5563, 3
    %v5608 = vrot.slane %v5564, 3
    %v5609 = vsel %vm4359, %v5607, %v5608
    %v5610 = vrot.slane %v5565, 3
    %v5611 = vsel %vm4359, %v5608, %v5610
    %v5612 = vrot.slane %v5566, 3
    %v5613 = vrot.slane %v5567, 3
    %v5614 = vsel %vm4359, %v5612, %v5613
    %v5615 = vrot.slane %v5568, 3
    %v5616 = vsel %vm4359, %v5613, %v5615
    %5617 = vrot.lane.b32.xlu0 %v5589, 123
    %v5618 = vpop.permute.xlu0 %5617
    %5619 = vrot.lane.b32.xlu0 %v5591, 123
    %v5620 = vpop.permute.xlu0 %5619
    %5621 = vrot.lane.b32.xlu0 %v5594, 123
    %v5622 = vpop.permute.xlu0 %5621
    %5623 = vrot.lane.b32.xlu0 %v5596, 123
    %v5624 = vpop.permute.xlu0 %5623
    %5625 = vrot.lane.b32.xlu0 %v5599, 123
    %v5626 = vpop.permute.xlu0 %5625
    %5627 = vrot.lane.b32.xlu0 %v5601, 123
    %v5628 = vpop.permute.xlu0 %5627
    %5629 = vrot.lane.b32.xlu0 %v5604, 123
    %v5630 = vpop.permute.xlu0 %5629
    %5631 = vrot.lane.b32.xlu0 %v5606, 123
    %v5632 = vpop.permute.xlu0 %5631
    %5633 = vrot.lane.b32.xlu0 %v5609, 123
    %v5634 = vpop.permute.xlu0 %5633
    %5635 = vrot.lane.b32.xlu0 %v5611, 123
    %v5636 = vpop.permute.xlu0 %5635
    %5637 = vrot.lane.b32.xlu0 %v5614, 123
    %v5638 = vpop.permute.xlu0 %5637
    %5639 = vrot.lane.b32.xlu0 %v5616, 123
    %v5640 = vpop.permute.xlu0 %5639
    %v5653 = vadd.f32 %v5538, %v5618
    %v5654 = vadd.f32 %v5539, %v5620
    %v5655 = vadd.f32 %v5540, %v5622
    %v5656 = vadd.f32 %v5541, %v5624
    %v5657 = vadd.f32 %v5542, %v5626
    %v5658 = vadd.f32 %v5543, %v5628
    %v5659 = vadd.f32 %v5544, %v5630
    %v5660 = vadd.f32 %v5545, %v5632
    %v5661 = vadd.f32 %v5546, %v5634
    %v5662 = vadd.f32 %v5547, %v5636
    %v5663 = vadd.f32 %v5548, %v5638
    %v5664 = vadd.f32 %v5549, %v5640
    %s5665 = sld [smem:[#allocation2 + $0x1b]]
    %s5666 = sld [smem:[#allocation2 + $0x4c]]
    %v5667 = vstv %s5665
    %v5668 = vmul.f32 %v5667, %v208
    %v5669 = vmul.f32 %v5667, %v209
    %v5670 = vmul.f32 %v5667, %v210
    %v5671 = vmul.f32 %v5667, %v211
    %v5672 = vmul.f32 %v5667, %v212
    %v5673 = vmul.f32 %v5667, %v213
    %v5674 = vmul.f32 %v5667, %v214
    %v5675 = vmul.f32 %v5667, %v215
    %v5676 = vmul.f32 %v5667, %v216
    %v5677 = vmul.f32 %v5667, %v217
    %v5678 = vmul.f32 %v5667, %v218
    %v5679 = vmul.f32 %v5667, %v219
    %v5680 = vmul.f32 %v5667, %v220
    %v5681 = vmul.f32 %v5667, %v221
    %v5682 = vmul.f32 %v5667, %v222
    %v5683 = vmul.f32 %v5667, %v223
    %v5684 = vmul.f32 %v5667, %v224
    %v5685 = vmul.f32 %v5667, %v225
    %v5704 = vrot.slane %v5668, 3
    %v5705 = vrot.slane %v5669, 3
    %v5706 = vsel %vm4359, %v5704, %v5705
    %v5707 = vrot.slane %v5670, 3
    %v5708 = vsel %vm4359, %v5705, %v5707
    %v5709 = vrot.slane %v5671, 3
    %v5710 = vrot.slane %v5672, 3
    %v5711 = vsel %vm4359, %v5709, %v5710
    %v5712 = vrot.slane %v5673, 3
    %v5713 = vsel %vm4359, %v5710, %v5712
    %v5714 = vrot.slane %v5674, 3
    %v5715 = vrot.slane %v5675, 3
    %v5716 = vsel %vm4359, %v5714, %v5715
    %v5717 = vrot.slane %v5676, 3
    %v5718 = vsel %vm4359, %v5715, %v5717
    %v5719 = vrot.slane %v5677, 3
    %v5720 = vrot.slane %v5678, 3
    %v5721 = vsel %vm4359, %v5719, %v5720
    %v5722 = vrot.slane %v5679, 3
    %v5723 = vsel %vm4359, %v5720, %v5722
    %v5724 = vrot.slane %v5680, 3
    %v5725 = vrot.slane %v5681, 3
    %v5726 = vsel %vm4359, %v5724, %v5725
    %v5727 = vrot.slane %v5682, 3
    %v5728 = vsel %vm4359, %v5725, %v5727
    %v5729 = vrot.slane %v5683, 3
    %v5730 = vrot.slane %v5684, 3
    %v5731 = vsel %vm4359, %v5729, %v5730
    %v5732 = vrot.slane %v5685, 3
    %v5733 = vsel %vm4359, %v5730, %v5732
    %5734 = vrot.lane.b32.xlu0 %v5706, 122
    %v5735 = vpop.permute.xlu0 %5734
    %5736 = vrot.lane.b32.xlu0 %v5708, 122
    %v5737 = vpop.permute.xlu0 %5736
    %5738 = vrot.lane.b32.xlu0 %v5711, 122
    %v5739 = vpop.permute.xlu0 %5738
    %5740 = vrot.lane.b32.xlu0 %v5713, 122
    %v5741 = vpop.permute.xlu0 %5740
    %5742 = vrot.lane.b32.xlu0 %v5716, 122
    %v5743 = vpop.permute.xlu0 %5742
    %5744 = vrot.lane.b32.xlu0 %v5718, 122
    %v5745 = vpop.permute.xlu0 %5744
    %5746 = vrot.lane.b32.xlu0 %v5721, 122
    %v5747 = vpop.permute.xlu0 %5746
    %5748 = vrot.lane.b32.xlu0 %v5723, 122
    %v5749 = vpop.permute.xlu0 %5748
    %5750 = vrot.lane.b32.xlu0 %v5726, 122
    %v5751 = vpop.permute.xlu0 %5750
    %5752 = vrot.lane.b32.xlu0 %v5728, 122
    %v5753 = vpop.permute.xlu0 %5752
    %5754 = vrot.lane.b32.xlu0 %v5731, 122
    %v5755 = vpop.permute.xlu0 %5754
    %5756 = vrot.lane.b32.xlu0 %v5733, 122
    %v5757 = vpop.permute.xlu0 %5756
    %v5770 = vadd.f32 %v5653, %v5735
    %v5771 = vadd.f32 %v5654, %v5737
    %v5772 = vadd.f32 %v5655, %v5739
    %v5773 = vadd.f32 %v5656, %v5741
    %v5774 = vadd.f32 %v5657, %v5743
    %v5775 = vadd.f32 %v5658, %v5745
    %v5776 = vadd.f32 %v5659, %v5747
    %v5777 = vadd.f32 %v5660, %v5749
    %v5778 = vadd.f32 %v5661, %v5751
    %v5779 = vadd.f32 %v5662, %v5753
    %v5780 = vadd.f32 %v5663, %v5755
    %v5781 = vadd.f32 %v5664, %v5757
    %v5782 = vstv %s5666
    %v5783 = vmul.f32 %v5782, %v190
    %v5784 = vmul.f32 %v5782, %v191
    %v5785 = vmul.f32 %v5782, %v192
    %v5786 = vmul.f32 %v5782, %v193
    %v5787 = vmul.f32 %v5782, %v194
    %v5788 = vmul.f32 %v5782, %v195
    %v5789 = vmul.f32 %v5782, %v196
    %v5790 = vmul.f32 %v5782, %v197
    %v5791 = vmul.f32 %v5782, %v198
    %v5792 = vmul.f32 %v5782, %v199
    %v5793 = vmul.f32 %v5782, %v200
    %v5794 = vmul.f32 %v5782, %v201
    %v5795 = vmul.f32 %v5782, %v202
    %v5796 = vmul.f32 %v5782, %v203
    %v5797 = vmul.f32 %v5782, %v204
    %v5798 = vmul.f32 %v5782, %v205
    %v5799 = vmul.f32 %v5782, %v206
    %v5800 = vmul.f32 %v5782, %v207
    %v5819 = vrot.slane %v5783, 3
    %v5820 = vrot.slane %v5784, 3
    %v5821 = vsel %vm4359, %v5819, %v5820
    %v5822 = vrot.slane %v5785, 3
    %v5823 = vsel %vm4359, %v5820, %v5822
    %v5824 = vrot.slane %v5786, 3
    %v5825 = vrot.slane %v5787, 3
    %v5826 = vsel %vm4359, %v5824, %v5825
    %v5827 = vrot.slane %v5788, 3
    %v5828 = vsel %vm4359, %v5825, %v5827
    %v5829 = vrot.slane %v5789, 3
    %v5830 = vrot.slane %v5790, 3
    %v5831 = vsel %vm4359, %v5829, %v5830
    %v5832 = vrot.slane %v5791, 3
    %v5833 = vsel %vm4359, %v5830, %v5832
    %v5834 = vrot.slane %v5792, 3
    %v5835 = vrot.slane %v5793, 3
    %v5836 = vsel %vm4359, %v5834, %v5835
    %v5837 = vrot.slane %v5794, 3
    %v5838 = vsel %vm4359, %v5835, %v5837
    %v5839 = vrot.slane %v5795, 3
    %v5840 = vrot.slane %v5796, 3
    %v5841 = vsel %vm4359, %v5839, %v5840
    %v5842 = vrot.slane %v5797, 3
    %v5843 = vsel %vm4359, %v5840, %v5842
    %v5844 = vrot.slane %v5798, 3
    %v5845 = vrot.slane %v5799, 3
    %v5846 = vsel %vm4359, %v5844, %v5845
    %v5847 = vrot.slane %v5800, 3
    %v5848 = vsel %vm4359, %v5845, %v5847
    %5849 = vrot.lane.b32.xlu0 %v5821, 122
    %v5850 = vpop.permute.xlu0 %5849
    %5851 = vrot.lane.b32.xlu0 %v5823, 122
    %v5852 = vpop.permute.xlu0 %5851
    %5853 = vrot.lane.b32.xlu0 %v5826, 122
    %v5854 = vpop.permute.xlu0 %5853
    %5855 = vrot.lane.b32.xlu0 %v5828, 122
    %v5856 = vpop.permute.xlu0 %5855
    %5857 = vrot.lane.b32.xlu0 %v5831, 122
    %v5858 = vpop.permute.xlu0 %5857
    %5859 = vrot.lane.b32.xlu0 %v5833, 122
    %v5860 = vpop.permute.xlu0 %5859
    %5861 = vrot.lane.b32.xlu0 %v5836, 122
    %v5862 = vpop.permute.xlu0 %5861
    %5863 = vrot.lane.b32.xlu0 %v5838, 122
    %v5864 = vpop.permute.xlu0 %5863
    %5865 = vrot.lane.b32.xlu0 %v5841, 122
    %v5866 = vpop.permute.xlu0 %5865
    %5867 = vrot.lane.b32.xlu0 %v5843, 122
    %v5868 = vpop.permute.xlu0 %5867
    %5869 = vrot.lane.b32.xlu0 %v5846, 122
    %v5870 = vpop.permute.xlu0 %5869
    %5871 = vrot.lane.b32.xlu0 %v5848, 122
    %v5872 = vpop.permute.xlu0 %5871
    %v5885 = vadd.f32 %v5770, %v5850
    %v5886 = vadd.f32 %v5771, %v5852
    %v5887 = vadd.f32 %v5772, %v5854
    %v5888 = vadd.f32 %v5773, %v5856
    %v5889 = vadd.f32 %v5774, %v5858
    %v5890 = vadd.f32 %v5775, %v5860
    %v5891 = vadd.f32 %v5776, %v5862
    %v5892 = vadd.f32 %v5777, %v5864
    %v5893 = vadd.f32 %v5778, %v5866
    %v5894 = vadd.f32 %v5779, %v5868
    %v5895 = vadd.f32 %v5780, %v5870
    %v5896 = vadd.f32 %v5781, %v5872
    %s5897 = sld [smem:[#allocation2 + $0x1c]]
    %s5898 = sld [smem:[#allocation2 + $0x4d]]
    %v5899 = vstv %s5897
    %v5900 = vmul.f32 %v5899, %v208
    %v5901 = vmul.f32 %v5899, %v209
    %v5902 = vmul.f32 %v5899, %v210
    %v5903 = vmul.f32 %v5899, %v211
    %v5904 = vmul.f32 %v5899, %v212
    %v5905 = vmul.f32 %v5899, %v213
    %v5906 = vmul.f32 %v5899, %v214
    %v5907 = vmul.f32 %v5899, %v215
    %v5908 = vmul.f32 %v5899, %v216
    %v5909 = vmul.f32 %v5899, %v217
    %v5910 = vmul.f32 %v5899, %v218
    %v5911 = vmul.f32 %v5899, %v219
    %v5912 = vmul.f32 %v5899, %v220
    %v5913 = vmul.f32 %v5899, %v221
    %v5914 = vmul.f32 %v5899, %v222
    %v5915 = vmul.f32 %v5899, %v223
    %v5916 = vmul.f32 %v5899, %v224
    %v5917 = vmul.f32 %v5899, %v225
    %vm5936 = vcmask 1043456
    %v5937 = vrot.slane %v5900, 4
    %v5938 = vrot.slane %v5901, 4
    %v5939 = vsel %vm5936, %v5937, %v5938
    %v5940 = vrot.slane %v5902, 4
    %v5941 = vsel %vm5936, %v5938, %v5940
    %v5942 = vrot.slane %v5903, 4
    %v5943 = vrot.slane %v5904, 4
    %v5944 = vsel %vm5936, %v5942, %v5943
    %v5945 = vrot.slane %v5905, 4
    %v5946 = vsel %vm5936, %v5943, %v5945
    %v5947 = vrot.slane %v5906, 4
    %v5948 = vrot.slane %v5907, 4
    %v5949 = vsel %vm5936, %v5947, %v5948
    %v5950 = vrot.slane %v5908, 4
    %v5951 = vsel %vm5936, %v5948, %v5950
    %v5952 = vrot.slane %v5909, 4
    %v5953 = vrot.slane %v5910, 4
    %v5954 = vsel %vm5936, %v5952, %v5953
    %v5955 = vrot.slane %v5911, 4
    %v5956 = vsel %vm5936, %v5953, %v5955
    %v5957 = vrot.slane %v5912, 4
    %v5958 = vrot.slane %v5913, 4
    %v5959 = vsel %vm5936, %v5957, %v5958
    %v5960 = vrot.slane %v5914, 4
    %v5961 = vsel %vm5936, %v5958, %v5960
    %v5962 = vrot.slane %v5915, 4
    %v5963 = vrot.slane %v5916, 4
    %v5964 = vsel %vm5936, %v5962, %v5963
    %v5965 = vrot.slane %v5917, 4
    %v5966 = vsel %vm5936, %v5963, %v5965
    %v5979 = vadd.f32 %v5885, %v5939
    %v5980 = vadd.f32 %v5886, %v5941
    %v5981 = vadd.f32 %v5887, %v5944
    %v5982 = vadd.f32 %v5888, %v5946
    %v5983 = vadd.f32 %v5889, %v5949
    %v5984 = vadd.f32 %v5890, %v5951
    %v5985 = vadd.f32 %v5891, %v5954
    %v5986 = vadd.f32 %v5892, %v5956
    %v5987 = vadd.f32 %v5893, %v5959
    %v5988 = vadd.f32 %v5894, %v5961
    %v5989 = vadd.f32 %v5895, %v5964
    %v5990 = vadd.f32 %v5896, %v5966
    %v5991 = vstv %s5898
    %v5992 = vmul.f32 %v5991, %v190
    %v5993 = vmul.f32 %v5991, %v191
    %v5994 = vmul.f32 %v5991, %v192
    %v5995 = vmul.f32 %v5991, %v193
    %v5996 = vmul.f32 %v5991, %v194
    %v5997 = vmul.f32 %v5991, %v195
    %v5998 = vmul.f32 %v5991, %v196
    %v5999 = vmul.f32 %v5991, %v197
    %v6000 = vmul.f32 %v5991, %v198
    %v6001 = vmul.f32 %v5991, %v199
    %v6002 = vmul.f32 %v5991, %v200
    %v6003 = vmul.f32 %v5991, %v201
    %v6004 = vmul.f32 %v5991, %v202
    %v6005 = vmul.f32 %v5991, %v203
    %v6006 = vmul.f32 %v5991, %v204
    %v6007 = vmul.f32 %v5991, %v205
    %v6008 = vmul.f32 %v5991, %v206
    %v6009 = vmul.f32 %v5991, %v207
    %v6028 = vrot.slane %v5992, 4
    %v6029 = vrot.slane %v5993, 4
    %v6030 = vsel %vm5936, %v6028, %v6029
    %v6031 = vrot.slane %v5994, 4
    %v6032 = vsel %vm5936, %v6029, %v6031
    %v6033 = vrot.slane %v5995, 4
    %v6034 = vrot.slane %v5996, 4
    %v6035 = vsel %vm5936, %v6033, %v6034
    %v6036 = vrot.slane %v5997, 4
    %v6037 = vsel %vm5936, %v6034, %v6036
    %v6038 = vrot.slane %v5998, 4
    %v6039 = vrot.slane %v5999, 4
    %v6040 = vsel %vm5936, %v6038, %v6039
    %v6041 = vrot.slane %v6000, 4
    %v6042 = vsel %vm5936, %v6039, %v6041
    %v6043 = vrot.slane %v6001, 4
    %v6044 = vrot.slane %v6002, 4
    %v6045 = vsel %vm5936, %v6043, %v6044
    %v6046 = vrot.slane %v6003, 4
    %v6047 = vsel %vm5936, %v6044, %v6046
    %v6048 = vrot.slane %v6004, 4
    %v6049 = vrot.slane %v6005, 4
    %v6050 = vsel %vm5936, %v6048, %v6049
    %v6051 = vrot.slane %v6006, 4
    %v6052 = vsel %vm5936, %v6049, %v6051
    %v6053 = vrot.slane %v6007, 4
    %v6054 = vrot.slane %v6008, 4
    %v6055 = vsel %vm5936, %v6053, %v6054
    %v6056 = vrot.slane %v6009, 4
    %v6057 = vsel %vm5936, %v6054, %v6056
    %v6070 = vadd.f32 %v5979, %v6030
    %v6071 = vadd.f32 %v5980, %v6032
    %v6072 = vadd.f32 %v5981, %v6035
    %v6073 = vadd.f32 %v5982, %v6037
    %v6074 = vadd.f32 %v5983, %v6040
    %v6075 = vadd.f32 %v5984, %v6042
    %v6076 = vadd.f32 %v5985, %v6045
    %v6077 = vadd.f32 %v5986, %v6047
    %v6078 = vadd.f32 %v5987, %v6050
    %v6079 = vadd.f32 %v5988, %v6052
    %v6080 = vadd.f32 %v5989, %v6055
    %v6081 = vadd.f32 %v5990, %v6057
    %s6082 = sld [smem:[#allocation2 + $0x1d]]
    %s6083 = sld [smem:[#allocation2 + $0x4e]]
    %v6084 = vstv %s6082
    %v6085 = vmul.f32 %v6084, %v208
    %v6086 = vmul.f32 %v6084, %v209
    %v6087 = vmul.f32 %v6084, %v210
    %v6088 = vmul.f32 %v6084, %v211
    %v6089 = vmul.f32 %v6084, %v212
    %v6090 = vmul.f32 %v6084, %v213
    %v6091 = vmul.f32 %v6084, %v214
    %v6092 = vmul.f32 %v6084, %v215
    %v6093 = vmul.f32 %v6084, %v216
    %v6094 = vmul.f32 %v6084, %v217
    %v6095 = vmul.f32 %v6084, %v218
    %v6096 = vmul.f32 %v6084, %v219
    %v6097 = vmul.f32 %v6084, %v220
    %v6098 = vmul.f32 %v6084, %v221
    %v6099 = vmul.f32 %v6084, %v222
    %v6100 = vmul.f32 %v6084, %v223
    %v6101 = vmul.f32 %v6084, %v224
    %v6102 = vmul.f32 %v6084, %v225
    %v6121 = vrot.slane %v6085, 4
    %v6122 = vrot.slane %v6086, 4
    %v6123 = vsel %vm5936, %v6121, %v6122
    %v6124 = vrot.slane %v6087, 4
    %v6125 = vsel %vm5936, %v6122, %v6124
    %v6126 = vrot.slane %v6088, 4
    %v6127 = vrot.slane %v6089, 4
    %v6128 = vsel %vm5936, %v6126, %v6127
    %v6129 = vrot.slane %v6090, 4
    %v6130 = vsel %vm5936, %v6127, %v6129
    %v6131 = vrot.slane %v6091, 4
    %v6132 = vrot.slane %v6092, 4
    %v6133 = vsel %vm5936, %v6131, %v6132
    %v6134 = vrot.slane %v6093, 4
    %v6135 = vsel %vm5936, %v6132, %v6134
    %v6136 = vrot.slane %v6094, 4
    %v6137 = vrot.slane %v6095, 4
    %v6138 = vsel %vm5936, %v6136, %v6137
    %v6139 = vrot.slane %v6096, 4
    %v6140 = vsel %vm5936, %v6137, %v6139
    %v6141 = vrot.slane %v6097, 4
    %v6142 = vrot.slane %v6098, 4
    %v6143 = vsel %vm5936, %v6141, %v6142
    %v6144 = vrot.slane %v6099, 4
    %v6145 = vsel %vm5936, %v6142, %v6144
    %v6146 = vrot.slane %v6100, 4
    %v6147 = vrot.slane %v6101, 4
    %v6148 = vsel %vm5936, %v6146, %v6147
    %v6149 = vrot.slane %v6102, 4
    %v6150 = vsel %vm5936, %v6147, %v6149
    %6151 = vrot.lane.b32.xlu0 %v6123, 127
    %v6152 = vpop.permute.xlu0 %6151
    %6153 = vrot.lane.b32.xlu0 %v6125, 127
    %v6154 = vpop.permute.xlu0 %6153
    %6155 = vrot.lane.b32.xlu0 %v6128, 127
    %v6156 = vpop.permute.xlu0 %6155
    %6157 = vrot.lane.b32.xlu0 %v6130, 127
    %v6158 = vpop.permute.xlu0 %6157
    %6159 = vrot.lane.b32.xlu0 %v6133, 127
    %v6160 = vpop.permute.xlu0 %6159
    %6161 = vrot.lane.b32.xlu0 %v6135, 127
    %v6162 = vpop.permute.xlu0 %6161
    %6163 = vrot.lane.b32.xlu0 %v6138, 127
    %v6164 = vpop.permute.xlu0 %6163
    %6165 = vrot.lane.b32.xlu0 %v6140, 127
    %v6166 = vpop.permute.xlu0 %6165
    %6167 = vrot.lane.b32.xlu0 %v6143, 127
    %v6168 = vpop.permute.xlu0 %6167
    %6169 = vrot.lane.b32.xlu0 %v6145, 127
    %v6170 = vpop.permute.xlu0 %6169
    %6171 = vrot.lane.b32.xlu0 %v6148, 127
    %v6172 = vpop.permute.xlu0 %6171
    %6173 = vrot.lane.b32.xlu0 %v6150, 127
    %v6174 = vpop.permute.xlu0 %6173
    %v6187 = vadd.f32 %v6070, %v6152
    %v6188 = vadd.f32 %v6071, %v6154
    %v6189 = vadd.f32 %v6072, %v6156
    %v6190 = vadd.f32 %v6073, %v6158
    %v6191 = vadd.f32 %v6074, %v6160
    %v6192 = vadd.f32 %v6075, %v6162
    %v6193 = vadd.f32 %v6076, %v6164
    %v6194 = vadd.f32 %v6077, %v6166
    %v6195 = vadd.f32 %v6078, %v6168
    %v6196 = vadd.f32 %v6079, %v6170
    %v6197 = vadd.f32 %v6080, %v6172
    %v6198 = vadd.f32 %v6081, %v6174
    %v6199 = vstv %s6083
    %v6200 = vmul.f32 %v6199, %v190
    %v6201 = vmul.f32 %v6199, %v191
    %v6202 = vmul.f32 %v6199, %v192
    %v6203 = vmul.f32 %v6199, %v193
    %v6204 = vmul.f32 %v6199, %v194
    %v6205 = vmul.f32 %v6199, %v195
    %v6206 = vmul.f32 %v6199, %v196
    %v6207 = vmul.f32 %v6199, %v197
    %v6208 = vmul.f32 %v6199, %v198
    %v6209 = vmul.f32 %v6199, %v199
    %v6210 = vmul.f32 %v6199, %v200
    %v6211 = vmul.f32 %v6199, %v201
    %v6212 = vmul.f32 %v6199, %v202
    %v6213 = vmul.f32 %v6199, %v203
    %v6214 = vmul.f32 %v6199, %v204
    %v6215 = vmul.f32 %v6199, %v205
    %v6216 = vmul.f32 %v6199, %v206
    %v6217 = vmul.f32 %v6199, %v207
    %v6236 = vrot.slane %v6200, 4
    %v6237 = vrot.slane %v6201, 4
    %v6238 = vsel %vm5936, %v6236, %v6237
    %v6239 = vrot.slane %v6202, 4
    %v6240 = vsel %vm5936, %v6237, %v6239
    %v6241 = vrot.slane %v6203, 4
    %v6242 = vrot.slane %v6204, 4
    %v6243 = vsel %vm5936, %v6241, %v6242
    %v6244 = vrot.slane %v6205, 4
    %v6245 = vsel %vm5936, %v6242, %v6244
    %v6246 = vrot.slane %v6206, 4
    %v6247 = vrot.slane %v6207, 4
    %v6248 = vsel %vm5936, %v6246, %v6247
    %v6249 = vrot.slane %v6208, 4
    %v6250 = vsel %vm5936, %v6247, %v6249
    %v6251 = vrot.slane %v6209, 4
    %v6252 = vrot.slane %v6210, 4
    %v6253 = vsel %vm5936, %v6251, %v6252
    %v6254 = vrot.slane %v6211, 4
    %v6255 = vsel %vm5936, %v6252, %v6254
    %v6256 = vrot.slane %v6212, 4
    %v6257 = vrot.slane %v6213, 4
    %v6258 = vsel %vm5936, %v6256, %v6257
    %v6259 = vrot.slane %v6214, 4
    %v6260 = vsel %vm5936, %v6257, %v6259
    %v6261 = vrot.slane %v6215, 4
    %v6262 = vrot.slane %v6216, 4
    %v6263 = vsel %vm5936, %v6261, %v6262
    %v6264 = vrot.slane %v6217, 4
    %v6265 = vsel %vm5936, %v6262, %v6264
    %6266 = vrot.lane.b32.xlu0 %v6238, 127
    %v6267 = vpop.permute.xlu0 %6266
    %6268 = vrot.lane.b32.xlu0 %v6240, 127
    %v6269 = vpop.permute.xlu0 %6268
    %6270 = vrot.lane.b32.xlu0 %v6243, 127
    %v6271 = vpop.permute.xlu0 %6270
    %6272 = vrot.lane.b32.xlu0 %v6245, 127
    %v6273 = vpop.permute.xlu0 %6272
    %6274 = vrot.lane.b32.xlu0 %v6248, 127
    %v6275 = vpop.permute.xlu0 %6274
    %6276 = vrot.lane.b32.xlu0 %v6250, 127
    %v6277 = vpop.permute.xlu0 %6276
    %6278 = vrot.lane.b32.xlu0 %v6253, 127
    %v6279 = vpop.permute.xlu0 %6278
    %6280 = vrot.lane.b32.xlu0 %v6255, 127
    %v6281 = vpop.permute.xlu0 %6280
    %6282 = vrot.lane.b32.xlu0 %v6258, 127
    %v6283 = vpop.permute.xlu0 %6282
    %6284 = vrot.lane.b32.xlu0 %v6260, 127
    %v6285 = vpop.permute.xlu0 %6284
    %6286 = vrot.lane.b32.xlu0 %v6263, 127
    %v6287 = vpop.permute.xlu0 %6286
    %6288 = vrot.lane.b32.xlu0 %v6265, 127
    %v6289 = vpop.permute.xlu0 %6288
    %v6302 = vadd.f32 %v6187, %v6267
    %v6303 = vadd.f32 %v6188, %v6269
    %v6304 = vadd.f32 %v6189, %v6271
    %v6305 = vadd.f32 %v6190, %v6273
    %v6306 = vadd.f32 %v6191, %v6275
    %v6307 = vadd.f32 %v6192, %v6277
    %v6308 = vadd.f32 %v6193, %v6279
    %v6309 = vadd.f32 %v6194, %v6281
    %v6310 = vadd.f32 %v6195, %v6283
    %v6311 = vadd.f32 %v6196, %v6285
    %v6312 = vadd.f32 %v6197, %v6287
    %v6313 = vadd.f32 %v6198, %v6289
    %s6314 = sld [smem:[#allocation2 + $0x1e]]
    %s6315 = sld [smem:[#allocation2 + $0x4f]]
    %v6316 = vstv %s6314
    %v6317 = vmul.f32 %v6316, %v208
    %v6318 = vmul.f32 %v6316, %v209
    %v6319 = vmul.f32 %v6316, %v210
    %v6320 = vmul.f32 %v6316, %v211
    %v6321 = vmul.f32 %v6316, %v212
    %v6322 = vmul.f32 %v6316, %v213
    %v6323 = vmul.f32 %v6316, %v214
    %v6324 = vmul.f32 %v6316, %v215
    %v6325 = vmul.f32 %v6316, %v216
    %v6326 = vmul.f32 %v6316, %v217
    %v6327 = vmul.f32 %v6316, %v218
    %v6328 = vmul.f32 %v6316, %v219
    %v6329 = vmul.f32 %v6316, %v220
    %v6330 = vmul.f32 %v6316, %v221
    %v6331 = vmul.f32 %v6316, %v222
    %v6332 = vmul.f32 %v6316, %v223
    %v6333 = vmul.f32 %v6316, %v224
    %v6334 = vmul.f32 %v6316, %v225
    %v6353 = vrot.slane %v6317, 4
    %v6354 = vrot.slane %v6318, 4
    %v6355 = vsel %vm5936, %v6353, %v6354
    %v6356 = vrot.slane %v6319, 4
    %v6357 = vsel %vm5936, %v6354, %v6356
    %v6358 = vrot.slane %v6320, 4
    %v6359 = vrot.slane %v6321, 4
    %v6360 = vsel %vm5936, %v6358, %v6359
    %v6361 = vrot.slane %v6322, 4
    %v6362 = vsel %vm5936, %v6359, %v6361
    %v6363 = vrot.slane %v6323, 4
    %v6364 = vrot.slane %v6324, 4
    %v6365 = vsel %vm5936, %v6363, %v6364
    %v6366 = vrot.slane %v6325, 4
    %v6367 = vsel %vm5936, %v6364, %v6366
    %v6368 = vrot.slane %v6326, 4
    %v6369 = vrot.slane %v6327, 4
    %v6370 = vsel %vm5936, %v6368, %v6369
    %v6371 = vrot.slane %v6328, 4
    %v6372 = vsel %vm5936, %v6369, %v6371
    %v6373 = vrot.slane %v6329, 4
    %v6374 = vrot.slane %v6330, 4
    %v6375 = vsel %vm5936, %v6373, %v6374
    %v6376 = vrot.slane %v6331, 4
    %v6377 = vsel %vm5936, %v6374, %v6376
    %v6378 = vrot.slane %v6332, 4
    %v6379 = vrot.slane %v6333, 4
    %v6380 = vsel %vm5936, %v6378, %v6379
    %v6381 = vrot.slane %v6334, 4
    %v6382 = vsel %vm5936, %v6379, %v6381
    %6383 = vrot.lane.b32.xlu0 %v6355, 126
    %v6384 = vpop.permute.xlu0 %6383
    %6385 = vrot.lane.b32.xlu0 %v6357, 126
    %v6386 = vpop.permute.xlu0 %6385
    %6387 = vrot.lane.b32.xlu0 %v6360, 126
    %v6388 = vpop.permute.xlu0 %6387
    %6389 = vrot.lane.b32.xlu0 %v6362, 126
    %v6390 = vpop.permute.xlu0 %6389
    %6391 = vrot.lane.b32.xlu0 %v6365, 126
    %v6392 = vpop.permute.xlu0 %6391
    %6393 = vrot.lane.b32.xlu0 %v6367, 126
    %v6394 = vpop.permute.xlu0 %6393
    %6395 = vrot.lane.b32.xlu0 %v6370, 126
    %v6396 = vpop.permute.xlu0 %6395
    %6397 = vrot.lane.b32.xlu0 %v6372, 126
    %v6398 = vpop.permute.xlu0 %6397
    %6399 = vrot.lane.b32.xlu0 %v6375, 126
    %v6400 = vpop.permute.xlu0 %6399
    %6401 = vrot.lane.b32.xlu0 %v6377, 126
    %v6402 = vpop.permute.xlu0 %6401
    %6403 = vrot.lane.b32.xlu0 %v6380, 126
    %v6404 = vpop.permute.xlu0 %6403
    %6405 = vrot.lane.b32.xlu0 %v6382, 126
    %v6406 = vpop.permute.xlu0 %6405
    %v6419 = vadd.f32 %v6302, %v6384
    %v6420 = vadd.f32 %v6303, %v6386
    %v6421 = vadd.f32 %v6304, %v6388
    %v6422 = vadd.f32 %v6305, %v6390
    %v6423 = vadd.f32 %v6306, %v6392
    %v6424 = vadd.f32 %v6307, %v6394
    %v6425 = vadd.f32 %v6308, %v6396
    %v6426 = vadd.f32 %v6309, %v6398
    %v6427 = vadd.f32 %v6310, %v6400
    %v6428 = vadd.f32 %v6311, %v6402
    %v6429 = vadd.f32 %v6312, %v6404
    %v6430 = vadd.f32 %v6313, %v6406
    %v6431 = vstv %s6315
    %v6432 = vmul.f32 %v6431, %v190
    %v6433 = vmul.f32 %v6431, %v191
    %v6434 = vmul.f32 %v6431, %v192
    %v6435 = vmul.f32 %v6431, %v193
    %v6436 = vmul.f32 %v6431, %v194
    %v6437 = vmul.f32 %v6431, %v195
    %v6438 = vmul.f32 %v6431, %v196
    %v6439 = vmul.f32 %v6431, %v197
    %v6440 = vmul.f32 %v6431, %v198
    %v6441 = vmul.f32 %v6431, %v199
    %v6442 = vmul.f32 %v6431, %v200
    %v6443 = vmul.f32 %v6431, %v201
    %v6444 = vmul.f32 %v6431, %v202
    %v6445 = vmul.f32 %v6431, %v203
    %v6446 = vmul.f32 %v6431, %v204
    %v6447 = vmul.f32 %v6431, %v205
    %v6448 = vmul.f32 %v6431, %v206
    %v6449 = vmul.f32 %v6431, %v207
    %v6468 = vrot.slane %v6432, 4
    %v6469 = vrot.slane %v6433, 4
    %v6470 = vsel %vm5936, %v6468, %v6469
    %v6471 = vrot.slane %v6434, 4
    %v6472 = vsel %vm5936, %v6469, %v6471
    %v6473 = vrot.slane %v6435, 4
    %v6474 = vrot.slane %v6436, 4
    %v6475 = vsel %vm5936, %v6473, %v6474
    %v6476 = vrot.slane %v6437, 4
    %v6477 = vsel %vm5936, %v6474, %v6476
    %v6478 = vrot.slane %v6438, 4
    %v6479 = vrot.slane %v6439, 4
    %v6480 = vsel %vm5936, %v6478, %v6479
    %v6481 = vrot.slane %v6440, 4
    %v6482 = vsel %vm5936, %v6479, %v6481
    %v6483 = vrot.slane %v6441, 4
    %v6484 = vrot.slane %v6442, 4
    %v6485 = vsel %vm5936, %v6483, %v6484
    %v6486 = vrot.slane %v6443, 4
    %v6487 = vsel %vm5936, %v6484, %v6486
    %v6488 = vrot.slane %v6444, 4
    %v6489 = vrot.slane %v6445, 4
    %v6490 = vsel %vm5936, %v6488, %v6489
    %v6491 = vrot.slane %v6446, 4
    %v6492 = vsel %vm5936, %v6489, %v6491
    %v6493 = vrot.slane %v6447, 4
    %v6494 = vrot.slane %v6448, 4
    %v6495 = vsel %vm5936, %v6493, %v6494
    %v6496 = vrot.slane %v6449, 4
    %v6497 = vsel %vm5936, %v6494, %v6496
    %6498 = vrot.lane.b32.xlu0 %v6470, 126
    %v6499 = vpop.permute.xlu0 %6498
    %6500 = vrot.lane.b32.xlu0 %v6472, 126
    %v6501 = vpop.permute.xlu0 %6500
    %6502 = vrot.lane.b32.xlu0 %v6475, 126
    %v6503 = vpop.permute.xlu0 %6502
    %6504 = vrot.lane.b32.xlu0 %v6477, 126
    %v6505 = vpop.permute.xlu0 %6504
    %6506 = vrot.lane.b32.xlu0 %v6480, 126
    %v6507 = vpop.permute.xlu0 %6506
    %6508 = vrot.lane.b32.xlu0 %v6482, 126
    %v6509 = vpop.permute.xlu0 %6508
    %6510 = vrot.lane.b32.xlu0 %v6485, 126
    %v6511 = vpop.permute.xlu0 %6510
    %6512 = vrot.lane.b32.xlu0 %v6487, 126
    %v6513 = vpop.permute.xlu0 %6512
    %6514 = vrot.lane.b32.xlu0 %v6490, 126
    %v6515 = vpop.permute.xlu0 %6514
    %6516 = vrot.lane.b32.xlu0 %v6492, 126
    %v6517 = vpop.permute.xlu0 %6516
    %6518 = vrot.lane.b32.xlu0 %v6495, 126
    %v6519 = vpop.permute.xlu0 %6518
    %6520 = vrot.lane.b32.xlu0 %v6497, 126
    %v6521 = vpop.permute.xlu0 %6520
    %v6534 = vadd.f32 %v6419, %v6499
    %v6535 = vadd.f32 %v6420, %v6501
    %v6536 = vadd.f32 %v6421, %v6503
    %v6537 = vadd.f32 %v6422, %v6505
    %v6538 = vadd.f32 %v6423, %v6507
    %v6539 = vadd.f32 %v6424, %v6509
    %v6540 = vadd.f32 %v6425, %v6511
    %v6541 = vadd.f32 %v6426, %v6513
    %v6542 = vadd.f32 %v6427, %v6515
    %v6543 = vadd.f32 %v6428, %v6517
    %v6544 = vadd.f32 %v6429, %v6519
    %v6545 = vadd.f32 %v6430, %v6521
    %s6546 = sld [smem:[#allocation2 + $0x1f]]
    %s6547 = sld [smem:[#allocation2 + $0x50]]
    %v6548 = vstv %s6546
    %v6549 = vmul.f32 %v6548, %v208
    %v6550 = vmul.f32 %v6548, %v209
    %v6551 = vmul.f32 %v6548, %v210
    %v6552 = vmul.f32 %v6548, %v211
    %v6553 = vmul.f32 %v6548, %v212
    %v6554 = vmul.f32 %v6548, %v213
    %v6555 = vmul.f32 %v6548, %v214
    %v6556 = vmul.f32 %v6548, %v215
    %v6557 = vmul.f32 %v6548, %v216
    %v6558 = vmul.f32 %v6548, %v217
    %v6559 = vmul.f32 %v6548, %v218
    %v6560 = vmul.f32 %v6548, %v219
    %v6561 = vmul.f32 %v6548, %v220
    %v6562 = vmul.f32 %v6548, %v221
    %v6563 = vmul.f32 %v6548, %v222
    %v6564 = vmul.f32 %v6548, %v223
    %v6565 = vmul.f32 %v6548, %v224
    %v6566 = vmul.f32 %v6548, %v225
    %v6585 = vrot.slane %v6549, 4
    %v6586 = vrot.slane %v6550, 4
    %v6587 = vsel %vm5936, %v6585, %v6586
    %v6588 = vrot.slane %v6551, 4
    %v6589 = vsel %vm5936, %v6586, %v6588
    %v6590 = vrot.slane %v6552, 4
    %v6591 = vrot.slane %v6553, 4
    %v6592 = vsel %vm5936, %v6590, %v6591
    %v6593 = vrot.slane %v6554, 4
    %v6594 = vsel %vm5936, %v6591, %v6593
    %v6595 = vrot.slane %v6555, 4
    %v6596 = vrot.slane %v6556, 4
    %v6597 = vsel %vm5936, %v6595, %v6596
    %v6598 = vrot.slane %v6557, 4
    %v6599 = vsel %vm5936, %v6596, %v6598
    %v6600 = vrot.slane %v6558, 4
    %v6601 = vrot.slane %v6559, 4
    %v6602 = vsel %vm5936, %v6600, %v6601
    %v6603 = vrot.slane %v6560, 4
    %v6604 = vsel %vm5936, %v6601, %v6603
    %v6605 = vrot.slane %v6561, 4
    %v6606 = vrot.slane %v6562, 4
    %v6607 = vsel %vm5936, %v6605, %v6606
    %v6608 = vrot.slane %v6563, 4
    %v6609 = vsel %vm5936, %v6606, %v6608
    %v6610 = vrot.slane %v6564, 4
    %v6611 = vrot.slane %v6565, 4
    %v6612 = vsel %vm5936, %v6610, %v6611
    %v6613 = vrot.slane %v6566, 4
    %v6614 = vsel %vm5936, %v6611, %v6613
    %6615 = vrot.lane.b32.xlu0 %v6587, 125
    %v6616 = vpop.permute.xlu0 %6615
    %6617 = vrot.lane.b32.xlu0 %v6589, 125
    %v6618 = vpop.permute.xlu0 %6617
    %6619 = vrot.lane.b32.xlu0 %v6592, 125
    %v6620 = vpop.permute.xlu0 %6619
    %6621 = vrot.lane.b32.xlu0 %v6594, 125
    %v6622 = vpop.permute.xlu0 %6621
    %6623 = vrot.lane.b32.xlu0 %v6597, 125
    %v6624 = vpop.permute.xlu0 %6623
    %6625 = vrot.lane.b32.xlu0 %v6599, 125
    %v6626 = vpop.permute.xlu0 %6625
    %6627 = vrot.lane.b32.xlu0 %v6602, 125
    %v6628 = vpop.permute.xlu0 %6627
    %6629 = vrot.lane.b32.xlu0 %v6604, 125
    %v6630 = vpop.permute.xlu0 %6629
    %6631 = vrot.lane.b32.xlu0 %v6607, 125
    %v6632 = vpop.permute.xlu0 %6631
    %6633 = vrot.lane.b32.xlu0 %v6609, 125
    %v6634 = vpop.permute.xlu0 %6633
    %6635 = vrot.lane.b32.xlu0 %v6612, 125
    %v6636 = vpop.permute.xlu0 %6635
    %6637 = vrot.lane.b32.xlu0 %v6614, 125
    %v6638 = vpop.permute.xlu0 %6637
    %v6651 = vadd.f32 %v6534, %v6616
    %v6652 = vadd.f32 %v6535, %v6618
    %v6653 = vadd.f32 %v6536, %v6620
    %v6654 = vadd.f32 %v6537, %v6622
    %v6655 = vadd.f32 %v6538, %v6624
    %v6656 = vadd.f32 %v6539, %v6626
    %v6657 = vadd.f32 %v6540, %v6628
    %v6658 = vadd.f32 %v6541, %v6630
    %v6659 = vadd.f32 %v6542, %v6632
    %v6660 = vadd.f32 %v6543, %v6634
    %v6661 = vadd.f32 %v6544, %v6636
    %v6662 = vadd.f32 %v6545, %v6638
    %v6663 = vstv %s6547
    %v6664 = vmul.f32 %v6663, %v190
    %v6665 = vmul.f32 %v6663, %v191
    %v6666 = vmul.f32 %v6663, %v192
    %v6667 = vmul.f32 %v6663, %v193
    %v6668 = vmul.f32 %v6663, %v194
    %v6669 = vmul.f32 %v6663, %v195
    %v6670 = vmul.f32 %v6663, %v196
    %v6671 = vmul.f32 %v6663, %v197
    %v6672 = vmul.f32 %v6663, %v198
    %v6673 = vmul.f32 %v6663, %v199
    %v6674 = vmul.f32 %v6663, %v200
    %v6675 = vmul.f32 %v6663, %v201
    %v6676 = vmul.f32 %v6663, %v202
    %v6677 = vmul.f32 %v6663, %v203
    %v6678 = vmul.f32 %v6663, %v204
    %v6679 = vmul.f32 %v6663, %v205
    %v6680 = vmul.f32 %v6663, %v206
    %v6681 = vmul.f32 %v6663, %v207
    %v6700 = vrot.slane %v6664, 4
    %v6701 = vrot.slane %v6665, 4
    %v6702 = vsel %vm5936, %v6700, %v6701
    %v6703 = vrot.slane %v6666, 4
    %v6704 = vsel %vm5936, %v6701, %v6703
    %v6705 = vrot.slane %v6667, 4
    %v6706 = vrot.slane %v6668, 4
    %v6707 = vsel %vm5936, %v6705, %v6706
    %v6708 = vrot.slane %v6669, 4
    %v6709 = vsel %vm5936, %v6706, %v6708
    %v6710 = vrot.slane %v6670, 4
    %v6711 = vrot.slane %v6671, 4
    %v6712 = vsel %vm5936, %v6710, %v6711
    %v6713 = vrot.slane %v6672, 4
    %v6714 = vsel %vm5936, %v6711, %v6713
    %v6715 = vrot.slane %v6673, 4
    %v6716 = vrot.slane %v6674, 4
    %v6717 = vsel %vm5936, %v6715, %v6716
    %v6718 = vrot.slane %v6675, 4
    %v6719 = vsel %vm5936, %v6716, %v6718
    %v6720 = vrot.slane %v6676, 4
    %v6721 = vrot.slane %v6677, 4
    %v6722 = vsel %vm5936, %v6720, %v6721
    %v6723 = vrot.slane %v6678, 4
    %v6724 = vsel %vm5936, %v6721, %v6723
    %v6725 = vrot.slane %v6679, 4
    %v6726 = vrot.slane %v6680, 4
    %v6727 = vsel %vm5936, %v6725, %v6726
    %v6728 = vrot.slane %v6681, 4
    %v6729 = vsel %vm5936, %v6726, %v6728
    %6730 = vrot.lane.b32.xlu0 %v6702, 125
    %v6731 = vpop.permute.xlu0 %6730
    %6732 = vrot.lane.b32.xlu0 %v6704, 125
    %v6733 = vpop.permute.xlu0 %6732
    %6734 = vrot.lane.b32.xlu0 %v6707, 125
    %v6735 = vpop.permute.xlu0 %6734
    %6736 = vrot.lane.b32.xlu0 %v6709, 125
    %v6737 = vpop.permute.xlu0 %6736
    %6738 = vrot.lane.b32.xlu0 %v6712, 125
    %v6739 = vpop.permute.xlu0 %6738
    %6740 = vrot.lane.b32.xlu0 %v6714, 125
    %v6741 = vpop.permute.xlu0 %6740
    %6742 = vrot.lane.b32.xlu0 %v6717, 125
    %v6743 = vpop.permute.xlu0 %6742
    %6744 = vrot.lane.b32.xlu0 %v6719, 125
    %v6745 = vpop.permute.xlu0 %6744
    %6746 = vrot.lane.b32.xlu0 %v6722, 125
    %v6747 = vpop.permute.xlu0 %6746
    %6748 = vrot.lane.b32.xlu0 %v6724, 125
    %v6749 = vpop.permute.xlu0 %6748
    %6750 = vrot.lane.b32.xlu0 %v6727, 125
    %v6751 = vpop.permute.xlu0 %6750
    %6752 = vrot.lane.b32.xlu0 %v6729, 125
    %v6753 = vpop.permute.xlu0 %6752
    %v6766 = vadd.f32 %v6651, %v6731
    %v6767 = vadd.f32 %v6652, %v6733
    %v6768 = vadd.f32 %v6653, %v6735
    %v6769 = vadd.f32 %v6654, %v6737
    %v6770 = vadd.f32 %v6655, %v6739
    %v6771 = vadd.f32 %v6656, %v6741
    %v6772 = vadd.f32 %v6657, %v6743
    %v6773 = vadd.f32 %v6658, %v6745
    %v6774 = vadd.f32 %v6659, %v6747
    %v6775 = vadd.f32 %v6660, %v6749
    %v6776 = vadd.f32 %v6661, %v6751
    %v6777 = vadd.f32 %v6662, %v6753
    %s6778 = sld [smem:[#allocation2 + $0x20]]
    %s6779 = sld [smem:[#allocation2 + $0x51]]
    %v6780 = vstv %s6778
    %v6781 = vmul.f32 %v6780, %v208
    %v6782 = vmul.f32 %v6780, %v209
    %v6783 = vmul.f32 %v6780, %v210
    %v6784 = vmul.f32 %v6780, %v211
    %v6785 = vmul.f32 %v6780, %v212
    %v6786 = vmul.f32 %v6780, %v213
    %v6787 = vmul.f32 %v6780, %v214
    %v6788 = vmul.f32 %v6780, %v215
    %v6789 = vmul.f32 %v6780, %v216
    %v6790 = vmul.f32 %v6780, %v217
    %v6791 = vmul.f32 %v6780, %v218
    %v6792 = vmul.f32 %v6780, %v219
    %v6793 = vmul.f32 %v6780, %v220
    %v6794 = vmul.f32 %v6780, %v221
    %v6795 = vmul.f32 %v6780, %v222
    %v6796 = vmul.f32 %v6780, %v223
    %v6797 = vmul.f32 %v6780, %v224
    %v6798 = vmul.f32 %v6780, %v225
    %v6817 = vrot.slane %v6781, 4
    %v6818 = vrot.slane %v6782, 4
    %v6819 = vsel %vm5936, %v6817, %v6818
    %v6820 = vrot.slane %v6783, 4
    %v6821 = vsel %vm5936, %v6818, %v6820
    %v6822 = vrot.slane %v6784, 4
    %v6823 = vrot.slane %v6785, 4
    %v6824 = vsel %vm5936, %v6822, %v6823
    %v6825 = vrot.slane %v6786, 4
    %v6826 = vsel %vm5936, %v6823, %v6825
    %v6827 = vrot.slane %v6787, 4
    %v6828 = vrot.slane %v6788, 4
    %v6829 = vsel %vm5936, %v6827, %v6828
    %v6830 = vrot.slane %v6789, 4
    %v6831 = vsel %vm5936, %v6828, %v6830
    %v6832 = vrot.slane %v6790, 4
    %v6833 = vrot.slane %v6791, 4
    %v6834 = vsel %vm5936, %v6832, %v6833
    %v6835 = vrot.slane %v6792, 4
    %v6836 = vsel %vm5936, %v6833, %v6835
    %v6837 = vrot.slane %v6793, 4
    %v6838 = vrot.slane %v6794, 4
    %v6839 = vsel %vm5936, %v6837, %v6838
    %v6840 = vrot.slane %v6795, 4
    %v6841 = vsel %vm5936, %v6838, %v6840
    %v6842 = vrot.slane %v6796, 4
    %v6843 = vrot.slane %v6797, 4
    %v6844 = vsel %vm5936, %v6842, %v6843
    %v6845 = vrot.slane %v6798, 4
    %v6846 = vsel %vm5936, %v6843, %v6845
    %6847 = vrot.lane.b32.xlu0 %v6819, 124
    %v6848 = vpop.permute.xlu0 %6847
    %6849 = vrot.lane.b32.xlu0 %v6821, 124
    %v6850 = vpop.permute.xlu0 %6849
    %6851 = vrot.lane.b32.xlu0 %v6824, 124
    %v6852 = vpop.permute.xlu0 %6851
    %6853 = vrot.lane.b32.xlu0 %v6826, 124
    %v6854 = vpop.permute.xlu0 %6853
    %6855 = vrot.lane.b32.xlu0 %v6829, 124
    %v6856 = vpop.permute.xlu0 %6855
    %6857 = vrot.lane.b32.xlu0 %v6831, 124
    %v6858 = vpop.permute.xlu0 %6857
    %6859 = vrot.lane.b32.xlu0 %v6834, 124
    %v6860 = vpop.permute.xlu0 %6859
    %6861 = vrot.lane.b32.xlu0 %v6836, 124
    %v6862 = vpop.permute.xlu0 %6861
    %6863 = vrot.lane.b32.xlu0 %v6839, 124
    %v6864 = vpop.permute.xlu0 %6863
    %6865 = vrot.lane.b32.xlu0 %v6841, 124
    %v6866 = vpop.permute.xlu0 %6865
    %6867 = vrot.lane.b32.xlu0 %v6844, 124
    %v6868 = vpop.permute.xlu0 %6867
    %6869 = vrot.lane.b32.xlu0 %v6846, 124
    %v6870 = vpop.permute.xlu0 %6869
    %v6883 = vadd.f32 %v6766, %v6848
    %v6884 = vadd.f32 %v6767, %v6850
    %v6885 = vadd.f32 %v6768, %v6852
    %v6886 = vadd.f32 %v6769, %v6854
    %v6887 = vadd.f32 %v6770, %v6856
    %v6888 = vadd.f32 %v6771, %v6858
    %v6889 = vadd.f32 %v6772, %v6860
    %v6890 = vadd.f32 %v6773, %v6862
    %v6891 = vadd.f32 %v6774, %v6864
    %v6892 = vadd.f32 %v6775, %v6866
    %v6893 = vadd.f32 %v6776, %v6868
    %v6894 = vadd.f32 %v6777, %v6870
    %v6895 = vstv %s6779
    %v6896 = vmul.f32 %v6895, %v190
    %v6897 = vmul.f32 %v6895, %v191
    %v6898 = vmul.f32 %v6895, %v192
    %v6899 = vmul.f32 %v6895, %v193
    %v6900 = vmul.f32 %v6895, %v194
    %v6901 = vmul.f32 %v6895, %v195
    %v6902 = vmul.f32 %v6895, %v196
    %v6903 = vmul.f32 %v6895, %v197
    %v6904 = vmul.f32 %v6895, %v198
    %v6905 = vmul.f32 %v6895, %v199
    %v6906 = vmul.f32 %v6895, %v200
    %v6907 = vmul.f32 %v6895, %v201
    %v6908 = vmul.f32 %v6895, %v202
    %v6909 = vmul.f32 %v6895, %v203
    %v6910 = vmul.f32 %v6895, %v204
    %v6911 = vmul.f32 %v6895, %v205
    %v6912 = vmul.f32 %v6895, %v206
    %v6913 = vmul.f32 %v6895, %v207
    %v6932 = vrot.slane %v6896, 4
    %v6933 = vrot.slane %v6897, 4
    %v6934 = vsel %vm5936, %v6932, %v6933
    %v6935 = vrot.slane %v6898, 4
    %v6936 = vsel %vm5936, %v6933, %v6935
    %v6937 = vrot.slane %v6899, 4
    %v6938 = vrot.slane %v6900, 4
    %v6939 = vsel %vm5936, %v6937, %v6938
    %v6940 = vrot.slane %v6901, 4
    %v6941 = vsel %vm5936, %v6938, %v6940
    %v6942 = vrot.slane %v6902, 4
    %v6943 = vrot.slane %v6903, 4
    %v6944 = vsel %vm5936, %v6942, %v6943
    %v6945 = vrot.slane %v6904, 4
    %v6946 = vsel %vm5936, %v6943, %v6945
    %v6947 = vrot.slane %v6905, 4
    %v6948 = vrot.slane %v6906, 4
    %v6949 = vsel %vm5936, %v6947, %v6948
    %v6950 = vrot.slane %v6907, 4
    %v6951 = vsel %vm5936, %v6948, %v6950
    %v6952 = vrot.slane %v6908, 4
    %v6953 = vrot.slane %v6909, 4
    %v6954 = vsel %vm5936, %v6952, %v6953
    %v6955 = vrot.slane %v6910, 4
    %v6956 = vsel %vm5936, %v6953, %v6955
    %v6957 = vrot.slane %v6911, 4
    %v6958 = vrot.slane %v6912, 4
    %v6959 = vsel %vm5936, %v6957, %v6958
    %v6960 = vrot.slane %v6913, 4
    %v6961 = vsel %vm5936, %v6958, %v6960
    %6962 = vrot.lane.b32.xlu0 %v6934, 124
    %v6963 = vpop.permute.xlu0 %6962
    %6964 = vrot.lane.b32.xlu0 %v6936, 124
    %v6965 = vpop.permute.xlu0 %6964
    %6966 = vrot.lane.b32.xlu0 %v6939, 124
    %v6967 = vpop.permute.xlu0 %6966
    %6968 = vrot.lane.b32.xlu0 %v6941, 124
    %v6969 = vpop.permute.xlu0 %6968
    %6970 = vrot.lane.b32.xlu0 %v6944, 124
    %v6971 = vpop.permute.xlu0 %6970
    %6972 = vrot.lane.b32.xlu0 %v6946, 124
    %v6973 = vpop.permute.xlu0 %6972
    %6974 = vrot.lane.b32.xlu0 %v6949, 124
    %v6975 = vpop.permute.xlu0 %6974
    %6976 = vrot.lane.b32.xlu0 %v6951, 124
    %v6977 = vpop.permute.xlu0 %6976
    %6978 = vrot.lane.b32.xlu0 %v6954, 124
    %v6979 = vpop.permute.xlu0 %6978
    %6980 = vrot.lane.b32.xlu0 %v6956, 124
    %v6981 = vpop.permute.xlu0 %6980
    %6982 = vrot.lane.b32.xlu0 %v6959, 124
    %v6983 = vpop.permute.xlu0 %6982
    %6984 = vrot.lane.b32.xlu0 %v6961, 124
    %v6985 = vpop.permute.xlu0 %6984
    %v6998 = vadd.f32 %v6883, %v6963
    %v6999 = vadd.f32 %v6884, %v6965
    %v7000 = vadd.f32 %v6885, %v6967
    %v7001 = vadd.f32 %v6886, %v6969
    %v7002 = vadd.f32 %v6887, %v6971
    %v7003 = vadd.f32 %v6888, %v6973
    %v7004 = vadd.f32 %v6889, %v6975
    %v7005 = vadd.f32 %v6890, %v6977
    %v7006 = vadd.f32 %v6891, %v6979
    %v7007 = vadd.f32 %v6892, %v6981
    %v7008 = vadd.f32 %v6893, %v6983
    %v7009 = vadd.f32 %v6894, %v6985
    %s7010 = sld [smem:[#allocation2 + $0x21]]
    %s7011 = sld [smem:[#allocation2 + $0x52]]
    %v7012 = vstv %s7010
    %v7013 = vmul.f32 %v7012, %v208
    %v7014 = vmul.f32 %v7012, %v209
    %v7015 = vmul.f32 %v7012, %v210
    %v7016 = vmul.f32 %v7012, %v211
    %v7017 = vmul.f32 %v7012, %v212
    %v7018 = vmul.f32 %v7012, %v213
    %v7019 = vmul.f32 %v7012, %v214
    %v7020 = vmul.f32 %v7012, %v215
    %v7021 = vmul.f32 %v7012, %v216
    %v7022 = vmul.f32 %v7012, %v217
    %v7023 = vmul.f32 %v7012, %v218
    %v7024 = vmul.f32 %v7012, %v219
    %v7025 = vmul.f32 %v7012, %v220
    %v7026 = vmul.f32 %v7012, %v221
    %v7027 = vmul.f32 %v7012, %v222
    %v7028 = vmul.f32 %v7012, %v223
    %v7029 = vmul.f32 %v7012, %v224
    %v7030 = vmul.f32 %v7012, %v225
    %v7049 = vrot.slane %v7013, 4
    %v7050 = vrot.slane %v7014, 4
    %v7051 = vsel %vm5936, %v7049, %v7050
    %v7052 = vrot.slane %v7015, 4
    %v7053 = vsel %vm5936, %v7050, %v7052
    %v7054 = vrot.slane %v7016, 4
    %v7055 = vrot.slane %v7017, 4
    %v7056 = vsel %vm5936, %v7054, %v7055
    %v7057 = vrot.slane %v7018, 4
    %v7058 = vsel %vm5936, %v7055, %v7057
    %v7059 = vrot.slane %v7019, 4
    %v7060 = vrot.slane %v7020, 4
    %v7061 = vsel %vm5936, %v7059, %v7060
    %v7062 = vrot.slane %v7021, 4
    %v7063 = vsel %vm5936, %v7060, %v7062
    %v7064 = vrot.slane %v7022, 4
    %v7065 = vrot.slane %v7023, 4
    %v7066 = vsel %vm5936, %v7064, %v7065
    %v7067 = vrot.slane %v7024, 4
    %v7068 = vsel %vm5936, %v7065, %v7067
    %v7069 = vrot.slane %v7025, 4
    %v7070 = vrot.slane %v7026, 4
    %v7071 = vsel %vm5936, %v7069, %v7070
    %v7072 = vrot.slane %v7027, 4
    %v7073 = vsel %vm5936, %v7070, %v7072
    %v7074 = vrot.slane %v7028, 4
    %v7075 = vrot.slane %v7029, 4
    %v7076 = vsel %vm5936, %v7074, %v7075
    %v7077 = vrot.slane %v7030, 4
    %v7078 = vsel %vm5936, %v7075, %v7077
    %7079 = vrot.lane.b32.xlu0 %v7051, 123
    %v7080 = vpop.permute.xlu0 %7079
    %7081 = vrot.lane.b32.xlu0 %v7053, 123
    %v7082 = vpop.permute.xlu0 %7081
    %7083 = vrot.lane.b32.xlu0 %v7056, 123
    %v7084 = vpop.permute.xlu0 %7083
    %7085 = vrot.lane.b32.xlu0 %v7058, 123
    %v7086 = vpop.permute.xlu0 %7085
    %7087 = vrot.lane.b32.xlu0 %v7061, 123
    %v7088 = vpop.permute.xlu0 %7087
    %7089 = vrot.lane.b32.xlu0 %v7063, 123
    %v7090 = vpop.permute.xlu0 %7089
    %7091 = vrot.lane.b32.xlu0 %v7066, 123
    %v7092 = vpop.permute.xlu0 %7091
    %7093 = vrot.lane.b32.xlu0 %v7068, 123
    %v7094 = vpop.permute.xlu0 %7093
    %7095 = vrot.lane.b32.xlu0 %v7071, 123
    %v7096 = vpop.permute.xlu0 %7095
    %7097 = vrot.lane.b32.xlu0 %v7073, 123
    %v7098 = vpop.permute.xlu0 %7097
    %7099 = vrot.lane.b32.xlu0 %v7076, 123
    %v7100 = vpop.permute.xlu0 %7099
    %7101 = vrot.lane.b32.xlu0 %v7078, 123
    %v7102 = vpop.permute.xlu0 %7101
    %v7115 = vadd.f32 %v6998, %v7080
    %v7116 = vadd.f32 %v6999, %v7082
    %v7117 = vadd.f32 %v7000, %v7084
    %v7118 = vadd.f32 %v7001, %v7086
    %v7119 = vadd.f32 %v7002, %v7088
    %v7120 = vadd.f32 %v7003, %v7090
    %v7121 = vadd.f32 %v7004, %v7092
    %v7122 = vadd.f32 %v7005, %v7094
    %v7123 = vadd.f32 %v7006, %v7096
    %v7124 = vadd.f32 %v7007, %v7098
    %v7125 = vadd.f32 %v7008, %v7100
    %v7126 = vadd.f32 %v7009, %v7102
    %v7127 = vstv %s7011
    %v7128 = vmul.f32 %v7127, %v190
    %v7129 = vmul.f32 %v7127, %v191
    %v7130 = vmul.f32 %v7127, %v192
    %v7131 = vmul.f32 %v7127, %v193
    %v7132 = vmul.f32 %v7127, %v194
    %v7133 = vmul.f32 %v7127, %v195
    %v7134 = vmul.f32 %v7127, %v196
    %v7135 = vmul.f32 %v7127, %v197
    %v7136 = vmul.f32 %v7127, %v198
    %v7137 = vmul.f32 %v7127, %v199
    %v7138 = vmul.f32 %v7127, %v200
    %v7139 = vmul.f32 %v7127, %v201
    %v7140 = vmul.f32 %v7127, %v202
    %v7141 = vmul.f32 %v7127, %v203
    %v7142 = vmul.f32 %v7127, %v204
    %v7143 = vmul.f32 %v7127, %v205
    %v7144 = vmul.f32 %v7127, %v206
    %v7145 = vmul.f32 %v7127, %v207
    %v7164 = vrot.slane %v7128, 4
    %v7165 = vrot.slane %v7129, 4
    %v7166 = vsel %vm5936, %v7164, %v7165
    %v7167 = vrot.slane %v7130, 4
    %v7168 = vsel %vm5936, %v7165, %v7167
    %v7169 = vrot.slane %v7131, 4
    %v7170 = vrot.slane %v7132, 4
    %v7171 = vsel %vm5936, %v7169, %v7170
    %v7172 = vrot.slane %v7133, 4
    %v7173 = vsel %vm5936, %v7170, %v7172
    %v7174 = vrot.slane %v7134, 4
    %v7175 = vrot.slane %v7135, 4
    %v7176 = vsel %vm5936, %v7174, %v7175
    %v7177 = vrot.slane %v7136, 4
    %v7178 = vsel %vm5936, %v7175, %v7177
    %v7179 = vrot.slane %v7137, 4
    %v7180 = vrot.slane %v7138, 4
    %v7181 = vsel %vm5936, %v7179, %v7180
    %v7182 = vrot.slane %v7139, 4
    %v7183 = vsel %vm5936, %v7180, %v7182
    %v7184 = vrot.slane %v7140, 4
    %v7185 = vrot.slane %v7141, 4
    %v7186 = vsel %vm5936, %v7184, %v7185
    %v7187 = vrot.slane %v7142, 4
    %v7188 = vsel %vm5936, %v7185, %v7187
    %v7189 = vrot.slane %v7143, 4
    %v7190 = vrot.slane %v7144, 4
    %v7191 = vsel %vm5936, %v7189, %v7190
    %v7192 = vrot.slane %v7145, 4
    %v7193 = vsel %vm5936, %v7190, %v7192
    %7194 = vrot.lane.b32.xlu0 %v7166, 123
    %v7195 = vpop.permute.xlu0 %7194
    %7196 = vrot.lane.b32.xlu0 %v7168, 123
    %v7197 = vpop.permute.xlu0 %7196
    %7198 = vrot.lane.b32.xlu0 %v7171, 123
    %v7199 = vpop.permute.xlu0 %7198
    %7200 = vrot.lane.b32.xlu0 %v7173, 123
    %v7201 = vpop.permute.xlu0 %7200
    %7202 = vrot.lane.b32.xlu0 %v7176, 123
    %v7203 = vpop.permute.xlu0 %7202
    %7204 = vrot.lane.b32.xlu0 %v7178, 123
    %v7205 = vpop.permute.xlu0 %7204
    %7206 = vrot.lane.b32.xlu0 %v7181, 123
    %v7207 = vpop.permute.xlu0 %7206
    %7208 = vrot.lane.b32.xlu0 %v7183, 123
    %v7209 = vpop.permute.xlu0 %7208
    %7210 = vrot.lane.b32.xlu0 %v7186, 123
    %v7211 = vpop.permute.xlu0 %7210
    %7212 = vrot.lane.b32.xlu0 %v7188, 123
    %v7213 = vpop.permute.xlu0 %7212
    %7214 = vrot.lane.b32.xlu0 %v7191, 123
    %v7215 = vpop.permute.xlu0 %7214
    %7216 = vrot.lane.b32.xlu0 %v7193, 123
    %v7217 = vpop.permute.xlu0 %7216
    %v7230 = vadd.f32 %v7115, %v7195
    %v7231 = vadd.f32 %v7116, %v7197
    %v7232 = vadd.f32 %v7117, %v7199
    %v7233 = vadd.f32 %v7118, %v7201
    %v7234 = vadd.f32 %v7119, %v7203
    %v7235 = vadd.f32 %v7120, %v7205
    %v7236 = vadd.f32 %v7121, %v7207
    %v7237 = vadd.f32 %v7122, %v7209
    %v7238 = vadd.f32 %v7123, %v7211
    %v7239 = vadd.f32 %v7124, %v7213
    %v7240 = vadd.f32 %v7125, %v7215
    %v7241 = vadd.f32 %v7126, %v7217
    %s7242 = sld [smem:[#allocation2 + $0x22]]
    %s7243 = sld [smem:[#allocation2 + $0x53]]
    %v7244 = vstv %s7242
    %v7245 = vmul.f32 %v7244, %v208
    %v7246 = vmul.f32 %v7244, %v209
    %v7247 = vmul.f32 %v7244, %v210
    %v7248 = vmul.f32 %v7244, %v211
    %v7249 = vmul.f32 %v7244, %v212
    %v7250 = vmul.f32 %v7244, %v213
    %v7251 = vmul.f32 %v7244, %v214
    %v7252 = vmul.f32 %v7244, %v215
    %v7253 = vmul.f32 %v7244, %v216
    %v7254 = vmul.f32 %v7244, %v217
    %v7255 = vmul.f32 %v7244, %v218
    %v7256 = vmul.f32 %v7244, %v219
    %v7257 = vmul.f32 %v7244, %v220
    %v7258 = vmul.f32 %v7244, %v221
    %v7259 = vmul.f32 %v7244, %v222
    %v7260 = vmul.f32 %v7244, %v223
    %v7261 = vmul.f32 %v7244, %v224
    %v7262 = vmul.f32 %v7244, %v225
    %v7281 = vrot.slane %v7245, 4
    %v7282 = vrot.slane %v7246, 4
    %v7283 = vsel %vm5936, %v7281, %v7282
    %v7284 = vrot.slane %v7247, 4
    %v7285 = vsel %vm5936, %v7282, %v7284
    %v7286 = vrot.slane %v7248, 4
    %v7287 = vrot.slane %v7249, 4
    %v7288 = vsel %vm5936, %v7286, %v7287
    %v7289 = vrot.slane %v7250, 4
    %v7290 = vsel %vm5936, %v7287, %v7289
    %v7291 = vrot.slane %v7251, 4
    %v7292 = vrot.slane %v7252, 4
    %v7293 = vsel %vm5936, %v7291, %v7292
    %v7294 = vrot.slane %v7253, 4
    %v7295 = vsel %vm5936, %v7292, %v7294
    %v7296 = vrot.slane %v7254, 4
    %v7297 = vrot.slane %v7255, 4
    %v7298 = vsel %vm5936, %v7296, %v7297
    %v7299 = vrot.slane %v7256, 4
    %v7300 = vsel %vm5936, %v7297, %v7299
    %v7301 = vrot.slane %v7257, 4
    %v7302 = vrot.slane %v7258, 4
    %v7303 = vsel %vm5936, %v7301, %v7302
    %v7304 = vrot.slane %v7259, 4
    %v7305 = vsel %vm5936, %v7302, %v7304
    %v7306 = vrot.slane %v7260, 4
    %v7307 = vrot.slane %v7261, 4
    %v7308 = vsel %vm5936, %v7306, %v7307
    %v7309 = vrot.slane %v7262, 4
    %v7310 = vsel %vm5936, %v7307, %v7309
    %7311 = vrot.lane.b32.xlu0 %v7283, 122
    %v7312 = vpop.permute.xlu0 %7311
    %7313 = vrot.lane.b32.xlu0 %v7285, 122
    %v7314 = vpop.permute.xlu0 %7313
    %7315 = vrot.lane.b32.xlu0 %v7288, 122
    %v7316 = vpop.permute.xlu0 %7315
    %7317 = vrot.lane.b32.xlu0 %v7290, 122
    %v7318 = vpop.permute.xlu0 %7317
    %7319 = vrot.lane.b32.xlu0 %v7293, 122
    %v7320 = vpop.permute.xlu0 %7319
    %7321 = vrot.lane.b32.xlu0 %v7295, 122
    %v7322 = vpop.permute.xlu0 %7321
    %7323 = vrot.lane.b32.xlu0 %v7298, 122
    %v7324 = vpop.permute.xlu0 %7323
    %7325 = vrot.lane.b32.xlu0 %v7300, 122
    %v7326 = vpop.permute.xlu0 %7325
    %7327 = vrot.lane.b32.xlu0 %v7303, 122
    %v7328 = vpop.permute.xlu0 %7327
    %7329 = vrot.lane.b32.xlu0 %v7305, 122
    %v7330 = vpop.permute.xlu0 %7329
    %7331 = vrot.lane.b32.xlu0 %v7308, 122
    %v7332 = vpop.permute.xlu0 %7331
    %7333 = vrot.lane.b32.xlu0 %v7310, 122
    %v7334 = vpop.permute.xlu0 %7333
    %v7347 = vadd.f32 %v7230, %v7312
    %v7348 = vadd.f32 %v7231, %v7314
    %v7349 = vadd.f32 %v7232, %v7316
    %v7350 = vadd.f32 %v7233, %v7318
    %v7351 = vadd.f32 %v7234, %v7320
    %v7352 = vadd.f32 %v7235, %v7322
    %v7353 = vadd.f32 %v7236, %v7324
    %v7354 = vadd.f32 %v7237, %v7326
    %v7355 = vadd.f32 %v7238, %v7328
    %v7356 = vadd.f32 %v7239, %v7330
    %v7357 = vadd.f32 %v7240, %v7332
    %v7358 = vadd.f32 %v7241, %v7334
    %v7359 = vstv %s7243
    %v7360 = vmul.f32 %v7359, %v190
    %v7361 = vmul.f32 %v7359, %v191
    %v7362 = vmul.f32 %v7359, %v192
    %v7363 = vmul.f32 %v7359, %v193
    %v7364 = vmul.f32 %v7359, %v194
    %v7365 = vmul.f32 %v7359, %v195
    %v7366 = vmul.f32 %v7359, %v196
    %v7367 = vmul.f32 %v7359, %v197
    %v7368 = vmul.f32 %v7359, %v198
    %v7369 = vmul.f32 %v7359, %v199
    %v7370 = vmul.f32 %v7359, %v200
    %v7371 = vmul.f32 %v7359, %v201
    %v7372 = vmul.f32 %v7359, %v202
    %v7373 = vmul.f32 %v7359, %v203
    %v7374 = vmul.f32 %v7359, %v204
    %v7375 = vmul.f32 %v7359, %v205
    %v7376 = vmul.f32 %v7359, %v206
    %v7377 = vmul.f32 %v7359, %v207
    %v7396 = vrot.slane %v7360, 4
    %v7397 = vrot.slane %v7361, 4
    %v7398 = vsel %vm5936, %v7396, %v7397
    %v7399 = vrot.slane %v7362, 4
    %v7400 = vsel %vm5936, %v7397, %v7399
    %v7401 = vrot.slane %v7363, 4
    %v7402 = vrot.slane %v7364, 4
    %v7403 = vsel %vm5936, %v7401, %v7402
    %v7404 = vrot.slane %v7365, 4
    %v7405 = vsel %vm5936, %v7402, %v7404
    %v7406 = vrot.slane %v7366, 4
    %v7407 = vrot.slane %v7367, 4
    %v7408 = vsel %vm5936, %v7406, %v7407
    %v7409 = vrot.slane %v7368, 4
    %v7410 = vsel %vm5936, %v7407, %v7409
    %v7411 = vrot.slane %v7369, 4
    %v7412 = vrot.slane %v7370, 4
    %v7413 = vsel %vm5936, %v7411, %v7412
    %v7414 = vrot.slane %v7371, 4
    %v7415 = vsel %vm5936, %v7412, %v7414
    %v7416 = vrot.slane %v7372, 4
    %v7417 = vrot.slane %v7373, 4
    %v7418 = vsel %vm5936, %v7416, %v7417
    %v7419 = vrot.slane %v7374, 4
    %v7420 = vsel %vm5936, %v7417, %v7419
    %v7421 = vrot.slane %v7375, 4
    %v7422 = vrot.slane %v7376, 4
    %v7423 = vsel %vm5936, %v7421, %v7422
    %v7424 = vrot.slane %v7377, 4
    %v7425 = vsel %vm5936, %v7422, %v7424
    %7426 = vrot.lane.b32.xlu0 %v7398, 122
    %v7427 = vpop.permute.xlu0 %7426
    %7428 = vrot.lane.b32.xlu0 %v7400, 122
    %v7429 = vpop.permute.xlu0 %7428
    %7430 = vrot.lane.b32.xlu0 %v7403, 122
    %v7431 = vpop.permute.xlu0 %7430
    %7432 = vrot.lane.b32.xlu0 %v7405, 122
    %v7433 = vpop.permute.xlu0 %7432
    %7434 = vrot.lane.b32.xlu0 %v7408, 122
    %v7435 = vpop.permute.xlu0 %7434
    %7436 = vrot.lane.b32.xlu0 %v7410, 122
    %v7437 = vpop.permute.xlu0 %7436
    %7438 = vrot.lane.b32.xlu0 %v7413, 122
    %v7439 = vpop.permute.xlu0 %7438
    %7440 = vrot.lane.b32.xlu0 %v7415, 122
    %v7441 = vpop.permute.xlu0 %7440
    %7442 = vrot.lane.b32.xlu0 %v7418, 122
    %v7443 = vpop.permute.xlu0 %7442
    %7444 = vrot.lane.b32.xlu0 %v7420, 122
    %v7445 = vpop.permute.xlu0 %7444
    %7446 = vrot.lane.b32.xlu0 %v7423, 122
    %v7447 = vpop.permute.xlu0 %7446
    %7448 = vrot.lane.b32.xlu0 %v7425, 122
    %v7449 = vpop.permute.xlu0 %7448
    %v7462 = vadd.f32 %v7347, %v7427
    %v7463 = vadd.f32 %v7348, %v7429
    %v7464 = vadd.f32 %v7349, %v7431
    %v7465 = vadd.f32 %v7350, %v7433
    %v7466 = vadd.f32 %v7351, %v7435
    %v7467 = vadd.f32 %v7352, %v7437
    %v7468 = vadd.f32 %v7353, %v7439
    %v7469 = vadd.f32 %v7354, %v7441
    %v7470 = vadd.f32 %v7355, %v7443
    %v7471 = vadd.f32 %v7356, %v7445
    %v7472 = vadd.f32 %v7357, %v7447
    %v7473 = vadd.f32 %v7358, %v7449
    %s7474 = sld [smem:[#allocation2 + $0x23]]
    %s7475 = sld [smem:[#allocation2 + $0x54]]
    %v7476 = vstv %s7474
    %v7477 = vmul.f32 %v7476, %v208
    %v7478 = vmul.f32 %v7476, %v209
    %v7479 = vmul.f32 %v7476, %v210
    %v7480 = vmul.f32 %v7476, %v211
    %v7481 = vmul.f32 %v7476, %v212
    %v7482 = vmul.f32 %v7476, %v213
    %v7483 = vmul.f32 %v7476, %v214
    %v7484 = vmul.f32 %v7476, %v215
    %v7485 = vmul.f32 %v7476, %v216
    %v7486 = vmul.f32 %v7476, %v217
    %v7487 = vmul.f32 %v7476, %v218
    %v7488 = vmul.f32 %v7476, %v219
    %v7489 = vmul.f32 %v7476, %v220
    %v7490 = vmul.f32 %v7476, %v221
    %v7491 = vmul.f32 %v7476, %v222
    %v7492 = vmul.f32 %v7476, %v223
    %v7493 = vmul.f32 %v7476, %v224
    %v7494 = vmul.f32 %v7476, %v225
    %vm7513 = vcmask 1042432
    %v7514 = vrot.slane %v7477, 5
    %v7515 = vrot.slane %v7478, 5
    %v7516 = vsel %vm7513, %v7514, %v7515
    %v7517 = vrot.slane %v7479, 5
    %v7518 = vsel %vm7513, %v7515, %v7517
    %v7519 = vrot.slane %v7480, 5
    %v7520 = vrot.slane %v7481, 5
    %v7521 = vsel %vm7513, %v7519, %v7520
    %v7522 = vrot.slane %v7482, 5
    %v7523 = vsel %vm7513, %v7520, %v7522
    %v7524 = vrot.slane %v7483, 5
    %v7525 = vrot.slane %v7484, 5
    %v7526 = vsel %vm7513, %v7524, %v7525
    %v7527 = vrot.slane %v7485, 5
    %v7528 = vsel %vm7513, %v7525, %v7527
    %v7529 = vrot.slane %v7486, 5
    %v7530 = vrot.slane %v7487, 5
    %v7531 = vsel %vm7513, %v7529, %v7530
    %v7532 = vrot.slane %v7488, 5
    %v7533 = vsel %vm7513, %v7530, %v7532
    %v7534 = vrot.slane %v7489, 5
    %v7535 = vrot.slane %v7490, 5
    %v7536 = vsel %vm7513, %v7534, %v7535
    %v7537 = vrot.slane %v7491, 5
    %v7538 = vsel %vm7513, %v7535, %v7537
    %v7539 = vrot.slane %v7492, 5
    %v7540 = vrot.slane %v7493, 5
    %v7541 = vsel %vm7513, %v7539, %v7540
    %v7542 = vrot.slane %v7494, 5
    %v7543 = vsel %vm7513, %v7540, %v7542
    %v7556 = vadd.f32 %v7462, %v7516
    %v7557 = vadd.f32 %v7463, %v7518
    %v7558 = vadd.f32 %v7464, %v7521
    %v7559 = vadd.f32 %v7465, %v7523
    %v7560 = vadd.f32 %v7466, %v7526
    %v7561 = vadd.f32 %v7467, %v7528
    %v7562 = vadd.f32 %v7468, %v7531
    %v7563 = vadd.f32 %v7469, %v7533
    %v7564 = vadd.f32 %v7470, %v7536
    %v7565 = vadd.f32 %v7471, %v7538
    %v7566 = vadd.f32 %v7472, %v7541
    %v7567 = vadd.f32 %v7473, %v7543
    %v7568 = vstv %s7475
    %v7569 = vmul.f32 %v7568, %v190
    %v7570 = vmul.f32 %v7568, %v191
    %v7571 = vmul.f32 %v7568, %v192
    %v7572 = vmul.f32 %v7568, %v193
    %v7573 = vmul.f32 %v7568, %v194
    %v7574 = vmul.f32 %v7568, %v195
    %v7575 = vmul.f32 %v7568, %v196
    %v7576 = vmul.f32 %v7568, %v197
    %v7577 = vmul.f32 %v7568, %v198
    %v7578 = vmul.f32 %v7568, %v199
    %v7579 = vmul.f32 %v7568, %v200
    %v7580 = vmul.f32 %v7568, %v201
    %v7581 = vmul.f32 %v7568, %v202
    %v7582 = vmul.f32 %v7568, %v203
    %v7583 = vmul.f32 %v7568, %v204
    %v7584 = vmul.f32 %v7568, %v205
    %v7585 = vmul.f32 %v7568, %v206
    %v7586 = vmul.f32 %v7568, %v207
    %v7605 = vrot.slane %v7569, 5
    %v7606 = vrot.slane %v7570, 5
    %v7607 = vsel %vm7513, %v7605, %v7606
    %v7608 = vrot.slane %v7571, 5
    %v7609 = vsel %vm7513, %v7606, %v7608
    %v7610 = vrot.slane %v7572, 5
    %v7611 = vrot.slane %v7573, 5
    %v7612 = vsel %vm7513, %v7610, %v7611
    %v7613 = vrot.slane %v7574, 5
    %v7614 = vsel %vm7513, %v7611, %v7613
    %v7615 = vrot.slane %v7575, 5
    %v7616 = vrot.slane %v7576, 5
    %v7617 = vsel %vm7513, %v7615, %v7616
    %v7618 = vrot.slane %v7577, 5
    %v7619 = vsel %vm7513, %v7616, %v7618
    %v7620 = vrot.slane %v7578, 5
    %v7621 = vrot.slane %v7579, 5
    %v7622 = vsel %vm7513, %v7620, %v7621
    %v7623 = vrot.slane %v7580, 5
    %v7624 = vsel %vm7513, %v7621, %v7623
    %v7625 = vrot.slane %v7581, 5
    %v7626 = vrot.slane %v7582, 5
    %v7627 = vsel %vm7513, %v7625, %v7626
    %v7628 = vrot.slane %v7583, 5
    %v7629 = vsel %vm7513, %v7626, %v7628
    %v7630 = vrot.slane %v7584, 5
    %v7631 = vrot.slane %v7585, 5
    %v7632 = vsel %vm7513, %v7630, %v7631
    %v7633 = vrot.slane %v7586, 5
    %v7634 = vsel %vm7513, %v7631, %v7633
    %v7647 = vadd.f32 %v7556, %v7607
    %v7648 = vadd.f32 %v7557, %v7609
    %v7649 = vadd.f32 %v7558, %v7612
    %v7650 = vadd.f32 %v7559, %v7614
    %v7651 = vadd.f32 %v7560, %v7617
    %v7652 = vadd.f32 %v7561, %v7619
    %v7653 = vadd.f32 %v7562, %v7622
    %v7654 = vadd.f32 %v7563, %v7624
    %v7655 = vadd.f32 %v7564, %v7627
    %v7656 = vadd.f32 %v7565, %v7629
    %v7657 = vadd.f32 %v7566, %v7632
    %v7658 = vadd.f32 %v7567, %v7634
    %s7659 = sld [smem:[#allocation2 + $0x24]]
    %s7660 = sld [smem:[#allocation2 + $0x55]]
    %v7661 = vstv %s7659
    %v7662 = vmul.f32 %v7661, %v208
    %v7663 = vmul.f32 %v7661, %v209
    %v7664 = vmul.f32 %v7661, %v210
    %v7665 = vmul.f32 %v7661, %v211
    %v7666 = vmul.f32 %v7661, %v212
    %v7667 = vmul.f32 %v7661, %v213
    %v7668 = vmul.f32 %v7661, %v214
    %v7669 = vmul.f32 %v7661, %v215
    %v7670 = vmul.f32 %v7661, %v216
    %v7671 = vmul.f32 %v7661, %v217
    %v7672 = vmul.f32 %v7661, %v218
    %v7673 = vmul.f32 %v7661, %v219
    %v7674 = vmul.f32 %v7661, %v220
    %v7675 = vmul.f32 %v7661, %v221
    %v7676 = vmul.f32 %v7661, %v222
    %v7677 = vmul.f32 %v7661, %v223
    %v7678 = vmul.f32 %v7661, %v224
    %v7679 = vmul.f32 %v7661, %v225
    %v7698 = vrot.slane %v7662, 5
    %v7699 = vrot.slane %v7663, 5
    %v7700 = vsel %vm7513, %v7698, %v7699
    %v7701 = vrot.slane %v7664, 5
    %v7702 = vsel %vm7513, %v7699, %v7701
    %v7703 = vrot.slane %v7665, 5
    %v7704 = vrot.slane %v7666, 5
    %v7705 = vsel %vm7513, %v7703, %v7704
    %v7706 = vrot.slane %v7667, 5
    %v7707 = vsel %vm7513, %v7704, %v7706
    %v7708 = vrot.slane %v7668, 5
    %v7709 = vrot.slane %v7669, 5
    %v7710 = vsel %vm7513, %v7708, %v7709
    %v7711 = vrot.slane %v7670, 5
    %v7712 = vsel %vm7513, %v7709, %v7711
    %v7713 = vrot.slane %v7671, 5
    %v7714 = vrot.slane %v7672, 5
    %v7715 = vsel %vm7513, %v7713, %v7714
    %v7716 = vrot.slane %v7673, 5
    %v7717 = vsel %vm7513, %v7714, %v7716
    %v7718 = vrot.slane %v7674, 5
    %v7719 = vrot.slane %v7675, 5
    %v7720 = vsel %vm7513, %v7718, %v7719
    %v7721 = vrot.slane %v7676, 5
    %v7722 = vsel %vm7513, %v7719, %v7721
    %v7723 = vrot.slane %v7677, 5
    %v7724 = vrot.slane %v7678, 5
    %v7725 = vsel %vm7513, %v7723, %v7724
    %v7726 = vrot.slane %v7679, 5
    %v7727 = vsel %vm7513, %v7724, %v7726
    %7728 = vrot.lane.b32.xlu0 %v7700, 127
    %v7729 = vpop.permute.xlu0 %7728
    %7730 = vrot.lane.b32.xlu0 %v7702, 127
    %v7731 = vpop.permute.xlu0 %7730
    %7732 = vrot.lane.b32.xlu0 %v7705, 127
    %v7733 = vpop.permute.xlu0 %7732
    %7734 = vrot.lane.b32.xlu0 %v7707, 127
    %v7735 = vpop.permute.xlu0 %7734
    %7736 = vrot.lane.b32.xlu0 %v7710, 127
    %v7737 = vpop.permute.xlu0 %7736
    %7738 = vrot.lane.b32.xlu0 %v7712, 127
    %v7739 = vpop.permute.xlu0 %7738
    %7740 = vrot.lane.b32.xlu0 %v7715, 127
    %v7741 = vpop.permute.xlu0 %7740
    %7742 = vrot.lane.b32.xlu0 %v7717, 127
    %v7743 = vpop.permute.xlu0 %7742
    %7744 = vrot.lane.b32.xlu0 %v7720, 127
    %v7745 = vpop.permute.xlu0 %7744
    %7746 = vrot.lane.b32.xlu0 %v7722, 127
    %v7747 = vpop.permute.xlu0 %7746
    %7748 = vrot.lane.b32.xlu0 %v7725, 127
    %v7749 = vpop.permute.xlu0 %7748
    %7750 = vrot.lane.b32.xlu0 %v7727, 127
    %v7751 = vpop.permute.xlu0 %7750
    %v7764 = vadd.f32 %v7647, %v7729
    %v7765 = vadd.f32 %v7648, %v7731
    %v7766 = vadd.f32 %v7649, %v7733
    %v7767 = vadd.f32 %v7650, %v7735
    %v7768 = vadd.f32 %v7651, %v7737
    %v7769 = vadd.f32 %v7652, %v7739
    %v7770 = vadd.f32 %v7653, %v7741
    %v7771 = vadd.f32 %v7654, %v7743
    %v7772 = vadd.f32 %v7655, %v7745
    %v7773 = vadd.f32 %v7656, %v7747
    %v7774 = vadd.f32 %v7657, %v7749
    %v7775 = vadd.f32 %v7658, %v7751
    %v7776 = vstv %s7660
    %v7777 = vmul.f32 %v7776, %v190
    %v7778 = vmul.f32 %v7776, %v191
    %v7779 = vmul.f32 %v7776, %v192
    %v7780 = vmul.f32 %v7776, %v193
    %v7781 = vmul.f32 %v7776, %v194
    %v7782 = vmul.f32 %v7776, %v195
    %v7783 = vmul.f32 %v7776, %v196
    %v7784 = vmul.f32 %v7776, %v197
    %v7785 = vmul.f32 %v7776, %v198
    %v7786 = vmul.f32 %v7776, %v199
    %v7787 = vmul.f32 %v7776, %v200
    %v7788 = vmul.f32 %v7776, %v201
    %v7789 = vmul.f32 %v7776, %v202
    %v7790 = vmul.f32 %v7776, %v203
    %v7791 = vmul.f32 %v7776, %v204
    %v7792 = vmul.f32 %v7776, %v205
    %v7793 = vmul.f32 %v7776, %v206
    %v7794 = vmul.f32 %v7776, %v207
    %v7813 = vrot.slane %v7777, 5
    %v7814 = vrot.slane %v7778, 5
    %v7815 = vsel %vm7513, %v7813, %v7814
    %v7816 = vrot.slane %v7779, 5
    %v7817 = vsel %vm7513, %v7814, %v7816
    %v7818 = vrot.slane %v7780, 5
    %v7819 = vrot.slane %v7781, 5
    %v7820 = vsel %vm7513, %v7818, %v7819
    %v7821 = vrot.slane %v7782, 5
    %v7822 = vsel %vm7513, %v7819, %v7821
    %v7823 = vrot.slane %v7783, 5
    %v7824 = vrot.slane %v7784, 5
    %v7825 = vsel %vm7513, %v7823, %v7824
    %v7826 = vrot.slane %v7785, 5
    %v7827 = vsel %vm7513, %v7824, %v7826
    %v7828 = vrot.slane %v7786, 5
    %v7829 = vrot.slane %v7787, 5
    %v7830 = vsel %vm7513, %v7828, %v7829
    %v7831 = vrot.slane %v7788, 5
    %v7832 = vsel %vm7513, %v7829, %v7831
    %v7833 = vrot.slane %v7789, 5
    %v7834 = vrot.slane %v7790, 5
    %v7835 = vsel %vm7513, %v7833, %v7834
    %v7836 = vrot.slane %v7791, 5
    %v7837 = vsel %vm7513, %v7834, %v7836
    %v7838 = vrot.slane %v7792, 5
    %v7839 = vrot.slane %v7793, 5
    %v7840 = vsel %vm7513, %v7838, %v7839
    %v7841 = vrot.slane %v7794, 5
    %v7842 = vsel %vm7513, %v7839, %v7841
    %7843 = vrot.lane.b32.xlu0 %v7815, 127
    %v7844 = vpop.permute.xlu0 %7843
    %7845 = vrot.lane.b32.xlu0 %v7817, 127
    %v7846 = vpop.permute.xlu0 %7845
    %7847 = vrot.lane.b32.xlu0 %v7820, 127
    %v7848 = vpop.permute.xlu0 %7847
    %7849 = vrot.lane.b32.xlu0 %v7822, 127
    %v7850 = vpop.permute.xlu0 %7849
    %7851 = vrot.lane.b32.xlu0 %v7825, 127
    %v7852 = vpop.permute.xlu0 %7851
    %7853 = vrot.lane.b32.xlu0 %v7827, 127
    %v7854 = vpop.permute.xlu0 %7853
    %7855 = vrot.lane.b32.xlu0 %v7830, 127
    %v7856 = vpop.permute.xlu0 %7855
    %7857 = vrot.lane.b32.xlu0 %v7832, 127
    %v7858 = vpop.permute.xlu0 %7857
    %7859 = vrot.lane.b32.xlu0 %v7835, 127
    %v7860 = vpop.permute.xlu0 %7859
    %7861 = vrot.lane.b32.xlu0 %v7837, 127
    %v7862 = vpop.permute.xlu0 %7861
    %7863 = vrot.lane.b32.xlu0 %v7840, 127
    %v7864 = vpop.permute.xlu0 %7863
    %7865 = vrot.lane.b32.xlu0 %v7842, 127
    %v7866 = vpop.permute.xlu0 %7865
    %v7879 = vadd.f32 %v7764, %v7844
    %v7880 = vadd.f32 %v7765, %v7846
    %v7881 = vadd.f32 %v7766, %v7848
    %v7882 = vadd.f32 %v7767, %v7850
    %v7883 = vadd.f32 %v7768, %v7852
    %v7884 = vadd.f32 %v7769, %v7854
    %v7885 = vadd.f32 %v7770, %v7856
    %v7886 = vadd.f32 %v7771, %v7858
    %v7887 = vadd.f32 %v7772, %v7860
    %v7888 = vadd.f32 %v7773, %v7862
    %v7889 = vadd.f32 %v7774, %v7864
    %v7890 = vadd.f32 %v7775, %v7866
    %s7891 = sld [smem:[#allocation2 + $0x25]]
    %s7892 = sld [smem:[#allocation2 + $0x56]]
    %v7893 = vstv %s7891
    %v7894 = vmul.f32 %v7893, %v208
    %v7895 = vmul.f32 %v7893, %v209
    %v7896 = vmul.f32 %v7893, %v210
    %v7897 = vmul.f32 %v7893, %v211
    %v7898 = vmul.f32 %v7893, %v212
    %v7899 = vmul.f32 %v7893, %v213
    %v7900 = vmul.f32 %v7893, %v214
    %v7901 = vmul.f32 %v7893, %v215
    %v7902 = vmul.f32 %v7893, %v216
    %v7903 = vmul.f32 %v7893, %v217
    %v7904 = vmul.f32 %v7893, %v218
    %v7905 = vmul.f32 %v7893, %v219
    %v7906 = vmul.f32 %v7893, %v220
    %v7907 = vmul.f32 %v7893, %v221
    %v7908 = vmul.f32 %v7893, %v222
    %v7909 = vmul.f32 %v7893, %v223
    %v7910 = vmul.f32 %v7893, %v224
    %v7911 = vmul.f32 %v7893, %v225
    %v7930 = vrot.slane %v7894, 5
    %v7931 = vrot.slane %v7895, 5
    %v7932 = vsel %vm7513, %v7930, %v7931
    %v7933 = vrot.slane %v7896, 5
    %v7934 = vsel %vm7513, %v7931, %v7933
    %v7935 = vrot.slane %v7897, 5
    %v7936 = vrot.slane %v7898, 5
    %v7937 = vsel %vm7513, %v7935, %v7936
    %v7938 = vrot.slane %v7899, 5
    %v7939 = vsel %vm7513, %v7936, %v7938
    %v7940 = vrot.slane %v7900, 5
    %v7941 = vrot.slane %v7901, 5
    %v7942 = vsel %vm7513, %v7940, %v7941
    %v7943 = vrot.slane %v7902, 5
    %v7944 = vsel %vm7513, %v7941, %v7943
    %v7945 = vrot.slane %v7903, 5
    %v7946 = vrot.slane %v7904, 5
    %v7947 = vsel %vm7513, %v7945, %v7946
    %v7948 = vrot.slane %v7905, 5
    %v7949 = vsel %vm7513, %v7946, %v7948
    %v7950 = vrot.slane %v7906, 5
    %v7951 = vrot.slane %v7907, 5
    %v7952 = vsel %vm7513, %v7950, %v7951
    %v7953 = vrot.slane %v7908, 5
    %v7954 = vsel %vm7513, %v7951, %v7953
    %v7955 = vrot.slane %v7909, 5
    %v7956 = vrot.slane %v7910, 5
    %v7957 = vsel %vm7513, %v7955, %v7956
    %v7958 = vrot.slane %v7911, 5
    %v7959 = vsel %vm7513, %v7956, %v7958
    %7960 = vrot.lane.b32.xlu0 %v7932, 126
    %v7961 = vpop.permute.xlu0 %7960
    %7962 = vrot.lane.b32.xlu0 %v7934, 126
    %v7963 = vpop.permute.xlu0 %7962
    %7964 = vrot.lane.b32.xlu0 %v7937, 126
    %v7965 = vpop.permute.xlu0 %7964
    %7966 = vrot.lane.b32.xlu0 %v7939, 126
    %v7967 = vpop.permute.xlu0 %7966
    %7968 = vrot.lane.b32.xlu0 %v7942, 126
    %v7969 = vpop.permute.xlu0 %7968
    %7970 = vrot.lane.b32.xlu0 %v7944, 126
    %v7971 = vpop.permute.xlu0 %7970
    %7972 = vrot.lane.b32.xlu0 %v7947, 126
    %v7973 = vpop.permute.xlu0 %7972
    %7974 = vrot.lane.b32.xlu0 %v7949, 126
    %v7975 = vpop.permute.xlu0 %7974
    %7976 = vrot.lane.b32.xlu0 %v7952, 126
    %v7977 = vpop.permute.xlu0 %7976
    %7978 = vrot.lane.b32.xlu0 %v7954, 126
    %v7979 = vpop.permute.xlu0 %7978
    %7980 = vrot.lane.b32.xlu0 %v7957, 126
    %v7981 = vpop.permute.xlu0 %7980
    %7982 = vrot.lane.b32.xlu0 %v7959, 126
    %v7983 = vpop.permute.xlu0 %7982
    %v7996 = vadd.f32 %v7879, %v7961
    %v7997 = vadd.f32 %v7880, %v7963
    %v7998 = vadd.f32 %v7881, %v7965
    %v7999 = vadd.f32 %v7882, %v7967
    %v8000 = vadd.f32 %v7883, %v7969
    %v8001 = vadd.f32 %v7884, %v7971
    %v8002 = vadd.f32 %v7885, %v7973
    %v8003 = vadd.f32 %v7886, %v7975
    %v8004 = vadd.f32 %v7887, %v7977
    %v8005 = vadd.f32 %v7888, %v7979
    %v8006 = vadd.f32 %v7889, %v7981
    %v8007 = vadd.f32 %v7890, %v7983
    %v8008 = vstv %s7892
    %v8009 = vmul.f32 %v8008, %v190
    %v8010 = vmul.f32 %v8008, %v191
    %v8011 = vmul.f32 %v8008, %v192
    %v8012 = vmul.f32 %v8008, %v193
    %v8013 = vmul.f32 %v8008, %v194
    %v8014 = vmul.f32 %v8008, %v195
    %v8015 = vmul.f32 %v8008, %v196
    %v8016 = vmul.f32 %v8008, %v197
    %v8017 = vmul.f32 %v8008, %v198
    %v8018 = vmul.f32 %v8008, %v199
    %v8019 = vmul.f32 %v8008, %v200
    %v8020 = vmul.f32 %v8008, %v201
    %v8021 = vmul.f32 %v8008, %v202
    %v8022 = vmul.f32 %v8008, %v203
    %v8023 = vmul.f32 %v8008, %v204
    %v8024 = vmul.f32 %v8008, %v205
    %v8025 = vmul.f32 %v8008, %v206
    %v8026 = vmul.f32 %v8008, %v207
    %v8045 = vrot.slane %v8009, 5
    %v8046 = vrot.slane %v8010, 5
    %v8047 = vsel %vm7513, %v8045, %v8046
    %v8048 = vrot.slane %v8011, 5
    %v8049 = vsel %vm7513, %v8046, %v8048
    %v8050 = vrot.slane %v8012, 5
    %v8051 = vrot.slane %v8013, 5
    %v8052 = vsel %vm7513, %v8050, %v8051
    %v8053 = vrot.slane %v8014, 5
    %v8054 = vsel %vm7513, %v8051, %v8053
    %v8055 = vrot.slane %v8015, 5
    %v8056 = vrot.slane %v8016, 5
    %v8057 = vsel %vm7513, %v8055, %v8056
    %v8058 = vrot.slane %v8017, 5
    %v8059 = vsel %vm7513, %v8056, %v8058
    %v8060 = vrot.slane %v8018, 5
    %v8061 = vrot.slane %v8019, 5
    %v8062 = vsel %vm7513, %v8060, %v8061
    %v8063 = vrot.slane %v8020, 5
    %v8064 = vsel %vm7513, %v8061, %v8063
    %v8065 = vrot.slane %v8021, 5
    %v8066 = vrot.slane %v8022, 5
    %v8067 = vsel %vm7513, %v8065, %v8066
    %v8068 = vrot.slane %v8023, 5
    %v8069 = vsel %vm7513, %v8066, %v8068
    %v8070 = vrot.slane %v8024, 5
    %v8071 = vrot.slane %v8025, 5
    %v8072 = vsel %vm7513, %v8070, %v8071
    %v8073 = vrot.slane %v8026, 5
    %v8074 = vsel %vm7513, %v8071, %v8073
    %8075 = vrot.lane.b32.xlu0 %v8047, 126
    %v8076 = vpop.permute.xlu0 %8075
    %8077 = vrot.lane.b32.xlu0 %v8049, 126
    %v8078 = vpop.permute.xlu0 %8077
    %8079 = vrot.lane.b32.xlu0 %v8052, 126
    %v8080 = vpop.permute.xlu0 %8079
    %8081 = vrot.lane.b32.xlu0 %v8054, 126
    %v8082 = vpop.permute.xlu0 %8081
    %8083 = vrot.lane.b32.xlu0 %v8057, 126
    %v8084 = vpop.permute.xlu0 %8083
    %8085 = vrot.lane.b32.xlu0 %v8059, 126
    %v8086 = vpop.permute.xlu0 %8085
    %8087 = vrot.lane.b32.xlu0 %v8062, 126
    %v8088 = vpop.permute.xlu0 %8087
    %8089 = vrot.lane.b32.xlu0 %v8064, 126
    %v8090 = vpop.permute.xlu0 %8089
    %8091 = vrot.lane.b32.xlu0 %v8067, 126
    %v8092 = vpop.permute.xlu0 %8091
    %8093 = vrot.lane.b32.xlu0 %v8069, 126
    %v8094 = vpop.permute.xlu0 %8093
    %8095 = vrot.lane.b32.xlu0 %v8072, 126
    %v8096 = vpop.permute.xlu0 %8095
    %8097 = vrot.lane.b32.xlu0 %v8074, 126
    %v8098 = vpop.permute.xlu0 %8097
    %v8111 = vadd.f32 %v7996, %v8076
    %v8112 = vadd.f32 %v7997, %v8078
    %v8113 = vadd.f32 %v7998, %v8080
    %v8114 = vadd.f32 %v7999, %v8082
    %v8115 = vadd.f32 %v8000, %v8084
    %v8116 = vadd.f32 %v8001, %v8086
    %v8117 = vadd.f32 %v8002, %v8088
    %v8118 = vadd.f32 %v8003, %v8090
    %v8119 = vadd.f32 %v8004, %v8092
    %v8120 = vadd.f32 %v8005, %v8094
    %v8121 = vadd.f32 %v8006, %v8096
    %v8122 = vadd.f32 %v8007, %v8098
    %s8123 = sld [smem:[#allocation2 + $0x26]]
    %s8124 = sld [smem:[#allocation2 + $0x57]]
    %v8125 = vstv %s8123
    %v8126 = vmul.f32 %v8125, %v208
    %v8127 = vmul.f32 %v8125, %v209
    %v8128 = vmul.f32 %v8125, %v210
    %v8129 = vmul.f32 %v8125, %v211
    %v8130 = vmul.f32 %v8125, %v212
    %v8131 = vmul.f32 %v8125, %v213
    %v8132 = vmul.f32 %v8125, %v214
    %v8133 = vmul.f32 %v8125, %v215
    %v8134 = vmul.f32 %v8125, %v216
    %v8135 = vmul.f32 %v8125, %v217
    %v8136 = vmul.f32 %v8125, %v218
    %v8137 = vmul.f32 %v8125, %v219
    %v8138 = vmul.f32 %v8125, %v220
    %v8139 = vmul.f32 %v8125, %v221
    %v8140 = vmul.f32 %v8125, %v222
    %v8141 = vmul.f32 %v8125, %v223
    %v8142 = vmul.f32 %v8125, %v224
    %v8143 = vmul.f32 %v8125, %v225
    %v8162 = vrot.slane %v8126, 5
    %v8163 = vrot.slane %v8127, 5
    %v8164 = vsel %vm7513, %v8162, %v8163
    %v8165 = vrot.slane %v8128, 5
    %v8166 = vsel %vm7513, %v8163, %v8165
    %v8167 = vrot.slane %v8129, 5
    %v8168 = vrot.slane %v8130, 5
    %v8169 = vsel %vm7513, %v8167, %v8168
    %v8170 = vrot.slane %v8131, 5
    %v8171 = vsel %vm7513, %v8168, %v8170
    %v8172 = vrot.slane %v8132, 5
    %v8173 = vrot.slane %v8133, 5
    %v8174 = vsel %vm7513, %v8172, %v8173
    %v8175 = vrot.slane %v8134, 5
    %v8176 = vsel %vm7513, %v8173, %v8175
    %v8177 = vrot.slane %v8135, 5
    %v8178 = vrot.slane %v8136, 5
    %v8179 = vsel %vm7513, %v8177, %v8178
    %v8180 = vrot.slane %v8137, 5
    %v8181 = vsel %vm7513, %v8178, %v8180
    %v8182 = vrot.slane %v8138, 5
    %v8183 = vrot.slane %v8139, 5
    %v8184 = vsel %vm7513, %v8182, %v8183
    %v8185 = vrot.slane %v8140, 5
    %v8186 = vsel %vm7513, %v8183, %v8185
    %v8187 = vrot.slane %v8141, 5
    %v8188 = vrot.slane %v8142, 5
    %v8189 = vsel %vm7513, %v8187, %v8188
    %v8190 = vrot.slane %v8143, 5
    %v8191 = vsel %vm7513, %v8188, %v8190
    %8192 = vrot.lane.b32.xlu0 %v8164, 125
    %v8193 = vpop.permute.xlu0 %8192
    %8194 = vrot.lane.b32.xlu0 %v8166, 125
    %v8195 = vpop.permute.xlu0 %8194
    %8196 = vrot.lane.b32.xlu0 %v8169, 125
    %v8197 = vpop.permute.xlu0 %8196
    %8198 = vrot.lane.b32.xlu0 %v8171, 125
    %v8199 = vpop.permute.xlu0 %8198
    %8200 = vrot.lane.b32.xlu0 %v8174, 125
    %v8201 = vpop.permute.xlu0 %8200
    %8202 = vrot.lane.b32.xlu0 %v8176, 125
    %v8203 = vpop.permute.xlu0 %8202
    %8204 = vrot.lane.b32.xlu0 %v8179, 125
    %v8205 = vpop.permute.xlu0 %8204
    %8206 = vrot.lane.b32.xlu0 %v8181, 125
    %v8207 = vpop.permute.xlu0 %8206
    %8208 = vrot.lane.b32.xlu0 %v8184, 125
    %v8209 = vpop.permute.xlu0 %8208
    %8210 = vrot.lane.b32.xlu0 %v8186, 125
    %v8211 = vpop.permute.xlu0 %8210
    %8212 = vrot.lane.b32.xlu0 %v8189, 125
    %v8213 = vpop.permute.xlu0 %8212
    %8214 = vrot.lane.b32.xlu0 %v8191, 125
    %v8215 = vpop.permute.xlu0 %8214
    %v8228 = vadd.f32 %v8111, %v8193
    %v8229 = vadd.f32 %v8112, %v8195
    %v8230 = vadd.f32 %v8113, %v8197
    %v8231 = vadd.f32 %v8114, %v8199
    %v8232 = vadd.f32 %v8115, %v8201
    %v8233 = vadd.f32 %v8116, %v8203
    %v8234 = vadd.f32 %v8117, %v8205
    %v8235 = vadd.f32 %v8118, %v8207
    %v8236 = vadd.f32 %v8119, %v8209
    %v8237 = vadd.f32 %v8120, %v8211
    %v8238 = vadd.f32 %v8121, %v8213
    %v8239 = vadd.f32 %v8122, %v8215
    %v8240 = vstv %s8124
    %v8241 = vmul.f32 %v8240, %v190
    %v8242 = vmul.f32 %v8240, %v191
    %v8243 = vmul.f32 %v8240, %v192
    %v8244 = vmul.f32 %v8240, %v193
    %v8245 = vmul.f32 %v8240, %v194
    %v8246 = vmul.f32 %v8240, %v195
    %v8247 = vmul.f32 %v8240, %v196
    %v8248 = vmul.f32 %v8240, %v197
    %v8249 = vmul.f32 %v8240, %v198
    %v8250 = vmul.f32 %v8240, %v199
    %v8251 = vmul.f32 %v8240, %v200
    %v8252 = vmul.f32 %v8240, %v201
    %v8253 = vmul.f32 %v8240, %v202
    %v8254 = vmul.f32 %v8240, %v203
    %v8255 = vmul.f32 %v8240, %v204
    %v8256 = vmul.f32 %v8240, %v205
    %v8257 = vmul.f32 %v8240, %v206
    %v8258 = vmul.f32 %v8240, %v207
    %v8277 = vrot.slane %v8241, 5
    %v8278 = vrot.slane %v8242, 5
    %v8279 = vsel %vm7513, %v8277, %v8278
    %v8280 = vrot.slane %v8243, 5
    %v8281 = vsel %vm7513, %v8278, %v8280
    %v8282 = vrot.slane %v8244, 5
    %v8283 = vrot.slane %v8245, 5
    %v8284 = vsel %vm7513, %v8282, %v8283
    %v8285 = vrot.slane %v8246, 5
    %v8286 = vsel %vm7513, %v8283, %v8285
    %v8287 = vrot.slane %v8247, 5
    %v8288 = vrot.slane %v8248, 5
    %v8289 = vsel %vm7513, %v8287, %v8288
    %v8290 = vrot.slane %v8249, 5
    %v8291 = vsel %vm7513, %v8288, %v8290
    %v8292 = vrot.slane %v8250, 5
    %v8293 = vrot.slane %v8251, 5
    %v8294 = vsel %vm7513, %v8292, %v8293
    %v8295 = vrot.slane %v8252, 5
    %v8296 = vsel %vm7513, %v8293, %v8295
    %v8297 = vrot.slane %v8253, 5
    %v8298 = vrot.slane %v8254, 5
    %v8299 = vsel %vm7513, %v8297, %v8298
    %v8300 = vrot.slane %v8255, 5
    %v8301 = vsel %vm7513, %v8298, %v8300
    %v8302 = vrot.slane %v8256, 5
    %v8303 = vrot.slane %v8257, 5
    %v8304 = vsel %vm7513, %v8302, %v8303
    %v8305 = vrot.slane %v8258, 5
    %v8306 = vsel %vm7513, %v8303, %v8305
    %8307 = vrot.lane.b32.xlu0 %v8279, 125
    %v8308 = vpop.permute.xlu0 %8307
    %8309 = vrot.lane.b32.xlu0 %v8281, 125
    %v8310 = vpop.permute.xlu0 %8309
    %8311 = vrot.lane.b32.xlu0 %v8284, 125
    %v8312 = vpop.permute.xlu0 %8311
    %8313 = vrot.lane.b32.xlu0 %v8286, 125
    %v8314 = vpop.permute.xlu0 %8313
    %8315 = vrot.lane.b32.xlu0 %v8289, 125
    %v8316 = vpop.permute.xlu0 %8315
    %8317 = vrot.lane.b32.xlu0 %v8291, 125
    %v8318 = vpop.permute.xlu0 %8317
    %8319 = vrot.lane.b32.xlu0 %v8294, 125
    %v8320 = vpop.permute.xlu0 %8319
    %8321 = vrot.lane.b32.xlu0 %v8296, 125
    %v8322 = vpop.permute.xlu0 %8321
    %8323 = vrot.lane.b32.xlu0 %v8299, 125
    %v8324 = vpop.permute.xlu0 %8323
    %8325 = vrot.lane.b32.xlu0 %v8301, 125
    %v8326 = vpop.permute.xlu0 %8325
    %8327 = vrot.lane.b32.xlu0 %v8304, 125
    %v8328 = vpop.permute.xlu0 %8327
    %8329 = vrot.lane.b32.xlu0 %v8306, 125
    %v8330 = vpop.permute.xlu0 %8329
    %v8343 = vadd.f32 %v8228, %v8308
    %v8344 = vadd.f32 %v8229, %v8310
    %v8345 = vadd.f32 %v8230, %v8312
    %v8346 = vadd.f32 %v8231, %v8314
    %v8347 = vadd.f32 %v8232, %v8316
    %v8348 = vadd.f32 %v8233, %v8318
    %v8349 = vadd.f32 %v8234, %v8320
    %v8350 = vadd.f32 %v8235, %v8322
    %v8351 = vadd.f32 %v8236, %v8324
    %v8352 = vadd.f32 %v8237, %v8326
    %v8353 = vadd.f32 %v8238, %v8328
    %v8354 = vadd.f32 %v8239, %v8330
    %s8355 = sld [smem:[#allocation2 + $0x27]]
    %s8356 = sld [smem:[#allocation2 + $0x58]]
    %v8357 = vstv %s8355
    %v8358 = vmul.f32 %v8357, %v208
    %v8359 = vmul.f32 %v8357, %v209
    %v8360 = vmul.f32 %v8357, %v210
    %v8361 = vmul.f32 %v8357, %v211
    %v8362 = vmul.f32 %v8357, %v212
    %v8363 = vmul.f32 %v8357, %v213
    %v8364 = vmul.f32 %v8357, %v214
    %v8365 = vmul.f32 %v8357, %v215
    %v8366 = vmul.f32 %v8357, %v216
    %v8367 = vmul.f32 %v8357, %v217
    %v8368 = vmul.f32 %v8357, %v218
    %v8369 = vmul.f32 %v8357, %v219
    %v8370 = vmul.f32 %v8357, %v220
    %v8371 = vmul.f32 %v8357, %v221
    %v8372 = vmul.f32 %v8357, %v222
    %v8373 = vmul.f32 %v8357, %v223
    %v8374 = vmul.f32 %v8357, %v224
    %v8375 = vmul.f32 %v8357, %v225
    %v8394 = vrot.slane %v8358, 5
    %v8395 = vrot.slane %v8359, 5
    %v8396 = vsel %vm7513, %v8394, %v8395
    %v8397 = vrot.slane %v8360, 5
    %v8398 = vsel %vm7513, %v8395, %v8397
    %v8399 = vrot.slane %v8361, 5
    %v8400 = vrot.slane %v8362, 5
    %v8401 = vsel %vm7513, %v8399, %v8400
    %v8402 = vrot.slane %v8363, 5
    %v8403 = vsel %vm7513, %v8400, %v8402
    %v8404 = vrot.slane %v8364, 5
    %v8405 = vrot.slane %v8365, 5
    %v8406 = vsel %vm7513, %v8404, %v8405
    %v8407 = vrot.slane %v8366, 5
    %v8408 = vsel %vm7513, %v8405, %v8407
    %v8409 = vrot.slane %v8367, 5
    %v8410 = vrot.slane %v8368, 5
    %v8411 = vsel %vm7513, %v8409, %v8410
    %v8412 = vrot.slane %v8369, 5
    %v8413 = vsel %vm7513, %v8410, %v8412
    %v8414 = vrot.slane %v8370, 5
    %v8415 = vrot.slane %v8371, 5
    %v8416 = vsel %vm7513, %v8414, %v8415
    %v8417 = vrot.slane %v8372, 5
    %v8418 = vsel %vm7513, %v8415, %v8417
    %v8419 = vrot.slane %v8373, 5
    %v8420 = vrot.slane %v8374, 5
    %v8421 = vsel %vm7513, %v8419, %v8420
    %v8422 = vrot.slane %v8375, 5
    %v8423 = vsel %vm7513, %v8420, %v8422
    %8424 = vrot.lane.b32.xlu0 %v8396, 124
    %v8425 = vpop.permute.xlu0 %8424
    %8426 = vrot.lane.b32.xlu0 %v8398, 124
    %v8427 = vpop.permute.xlu0 %8426
    %8428 = vrot.lane.b32.xlu0 %v8401, 124
    %v8429 = vpop.permute.xlu0 %8428
    %8430 = vrot.lane.b32.xlu0 %v8403, 124
    %v8431 = vpop.permute.xlu0 %8430
    %8432 = vrot.lane.b32.xlu0 %v8406, 124
    %v8433 = vpop.permute.xlu0 %8432
    %8434 = vrot.lane.b32.xlu0 %v8408, 124
    %v8435 = vpop.permute.xlu0 %8434
    %8436 = vrot.lane.b32.xlu0 %v8411, 124
    %v8437 = vpop.permute.xlu0 %8436
    %8438 = vrot.lane.b32.xlu0 %v8413, 124
    %v8439 = vpop.permute.xlu0 %8438
    %8440 = vrot.lane.b32.xlu0 %v8416, 124
    %v8441 = vpop.permute.xlu0 %8440
    %8442 = vrot.lane.b32.xlu0 %v8418, 124
    %v8443 = vpop.permute.xlu0 %8442
    %8444 = vrot.lane.b32.xlu0 %v8421, 124
    %v8445 = vpop.permute.xlu0 %8444
    %8446 = vrot.lane.b32.xlu0 %v8423, 124
    %v8447 = vpop.permute.xlu0 %8446
    %v8460 = vadd.f32 %v8343, %v8425
    %v8461 = vadd.f32 %v8344, %v8427
    %v8462 = vadd.f32 %v8345, %v8429
    %v8463 = vadd.f32 %v8346, %v8431
    %v8464 = vadd.f32 %v8347, %v8433
    %v8465 = vadd.f32 %v8348, %v8435
    %v8466 = vadd.f32 %v8349, %v8437
    %v8467 = vadd.f32 %v8350, %v8439
    %v8468 = vadd.f32 %v8351, %v8441
    %v8469 = vadd.f32 %v8352, %v8443
    %v8470 = vadd.f32 %v8353, %v8445
    %v8471 = vadd.f32 %v8354, %v8447
    %v8472 = vstv %s8356
    %v8473 = vmul.f32 %v8472, %v190
    %v8474 = vmul.f32 %v8472, %v191
    %v8475 = vmul.f32 %v8472, %v192
    %v8476 = vmul.f32 %v8472, %v193
    %v8477 = vmul.f32 %v8472, %v194
    %v8478 = vmul.f32 %v8472, %v195
    %v8479 = vmul.f32 %v8472, %v196
    %v8480 = vmul.f32 %v8472, %v197
    %v8481 = vmul.f32 %v8472, %v198
    %v8482 = vmul.f32 %v8472, %v199
    %v8483 = vmul.f32 %v8472, %v200
    %v8484 = vmul.f32 %v8472, %v201
    %v8485 = vmul.f32 %v8472, %v202
    %v8486 = vmul.f32 %v8472, %v203
    %v8487 = vmul.f32 %v8472, %v204
    %v8488 = vmul.f32 %v8472, %v205
    %v8489 = vmul.f32 %v8472, %v206
    %v8490 = vmul.f32 %v8472, %v207
    %v8509 = vrot.slane %v8473, 5
    %v8510 = vrot.slane %v8474, 5
    %v8511 = vsel %vm7513, %v8509, %v8510
    %v8512 = vrot.slane %v8475, 5
    %v8513 = vsel %vm7513, %v8510, %v8512
    %v8514 = vrot.slane %v8476, 5
    %v8515 = vrot.slane %v8477, 5
    %v8516 = vsel %vm7513, %v8514, %v8515
    %v8517 = vrot.slane %v8478, 5
    %v8518 = vsel %vm7513, %v8515, %v8517
    %v8519 = vrot.slane %v8479, 5
    %v8520 = vrot.slane %v8480, 5
    %v8521 = vsel %vm7513, %v8519, %v8520
    %v8522 = vrot.slane %v8481, 5
    %v8523 = vsel %vm7513, %v8520, %v8522
    %v8524 = vrot.slane %v8482, 5
    %v8525 = vrot.slane %v8483, 5
    %v8526 = vsel %vm7513, %v8524, %v8525
    %v8527 = vrot.slane %v8484, 5
    %v8528 = vsel %vm7513, %v8525, %v8527
    %v8529 = vrot.slane %v8485, 5
    %v8530 = vrot.slane %v8486, 5
    %v8531 = vsel %vm7513, %v8529, %v8530
    %v8532 = vrot.slane %v8487, 5
    %v8533 = vsel %vm7513, %v8530, %v8532
    %v8534 = vrot.slane %v8488, 5
    %v8535 = vrot.slane %v8489, 5
    %v8536 = vsel %vm7513, %v8534, %v8535
    %v8537 = vrot.slane %v8490, 5
    %v8538 = vsel %vm7513, %v8535, %v8537
    %8539 = vrot.lane.b32.xlu0 %v8511, 124
    %v8540 = vpop.permute.xlu0 %8539
    %8541 = vrot.lane.b32.xlu0 %v8513, 124
    %v8542 = vpop.permute.xlu0 %8541
    %8543 = vrot.lane.b32.xlu0 %v8516, 124
    %v8544 = vpop.permute.xlu0 %8543
    %8545 = vrot.lane.b32.xlu0 %v8518, 124
    %v8546 = vpop.permute.xlu0 %8545
    %8547 = vrot.lane.b32.xlu0 %v8521, 124
    %v8548 = vpop.permute.xlu0 %8547
    %8549 = vrot.lane.b32.xlu0 %v8523, 124
    %v8550 = vpop.permute.xlu0 %8549
    %8551 = vrot.lane.b32.xlu0 %v8526, 124
    %v8552 = vpop.permute.xlu0 %8551
    %8553 = vrot.lane.b32.xlu0 %v8528, 124
    %v8554 = vpop.permute.xlu0 %8553
    %8555 = vrot.lane.b32.xlu0 %v8531, 124
    %v8556 = vpop.permute.xlu0 %8555
    %8557 = vrot.lane.b32.xlu0 %v8533, 124
    %v8558 = vpop.permute.xlu0 %8557
    %8559 = vrot.lane.b32.xlu0 %v8536, 124
    %v8560 = vpop.permute.xlu0 %8559
    %8561 = vrot.lane.b32.xlu0 %v8538, 124
    %v8562 = vpop.permute.xlu0 %8561
    %v8575 = vadd.f32 %v8460, %v8540
    %v8576 = vadd.f32 %v8461, %v8542
    %v8577 = vadd.f32 %v8462, %v8544
    %v8578 = vadd.f32 %v8463, %v8546
    %v8579 = vadd.f32 %v8464, %v8548
    %v8580 = vadd.f32 %v8465, %v8550
    %v8581 = vadd.f32 %v8466, %v8552
    %v8582 = vadd.f32 %v8467, %v8554
    %v8583 = vadd.f32 %v8468, %v8556
    %v8584 = vadd.f32 %v8469, %v8558
    %v8585 = vadd.f32 %v8470, %v8560
    %v8586 = vadd.f32 %v8471, %v8562
    %s8587 = sld [smem:[#allocation2 + $0x28]]
    %s8588 = sld [smem:[#allocation2 + $0x59]]
    %v8589 = vstv %s8587
    %v8590 = vmul.f32 %v8589, %v208
    %v8591 = vmul.f32 %v8589, %v209
    %v8592 = vmul.f32 %v8589, %v210
    %v8593 = vmul.f32 %v8589, %v211
    %v8594 = vmul.f32 %v8589, %v212
    %v8595 = vmul.f32 %v8589, %v213
    %v8596 = vmul.f32 %v8589, %v214
    %v8597 = vmul.f32 %v8589, %v215
    %v8598 = vmul.f32 %v8589, %v216
    %v8599 = vmul.f32 %v8589, %v217
    %v8600 = vmul.f32 %v8589, %v218
    %v8601 = vmul.f32 %v8589, %v219
    %v8602 = vmul.f32 %v8589, %v220
    %v8603 = vmul.f32 %v8589, %v221
    %v8604 = vmul.f32 %v8589, %v222
    %v8605 = vmul.f32 %v8589, %v223
    %v8606 = vmul.f32 %v8589, %v224
    %v8607 = vmul.f32 %v8589, %v225
    %v8626 = vrot.slane %v8590, 5
    %v8627 = vrot.slane %v8591, 5
    %v8628 = vsel %vm7513, %v8626, %v8627
    %v8629 = vrot.slane %v8592, 5
    %v8630 = vsel %vm7513, %v8627, %v8629
    %v8631 = vrot.slane %v8593, 5
    %v8632 = vrot.slane %v8594, 5
    %v8633 = vsel %vm7513, %v8631, %v8632
    %v8634 = vrot.slane %v8595, 5
    %v8635 = vsel %vm7513, %v8632, %v8634
    %v8636 = vrot.slane %v8596, 5
    %v8637 = vrot.slane %v8597, 5
    %v8638 = vsel %vm7513, %v8636, %v8637
    %v8639 = vrot.slane %v8598, 5
    %v8640 = vsel %vm7513, %v8637, %v8639
    %v8641 = vrot.slane %v8599, 5
    %v8642 = vrot.slane %v8600, 5
    %v8643 = vsel %vm7513, %v8641, %v8642
    %v8644 = vrot.slane %v8601, 5
    %v8645 = vsel %vm7513, %v8642, %v8644
    %v8646 = vrot.slane %v8602, 5
    %v8647 = vrot.slane %v8603, 5
    %v8648 = vsel %vm7513, %v8646, %v8647
    %v8649 = vrot.slane %v8604, 5
    %v8650 = vsel %vm7513, %v8647, %v8649
    %v8651 = vrot.slane %v8605, 5
    %v8652 = vrot.slane %v8606, 5
    %v8653 = vsel %vm7513, %v8651, %v8652
    %v8654 = vrot.slane %v8607, 5
    %v8655 = vsel %vm7513, %v8652, %v8654
    %8656 = vrot.lane.b32.xlu0 %v8628, 123
    %v8657 = vpop.permute.xlu0 %8656
    %8658 = vrot.lane.b32.xlu0 %v8630, 123
    %v8659 = vpop.permute.xlu0 %8658
    %8660 = vrot.lane.b32.xlu0 %v8633, 123
    %v8661 = vpop.permute.xlu0 %8660
    %8662 = vrot.lane.b32.xlu0 %v8635, 123
    %v8663 = vpop.permute.xlu0 %8662
    %8664 = vrot.lane.b32.xlu0 %v8638, 123
    %v8665 = vpop.permute.xlu0 %8664
    %8666 = vrot.lane.b32.xlu0 %v8640, 123
    %v8667 = vpop.permute.xlu0 %8666
    %8668 = vrot.lane.b32.xlu0 %v8643, 123
    %v8669 = vpop.permute.xlu0 %8668
    %8670 = vrot.lane.b32.xlu0 %v8645, 123
    %v8671 = vpop.permute.xlu0 %8670
    %8672 = vrot.lane.b32.xlu0 %v8648, 123
    %v8673 = vpop.permute.xlu0 %8672
    %8674 = vrot.lane.b32.xlu0 %v8650, 123
    %v8675 = vpop.permute.xlu0 %8674
    %8676 = vrot.lane.b32.xlu0 %v8653, 123
    %v8677 = vpop.permute.xlu0 %8676
    %8678 = vrot.lane.b32.xlu0 %v8655, 123
    %v8679 = vpop.permute.xlu0 %8678
    %v8692 = vadd.f32 %v8575, %v8657
    %v8693 = vadd.f32 %v8576, %v8659
    %v8694 = vadd.f32 %v8577, %v8661
    %v8695 = vadd.f32 %v8578, %v8663
    %v8696 = vadd.f32 %v8579, %v8665
    %v8697 = vadd.f32 %v8580, %v8667
    %v8698 = vadd.f32 %v8581, %v8669
    %v8699 = vadd.f32 %v8582, %v8671
    %v8700 = vadd.f32 %v8583, %v8673
    %v8701 = vadd.f32 %v8584, %v8675
    %v8702 = vadd.f32 %v8585, %v8677
    %v8703 = vadd.f32 %v8586, %v8679
    %v8704 = vstv %s8588
    %v8705 = vmul.f32 %v8704, %v190
    %v8706 = vmul.f32 %v8704, %v191
    %v8707 = vmul.f32 %v8704, %v192
    %v8708 = vmul.f32 %v8704, %v193
    %v8709 = vmul.f32 %v8704, %v194
    %v8710 = vmul.f32 %v8704, %v195
    %v8711 = vmul.f32 %v8704, %v196
    %v8712 = vmul.f32 %v8704, %v197
    %v8713 = vmul.f32 %v8704, %v198
    %v8714 = vmul.f32 %v8704, %v199
    %v8715 = vmul.f32 %v8704, %v200
    %v8716 = vmul.f32 %v8704, %v201
    %v8717 = vmul.f32 %v8704, %v202
    %v8718 = vmul.f32 %v8704, %v203
    %v8719 = vmul.f32 %v8704, %v204
    %v8720 = vmul.f32 %v8704, %v205
    %v8721 = vmul.f32 %v8704, %v206
    %v8722 = vmul.f32 %v8704, %v207
    %v8741 = vrot.slane %v8705, 5
    %v8742 = vrot.slane %v8706, 5
    %v8743 = vsel %vm7513, %v8741, %v8742
    %v8744 = vrot.slane %v8707, 5
    %v8745 = vsel %vm7513, %v8742, %v8744
    %v8746 = vrot.slane %v8708, 5
    %v8747 = vrot.slane %v8709, 5
    %v8748 = vsel %vm7513, %v8746, %v8747
    %v8749 = vrot.slane %v8710, 5
    %v8750 = vsel %vm7513, %v8747, %v8749
    %v8751 = vrot.slane %v8711, 5
    %v8752 = vrot.slane %v8712, 5
    %v8753 = vsel %vm7513, %v8751, %v8752
    %v8754 = vrot.slane %v8713, 5
    %v8755 = vsel %vm7513, %v8752, %v8754
    %v8756 = vrot.slane %v8714, 5
    %v8757 = vrot.slane %v8715, 5
    %v8758 = vsel %vm7513, %v8756, %v8757
    %v8759 = vrot.slane %v8716, 5
    %v8760 = vsel %vm7513, %v8757, %v8759
    %v8761 = vrot.slane %v8717, 5
    %v8762 = vrot.slane %v8718, 5
    %v8763 = vsel %vm7513, %v8761, %v8762
    %v8764 = vrot.slane %v8719, 5
    %v8765 = vsel %vm7513, %v8762, %v8764
    %v8766 = vrot.slane %v8720, 5
    %v8767 = vrot.slane %v8721, 5
    %v8768 = vsel %vm7513, %v8766, %v8767
    %v8769 = vrot.slane %v8722, 5
    %v8770 = vsel %vm7513, %v8767, %v8769
    %8771 = vrot.lane.b32.xlu0 %v8743, 123
    %v8772 = vpop.permute.xlu0 %8771
    %8773 = vrot.lane.b32.xlu0 %v8745, 123
    %v8774 = vpop.permute.xlu0 %8773
    %8775 = vrot.lane.b32.xlu0 %v8748, 123
    %v8776 = vpop.permute.xlu0 %8775
    %8777 = vrot.lane.b32.xlu0 %v8750, 123
    %v8778 = vpop.permute.xlu0 %8777
    %8779 = vrot.lane.b32.xlu0 %v8753, 123
    %v8780 = vpop.permute.xlu0 %8779
    %8781 = vrot.lane.b32.xlu0 %v8755, 123
    %v8782 = vpop.permute.xlu0 %8781
    %8783 = vrot.lane.b32.xlu0 %v8758, 123
    %v8784 = vpop.permute.xlu0 %8783
    %8785 = vrot.lane.b32.xlu0 %v8760, 123
    %v8786 = vpop.permute.xlu0 %8785
    %8787 = vrot.lane.b32.xlu0 %v8763, 123
    %v8788 = vpop.permute.xlu0 %8787
    %8789 = vrot.lane.b32.xlu0 %v8765, 123
    %v8790 = vpop.permute.xlu0 %8789
    %8791 = vrot.lane.b32.xlu0 %v8768, 123
    %v8792 = vpop.permute.xlu0 %8791
    %8793 = vrot.lane.b32.xlu0 %v8770, 123
    %v8794 = vpop.permute.xlu0 %8793
    %v8807 = vadd.f32 %v8692, %v8772
    %v8808 = vadd.f32 %v8693, %v8774
    %v8809 = vadd.f32 %v8694, %v8776
    %v8810 = vadd.f32 %v8695, %v8778
    %v8811 = vadd.f32 %v8696, %v8780
    %v8812 = vadd.f32 %v8697, %v8782
    %v8813 = vadd.f32 %v8698, %v8784
    %v8814 = vadd.f32 %v8699, %v8786
    %v8815 = vadd.f32 %v8700, %v8788
    %v8816 = vadd.f32 %v8701, %v8790
    %v8817 = vadd.f32 %v8702, %v8792
    %v8818 = vadd.f32 %v8703, %v8794
    %s8819 = sld [smem:[#allocation2 + $0x29]]
    %s8820 = sld [smem:[#allocation2 + $0x5a]]
    %v8821 = vstv %s8819
    %v8822 = vmul.f32 %v8821, %v208
    %v8823 = vmul.f32 %v8821, %v209
    %v8824 = vmul.f32 %v8821, %v210
    %v8825 = vmul.f32 %v8821, %v211
    %v8826 = vmul.f32 %v8821, %v212
    %v8827 = vmul.f32 %v8821, %v213
    %v8828 = vmul.f32 %v8821, %v214
    %v8829 = vmul.f32 %v8821, %v215
    %v8830 = vmul.f32 %v8821, %v216
    %v8831 = vmul.f32 %v8821, %v217
    %v8832 = vmul.f32 %v8821, %v218
    %v8833 = vmul.f32 %v8821, %v219
    %v8834 = vmul.f32 %v8821, %v220
    %v8835 = vmul.f32 %v8821, %v221
    %v8836 = vmul.f32 %v8821, %v222
    %v8837 = vmul.f32 %v8821, %v223
    %v8838 = vmul.f32 %v8821, %v224
    %v8839 = vmul.f32 %v8821, %v225
    %v8858 = vrot.slane %v8822, 5
    %v8859 = vrot.slane %v8823, 5
    %v8860 = vsel %vm7513, %v8858, %v8859
    %v8861 = vrot.slane %v8824, 5
    %v8862 = vsel %vm7513, %v8859, %v8861
    %v8863 = vrot.slane %v8825, 5
    %v8864 = vrot.slane %v8826, 5
    %v8865 = vsel %vm7513, %v8863, %v8864
    %v8866 = vrot.slane %v8827, 5
    %v8867 = vsel %vm7513, %v8864, %v8866
    %v8868 = vrot.slane %v8828, 5
    %v8869 = vrot.slane %v8829, 5
    %v8870 = vsel %vm7513, %v8868, %v8869
    %v8871 = vrot.slane %v8830, 5
    %v8872 = vsel %vm7513, %v8869, %v8871
    %v8873 = vrot.slane %v8831, 5
    %v8874 = vrot.slane %v8832, 5
    %v8875 = vsel %vm7513, %v8873, %v8874
    %v8876 = vrot.slane %v8833, 5
    %v8877 = vsel %vm7513, %v8874, %v8876
    %v8878 = vrot.slane %v8834, 5
    %v8879 = vrot.slane %v8835, 5
    %v8880 = vsel %vm7513, %v8878, %v8879
    %v8881 = vrot.slane %v8836, 5
    %v8882 = vsel %vm7513, %v8879, %v8881
    %v8883 = vrot.slane %v8837, 5
    %v8884 = vrot.slane %v8838, 5
    %v8885 = vsel %vm7513, %v8883, %v8884
    %v8886 = vrot.slane %v8839, 5
    %v8887 = vsel %vm7513, %v8884, %v8886
    %8888 = vrot.lane.b32.xlu0 %v8860, 122
    %v8889 = vpop.permute.xlu0 %8888
    %8890 = vrot.lane.b32.xlu0 %v8862, 122
    %v8891 = vpop.permute.xlu0 %8890
    %8892 = vrot.lane.b32.xlu0 %v8865, 122
    %v8893 = vpop.permute.xlu0 %8892
    %8894 = vrot.lane.b32.xlu0 %v8867, 122
    %v8895 = vpop.permute.xlu0 %8894
    %8896 = vrot.lane.b32.xlu0 %v8870, 122
    %v8897 = vpop.permute.xlu0 %8896
    %8898 = vrot.lane.b32.xlu0 %v8872, 122
    %v8899 = vpop.permute.xlu0 %8898
    %8900 = vrot.lane.b32.xlu0 %v8875, 122
    %v8901 = vpop.permute.xlu0 %8900
    %8902 = vrot.lane.b32.xlu0 %v8877, 122
    %v8903 = vpop.permute.xlu0 %8902
    %8904 = vrot.lane.b32.xlu0 %v8880, 122
    %v8905 = vpop.permute.xlu0 %8904
    %8906 = vrot.lane.b32.xlu0 %v8882, 122
    %v8907 = vpop.permute.xlu0 %8906
    %8908 = vrot.lane.b32.xlu0 %v8885, 122
    %v8909 = vpop.permute.xlu0 %8908
    %8910 = vrot.lane.b32.xlu0 %v8887, 122
    %v8911 = vpop.permute.xlu0 %8910
    %v8924 = vadd.f32 %v8807, %v8889
    %v8925 = vadd.f32 %v8808, %v8891
    %v8926 = vadd.f32 %v8809, %v8893
    %v8927 = vadd.f32 %v8810, %v8895
    %v8928 = vadd.f32 %v8811, %v8897
    %v8929 = vadd.f32 %v8812, %v8899
    %v8930 = vadd.f32 %v8813, %v8901
    %v8931 = vadd.f32 %v8814, %v8903
    %v8932 = vadd.f32 %v8815, %v8905
    %v8933 = vadd.f32 %v8816, %v8907
    %v8934 = vadd.f32 %v8817, %v8909
    %v8935 = vadd.f32 %v8818, %v8911
    %v8936 = vstv %s8820
    %v8937 = vmul.f32 %v8936, %v190
    %v8938 = vmul.f32 %v8936, %v191
    %v8939 = vmul.f32 %v8936, %v192
    %v8940 = vmul.f32 %v8936, %v193
    %v8941 = vmul.f32 %v8936, %v194
    %v8942 = vmul.f32 %v8936, %v195
    %v8943 = vmul.f32 %v8936, %v196
    %v8944 = vmul.f32 %v8936, %v197
    %v8945 = vmul.f32 %v8936, %v198
    %v8946 = vmul.f32 %v8936, %v199
    %v8947 = vmul.f32 %v8936, %v200
    %v8948 = vmul.f32 %v8936, %v201
    %v8949 = vmul.f32 %v8936, %v202
    %v8950 = vmul.f32 %v8936, %v203
    %v8951 = vmul.f32 %v8936, %v204
    %v8952 = vmul.f32 %v8936, %v205
    %v8953 = vmul.f32 %v8936, %v206
    %v8954 = vmul.f32 %v8936, %v207
    %v8973 = vrot.slane %v8937, 5
    %v8974 = vrot.slane %v8938, 5
    %v8975 = vsel %vm7513, %v8973, %v8974
    %v8976 = vrot.slane %v8939, 5
    %v8977 = vsel %vm7513, %v8974, %v8976
    %v8978 = vrot.slane %v8940, 5
    %v8979 = vrot.slane %v8941, 5
    %v8980 = vsel %vm7513, %v8978, %v8979
    %v8981 = vrot.slane %v8942, 5
    %v8982 = vsel %vm7513, %v8979, %v8981
    %v8983 = vrot.slane %v8943, 5
    %v8984 = vrot.slane %v8944, 5
    %v8985 = vsel %vm7513, %v8983, %v8984
    %v8986 = vrot.slane %v8945, 5
    %v8987 = vsel %vm7513, %v8984, %v8986
    %v8988 = vrot.slane %v8946, 5
    %v8989 = vrot.slane %v8947, 5
    %v8990 = vsel %vm7513, %v8988, %v8989
    %v8991 = vrot.slane %v8948, 5
    %v8992 = vsel %vm7513, %v8989, %v8991
    %v8993 = vrot.slane %v8949, 5
    %v8994 = vrot.slane %v8950, 5
    %v8995 = vsel %vm7513, %v8993, %v8994
    %v8996 = vrot.slane %v8951, 5
    %v8997 = vsel %vm7513, %v8994, %v8996
    %v8998 = vrot.slane %v8952, 5
    %v8999 = vrot.slane %v8953, 5
    %v9000 = vsel %vm7513, %v8998, %v8999
    %v9001 = vrot.slane %v8954, 5
    %v9002 = vsel %vm7513, %v8999, %v9001
    %9003 = vrot.lane.b32.xlu0 %v8975, 122
    %v9004 = vpop.permute.xlu0 %9003
    %9005 = vrot.lane.b32.xlu0 %v8977, 122
    %v9006 = vpop.permute.xlu0 %9005
    %9007 = vrot.lane.b32.xlu0 %v8980, 122
    %v9008 = vpop.permute.xlu0 %9007
    %9009 = vrot.lane.b32.xlu0 %v8982, 122
    %v9010 = vpop.permute.xlu0 %9009
    %9011 = vrot.lane.b32.xlu0 %v8985, 122
    %v9012 = vpop.permute.xlu0 %9011
    %9013 = vrot.lane.b32.xlu0 %v8987, 122
    %v9014 = vpop.permute.xlu0 %9013
    %9015 = vrot.lane.b32.xlu0 %v8990, 122
    %v9016 = vpop.permute.xlu0 %9015
    %9017 = vrot.lane.b32.xlu0 %v8992, 122
    %v9018 = vpop.permute.xlu0 %9017
    %9019 = vrot.lane.b32.xlu0 %v8995, 122
    %v9020 = vpop.permute.xlu0 %9019
    %9021 = vrot.lane.b32.xlu0 %v8997, 122
    %v9022 = vpop.permute.xlu0 %9021
    %9023 = vrot.lane.b32.xlu0 %v9000, 122
    %v9024 = vpop.permute.xlu0 %9023
    %9025 = vrot.lane.b32.xlu0 %v9002, 122
    %v9026 = vpop.permute.xlu0 %9025
    %v9039 = vadd.f32 %v8924, %v9004
    %v9040 = vadd.f32 %v8925, %v9006
    %v9041 = vadd.f32 %v8926, %v9008
    %v9042 = vadd.f32 %v8927, %v9010
    %v9043 = vadd.f32 %v8928, %v9012
    %v9044 = vadd.f32 %v8929, %v9014
    %v9045 = vadd.f32 %v8930, %v9016
    %v9046 = vadd.f32 %v8931, %v9018
    %v9047 = vadd.f32 %v8932, %v9020
    %v9048 = vadd.f32 %v8933, %v9022
    %v9049 = vadd.f32 %v8934, %v9024
    %v9050 = vadd.f32 %v8935, %v9026
    %s9051 = sld [smem:[#allocation2 + $0x2a]]
    %s9052 = sld [smem:[#allocation2 + $0x5b]]
    %v9053 = vstv %s9051
    %v9054 = vmul.f32 %v9053, %v208
    %v9055 = vmul.f32 %v9053, %v209
    %v9056 = vmul.f32 %v9053, %v210
    %v9057 = vmul.f32 %v9053, %v211
    %v9058 = vmul.f32 %v9053, %v212
    %v9059 = vmul.f32 %v9053, %v213
    %v9060 = vmul.f32 %v9053, %v214
    %v9061 = vmul.f32 %v9053, %v215
    %v9062 = vmul.f32 %v9053, %v216
    %v9063 = vmul.f32 %v9053, %v217
    %v9064 = vmul.f32 %v9053, %v218
    %v9065 = vmul.f32 %v9053, %v219
    %v9066 = vmul.f32 %v9053, %v220
    %v9067 = vmul.f32 %v9053, %v221
    %v9068 = vmul.f32 %v9053, %v222
    %v9069 = vmul.f32 %v9053, %v223
    %v9070 = vmul.f32 %v9053, %v224
    %v9071 = vmul.f32 %v9053, %v225
    %vm9090 = vcmask 1041408
    %v9091 = vrot.slane %v9054, 6
    %v9092 = vrot.slane %v9055, 6
    %v9093 = vsel %vm9090, %v9091, %v9092
    %v9094 = vrot.slane %v9056, 6
    %v9095 = vsel %vm9090, %v9092, %v9094
    %v9096 = vrot.slane %v9057, 6
    %v9097 = vrot.slane %v9058, 6
    %v9098 = vsel %vm9090, %v9096, %v9097
    %v9099 = vrot.slane %v9059, 6
    %v9100 = vsel %vm9090, %v9097, %v9099
    %v9101 = vrot.slane %v9060, 6
    %v9102 = vrot.slane %v9061, 6
    %v9103 = vsel %vm9090, %v9101, %v9102
    %v9104 = vrot.slane %v9062, 6
    %v9105 = vsel %vm9090, %v9102, %v9104
    %v9106 = vrot.slane %v9063, 6
    %v9107 = vrot.slane %v9064, 6
    %v9108 = vsel %vm9090, %v9106, %v9107
    %v9109 = vrot.slane %v9065, 6
    %v9110 = vsel %vm9090, %v9107, %v9109
    %v9111 = vrot.slane %v9066, 6
    %v9112 = vrot.slane %v9067, 6
    %v9113 = vsel %vm9090, %v9111, %v9112
    %v9114 = vrot.slane %v9068, 6
    %v9115 = vsel %vm9090, %v9112, %v9114
    %v9116 = vrot.slane %v9069, 6
    %v9117 = vrot.slane %v9070, 6
    %v9118 = vsel %vm9090, %v9116, %v9117
    %v9119 = vrot.slane %v9071, 6
    %v9120 = vsel %vm9090, %v9117, %v9119
    %v9133 = vadd.f32 %v9039, %v9093
    %v9134 = vadd.f32 %v9040, %v9095
    %v9135 = vadd.f32 %v9041, %v9098
    %v9136 = vadd.f32 %v9042, %v9100
    %v9137 = vadd.f32 %v9043, %v9103
    %v9138 = vadd.f32 %v9044, %v9105
    %v9139 = vadd.f32 %v9045, %v9108
    %v9140 = vadd.f32 %v9046, %v9110
    %v9141 = vadd.f32 %v9047, %v9113
    %v9142 = vadd.f32 %v9048, %v9115
    %v9143 = vadd.f32 %v9049, %v9118
    %v9144 = vadd.f32 %v9050, %v9120
    %v9145 = vstv %s9052
    %v9146 = vmul.f32 %v9145, %v190
    %v9147 = vmul.f32 %v9145, %v191
    %v9148 = vmul.f32 %v9145, %v192
    %v9149 = vmul.f32 %v9145, %v193
    %v9150 = vmul.f32 %v9145, %v194
    %v9151 = vmul.f32 %v9145, %v195
    %v9152 = vmul.f32 %v9145, %v196
    %v9153 = vmul.f32 %v9145, %v197
    %v9154 = vmul.f32 %v9145, %v198
    %v9155 = vmul.f32 %v9145, %v199
    %v9156 = vmul.f32 %v9145, %v200
    %v9157 = vmul.f32 %v9145, %v201
    %v9158 = vmul.f32 %v9145, %v202
    %v9159 = vmul.f32 %v9145, %v203
    %v9160 = vmul.f32 %v9145, %v204
    %v9161 = vmul.f32 %v9145, %v205
    %v9162 = vmul.f32 %v9145, %v206
    %v9163 = vmul.f32 %v9145, %v207
    %v9182 = vrot.slane %v9146, 6
    %v9183 = vrot.slane %v9147, 6
    %v9184 = vsel %vm9090, %v9182, %v9183
    %v9185 = vrot.slane %v9148, 6
    %v9186 = vsel %vm9090, %v9183, %v9185
    %v9187 = vrot.slane %v9149, 6
    %v9188 = vrot.slane %v9150, 6
    %v9189 = vsel %vm9090, %v9187, %v9188
    %v9190 = vrot.slane %v9151, 6
    %v9191 = vsel %vm9090, %v9188, %v9190
    %v9192 = vrot.slane %v9152, 6
    %v9193 = vrot.slane %v9153, 6
    %v9194 = vsel %vm9090, %v9192, %v9193
    %v9195 = vrot.slane %v9154, 6
    %v9196 = vsel %vm9090, %v9193, %v9195
    %v9197 = vrot.slane %v9155, 6
    %v9198 = vrot.slane %v9156, 6
    %v9199 = vsel %vm9090, %v9197, %v9198
    %v9200 = vrot.slane %v9157, 6
    %v9201 = vsel %vm9090, %v9198, %v9200
    %v9202 = vrot.slane %v9158, 6
    %v9203 = vrot.slane %v9159, 6
    %v9204 = vsel %vm9090, %v9202, %v9203
    %v9205 = vrot.slane %v9160, 6
    %v9206 = vsel %vm9090, %v9203, %v9205
    %v9207 = vrot.slane %v9161, 6
    %v9208 = vrot.slane %v9162, 6
    %v9209 = vsel %vm9090, %v9207, %v9208
    %v9210 = vrot.slane %v9163, 6
    %v9211 = vsel %vm9090, %v9208, %v9210
    %v9224 = vadd.f32 %v9133, %v9184
    %v9225 = vadd.f32 %v9134, %v9186
    %v9226 = vadd.f32 %v9135, %v9189
    %v9227 = vadd.f32 %v9136, %v9191
    %v9228 = vadd.f32 %v9137, %v9194
    %v9229 = vadd.f32 %v9138, %v9196
    %v9230 = vadd.f32 %v9139, %v9199
    %v9231 = vadd.f32 %v9140, %v9201
    %v9232 = vadd.f32 %v9141, %v9204
    %v9233 = vadd.f32 %v9142, %v9206
    %v9234 = vadd.f32 %v9143, %v9209
    %v9235 = vadd.f32 %v9144, %v9211
    %s9236 = sld [smem:[#allocation2 + $0x2b]]
    %s9237 = sld [smem:[#allocation2 + $0x5c]]
    %v9238 = vstv %s9236
    %v9239 = vmul.f32 %v9238, %v208
    %v9240 = vmul.f32 %v9238, %v209
    %v9241 = vmul.f32 %v9238, %v210
    %v9242 = vmul.f32 %v9238, %v211
    %v9243 = vmul.f32 %v9238, %v212
    %v9244 = vmul.f32 %v9238, %v213
    %v9245 = vmul.f32 %v9238, %v214
    %v9246 = vmul.f32 %v9238, %v215
    %v9247 = vmul.f32 %v9238, %v216
    %v9248 = vmul.f32 %v9238, %v217
    %v9249 = vmul.f32 %v9238, %v218
    %v9250 = vmul.f32 %v9238, %v219
    %v9251 = vmul.f32 %v9238, %v220
    %v9252 = vmul.f32 %v9238, %v221
    %v9253 = vmul.f32 %v9238, %v222
    %v9254 = vmul.f32 %v9238, %v223
    %v9255 = vmul.f32 %v9238, %v224
    %v9256 = vmul.f32 %v9238, %v225
    %v9275 = vrot.slane %v9239, 6
    %v9276 = vrot.slane %v9240, 6
    %v9277 = vsel %vm9090, %v9275, %v9276
    %v9278 = vrot.slane %v9241, 6
    %v9279 = vsel %vm9090, %v9276, %v9278
    %v9280 = vrot.slane %v9242, 6
    %v9281 = vrot.slane %v9243, 6
    %v9282 = vsel %vm9090, %v9280, %v9281
    %v9283 = vrot.slane %v9244, 6
    %v9284 = vsel %vm9090, %v9281, %v9283
    %v9285 = vrot.slane %v9245, 6
    %v9286 = vrot.slane %v9246, 6
    %v9287 = vsel %vm9090, %v9285, %v9286
    %v9288 = vrot.slane %v9247, 6
    %v9289 = vsel %vm9090, %v9286, %v9288
    %v9290 = vrot.slane %v9248, 6
    %v9291 = vrot.slane %v9249, 6
    %v9292 = vsel %vm9090, %v9290, %v9291
    %v9293 = vrot.slane %v9250, 6
    %v9294 = vsel %vm9090, %v9291, %v9293
    %v9295 = vrot.slane %v9251, 6
    %v9296 = vrot.slane %v9252, 6
    %v9297 = vsel %vm9090, %v9295, %v9296
    %v9298 = vrot.slane %v9253, 6
    %v9299 = vsel %vm9090, %v9296, %v9298
    %v9300 = vrot.slane %v9254, 6
    %v9301 = vrot.slane %v9255, 6
    %v9302 = vsel %vm9090, %v9300, %v9301
    %v9303 = vrot.slane %v9256, 6
    %v9304 = vsel %vm9090, %v9301, %v9303
    %9305 = vrot.lane.b32.xlu0 %v9277, 127
    %v9306 = vpop.permute.xlu0 %9305
    %9307 = vrot.lane.b32.xlu0 %v9279, 127
    %v9308 = vpop.permute.xlu0 %9307
    %9309 = vrot.lane.b32.xlu0 %v9282, 127
    %v9310 = vpop.permute.xlu0 %9309
    %9311 = vrot.lane.b32.xlu0 %v9284, 127
    %v9312 = vpop.permute.xlu0 %9311
    %9313 = vrot.lane.b32.xlu0 %v9287, 127
    %v9314 = vpop.permute.xlu0 %9313
    %9315 = vrot.lane.b32.xlu0 %v9289, 127
    %v9316 = vpop.permute.xlu0 %9315
    %9317 = vrot.lane.b32.xlu0 %v9292, 127
    %v9318 = vpop.permute.xlu0 %9317
    %9319 = vrot.lane.b32.xlu0 %v9294, 127
    %v9320 = vpop.permute.xlu0 %9319
    %9321 = vrot.lane.b32.xlu0 %v9297, 127
    %v9322 = vpop.permute.xlu0 %9321
    %9323 = vrot.lane.b32.xlu0 %v9299, 127
    %v9324 = vpop.permute.xlu0 %9323
    %9325 = vrot.lane.b32.xlu0 %v9302, 127
    %v9326 = vpop.permute.xlu0 %9325
    %9327 = vrot.lane.b32.xlu0 %v9304, 127
    %v9328 = vpop.permute.xlu0 %9327
    %v9341 = vadd.f32 %v9224, %v9306
    %v9342 = vadd.f32 %v9225, %v9308
    %v9343 = vadd.f32 %v9226, %v9310
    %v9344 = vadd.f32 %v9227, %v9312
    %v9345 = vadd.f32 %v9228, %v9314
    %v9346 = vadd.f32 %v9229, %v9316
    %v9347 = vadd.f32 %v9230, %v9318
    %v9348 = vadd.f32 %v9231, %v9320
    %v9349 = vadd.f32 %v9232, %v9322
    %v9350 = vadd.f32 %v9233, %v9324
    %v9351 = vadd.f32 %v9234, %v9326
    %v9352 = vadd.f32 %v9235, %v9328
    %v9353 = vstv %s9237
    %v9354 = vmul.f32 %v9353, %v190
    %v9355 = vmul.f32 %v9353, %v191
    %v9356 = vmul.f32 %v9353, %v192
    %v9357 = vmul.f32 %v9353, %v193
    %v9358 = vmul.f32 %v9353, %v194
    %v9359 = vmul.f32 %v9353, %v195
    %v9360 = vmul.f32 %v9353, %v196
    %v9361 = vmul.f32 %v9353, %v197
    %v9362 = vmul.f32 %v9353, %v198
    %v9363 = vmul.f32 %v9353, %v199
    %v9364 = vmul.f32 %v9353, %v200
    %v9365 = vmul.f32 %v9353, %v201
    %v9366 = vmul.f32 %v9353, %v202
    %v9367 = vmul.f32 %v9353, %v203
    %v9368 = vmul.f32 %v9353, %v204
    %v9369 = vmul.f32 %v9353, %v205
    %v9370 = vmul.f32 %v9353, %v206
    %v9371 = vmul.f32 %v9353, %v207
    %v9390 = vrot.slane %v9354, 6
    %v9391 = vrot.slane %v9355, 6
    %v9392 = vsel %vm9090, %v9390, %v9391
    %v9393 = vrot.slane %v9356, 6
    %v9394 = vsel %vm9090, %v9391, %v9393
    %v9395 = vrot.slane %v9357, 6
    %v9396 = vrot.slane %v9358, 6
    %v9397 = vsel %vm9090, %v9395, %v9396
    %v9398 = vrot.slane %v9359, 6
    %v9399 = vsel %vm9090, %v9396, %v9398
    %v9400 = vrot.slane %v9360, 6
    %v9401 = vrot.slane %v9361, 6
    %v9402 = vsel %vm9090, %v9400, %v9401
    %v9403 = vrot.slane %v9362, 6
    %v9404 = vsel %vm9090, %v9401, %v9403
    %v9405 = vrot.slane %v9363, 6
    %v9406 = vrot.slane %v9364, 6
    %v9407 = vsel %vm9090, %v9405, %v9406
    %v9408 = vrot.slane %v9365, 6
    %v9409 = vsel %vm9090, %v9406, %v9408
    %v9410 = vrot.slane %v9366, 6
    %v9411 = vrot.slane %v9367, 6
    %v9412 = vsel %vm9090, %v9410, %v9411
    %v9413 = vrot.slane %v9368, 6
    %v9414 = vsel %vm9090, %v9411, %v9413
    %v9415 = vrot.slane %v9369, 6
    %v9416 = vrot.slane %v9370, 6
    %v9417 = vsel %vm9090, %v9415, %v9416
    %v9418 = vrot.slane %v9371, 6
    %v9419 = vsel %vm9090, %v9416, %v9418
    %9420 = vrot.lane.b32.xlu0 %v9392, 127
    %v9421 = vpop.permute.xlu0 %9420
    %9422 = vrot.lane.b32.xlu0 %v9394, 127
    %v9423 = vpop.permute.xlu0 %9422
    %9424 = vrot.lane.b32.xlu0 %v9397, 127
    %v9425 = vpop.permute.xlu0 %9424
    %9426 = vrot.lane.b32.xlu0 %v9399, 127
    %v9427 = vpop.permute.xlu0 %9426
    %9428 = vrot.lane.b32.xlu0 %v9402, 127
    %v9429 = vpop.permute.xlu0 %9428
    %9430 = vrot.lane.b32.xlu0 %v9404, 127
    %v9431 = vpop.permute.xlu0 %9430
    %9432 = vrot.lane.b32.xlu0 %v9407, 127
    %v9433 = vpop.permute.xlu0 %9432
    %9434 = vrot.lane.b32.xlu0 %v9409, 127
    %v9435 = vpop.permute.xlu0 %9434
    %9436 = vrot.lane.b32.xlu0 %v9412, 127
    %v9437 = vpop.permute.xlu0 %9436
    %9438 = vrot.lane.b32.xlu0 %v9414, 127
    %v9439 = vpop.permute.xlu0 %9438
    %9440 = vrot.lane.b32.xlu0 %v9417, 127
    %v9441 = vpop.permute.xlu0 %9440
    %9442 = vrot.lane.b32.xlu0 %v9419, 127
    %v9443 = vpop.permute.xlu0 %9442
    %v9456 = vadd.f32 %v9341, %v9421
    %v9457 = vadd.f32 %v9342, %v9423
    %v9458 = vadd.f32 %v9343, %v9425
    %v9459 = vadd.f32 %v9344, %v9427
    %v9460 = vadd.f32 %v9345, %v9429
    %v9461 = vadd.f32 %v9346, %v9431
    %v9462 = vadd.f32 %v9347, %v9433
    %v9463 = vadd.f32 %v9348, %v9435
    %v9464 = vadd.f32 %v9349, %v9437
    %v9465 = vadd.f32 %v9350, %v9439
    %v9466 = vadd.f32 %v9351, %v9441
    %v9467 = vadd.f32 %v9352, %v9443
    %s9468 = sld [smem:[#allocation2 + $0x2c]]
    %s9469 = sld [smem:[#allocation2 + $0x5d]]
    %v9470 = vstv %s9468
    %v9471 = vmul.f32 %v9470, %v208
    %v9472 = vmul.f32 %v9470, %v209
    %v9473 = vmul.f32 %v9470, %v210
    %v9474 = vmul.f32 %v9470, %v211
    %v9475 = vmul.f32 %v9470, %v212
    %v9476 = vmul.f32 %v9470, %v213
    %v9477 = vmul.f32 %v9470, %v214
    %v9478 = vmul.f32 %v9470, %v215
    %v9479 = vmul.f32 %v9470, %v216
    %v9480 = vmul.f32 %v9470, %v217
    %v9481 = vmul.f32 %v9470, %v218
    %v9482 = vmul.f32 %v9470, %v219
    %v9483 = vmul.f32 %v9470, %v220
    %v9484 = vmul.f32 %v9470, %v221
    %v9485 = vmul.f32 %v9470, %v222
    %v9486 = vmul.f32 %v9470, %v223
    %v9487 = vmul.f32 %v9470, %v224
    %v9488 = vmul.f32 %v9470, %v225
    %v9507 = vrot.slane %v9471, 6
    %v9508 = vrot.slane %v9472, 6
    %v9509 = vsel %vm9090, %v9507, %v9508
    %v9510 = vrot.slane %v9473, 6
    %v9511 = vsel %vm9090, %v9508, %v9510
    %v9512 = vrot.slane %v9474, 6
    %v9513 = vrot.slane %v9475, 6
    %v9514 = vsel %vm9090, %v9512, %v9513
    %v9515 = vrot.slane %v9476, 6
    %v9516 = vsel %vm9090, %v9513, %v9515
    %v9517 = vrot.slane %v9477, 6
    %v9518 = vrot.slane %v9478, 6
    %v9519 = vsel %vm9090, %v9517, %v9518
    %v9520 = vrot.slane %v9479, 6
    %v9521 = vsel %vm9090, %v9518, %v9520
    %v9522 = vrot.slane %v9480, 6
    %v9523 = vrot.slane %v9481, 6
    %v9524 = vsel %vm9090, %v9522, %v9523
    %v9525 = vrot.slane %v9482, 6
    %v9526 = vsel %vm9090, %v9523, %v9525
    %v9527 = vrot.slane %v9483, 6
    %v9528 = vrot.slane %v9484, 6
    %v9529 = vsel %vm9090, %v9527, %v9528
    %v9530 = vrot.slane %v9485, 6
    %v9531 = vsel %vm9090, %v9528, %v9530
    %v9532 = vrot.slane %v9486, 6
    %v9533 = vrot.slane %v9487, 6
    %v9534 = vsel %vm9090, %v9532, %v9533
    %v9535 = vrot.slane %v9488, 6
    %v9536 = vsel %vm9090, %v9533, %v9535
    %9537 = vrot.lane.b32.xlu0 %v9509, 126
    %v9538 = vpop.permute.xlu0 %9537
    %9539 = vrot.lane.b32.xlu0 %v9511, 126
    %v9540 = vpop.permute.xlu0 %9539
    %9541 = vrot.lane.b32.xlu0 %v9514, 126
    %v9542 = vpop.permute.xlu0 %9541
    %9543 = vrot.lane.b32.xlu0 %v9516, 126
    %v9544 = vpop.permute.xlu0 %9543
    %9545 = vrot.lane.b32.xlu0 %v9519, 126
    %v9546 = vpop.permute.xlu0 %9545
    %9547 = vrot.lane.b32.xlu0 %v9521, 126
    %v9548 = vpop.permute.xlu0 %9547
    %9549 = vrot.lane.b32.xlu0 %v9524, 126
    %v9550 = vpop.permute.xlu0 %9549
    %9551 = vrot.lane.b32.xlu0 %v9526, 126
    %v9552 = vpop.permute.xlu0 %9551
    %9553 = vrot.lane.b32.xlu0 %v9529, 126
    %v9554 = vpop.permute.xlu0 %9553
    %9555 = vrot.lane.b32.xlu0 %v9531, 126
    %v9556 = vpop.permute.xlu0 %9555
    %9557 = vrot.lane.b32.xlu0 %v9534, 126
    %v9558 = vpop.permute.xlu0 %9557
    %9559 = vrot.lane.b32.xlu0 %v9536, 126
    %v9560 = vpop.permute.xlu0 %9559
    %v9573 = vadd.f32 %v9456, %v9538
    %v9574 = vadd.f32 %v9457, %v9540
    %v9575 = vadd.f32 %v9458, %v9542
    %v9576 = vadd.f32 %v9459, %v9544
    %v9577 = vadd.f32 %v9460, %v9546
    %v9578 = vadd.f32 %v9461, %v9548
    %v9579 = vadd.f32 %v9462, %v9550
    %v9580 = vadd.f32 %v9463, %v9552
    %v9581 = vadd.f32 %v9464, %v9554
    %v9582 = vadd.f32 %v9465, %v9556
    %v9583 = vadd.f32 %v9466, %v9558
    %v9584 = vadd.f32 %v9467, %v9560
    %v9585 = vstv %s9469
    %v9586 = vmul.f32 %v9585, %v190
    %v9587 = vmul.f32 %v9585, %v191
    %v9588 = vmul.f32 %v9585, %v192
    %v9589 = vmul.f32 %v9585, %v193
    %v9590 = vmul.f32 %v9585, %v194
    %v9591 = vmul.f32 %v9585, %v195
    %v9592 = vmul.f32 %v9585, %v196
    %v9593 = vmul.f32 %v9585, %v197
    %v9594 = vmul.f32 %v9585, %v198
    %v9595 = vmul.f32 %v9585, %v199
    %v9596 = vmul.f32 %v9585, %v200
    %v9597 = vmul.f32 %v9585, %v201
    %v9598 = vmul.f32 %v9585, %v202
    %v9599 = vmul.f32 %v9585, %v203
    %v9600 = vmul.f32 %v9585, %v204
    %v9601 = vmul.f32 %v9585, %v205
    %v9602 = vmul.f32 %v9585, %v206
    %v9603 = vmul.f32 %v9585, %v207
    %v9622 = vrot.slane %v9586, 6
    %v9623 = vrot.slane %v9587, 6
    %v9624 = vsel %vm9090, %v9622, %v9623
    %v9625 = vrot.slane %v9588, 6
    %v9626 = vsel %vm9090, %v9623, %v9625
    %v9627 = vrot.slane %v9589, 6
    %v9628 = vrot.slane %v9590, 6
    %v9629 = vsel %vm9090, %v9627, %v9628
    %v9630 = vrot.slane %v9591, 6
    %v9631 = vsel %vm9090, %v9628, %v9630
    %v9632 = vrot.slane %v9592, 6
    %v9633 = vrot.slane %v9593, 6
    %v9634 = vsel %vm9090, %v9632, %v9633
    %v9635 = vrot.slane %v9594, 6
    %v9636 = vsel %vm9090, %v9633, %v9635
    %v9637 = vrot.slane %v9595, 6
    %v9638 = vrot.slane %v9596, 6
    %v9639 = vsel %vm9090, %v9637, %v9638
    %v9640 = vrot.slane %v9597, 6
    %v9641 = vsel %vm9090, %v9638, %v9640
    %v9642 = vrot.slane %v9598, 6
    %v9643 = vrot.slane %v9599, 6
    %v9644 = vsel %vm9090, %v9642, %v9643
    %v9645 = vrot.slane %v9600, 6
    %v9646 = vsel %vm9090, %v9643, %v9645
    %v9647 = vrot.slane %v9601, 6
    %v9648 = vrot.slane %v9602, 6
    %v9649 = vsel %vm9090, %v9647, %v9648
    %v9650 = vrot.slane %v9603, 6
    %v9651 = vsel %vm9090, %v9648, %v9650
    %9652 = vrot.lane.b32.xlu0 %v9624, 126
    %v9653 = vpop.permute.xlu0 %9652
    %9654 = vrot.lane.b32.xlu0 %v9626, 126
    %v9655 = vpop.permute.xlu0 %9654
    %9656 = vrot.lane.b32.xlu0 %v9629, 126
    %v9657 = vpop.permute.xlu0 %9656
    %9658 = vrot.lane.b32.xlu0 %v9631, 126
    %v9659 = vpop.permute.xlu0 %9658
    %9660 = vrot.lane.b32.xlu0 %v9634, 126
    %v9661 = vpop.permute.xlu0 %9660
    %9662 = vrot.lane.b32.xlu0 %v9636, 126
    %v9663 = vpop.permute.xlu0 %9662
    %9664 = vrot.lane.b32.xlu0 %v9639, 126
    %v9665 = vpop.permute.xlu0 %9664
    %9666 = vrot.lane.b32.xlu0 %v9641, 126
    %v9667 = vpop.permute.xlu0 %9666
    %9668 = vrot.lane.b32.xlu0 %v9644, 126
    %v9669 = vpop.permute.xlu0 %9668
    %9670 = vrot.lane.b32.xlu0 %v9646, 126
    %v9671 = vpop.permute.xlu0 %9670
    %9672 = vrot.lane.b32.xlu0 %v9649, 126
    %v9673 = vpop.permute.xlu0 %9672
    %9674 = vrot.lane.b32.xlu0 %v9651, 126
    %v9675 = vpop.permute.xlu0 %9674
    %v9688 = vadd.f32 %v9573, %v9653
    %v9689 = vadd.f32 %v9574, %v9655
    %v9690 = vadd.f32 %v9575, %v9657
    %v9691 = vadd.f32 %v9576, %v9659
    %v9692 = vadd.f32 %v9577, %v9661
    %v9693 = vadd.f32 %v9578, %v9663
    %v9694 = vadd.f32 %v9579, %v9665
    %v9695 = vadd.f32 %v9580, %v9667
    %v9696 = vadd.f32 %v9581, %v9669
    %v9697 = vadd.f32 %v9582, %v9671
    %v9698 = vadd.f32 %v9583, %v9673
    %v9699 = vadd.f32 %v9584, %v9675
    %s9700 = sld [smem:[#allocation2 + $0x2d]]
    %s9701 = sld [smem:[#allocation2 + $0x5e]]
    %v9702 = vstv %s9700
    %v9703 = vmul.f32 %v9702, %v208
    %v9704 = vmul.f32 %v9702, %v209
    %v9705 = vmul.f32 %v9702, %v210
    %v9706 = vmul.f32 %v9702, %v211
    %v9707 = vmul.f32 %v9702, %v212
    %v9708 = vmul.f32 %v9702, %v213
    %v9709 = vmul.f32 %v9702, %v214
    %v9710 = vmul.f32 %v9702, %v215
    %v9711 = vmul.f32 %v9702, %v216
    %v9712 = vmul.f32 %v9702, %v217
    %v9713 = vmul.f32 %v9702, %v218
    %v9714 = vmul.f32 %v9702, %v219
    %v9715 = vmul.f32 %v9702, %v220
    %v9716 = vmul.f32 %v9702, %v221
    %v9717 = vmul.f32 %v9702, %v222
    %v9718 = vmul.f32 %v9702, %v223
    %v9719 = vmul.f32 %v9702, %v224
    %v9720 = vmul.f32 %v9702, %v225
    %v9739 = vrot.slane %v9703, 6
    %v9740 = vrot.slane %v9704, 6
    %v9741 = vsel %vm9090, %v9739, %v9740
    %v9742 = vrot.slane %v9705, 6
    %v9743 = vsel %vm9090, %v9740, %v9742
    %v9744 = vrot.slane %v9706, 6
    %v9745 = vrot.slane %v9707, 6
    %v9746 = vsel %vm9090, %v9744, %v9745
    %v9747 = vrot.slane %v9708, 6
    %v9748 = vsel %vm9090, %v9745, %v9747
    %v9749 = vrot.slane %v9709, 6
    %v9750 = vrot.slane %v9710, 6
    %v9751 = vsel %vm9090, %v9749, %v9750
    %v9752 = vrot.slane %v9711, 6
    %v9753 = vsel %vm9090, %v9750, %v9752
    %v9754 = vrot.slane %v9712, 6
    %v9755 = vrot.slane %v9713, 6
    %v9756 = vsel %vm9090, %v9754, %v9755
    %v9757 = vrot.slane %v9714, 6
    %v9758 = vsel %vm9090, %v9755, %v9757
    %v9759 = vrot.slane %v9715, 6
    %v9760 = vrot.slane %v9716, 6
    %v9761 = vsel %vm9090, %v9759, %v9760
    %v9762 = vrot.slane %v9717, 6
    %v9763 = vsel %vm9090, %v9760, %v9762
    %v9764 = vrot.slane %v9718, 6
    %v9765 = vrot.slane %v9719, 6
    %v9766 = vsel %vm9090, %v9764, %v9765
    %v9767 = vrot.slane %v9720, 6
    %v9768 = vsel %vm9090, %v9765, %v9767
    %9769 = vrot.lane.b32.xlu0 %v9741, 125
    %v9770 = vpop.permute.xlu0 %9769
    %9771 = vrot.lane.b32.xlu0 %v9743, 125
    %v9772 = vpop.permute.xlu0 %9771
    %9773 = vrot.lane.b32.xlu0 %v9746, 125
    %v9774 = vpop.permute.xlu0 %9773
    %9775 = vrot.lane.b32.xlu0 %v9748, 125
    %v9776 = vpop.permute.xlu0 %9775
    %9777 = vrot.lane.b32.xlu0 %v9751, 125
    %v9778 = vpop.permute.xlu0 %9777
    %9779 = vrot.lane.b32.xlu0 %v9753, 125
    %v9780 = vpop.permute.xlu0 %9779
    %9781 = vrot.lane.b32.xlu0 %v9756, 125
    %v9782 = vpop.permute.xlu0 %9781
    %9783 = vrot.lane.b32.xlu0 %v9758, 125
    %v9784 = vpop.permute.xlu0 %9783
    %9785 = vrot.lane.b32.xlu0 %v9761, 125
    %v9786 = vpop.permute.xlu0 %9785
    %9787 = vrot.lane.b32.xlu0 %v9763, 125
    %v9788 = vpop.permute.xlu0 %9787
    %9789 = vrot.lane.b32.xlu0 %v9766, 125
    %v9790 = vpop.permute.xlu0 %9789
    %9791 = vrot.lane.b32.xlu0 %v9768, 125
    %v9792 = vpop.permute.xlu0 %9791
    %v9805 = vadd.f32 %v9688, %v9770
    %v9806 = vadd.f32 %v9689, %v9772
    %v9807 = vadd.f32 %v9690, %v9774
    %v9808 = vadd.f32 %v9691, %v9776
    %v9809 = vadd.f32 %v9692, %v9778
    %v9810 = vadd.f32 %v9693, %v9780
    %v9811 = vadd.f32 %v9694, %v9782
    %v9812 = vadd.f32 %v9695, %v9784
    %v9813 = vadd.f32 %v9696, %v9786
    %v9814 = vadd.f32 %v9697, %v9788
    %v9815 = vadd.f32 %v9698, %v9790
    %v9816 = vadd.f32 %v9699, %v9792
    %v9817 = vstv %s9701
    %v9818 = vmul.f32 %v9817, %v190
    %v9819 = vmul.f32 %v9817, %v191
    %v9820 = vmul.f32 %v9817, %v192
    %v9821 = vmul.f32 %v9817, %v193
    %v9822 = vmul.f32 %v9817, %v194
    %v9823 = vmul.f32 %v9817, %v195
    %v9824 = vmul.f32 %v9817, %v196
    %v9825 = vmul.f32 %v9817, %v197
    %v9826 = vmul.f32 %v9817, %v198
    %v9827 = vmul.f32 %v9817, %v199
    %v9828 = vmul.f32 %v9817, %v200
    %v9829 = vmul.f32 %v9817, %v201
    %v9830 = vmul.f32 %v9817, %v202
    %v9831 = vmul.f32 %v9817, %v203
    %v9832 = vmul.f32 %v9817, %v204
    %v9833 = vmul.f32 %v9817, %v205
    %v9834 = vmul.f32 %v9817, %v206
    %v9835 = vmul.f32 %v9817, %v207
    %v9854 = vrot.slane %v9818, 6
    %v9855 = vrot.slane %v9819, 6
    %v9856 = vsel %vm9090, %v9854, %v9855
    %v9857 = vrot.slane %v9820, 6
    %v9858 = vsel %vm9090, %v9855, %v9857
    %v9859 = vrot.slane %v9821, 6
    %v9860 = vrot.slane %v9822, 6
    %v9861 = vsel %vm9090, %v9859, %v9860
    %v9862 = vrot.slane %v9823, 6
    %v9863 = vsel %vm9090, %v9860, %v9862
    %v9864 = vrot.slane %v9824, 6
    %v9865 = vrot.slane %v9825, 6
    %v9866 = vsel %vm9090, %v9864, %v9865
    %v9867 = vrot.slane %v9826, 6
    %v9868 = vsel %vm9090, %v9865, %v9867
    %v9869 = vrot.slane %v9827, 6
    %v9870 = vrot.slane %v9828, 6
    %v9871 = vsel %vm9090, %v9869, %v9870
    %v9872 = vrot.slane %v9829, 6
    %v9873 = vsel %vm9090, %v9870, %v9872
    %v9874 = vrot.slane %v9830, 6
    %v9875 = vrot.slane %v9831, 6
    %v9876 = vsel %vm9090, %v9874, %v9875
    %v9877 = vrot.slane %v9832, 6
    %v9878 = vsel %vm9090, %v9875, %v9877
    %v9879 = vrot.slane %v9833, 6
    %v9880 = vrot.slane %v9834, 6
    %v9881 = vsel %vm9090, %v9879, %v9880
    %v9882 = vrot.slane %v9835, 6
    %v9883 = vsel %vm9090, %v9880, %v9882
    %9884 = vrot.lane.b32.xlu0 %v9856, 125
    %v9885 = vpop.permute.xlu0 %9884
    %9886 = vrot.lane.b32.xlu0 %v9858, 125
    %v9887 = vpop.permute.xlu0 %9886
    %9888 = vrot.lane.b32.xlu0 %v9861, 125
    %v9889 = vpop.permute.xlu0 %9888
    %9890 = vrot.lane.b32.xlu0 %v9863, 125
    %v9891 = vpop.permute.xlu0 %9890
    %9892 = vrot.lane.b32.xlu0 %v9866, 125
    %v9893 = vpop.permute.xlu0 %9892
    %9894 = vrot.lane.b32.xlu0 %v9868, 125
    %v9895 = vpop.permute.xlu0 %9894
    %9896 = vrot.lane.b32.xlu0 %v9871, 125
    %v9897 = vpop.permute.xlu0 %9896
    %9898 = vrot.lane.b32.xlu0 %v9873, 125
    %v9899 = vpop.permute.xlu0 %9898
    %9900 = vrot.lane.b32.xlu0 %v9876, 125
    %v9901 = vpop.permute.xlu0 %9900
    %9902 = vrot.lane.b32.xlu0 %v9878, 125
    %v9903 = vpop.permute.xlu0 %9902
    %9904 = vrot.lane.b32.xlu0 %v9881, 125
    %v9905 = vpop.permute.xlu0 %9904
    %9906 = vrot.lane.b32.xlu0 %v9883, 125
    %v9907 = vpop.permute.xlu0 %9906
    %v9920 = vadd.f32 %v9805, %v9885
    %v9921 = vadd.f32 %v9806, %v9887
    %v9922 = vadd.f32 %v9807, %v9889
    %v9923 = vadd.f32 %v9808, %v9891
    %v9924 = vadd.f32 %v9809, %v9893
    %v9925 = vadd.f32 %v9810, %v9895
    %v9926 = vadd.f32 %v9811, %v9897
    %v9927 = vadd.f32 %v9812, %v9899
    %v9928 = vadd.f32 %v9813, %v9901
    %v9929 = vadd.f32 %v9814, %v9903
    %v9930 = vadd.f32 %v9815, %v9905
    %v9931 = vadd.f32 %v9816, %v9907
    %s9932 = sld [smem:[#allocation2 + $0x2e]]
    %s9933 = sld [smem:[#allocation2 + $0x5f]]
    %v9934 = vstv %s9932
    %v9935 = vmul.f32 %v9934, %v208
    %v9936 = vmul.f32 %v9934, %v209
    %v9937 = vmul.f32 %v9934, %v210
    %v9938 = vmul.f32 %v9934, %v211
    %v9939 = vmul.f32 %v9934, %v212
    %v9940 = vmul.f32 %v9934, %v213
    %v9941 = vmul.f32 %v9934, %v214
    %v9942 = vmul.f32 %v9934, %v215
    %v9943 = vmul.f32 %v9934, %v216
    %v9944 = vmul.f32 %v9934, %v217
    %v9945 = vmul.f32 %v9934, %v218
    %v9946 = vmul.f32 %v9934, %v219
    %v9947 = vmul.f32 %v9934, %v220
    %v9948 = vmul.f32 %v9934, %v221
    %v9949 = vmul.f32 %v9934, %v222
    %v9950 = vmul.f32 %v9934, %v223
    %v9951 = vmul.f32 %v9934, %v224
    %v9952 = vmul.f32 %v9934, %v225
    %v9971 = vrot.slane %v9935, 6
    %v9972 = vrot.slane %v9936, 6
    %v9973 = vsel %vm9090, %v9971, %v9972
    %v9974 = vrot.slane %v9937, 6
    %v9975 = vsel %vm9090, %v9972, %v9974
    %v9976 = vrot.slane %v9938, 6
    %v9977 = vrot.slane %v9939, 6
    %v9978 = vsel %vm9090, %v9976, %v9977
    %v9979 = vrot.slane %v9940, 6
    %v9980 = vsel %vm9090, %v9977, %v9979
    %v9981 = vrot.slane %v9941, 6
    %v9982 = vrot.slane %v9942, 6
    %v9983 = vsel %vm9090, %v9981, %v9982
    %v9984 = vrot.slane %v9943, 6
    %v9985 = vsel %vm9090, %v9982, %v9984
    %v9986 = vrot.slane %v9944, 6
    %v9987 = vrot.slane %v9945, 6
    %v9988 = vsel %vm9090, %v9986, %v9987
    %v9989 = vrot.slane %v9946, 6
    %v9990 = vsel %vm9090, %v9987, %v9989
    %v9991 = vrot.slane %v9947, 6
    %v9992 = vrot.slane %v9948, 6
    %v9993 = vsel %vm9090, %v9991, %v9992
    %v9994 = vrot.slane %v9949, 6
    %v9995 = vsel %vm9090, %v9992, %v9994
    %v9996 = vrot.slane %v9950, 6
    %v9997 = vrot.slane %v9951, 6
    %v9998 = vsel %vm9090, %v9996, %v9997
    %v9999 = vrot.slane %v9952, 6
    %v10000 = vsel %vm9090, %v9997, %v9999
    %10001 = vrot.lane.b32.xlu0 %v9973, 124
    %v10002 = vpop.permute.xlu0 %10001
    %10003 = vrot.lane.b32.xlu0 %v9975, 124
    %v10004 = vpop.permute.xlu0 %10003
    %10005 = vrot.lane.b32.xlu0 %v9978, 124
    %v10006 = vpop.permute.xlu0 %10005
    %10007 = vrot.lane.b32.xlu0 %v9980, 124
    %v10008 = vpop.permute.xlu0 %10007
    %10009 = vrot.lane.b32.xlu0 %v9983, 124
    %v10010 = vpop.permute.xlu0 %10009
    %10011 = vrot.lane.b32.xlu0 %v9985, 124
    %v10012 = vpop.permute.xlu0 %10011
    %10013 = vrot.lane.b32.xlu0 %v9988, 124
    %v10014 = vpop.permute.xlu0 %10013
    %10015 = vrot.lane.b32.xlu0 %v9990, 124
    %v10016 = vpop.permute.xlu0 %10015
    %10017 = vrot.lane.b32.xlu0 %v9993, 124
    %v10018 = vpop.permute.xlu0 %10017
    %10019 = vrot.lane.b32.xlu0 %v9995, 124
    %v10020 = vpop.permute.xlu0 %10019
    %10021 = vrot.lane.b32.xlu0 %v9998, 124
    %v10022 = vpop.permute.xlu0 %10021
    %10023 = vrot.lane.b32.xlu0 %v10000, 124
    %v10024 = vpop.permute.xlu0 %10023
    %v10037 = vadd.f32 %v9920, %v10002
    %v10038 = vadd.f32 %v9921, %v10004
    %v10039 = vadd.f32 %v9922, %v10006
    %v10040 = vadd.f32 %v9923, %v10008
    %v10041 = vadd.f32 %v9924, %v10010
    %v10042 = vadd.f32 %v9925, %v10012
    %v10043 = vadd.f32 %v9926, %v10014
    %v10044 = vadd.f32 %v9927, %v10016
    %v10045 = vadd.f32 %v9928, %v10018
    %v10046 = vadd.f32 %v9929, %v10020
    %v10047 = vadd.f32 %v9930, %v10022
    %v10048 = vadd.f32 %v9931, %v10024
    %v10049 = vstv %s9933
    %v10050 = vmul.f32 %v10049, %v190
    %v10051 = vmul.f32 %v10049, %v191
    %v10052 = vmul.f32 %v10049, %v192
    %v10053 = vmul.f32 %v10049, %v193
    %v10054 = vmul.f32 %v10049, %v194
    %v10055 = vmul.f32 %v10049, %v195
    %v10056 = vmul.f32 %v10049, %v196
    %v10057 = vmul.f32 %v10049, %v197
    %v10058 = vmul.f32 %v10049, %v198
    %v10059 = vmul.f32 %v10049, %v199
    %v10060 = vmul.f32 %v10049, %v200
    %v10061 = vmul.f32 %v10049, %v201
    %v10062 = vmul.f32 %v10049, %v202
    %v10063 = vmul.f32 %v10049, %v203
    %v10064 = vmul.f32 %v10049, %v204
    %v10065 = vmul.f32 %v10049, %v205
    %v10066 = vmul.f32 %v10049, %v206
    %v10067 = vmul.f32 %v10049, %v207
    %v10086 = vrot.slane %v10050, 6
    %v10087 = vrot.slane %v10051, 6
    %v10088 = vsel %vm9090, %v10086, %v10087
    %v10089 = vrot.slane %v10052, 6
    %v10090 = vsel %vm9090, %v10087, %v10089
    %v10091 = vrot.slane %v10053, 6
    %v10092 = vrot.slane %v10054, 6
    %v10093 = vsel %vm9090, %v10091, %v10092
    %v10094 = vrot.slane %v10055, 6
    %v10095 = vsel %vm9090, %v10092, %v10094
    %v10096 = vrot.slane %v10056, 6
    %v10097 = vrot.slane %v10057, 6
    %v10098 = vsel %vm9090, %v10096, %v10097
    %v10099 = vrot.slane %v10058, 6
    %v10100 = vsel %vm9090, %v10097, %v10099
    %v10101 = vrot.slane %v10059, 6
    %v10102 = vrot.slane %v10060, 6
    %v10103 = vsel %vm9090, %v10101, %v10102
    %v10104 = vrot.slane %v10061, 6
    %v10105 = vsel %vm9090, %v10102, %v10104
    %v10106 = vrot.slane %v10062, 6
    %v10107 = vrot.slane %v10063, 6
    %v10108 = vsel %vm9090, %v10106, %v10107
    %v10109 = vrot.slane %v10064, 6
    %v10110 = vsel %vm9090, %v10107, %v10109
    %v10111 = vrot.slane %v10065, 6
    %v10112 = vrot.slane %v10066, 6
    %v10113 = vsel %vm9090, %v10111, %v10112
    %v10114 = vrot.slane %v10067, 6
    %v10115 = vsel %vm9090, %v10112, %v10114
    %10116 = vrot.lane.b32.xlu0 %v10088, 124
    %v10117 = vpop.permute.xlu0 %10116
    %10118 = vrot.lane.b32.xlu0 %v10090, 124
    %v10119 = vpop.permute.xlu0 %10118
    %10120 = vrot.lane.b32.xlu0 %v10093, 124
    %v10121 = vpop.permute.xlu0 %10120
    %10122 = vrot.lane.b32.xlu0 %v10095, 124
    %v10123 = vpop.permute.xlu0 %10122
    %10124 = vrot.lane.b32.xlu0 %v10098, 124
    %v10125 = vpop.permute.xlu0 %10124
    %10126 = vrot.lane.b32.xlu0 %v10100, 124
    %v10127 = vpop.permute.xlu0 %10126
    %10128 = vrot.lane.b32.xlu0 %v10103, 124
    %v10129 = vpop.permute.xlu0 %10128
    %10130 = vrot.lane.b32.xlu0 %v10105, 124
    %v10131 = vpop.permute.xlu0 %10130
    %10132 = vrot.lane.b32.xlu0 %v10108, 124
    %v10133 = vpop.permute.xlu0 %10132
    %10134 = vrot.lane.b32.xlu0 %v10110, 124
    %v10135 = vpop.permute.xlu0 %10134
    %10136 = vrot.lane.b32.xlu0 %v10113, 124
    %v10137 = vpop.permute.xlu0 %10136
    %10138 = vrot.lane.b32.xlu0 %v10115, 124
    %v10139 = vpop.permute.xlu0 %10138
    %v10152 = vadd.f32 %v10037, %v10117
    %v10153 = vadd.f32 %v10038, %v10119
    %v10154 = vadd.f32 %v10039, %v10121
    %v10155 = vadd.f32 %v10040, %v10123
    %v10156 = vadd.f32 %v10041, %v10125
    %v10157 = vadd.f32 %v10042, %v10127
    %v10158 = vadd.f32 %v10043, %v10129
    %v10159 = vadd.f32 %v10044, %v10131
    %v10160 = vadd.f32 %v10045, %v10133
    %v10161 = vadd.f32 %v10046, %v10135
    %v10162 = vadd.f32 %v10047, %v10137
    %v10163 = vadd.f32 %v10048, %v10139
    %s10164 = sld [smem:[#allocation2 + $0x2f]]
    %s10165 = sld [smem:[#allocation2 + $0x60]]
    %v10166 = vstv %s10164
    %v10167 = vmul.f32 %v10166, %v208
    %v10168 = vmul.f32 %v10166, %v209
    %v10169 = vmul.f32 %v10166, %v210
    %v10170 = vmul.f32 %v10166, %v211
    %v10171 = vmul.f32 %v10166, %v212
    %v10172 = vmul.f32 %v10166, %v213
    %v10173 = vmul.f32 %v10166, %v214
    %v10174 = vmul.f32 %v10166, %v215
    %v10175 = vmul.f32 %v10166, %v216
    %v10176 = vmul.f32 %v10166, %v217
    %v10177 = vmul.f32 %v10166, %v218
    %v10178 = vmul.f32 %v10166, %v219
    %v10179 = vmul.f32 %v10166, %v220
    %v10180 = vmul.f32 %v10166, %v221
    %v10181 = vmul.f32 %v10166, %v222
    %v10182 = vmul.f32 %v10166, %v223
    %v10183 = vmul.f32 %v10166, %v224
    %v10184 = vmul.f32 %v10166, %v225
    %v10203 = vrot.slane %v10167, 6
    %v10204 = vrot.slane %v10168, 6
    %v10205 = vsel %vm9090, %v10203, %v10204
    %v10206 = vrot.slane %v10169, 6
    %v10207 = vsel %vm9090, %v10204, %v10206
    %v10208 = vrot.slane %v10170, 6
    %v10209 = vrot.slane %v10171, 6
    %v10210 = vsel %vm9090, %v10208, %v10209
    %v10211 = vrot.slane %v10172, 6
    %v10212 = vsel %vm9090, %v10209, %v10211
    %v10213 = vrot.slane %v10173, 6
    %v10214 = vrot.slane %v10174, 6
    %v10215 = vsel %vm9090, %v10213, %v10214
    %v10216 = vrot.slane %v10175, 6
    %v10217 = vsel %vm9090, %v10214, %v10216
    %v10218 = vrot.slane %v10176, 6
    %v10219 = vrot.slane %v10177, 6
    %v10220 = vsel %vm9090, %v10218, %v10219
    %v10221 = vrot.slane %v10178, 6
    %v10222 = vsel %vm9090, %v10219, %v10221
    %v10223 = vrot.slane %v10179, 6
    %v10224 = vrot.slane %v10180, 6
    %v10225 = vsel %vm9090, %v10223, %v10224
    %v10226 = vrot.slane %v10181, 6
    %v10227 = vsel %vm9090, %v10224, %v10226
    %v10228 = vrot.slane %v10182, 6
    %v10229 = vrot.slane %v10183, 6
    %v10230 = vsel %vm9090, %v10228, %v10229
    %v10231 = vrot.slane %v10184, 6
    %v10232 = vsel %vm9090, %v10229, %v10231
    %10233 = vrot.lane.b32.xlu0 %v10205, 123
    %v10234 = vpop.permute.xlu0 %10233
    %10235 = vrot.lane.b32.xlu0 %v10207, 123
    %v10236 = vpop.permute.xlu0 %10235
    %10237 = vrot.lane.b32.xlu0 %v10210, 123
    %v10238 = vpop.permute.xlu0 %10237
    %10239 = vrot.lane.b32.xlu0 %v10212, 123
    %v10240 = vpop.permute.xlu0 %10239
    %10241 = vrot.lane.b32.xlu0 %v10215, 123
    %v10242 = vpop.permute.xlu0 %10241
    %10243 = vrot.lane.b32.xlu0 %v10217, 123
    %v10244 = vpop.permute.xlu0 %10243
    %10245 = vrot.lane.b32.xlu0 %v10220, 123
    %v10246 = vpop.permute.xlu0 %10245
    %10247 = vrot.lane.b32.xlu0 %v10222, 123
    %v10248 = vpop.permute.xlu0 %10247
    %10249 = vrot.lane.b32.xlu0 %v10225, 123
    %v10250 = vpop.permute.xlu0 %10249
    %10251 = vrot.lane.b32.xlu0 %v10227, 123
    %v10252 = vpop.permute.xlu0 %10251
    %10253 = vrot.lane.b32.xlu0 %v10230, 123
    %v10254 = vpop.permute.xlu0 %10253
    %10255 = vrot.lane.b32.xlu0 %v10232, 123
    %v10256 = vpop.permute.xlu0 %10255
    %v10269 = vadd.f32 %v10152, %v10234
    %v10270 = vadd.f32 %v10153, %v10236
    %v10271 = vadd.f32 %v10154, %v10238
    %v10272 = vadd.f32 %v10155, %v10240
    %v10273 = vadd.f32 %v10156, %v10242
    %v10274 = vadd.f32 %v10157, %v10244
    %v10275 = vadd.f32 %v10158, %v10246
    %v10276 = vadd.f32 %v10159, %v10248
    %v10277 = vadd.f32 %v10160, %v10250
    %v10278 = vadd.f32 %v10161, %v10252
    %v10279 = vadd.f32 %v10162, %v10254
    %v10280 = vadd.f32 %v10163, %v10256
    %v10281 = vstv %s10165
    %v10282 = vmul.f32 %v10281, %v190
    %v10283 = vmul.f32 %v10281, %v191
    %v10284 = vmul.f32 %v10281, %v192
    %v10285 = vmul.f32 %v10281, %v193
    %v10286 = vmul.f32 %v10281, %v194
    %v10287 = vmul.f32 %v10281, %v195
    %v10288 = vmul.f32 %v10281, %v196
    %v10289 = vmul.f32 %v10281, %v197
    %v10290 = vmul.f32 %v10281, %v198
    %v10291 = vmul.f32 %v10281, %v199
    %v10292 = vmul.f32 %v10281, %v200
    %v10293 = vmul.f32 %v10281, %v201
    %v10294 = vmul.f32 %v10281, %v202
    %v10295 = vmul.f32 %v10281, %v203
    %v10296 = vmul.f32 %v10281, %v204
    %v10297 = vmul.f32 %v10281, %v205
    %v10298 = vmul.f32 %v10281, %v206
    %v10299 = vmul.f32 %v10281, %v207
    %v10318 = vrot.slane %v10282, 6
    %v10319 = vrot.slane %v10283, 6
    %v10320 = vsel %vm9090, %v10318, %v10319
    %v10321 = vrot.slane %v10284, 6
    %v10322 = vsel %vm9090, %v10319, %v10321
    %v10323 = vrot.slane %v10285, 6
    %v10324 = vrot.slane %v10286, 6
    %v10325 = vsel %vm9090, %v10323, %v10324
    %v10326 = vrot.slane %v10287, 6
    %v10327 = vsel %vm9090, %v10324, %v10326
    %v10328 = vrot.slane %v10288, 6
    %v10329 = vrot.slane %v10289, 6
    %v10330 = vsel %vm9090, %v10328, %v10329
    %v10331 = vrot.slane %v10290, 6
    %v10332 = vsel %vm9090, %v10329, %v10331
    %v10333 = vrot.slane %v10291, 6
    %v10334 = vrot.slane %v10292, 6
    %v10335 = vsel %vm9090, %v10333, %v10334
    %v10336 = vrot.slane %v10293, 6
    %v10337 = vsel %vm9090, %v10334, %v10336
    %v10338 = vrot.slane %v10294, 6
    %v10339 = vrot.slane %v10295, 6
    %v10340 = vsel %vm9090, %v10338, %v10339
    %v10341 = vrot.slane %v10296, 6
    %v10342 = vsel %vm9090, %v10339, %v10341
    %v10343 = vrot.slane %v10297, 6
    %v10344 = vrot.slane %v10298, 6
    %v10345 = vsel %vm9090, %v10343, %v10344
    %v10346 = vrot.slane %v10299, 6
    %v10347 = vsel %vm9090, %v10344, %v10346
    %10348 = vrot.lane.b32.xlu0 %v10320, 123
    %v10349 = vpop.permute.xlu0 %10348
    %10350 = vrot.lane.b32.xlu0 %v10322, 123
    %v10351 = vpop.permute.xlu0 %10350
    %10352 = vrot.lane.b32.xlu0 %v10325, 123
    %v10353 = vpop.permute.xlu0 %10352
    %10354 = vrot.lane.b32.xlu0 %v10327, 123
    %v10355 = vpop.permute.xlu0 %10354
    %10356 = vrot.lane.b32.xlu0 %v10330, 123
    %v10357 = vpop.permute.xlu0 %10356
    %10358 = vrot.lane.b32.xlu0 %v10332, 123
    %v10359 = vpop.permute.xlu0 %10358
    %10360 = vrot.lane.b32.xlu0 %v10335, 123
    %v10361 = vpop.permute.xlu0 %10360
    %10362 = vrot.lane.b32.xlu0 %v10337, 123
    %v10363 = vpop.permute.xlu0 %10362
    %10364 = vrot.lane.b32.xlu0 %v10340, 123
    %v10365 = vpop.permute.xlu0 %10364
    %10366 = vrot.lane.b32.xlu0 %v10342, 123
    %v10367 = vpop.permute.xlu0 %10366
    %10368 = vrot.lane.b32.xlu0 %v10345, 123
    %v10369 = vpop.permute.xlu0 %10368
    %10370 = vrot.lane.b32.xlu0 %v10347, 123
    %v10371 = vpop.permute.xlu0 %10370
    %v10384 = vadd.f32 %v10269, %v10349
    %v10385 = vadd.f32 %v10270, %v10351
    %v10386 = vadd.f32 %v10271, %v10353
    %v10387 = vadd.f32 %v10272, %v10355
    %v10388 = vadd.f32 %v10273, %v10357
    %v10389 = vadd.f32 %v10274, %v10359
    %v10390 = vadd.f32 %v10275, %v10361
    %v10391 = vadd.f32 %v10276, %v10363
    %v10392 = vadd.f32 %v10277, %v10365
    %v10393 = vadd.f32 %v10278, %v10367
    %v10394 = vadd.f32 %v10279, %v10369
    %v10395 = vadd.f32 %v10280, %v10371
    %s10396 = sld [smem:[#allocation2 + $0x30]]
    %s10397 = sld [smem:[#allocation2 + $0x61]]
    %v10398 = vstv %s10396
    %v10399 = vmul.f32 %v10398, %v208
    %v10400 = vmul.f32 %v10398, %v209
    %v10401 = vmul.f32 %v10398, %v210
    %v10402 = vmul.f32 %v10398, %v211
    %v10403 = vmul.f32 %v10398, %v212
    %v10404 = vmul.f32 %v10398, %v213
    %v10405 = vmul.f32 %v10398, %v214
    %v10406 = vmul.f32 %v10398, %v215
    %v10407 = vmul.f32 %v10398, %v216
    %v10408 = vmul.f32 %v10398, %v217
    %v10409 = vmul.f32 %v10398, %v218
    %v10410 = vmul.f32 %v10398, %v219
    %v10411 = vmul.f32 %v10398, %v220
    %v10412 = vmul.f32 %v10398, %v221
    %v10413 = vmul.f32 %v10398, %v222
    %v10414 = vmul.f32 %v10398, %v223
    %v10415 = vmul.f32 %v10398, %v224
    %v10416 = vmul.f32 %v10398, %v225
    %v10435 = vrot.slane %v10399, 6
    %v10436 = vrot.slane %v10400, 6
    %v10437 = vsel %vm9090, %v10435, %v10436
    %v10438 = vrot.slane %v10401, 6
    %v10439 = vsel %vm9090, %v10436, %v10438
    %v10440 = vrot.slane %v10402, 6
    %v10441 = vrot.slane %v10403, 6
    %v10442 = vsel %vm9090, %v10440, %v10441
    %v10443 = vrot.slane %v10404, 6
    %v10444 = vsel %vm9090, %v10441, %v10443
    %v10445 = vrot.slane %v10405, 6
    %v10446 = vrot.slane %v10406, 6
    %v10447 = vsel %vm9090, %v10445, %v10446
    %v10448 = vrot.slane %v10407, 6
    %v10449 = vsel %vm9090, %v10446, %v10448
    %v10450 = vrot.slane %v10408, 6
    %v10451 = vrot.slane %v10409, 6
    %v10452 = vsel %vm9090, %v10450, %v10451
    %v10453 = vrot.slane %v10410, 6
    %v10454 = vsel %vm9090, %v10451, %v10453
    %v10455 = vrot.slane %v10411, 6
    %v10456 = vrot.slane %v10412, 6
    %v10457 = vsel %vm9090, %v10455, %v10456
    %v10458 = vrot.slane %v10413, 6
    %v10459 = vsel %vm9090, %v10456, %v10458
    %v10460 = vrot.slane %v10414, 6
    %v10461 = vrot.slane %v10415, 6
    %v10462 = vsel %vm9090, %v10460, %v10461
    %v10463 = vrot.slane %v10416, 6
    %v10464 = vsel %vm9090, %v10461, %v10463
    %10465 = vrot.lane.b32.xlu0 %v10437, 122
    %v10466 = vpop.permute.xlu0 %10465
    %10467 = vrot.lane.b32.xlu0 %v10439, 122
    %v10468 = vpop.permute.xlu0 %10467
    %10469 = vrot.lane.b32.xlu0 %v10442, 122
    %v10470 = vpop.permute.xlu0 %10469
    %10471 = vrot.lane.b32.xlu0 %v10444, 122
    %v10472 = vpop.permute.xlu0 %10471
    %10473 = vrot.lane.b32.xlu0 %v10447, 122
    %v10474 = vpop.permute.xlu0 %10473
    %10475 = vrot.lane.b32.xlu0 %v10449, 122
    %v10476 = vpop.permute.xlu0 %10475
    %10477 = vrot.lane.b32.xlu0 %v10452, 122
    %v10478 = vpop.permute.xlu0 %10477
    %10479 = vrot.lane.b32.xlu0 %v10454, 122
    %v10480 = vpop.permute.xlu0 %10479
    %10481 = vrot.lane.b32.xlu0 %v10457, 122
    %v10482 = vpop.permute.xlu0 %10481
    %10483 = vrot.lane.b32.xlu0 %v10459, 122
    %v10484 = vpop.permute.xlu0 %10483
    %10485 = vrot.lane.b32.xlu0 %v10462, 122
    %v10486 = vpop.permute.xlu0 %10485
    %10487 = vrot.lane.b32.xlu0 %v10464, 122
    %v10488 = vpop.permute.xlu0 %10487
    %v10501 = vadd.f32 %v10384, %v10466
    %v10502 = vadd.f32 %v10385, %v10468
    %v10503 = vadd.f32 %v10386, %v10470
    %v10504 = vadd.f32 %v10387, %v10472
    %v10505 = vadd.f32 %v10388, %v10474
    %v10506 = vadd.f32 %v10389, %v10476
    %v10507 = vadd.f32 %v10390, %v10478
    %v10508 = vadd.f32 %v10391, %v10480
    %v10509 = vadd.f32 %v10392, %v10482
    %v10510 = vadd.f32 %v10393, %v10484
    %v10511 = vadd.f32 %v10394, %v10486
    %v10512 = vadd.f32 %v10395, %v10488
    %v10513 = vstv %s10397
    %v10514 = vmul.f32 %v10513, %v190
    %v10515 = vmul.f32 %v10513, %v191
    %v10516 = vmul.f32 %v10513, %v192
    %v10517 = vmul.f32 %v10513, %v193
    %v10518 = vmul.f32 %v10513, %v194
    %v10519 = vmul.f32 %v10513, %v195
    %v10520 = vmul.f32 %v10513, %v196
    %v10521 = vmul.f32 %v10513, %v197
    %v10522 = vmul.f32 %v10513, %v198
    %v10523 = vmul.f32 %v10513, %v199
    %v10524 = vmul.f32 %v10513, %v200
    %v10525 = vmul.f32 %v10513, %v201
    %v10526 = vmul.f32 %v10513, %v202
    %v10527 = vmul.f32 %v10513, %v203
    %v10528 = vmul.f32 %v10513, %v204
    %v10529 = vmul.f32 %v10513, %v205
    %v10530 = vmul.f32 %v10513, %v206
    %v10531 = vmul.f32 %v10513, %v207
    %v10550 = vrot.slane %v10514, 6
    %v10551 = vrot.slane %v10515, 6
    %v10552 = vsel %vm9090, %v10550, %v10551
    %v10553 = vrot.slane %v10516, 6
    %v10554 = vsel %vm9090, %v10551, %v10553
    %v10555 = vrot.slane %v10517, 6
    %v10556 = vrot.slane %v10518, 6
    %v10557 = vsel %vm9090, %v10555, %v10556
    %v10558 = vrot.slane %v10519, 6
    %v10559 = vsel %vm9090, %v10556, %v10558
    %v10560 = vrot.slane %v10520, 6
    %v10561 = vrot.slane %v10521, 6
    %v10562 = vsel %vm9090, %v10560, %v10561
    %v10563 = vrot.slane %v10522, 6
    %v10564 = vsel %vm9090, %v10561, %v10563
    %v10565 = vrot.slane %v10523, 6
    %v10566 = vrot.slane %v10524, 6
    %v10567 = vsel %vm9090, %v10565, %v10566
    %v10568 = vrot.slane %v10525, 6
    %v10569 = vsel %vm9090, %v10566, %v10568
    %v10570 = vrot.slane %v10526, 6
    %v10571 = vrot.slane %v10527, 6
    %v10572 = vsel %vm9090, %v10570, %v10571
    %v10573 = vrot.slane %v10528, 6
    %v10574 = vsel %vm9090, %v10571, %v10573
    %v10575 = vrot.slane %v10529, 6
    %v10576 = vrot.slane %v10530, 6
    %v10577 = vsel %vm9090, %v10575, %v10576
    %v10578 = vrot.slane %v10531, 6
    %v10579 = vsel %vm9090, %v10576, %v10578
    %10580 = vrot.lane.b32.xlu0 %v10552, 122
    %v10581 = vpop.permute.xlu0 %10580
    %10582 = vrot.lane.b32.xlu0 %v10554, 122
    %v10583 = vpop.permute.xlu0 %10582
    %10584 = vrot.lane.b32.xlu0 %v10557, 122
    %v10585 = vpop.permute.xlu0 %10584
    %10586 = vrot.lane.b32.xlu0 %v10559, 122
    %v10587 = vpop.permute.xlu0 %10586
    %10588 = vrot.lane.b32.xlu0 %v10562, 122
    %v10589 = vpop.permute.xlu0 %10588
    %10590 = vrot.lane.b32.xlu0 %v10564, 122
    %v10591 = vpop.permute.xlu0 %10590
    %10592 = vrot.lane.b32.xlu0 %v10567, 122
    %v10593 = vpop.permute.xlu0 %10592
    %10594 = vrot.lane.b32.xlu0 %v10569, 122
    %v10595 = vpop.permute.xlu0 %10594
    %10596 = vrot.lane.b32.xlu0 %v10572, 122
    %v10597 = vpop.permute.xlu0 %10596
    %10598 = vrot.lane.b32.xlu0 %v10574, 122
    %v10599 = vpop.permute.xlu0 %10598
    %10600 = vrot.lane.b32.xlu0 %v10577, 122
    %v10601 = vpop.permute.xlu0 %10600
    %10602 = vrot.lane.b32.xlu0 %v10579, 122
    %v10603 = vpop.permute.xlu0 %10602
    %v10616 = vadd.f32 %v10501, %v10581
    %v10617 = vadd.f32 %v10502, %v10583
    %v10618 = vadd.f32 %v10503, %v10585
    %v10619 = vadd.f32 %v10504, %v10587
    %v10620 = vadd.f32 %v10505, %v10589
    %v10621 = vadd.f32 %v10506, %v10591
    %v10622 = vadd.f32 %v10507, %v10593
    %v10623 = vadd.f32 %v10508, %v10595
    %v10624 = vadd.f32 %v10509, %v10597
    %v10625 = vadd.f32 %v10510, %v10599
    %v10626 = vadd.f32 %v10511, %v10601
    %v10627 = vadd.f32 %v10512, %v10603
    %v10628 = vsub.f32 0.0, %v10616
    %v10629 = vsub.f32 0.0, %v10617
    %v10630 = vsub.f32 0.0, %v10618
    %v10631 = vsub.f32 0.0, %v10619
    %v10632 = vsub.f32 0.0, %v10620
    %v10633 = vsub.f32 0.0, %v10621
    %v10634 = vsub.f32 0.0, %v10622
    %v10635 = vsub.f32 0.0, %v10623
    %v10636 = vsub.f32 0.0, %v10624
    %v10637 = vsub.f32 0.0, %v10625
    %v10638 = vsub.f32 0.0, %v10626
    %v10639 = vsub.f32 0.0, %v10627
    %v10640 = vmul.f32 %v10628, 1.442695
    %v10641 = vpow.pop %v10640
    %v10642 = vmul.f32 %v10629, 1.442695
    %v10643 = vpow.pop %v10642
    %v10644 = vmul.f32 %v10630, 1.442695
    %v10645 = vpow.pop %v10644
    %v10646 = vmul.f32 %v10631, 1.442695
    %v10647 = vpow.pop %v10646
    %v10648 = vmul.f32 %v10632, 1.442695
    %v10649 = vpow.pop %v10648
    %v10650 = vmul.f32 %v10633, 1.442695
    %v10651 = vpow.pop %v10650
    %v10652 = vmul.f32 %v10634, 1.442695
    %v10653 = vpow.pop %v10652
    %v10654 = vmul.f32 %v10635, 1.442695
    %v10655 = vpow.pop %v10654
    %v10656 = vmul.f32 %v10636, 1.442695
    %v10657 = vpow.pop %v10656
    %v10658 = vmul.f32 %v10637, 1.442695
    %v10659 = vpow.pop %v10658
    %v10660 = vmul.f32 %v10638, 1.442695
    %v10661 = vpow.pop %v10660
    %v10662 = vmul.f32 %v10639, 1.442695
    %v10663 = vpow.pop %v10662
    %v10664 = vadd.f32 %v10641, 1.0
    %v10665 = vadd.f32 %v10643, 1.0
    %v10666 = vadd.f32 %v10645, 1.0
    %v10667 = vadd.f32 %v10647, 1.0
    %v10668 = vadd.f32 %v10649, 1.0
    %v10669 = vadd.f32 %v10651, 1.0
    %v10670 = vadd.f32 %v10653, 1.0
    %v10671 = vadd.f32 %v10655, 1.0
    %v10672 = vadd.f32 %v10657, 1.0
    %v10673 = vadd.f32 %v10659, 1.0
    %v10674 = vadd.f32 %v10661, 1.0
    %v10675 = vadd.f32 %v10663, 1.0
    %v10676 = vrcp.pop %v10664
    %v10677 = vmul.f32 %v10664, %v10676
    %v10678 = vsub.f32 1.0, %v10677
    %v10679 = vmul.f32 %v10676, %v10678
    %v10680 = vadd.f32 %v10676, %v10679
    %vm10681 = vweird.f32 %v10664
    %vm10682 = vweird.f32 %v10676
    %vm10683 = vmor %vm10681, %vm10682
    %v10684 = vsel %vm10683, %v10676, %v10680
    %v10685 = vand.u32 2147483647, %v10664
    %vm10686 = vcmp.eq.f32.partialorder %v10685, 8.507059e+37
    %v10687 = vand.u32 %v10664, 2147483648
    %v10688 = vor.u32 1.1754944e-38, %v10687
    %v10689 = vsel %vm10686, %v10688, %v10684
    %v10690 = vmul.f32 1.0, %v10689
    %v10691 = vrcp.pop %v10665
    %v10692 = vmul.f32 %v10665, %v10691
    %v10693 = vsub.f32 1.0, %v10692
    %v10694 = vmul.f32 %v10691, %v10693
    %v10695 = vadd.f32 %v10691, %v10694
    %vm10696 = vweird.f32 %v10665
    %vm10697 = vweird.f32 %v10691
    %vm10698 = vmor %vm10696, %vm10697
    %v10699 = vsel %vm10698, %v10691, %v10695
    %v10700 = vand.u32 2147483647, %v10665
    %vm10701 = vcmp.eq.f32.partialorder %v10700, 8.507059e+37
    %v10702 = vand.u32 %v10665, 2147483648
    %v10703 = vor.u32 1.1754944e-38, %v10702
    %v10704 = vsel %vm10701, %v10703, %v10699
    %v10705 = vmul.f32 1.0, %v10704
    %v10706 = vrcp.pop %v10666
    %v10707 = vmul.f32 %v10666, %v10706
    %v10708 = vsub.f32 1.0, %v10707
    %v10709 = vmul.f32 %v10706, %v10708
    %v10710 = vadd.f32 %v10706, %v10709
    %vm10711 = vweird.f32 %v10666
    %vm10712 = vweird.f32 %v10706
    %vm10713 = vmor %vm10711, %vm10712
    %v10714 = vsel %vm10713, %v10706, %v10710
    %v10715 = vand.u32 2147483647, %v10666
    %vm10716 = vcmp.eq.f32.partialorder %v10715, 8.507059e+37
    %v10717 = vand.u32 %v10666, 2147483648
    %v10718 = vor.u32 1.1754944e-38, %v10717
    %v10719 = vsel %vm10716, %v10718, %v10714
    %v10720 = vmul.f32 1.0, %v10719
    %v10721 = vrcp.pop %v10667
    %v10722 = vmul.f32 %v10667, %v10721
    %v10723 = vsub.f32 1.0, %v10722
    %v10724 = vmul.f32 %v10721, %v10723
    %v10725 = vadd.f32 %v10721, %v10724
    %vm10726 = vweird.f32 %v10667
    %vm10727 = vweird.f32 %v10721
    %vm10728 = vmor %vm10726, %vm10727
    %v10729 = vsel %vm10728, %v10721, %v10725
    %v10730 = vand.u32 2147483647, %v10667
    %vm10731 = vcmp.eq.f32.partialorder %v10730, 8.507059e+37
    %v10732 = vand.u32 %v10667, 2147483648
    %v10733 = vor.u32 1.1754944e-38, %v10732
    %v10734 = vsel %vm10731, %v10733, %v10729
    %v10735 = vmul.f32 1.0, %v10734
    %v10736 = vrcp.pop %v10668
    %v10737 = vmul.f32 %v10668, %v10736
    %v10738 = vsub.f32 1.0, %v10737
    %v10739 = vmul.f32 %v10736, %v10738
    %v10740 = vadd.f32 %v10736, %v10739
    %vm10741 = vweird.f32 %v10668
    %vm10742 = vweird.f32 %v10736
    %vm10743 = vmor %vm10741, %vm10742
    %v10744 = vsel %vm10743, %v10736, %v10740
    %v10745 = vand.u32 2147483647, %v10668
    %vm10746 = vcmp.eq.f32.partialorder %v10745, 8.507059e+37
    %v10747 = vand.u32 %v10668, 2147483648
    %v10748 = vor.u32 1.1754944e-38, %v10747
    %v10749 = vsel %vm10746, %v10748, %v10744
    %v10750 = vmul.f32 1.0, %v10749
    %v10751 = vrcp.pop %v10669
    %v10752 = vmul.f32 %v10669, %v10751
    %v10753 = vsub.f32 1.0, %v10752
    %v10754 = vmul.f32 %v10751, %v10753
    %v10755 = vadd.f32 %v10751, %v10754
    %vm10756 = vweird.f32 %v10669
    %vm10757 = vweird.f32 %v10751
    %vm10758 = vmor %vm10756, %vm10757
    %v10759 = vsel %vm10758, %v10751, %v10755
    %v10760 = vand.u32 2147483647, %v10669
    %vm10761 = vcmp.eq.f32.partialorder %v10760, 8.507059e+37
    %v10762 = vand.u32 %v10669, 2147483648
    %v10763 = vor.u32 1.1754944e-38, %v10762
    %v10764 = vsel %vm10761, %v10763, %v10759
    %v10765 = vmul.f32 1.0, %v10764
    %v10766 = vrcp.pop %v10670
    %v10767 = vmul.f32 %v10670, %v10766
    %v10768 = vsub.f32 1.0, %v10767
    %v10769 = vmul.f32 %v10766, %v10768
    %v10770 = vadd.f32 %v10766, %v10769
    %vm10771 = vweird.f32 %v10670
    %vm10772 = vweird.f32 %v10766
    %vm10773 = vmor %vm10771, %vm10772
    %v10774 = vsel %vm10773, %v10766, %v10770
    %v10775 = vand.u32 2147483647, %v10670
    %vm10776 = vcmp.eq.f32.partialorder %v10775, 8.507059e+37
    %v10777 = vand.u32 %v10670, 2147483648
    %v10778 = vor.u32 1.1754944e-38, %v10777
    %v10779 = vsel %vm10776, %v10778, %v10774
    %v10780 = vmul.f32 1.0, %v10779
    %v10781 = vrcp.pop %v10671
    %v10782 = vmul.f32 %v10671, %v10781
    %v10783 = vsub.f32 1.0, %v10782
    %v10784 = vmul.f32 %v10781, %v10783
    %v10785 = vadd.f32 %v10781, %v10784
    %vm10786 = vweird.f32 %v10671
    %vm10787 = vweird.f32 %v10781
    %vm10788 = vmor %vm10786, %vm10787
    %v10789 = vsel %vm10788, %v10781, %v10785
    %v10790 = vand.u32 2147483647, %v10671
    %vm10791 = vcmp.eq.f32.partialorder %v10790, 8.507059e+37
    %v10792 = vand.u32 %v10671, 2147483648
    %v10793 = vor.u32 1.1754944e-38, %v10792
    %v10794 = vsel %vm10791, %v10793, %v10789
    %v10795 = vmul.f32 1.0, %v10794
    %v10796 = vrcp.pop %v10672
    %v10797 = vmul.f32 %v10672, %v10796
    %v10798 = vsub.f32 1.0, %v10797
    %v10799 = vmul.f32 %v10796, %v10798
    %v10800 = vadd.f32 %v10796, %v10799
    %vm10801 = vweird.f32 %v10672
    %vm10802 = vweird.f32 %v10796
    %vm10803 = vmor %vm10801, %vm10802
    %v10804 = vsel %vm10803, %v10796, %v10800
    %v10805 = vand.u32 2147483647, %v10672
    %vm10806 = vcmp.eq.f32.partialorder %v10805, 8.507059e+37
    %v10807 = vand.u32 %v10672, 2147483648
    %v10808 = vor.u32 1.1754944e-38, %v10807
    %v10809 = vsel %vm10806, %v10808, %v10804
    %v10810 = vmul.f32 1.0, %v10809
    %v10811 = vrcp.pop %v10673
    %v10812 = vmul.f32 %v10673, %v10811
    %v10813 = vsub.f32 1.0, %v10812
    %v10814 = vmul.f32 %v10811, %v10813
    %v10815 = vadd.f32 %v10811, %v10814
    %vm10816 = vweird.f32 %v10673
    %vm10817 = vweird.f32 %v10811
    %vm10818 = vmor %vm10816, %vm10817
    %v10819 = vsel %vm10818, %v10811, %v10815
    %v10820 = vand.u32 2147483647, %v10673
    %vm10821 = vcmp.eq.f32.partialorder %v10820, 8.507059e+37
    %v10822 = vand.u32 %v10673, 2147483648
    %v10823 = vor.u32 1.1754944e-38, %v10822
    %v10824 = vsel %vm10821, %v10823, %v10819
    %v10825 = vmul.f32 1.0, %v10824
    %v10826 = vrcp.pop %v10674
    %v10827 = vmul.f32 %v10674, %v10826
    %v10828 = vsub.f32 1.0, %v10827
    %v10829 = vmul.f32 %v10826, %v10828
    %v10830 = vadd.f32 %v10826, %v10829
    %vm10831 = vweird.f32 %v10674
    %vm10832 = vweird.f32 %v10826
    %vm10833 = vmor %vm10831, %vm10832
    %v10834 = vsel %vm10833, %v10826, %v10830
    %v10835 = vand.u32 2147483647, %v10674
    %vm10836 = vcmp.eq.f32.partialorder %v10835, 8.507059e+37
    %v10837 = vand.u32 %v10674, 2147483648
    %v10838 = vor.u32 1.1754944e-38, %v10837
    %v10839 = vsel %vm10836, %v10838, %v10834
    %v10840 = vmul.f32 1.0, %v10839
    %v10841 = vrcp.pop %v10675
    %v10842 = vmul.f32 %v10675, %v10841
    %v10843 = vsub.f32 1.0, %v10842
    %v10844 = vmul.f32 %v10841, %v10843
    %v10845 = vadd.f32 %v10841, %v10844
    %vm10846 = vweird.f32 %v10675
    %vm10847 = vweird.f32 %v10841
    %vm10848 = vmor %vm10846, %vm10847
    %v10849 = vsel %vm10848, %v10841, %v10845
    %v10850 = vand.u32 2147483647, %v10675
    %vm10851 = vcmp.eq.f32.partialorder %v10850, 8.507059e+37
    %v10852 = vand.u32 %v10675, 2147483648
    %v10853 = vor.u32 1.1754944e-38, %v10852
    %v10854 = vsel %vm10851, %v10853, %v10849
    %v10855 = vmul.f32 1.0, %v10854
    %v10874 = vrot.slane %v25, 3
    %v10875 = vrot.slane %v26, 3
    %v10876 = vsel %vm4359, %v10874, %v10875
    %v10877 = vrot.slane %v27, 3
    %v10878 = vsel %vm4359, %v10875, %v10877
    %v10879 = vrot.slane %v28, 3
    %v10880 = vrot.slane %v29, 3
    %v10881 = vsel %vm4359, %v10879, %v10880
    %v10882 = vrot.slane %v30, 3
    %v10883 = vsel %vm4359, %v10880, %v10882
    %v10884 = vrot.slane %v31, 3
    %v10885 = vrot.slane %v32, 3
    %v10886 = vsel %vm4359, %v10884, %v10885
    %v10887 = vrot.slane %v33, 3
    %v10888 = vsel %vm4359, %v10885, %v10887
    %v10889 = vrot.slane %v34, 3
    %v10890 = vrot.slane %v35, 3
    %v10891 = vsel %vm4359, %v10889, %v10890
    %v10892 = vrot.slane %v36, 3
    %v10893 = vsel %vm4359, %v10890, %v10892
    %v10894 = vrot.slane %v37, 3
    %v10895 = vrot.slane %v38, 3
    %v10896 = vsel %vm4359, %v10894, %v10895
    %v10897 = vrot.slane %v39, 3
    %v10898 = vsel %vm4359, %v10895, %v10897
    %v10899 = vrot.slane %v40, 3
    %v10900 = vrot.slane %v41, 3
    %v10901 = vsel %vm4359, %v10899, %v10900
    %v10902 = vrot.slane %v42, 3
    %v10903 = vsel %vm4359, %v10900, %v10902
    %10904 = vrot.lane.b32.xlu0 %v10876, 125
    %v10905 = vpop.permute.xlu0 %10904
    %10906 = vrot.lane.b32.xlu0 %v10878, 125
    %v10907 = vpop.permute.xlu0 %10906
    %10908 = vrot.lane.b32.xlu0 %v10881, 125
    %v10909 = vpop.permute.xlu0 %10908
    %10910 = vrot.lane.b32.xlu0 %v10883, 125
    %v10911 = vpop.permute.xlu0 %10910
    %10912 = vrot.lane.b32.xlu0 %v10886, 125
    %v10913 = vpop.permute.xlu0 %10912
    %10914 = vrot.lane.b32.xlu0 %v10888, 125
    %v10915 = vpop.permute.xlu0 %10914
    %10916 = vrot.lane.b32.xlu0 %v10891, 125
    %v10917 = vpop.permute.xlu0 %10916
    %10918 = vrot.lane.b32.xlu0 %v10893, 125
    %v10919 = vpop.permute.xlu0 %10918
    %10920 = vrot.lane.b32.xlu0 %v10896, 125
    %v10921 = vpop.permute.xlu0 %10920
    %10922 = vrot.lane.b32.xlu0 %v10898, 125
    %v10923 = vpop.permute.xlu0 %10922
    %10924 = vrot.lane.b32.xlu0 %v10901, 125
    %v10925 = vpop.permute.xlu0 %10924
    %10926 = vrot.lane.b32.xlu0 %v10903, 125
    %v10927 = vpop.permute.xlu0 %10926
    %v10940 = vmul.f32 %v10690, %v10905
    %v10941 = vmul.f32 %v10705, %v10907
    %v10942 = vmul.f32 %v10720, %v10909
    %v10943 = vmul.f32 %v10735, %v10911
    %v10944 = vmul.f32 %v10750, %v10913
    %v10945 = vmul.f32 %v10765, %v10915
    %v10946 = vmul.f32 %v10780, %v10917
    %v10947 = vmul.f32 %v10795, %v10919
    %v10948 = vmul.f32 %v10810, %v10921
    %v10949 = vmul.f32 %v10825, %v10923
    %v10950 = vmul.f32 %v10840, %v10925
    %v10951 = vmul.f32 %v10855, %v10927
    %vm10952 = vcmask 130048
    %10953 = vst.msk [vmem:[#allocation5] sm:$0xff] %vm10952, %v10940
    %10954 = vst.msk [vmem:[#allocation5 + $0x8] sm:$0xff] %vm10952, %v10941
    %10955 = vst.msk [vmem:[#allocation5 + $0x40] sm:$0xff] %vm10952, %v10942
    %10956 = vst.msk [vmem:[#allocation5 + $0x48] sm:$0xff] %vm10952, %v10943
    %10957 = vst.msk [vmem:[#allocation5 + $0x80] sm:$0xff] %vm10952, %v10944
    %10958 = vst.msk [vmem:[#allocation5 + $0x88] sm:$0xff] %vm10952, %v10945
    %10959 = vst.msk [vmem:[#allocation5 + $0xc0] sm:$0xff] %vm10952, %v10946
    %10960 = vst.msk [vmem:[#allocation5 + $0xc8] sm:$0xff] %vm10952, %v10947
    %10961 = vst.msk [vmem:[#allocation5 + $0x100] sm:$0xff] %vm10952, %v10948
    %10962 = vst.msk [vmem:[#allocation5 + $0x108] sm:$0xff] %vm10952, %v10949
    %10963 = vst.msk [vmem:[#allocation5 + $0x140] sm:$0xff] %vm10952, %v10950
    %10964 = vst.msk [vmem:[#allocation5 + $0x148] sm:$0xff] %vm10952, %v10951
    %v10965 = vld [vmem:[%s43] sm:$0xff]
    %v10966 = vld [vmem:[%s43 + $0x8] sm:$0xff]
    %v10967 = vld [vmem:[%s43 + $0x10] sm:$0x3f]
    %v10968 = vld [vmem:[%s43 + $0x60] sm:$0xff]
    %v10969 = vld [vmem:[%s43 + $0x68] sm:$0xff]
    %v10970 = vld [vmem:[%s43 + $0x70] sm:$0x3f]
    %v10971 = vld [vmem:[%s43 + $0xc0] sm:$0xff]
    %v10972 = vld [vmem:[%s43 + $0xc8] sm:$0xff]
    %v10973 = vld [vmem:[%s43 + $0xd0] sm:$0x3f]
    %v10974 = vld [vmem:[%s43 + $0x120] sm:$0xff]
    %v10975 = vld [vmem:[%s43 + $0x128] sm:$0xff]
    %v10976 = vld [vmem:[%s43 + $0x130] sm:$0x3f]
    %v10977 = vld [vmem:[%s43 + $0x180] sm:$0xff]
    %v10978 = vld [vmem:[%s43 + $0x188] sm:$0xff]
    %v10979 = vld [vmem:[%s43 + $0x190] sm:$0x3f]
    %v10980 = vld [vmem:[%s43 + $0x1e0] sm:$0xff]
    %v10981 = vld [vmem:[%s43 + $0x1e8] sm:$0xff]
    %v10982 = vld [vmem:[%s43 + $0x1f0] sm:$0x3f]
    %v11001 = vrot.slane %v10965, 3
    %v11002 = vrot.slane %v10966, 3
    %v11003 = vsel %vm4359, %v11001, %v11002
    %v11004 = vrot.slane %v10967, 3
    %v11005 = vsel %vm4359, %v11002, %v11004
    %v11006 = vrot.slane %v10968, 3
    %v11007 = vrot.slane %v10969, 3
    %v11008 = vsel %vm4359, %v11006, %v11007
    %v11009 = vrot.slane %v10970, 3
    %v11010 = vsel %vm4359, %v11007, %v11009
    %v11011 = vrot.slane %v10971, 3
    %v11012 = vrot.slane %v10972, 3
    %v11013 = vsel %vm4359, %v11011, %v11012
    %v11014 = vrot.slane %v10973, 3
    %v11015 = vsel %vm4359, %v11012, %v11014
    %v11016 = vrot.slane %v10974, 3
    %v11017 = vrot.slane %v10975, 3
    %v11018 = vsel %vm4359, %v11016, %v11017
    %v11019 = vrot.slane %v10976, 3
    %v11020 = vsel %vm4359, %v11017, %v11019
    %v11021 = vrot.slane %v10977, 3
    %v11022 = vrot.slane %v10978, 3
    %v11023 = vsel %vm4359, %v11021, %v11022
    %v11024 = vrot.slane %v10979, 3
    %v11025 = vsel %vm4359, %v11022, %v11024
    %v11026 = vrot.slane %v10980, 3
    %v11027 = vrot.slane %v10981, 3
    %v11028 = vsel %vm4359, %v11026, %v11027
    %v11029 = vrot.slane %v10982, 3
    %v11030 = vsel %vm4359, %v11027, %v11029
    %11031 = vrot.lane.b32.xlu0 %v11003, 125
    %v11032 = vpop.permute.xlu0 %11031
    %11033 = vrot.lane.b32.xlu0 %v11005, 125
    %v11034 = vpop.permute.xlu0 %11033
    %11035 = vrot.lane.b32.xlu0 %v11008, 125
    %v11036 = vpop.permute.xlu0 %11035
    %11037 = vrot.lane.b32.xlu0 %v11010, 125
    %v11038 = vpop.permute.xlu0 %11037
    %11039 = vrot.lane.b32.xlu0 %v11013, 125
    %v11040 = vpop.permute.xlu0 %11039
    %11041 = vrot.lane.b32.xlu0 %v11015, 125
    %v11042 = vpop.permute.xlu0 %11041
    %11043 = vrot.lane.b32.xlu0 %v11018, 125
    %v11044 = vpop.permute.xlu0 %11043
    %11045 = vrot.lane.b32.xlu0 %v11020, 125
    %v11046 = vpop.permute.xlu0 %11045
    %11047 = vrot.lane.b32.xlu0 %v11023, 125
    %v11048 = vpop.permute.xlu0 %11047
    %11049 = vrot.lane.b32.xlu0 %v11025, 125
    %v11050 = vpop.permute.xlu0 %11049
    %11051 = vrot.lane.b32.xlu0 %v11028, 125
    %v11052 = vpop.permute.xlu0 %11051
    %11053 = vrot.lane.b32.xlu0 %v11030, 125
    %v11054 = vpop.permute.xlu0 %11053
    %v11067 = vmul.f32 %v10690, %v11032
    %v11068 = vmul.f32 %v10705, %v11034
    %v11069 = vmul.f32 %v10720, %v11036
    %v11070 = vmul.f32 %v10735, %v11038
    %v11071 = vmul.f32 %v10750, %v11040
    %v11072 = vmul.f32 %v10765, %v11042
    %v11073 = vmul.f32 %v10780, %v11044
    %v11074 = vmul.f32 %v10795, %v11046
    %v11075 = vmul.f32 %v10810, %v11048
    %v11076 = vmul.f32 %v10825, %v11050
    %v11077 = vmul.f32 %v10840, %v11052
    %v11078 = vmul.f32 %v10855, %v11054
    %s11079 = scalar_lea.vmem [#allocation5], 16
    %11080 = vst.msk [vmem:[%s11079] sm:$0xff] %vm10952, %v11067
    %11081 = vst.msk [vmem:[%s11079 + $0x8] sm:$0xff] %vm10952, %v11068
    %11082 = vst.msk [vmem:[%s11079 + $0x40] sm:$0xff] %vm10952, %v11069
    %11083 = vst.msk [vmem:[%s11079 + $0x48] sm:$0xff] %vm10952, %v11070
    %11084 = vst.msk [vmem:[%s11079 + $0x80] sm:$0xff] %vm10952, %v11071
    %11085 = vst.msk [vmem:[%s11079 + $0x88] sm:$0xff] %vm10952, %v11072
    %11086 = vst.msk [vmem:[%s11079 + $0xc0] sm:$0xff] %vm10952, %v11073
    %11087 = vst.msk [vmem:[%s11079 + $0xc8] sm:$0xff] %vm10952, %v11074
    %11088 = vst.msk [vmem:[%s11079 + $0x100] sm:$0xff] %vm10952, %v11075
    %11089 = vst.msk [vmem:[%s11079 + $0x108] sm:$0xff] %vm10952, %v11076
    %11090 = vst.msk [vmem:[%s11079 + $0x140] sm:$0xff] %vm10952, %v11077
    %11091 = vst.msk [vmem:[%s11079 + $0x148] sm:$0xff] %vm10952, %v11078
    %v11092 = vld [vmem:[%s98] sm:$0xff]
    %v11093 = vld [vmem:[%s98 + $0x8] sm:$0xff]
    %v11094 = vld [vmem:[%s98 + $0x10] sm:$0x3f]
    %v11095 = vld [vmem:[%s98 + $0x60] sm:$0xff]
    %v11096 = vld [vmem:[%s98 + $0x68] sm:$0xff]
    %v11097 = vld [vmem:[%s98 + $0x70] sm:$0x3f]
    %v11098 = vld [vmem:[%s98 + $0xc0] sm:$0xff]
    %v11099 = vld [vmem:[%s98 + $0xc8] sm:$0xff]
    %v11100 = vld [vmem:[%s98 + $0xd0] sm:$0x3f]
    %v11101 = vld [vmem:[%s98 + $0x120] sm:$0xff]
    %v11102 = vld [vmem:[%s98 + $0x128] sm:$0xff]
    %v11103 = vld [vmem:[%s98 + $0x130] sm:$0x3f]
    %v11104 = vld [vmem:[%s98 + $0x180] sm:$0xff]
    %v11105 = vld [vmem:[%s98 + $0x188] sm:$0xff]
    %v11106 = vld [vmem:[%s98 + $0x190] sm:$0x3f]
    %v11107 = vld [vmem:[%s98 + $0x1e0] sm:$0xff]
    %v11108 = vld [vmem:[%s98 + $0x1e8] sm:$0xff]
    %v11109 = vld [vmem:[%s98 + $0x1f0] sm:$0x3f]
    %v11128 = vrot.slane %v11092, 3
    %v11129 = vrot.slane %v11093, 3
    %v11130 = vsel %vm4359, %v11128, %v11129
    %v11131 = vrot.slane %v11094, 3
    %v11132 = vsel %vm4359, %v11129, %v11131
    %v11133 = vrot.slane %v11095, 3
    %v11134 = vrot.slane %v11096, 3
    %v11135 = vsel %vm4359, %v11133, %v11134
    %v11136 = vrot.slane %v11097, 3
    %v11137 = vsel %vm4359, %v11134, %v11136
    %v11138 = vrot.slane %v11098, 3
    %v11139 = vrot.slane %v11099, 3
    %v11140 = vsel %vm4359, %v11138, %v11139
    %v11141 = vrot.slane %v11100, 3
    %v11142 = vsel %vm4359, %v11139, %v11141
    %v11143 = vrot.slane %v11101, 3
    %v11144 = vrot.slane %v11102, 3
    %v11145 = vsel %vm4359, %v11143, %v11144
    %v11146 = vrot.slane %v11103, 3
    %v11147 = vsel %vm4359, %v11144, %v11146
    %v11148 = vrot.slane %v11104, 3
    %v11149 = vrot.slane %v11105, 3
    %v11150 = vsel %vm4359, %v11148, %v11149
    %v11151 = vrot.slane %v11106, 3
    %v11152 = vsel %vm4359, %v11149, %v11151
    %v11153 = vrot.slane %v11107, 3
    %v11154 = vrot.slane %v11108, 3
    %v11155 = vsel %vm4359, %v11153, %v11154
    %v11156 = vrot.slane %v11109, 3
    %v11157 = vsel %vm4359, %v11154, %v11156
    %11158 = vrot.lane.b32.xlu0 %v11130, 125
    %v11159 = vpop.permute.xlu0 %11158
    %11160 = vrot.lane.b32.xlu0 %v11132, 125
    %v11161 = vpop.permute.xlu0 %11160
    %11162 = vrot.lane.b32.xlu0 %v11135, 125
    %v11163 = vpop.permute.xlu0 %11162
    %11164 = vrot.lane.b32.xlu0 %v11137, 125
    %v11165 = vpop.permute.xlu0 %11164
    %11166 = vrot.lane.b32.xlu0 %v11140, 125
    %v11167 = vpop.permute.xlu0 %11166
    %11168 = vrot.lane.b32.xlu0 %v11142, 125
    %v11169 = vpop.permute.xlu0 %11168
    %11170 = vrot.lane.b32.xlu0 %v11145, 125
    %v11171 = vpop.permute.xlu0 %11170
    %11172 = vrot.lane.b32.xlu0 %v11147, 125
    %v11173 = vpop.permute.xlu0 %11172
    %11174 = vrot.lane.b32.xlu0 %v11150, 125
    %v11175 = vpop.permute.xlu0 %11174
    %11176 = vrot.lane.b32.xlu0 %v11152, 125
    %v11177 = vpop.permute.xlu0 %11176
    %11178 = vrot.lane.b32.xlu0 %v11155, 125
    %v11179 = vpop.permute.xlu0 %11178
    %11180 = vrot.lane.b32.xlu0 %v11157, 125
    %v11181 = vpop.permute.xlu0 %11180
    %v11194 = vmul.f32 %v10690, %v11159
    %v11195 = vmul.f32 %v10705, %v11161
    %v11196 = vmul.f32 %v10720, %v11163
    %v11197 = vmul.f32 %v10735, %v11165
    %v11198 = vmul.f32 %v10750, %v11167
    %v11199 = vmul.f32 %v10765, %v11169
    %v11200 = vmul.f32 %v10780, %v11171
    %v11201 = vmul.f32 %v10795, %v11173
    %v11202 = vmul.f32 %v10810, %v11175
    %v11203 = vmul.f32 %v10825, %v11177
    %v11204 = vmul.f32 %v10840, %v11179
    %v11205 = vmul.f32 %v10855, %v11181
    %s11206 = scalar_lea.vmem [#allocation5], 32
    %11207 = vst.msk [vmem:[%s11206] sm:$0xff] %vm10952, %v11194
    %11208 = vst.msk [vmem:[%s11206 + $0x8] sm:$0xff] %vm10952, %v11195
    %11209 = vst.msk [vmem:[%s11206 + $0x40] sm:$0xff] %vm10952, %v11196
    %11210 = vst.msk [vmem:[%s11206 + $0x48] sm:$0xff] %vm10952, %v11197
    %11211 = vst.msk [vmem:[%s11206 + $0x80] sm:$0xff] %vm10952, %v11198
    %11212 = vst.msk [vmem:[%s11206 + $0x88] sm:$0xff] %vm10952, %v11199
    %11213 = vst.msk [vmem:[%s11206 + $0xc0] sm:$0xff] %vm10952, %v11200
    %11214 = vst.msk [vmem:[%s11206 + $0xc8] sm:$0xff] %vm10952, %v11201
    %11215 = vst.msk [vmem:[%s11206 + $0x100] sm:$0xff] %vm10952, %v11202
    %11216 = vst.msk [vmem:[%s11206 + $0x108] sm:$0xff] %vm10952, %v11203
    %11217 = vst.msk [vmem:[%s11206 + $0x140] sm:$0xff] %vm10952, %v11204
    %11218 = vst.msk [vmem:[%s11206 + $0x148] sm:$0xff] %vm10952, %v11205
    %v11219 = vld [vmem:[%s153] sm:$0xff]
    %v11220 = vld [vmem:[%s153 + $0x8] sm:$0xff]
    %v11221 = vld [vmem:[%s153 + $0x10] sm:$0x3f]
    %v11222 = vld [vmem:[%s153 + $0x60] sm:$0xff]
    %v11223 = vld [vmem:[%s153 + $0x68] sm:$0xff]
    %v11224 = vld [vmem:[%s153 + $0x70] sm:$0x3f]
    %v11225 = vld [vmem:[%s153 + $0xc0] sm:$0xff]
    %v11226 = vld [vmem:[%s153 + $0xc8] sm:$0xff]
    %v11227 = vld [vmem:[%s153 + $0xd0] sm:$0x3f]
    %v11228 = vld [vmem:[%s153 + $0x120] sm:$0xff]
    %v11229 = vld [vmem:[%s153 + $0x128] sm:$0xff]
    %v11230 = vld [vmem:[%s153 + $0x130] sm:$0x3f]
    %v11231 = vld [vmem:[%s153 + $0x180] sm:$0xff]
    %v11232 = vld [vmem:[%s153 + $0x188] sm:$0xff]
    %v11233 = vld [vmem:[%s153 + $0x190] sm:$0x3f]
    %v11234 = vld [vmem:[%s153 + $0x1e0] sm:$0xff]
    %v11235 = vld [vmem:[%s153 + $0x1e8] sm:$0xff]
    %v11236 = vld [vmem:[%s153 + $0x1f0] sm:$0x3f]
    %v11255 = vrot.slane %v11219, 3
    %v11256 = vrot.slane %v11220, 3
    %v11257 = vsel %vm4359, %v11255, %v11256
    %v11258 = vrot.slane %v11221, 3
    %v11259 = vsel %vm4359, %v11256, %v11258
    %v11260 = vrot.slane %v11222, 3
    %v11261 = vrot.slane %v11223, 3
    %v11262 = vsel %vm4359, %v11260, %v11261
    %v11263 = vrot.slane %v11224, 3
    %v11264 = vsel %vm4359, %v11261, %v11263
    %v11265 = vrot.slane %v11225, 3
    %v11266 = vrot.slane %v11226, 3
    %v11267 = vsel %vm4359, %v11265, %v11266
    %v11268 = vrot.slane %v11227, 3
    %v11269 = vsel %vm4359, %v11266, %v11268
    %v11270 = vrot.slane %v11228, 3
    %v11271 = vrot.slane %v11229, 3
    %v11272 = vsel %vm4359, %v11270, %v11271
    %v11273 = vrot.slane %v11230, 3
    %v11274 = vsel %vm4359, %v11271, %v11273
    %v11275 = vrot.slane %v11231, 3
    %v11276 = vrot.slane %v11232, 3
    %v11277 = vsel %vm4359, %v11275, %v11276
    %v11278 = vrot.slane %v11233, 3
    %v11279 = vsel %vm4359, %v11276, %v11278
    %v11280 = vrot.slane %v11234, 3
    %v11281 = vrot.slane %v11235, 3
    %v11282 = vsel %vm4359, %v11280, %v11281
    %v11283 = vrot.slane %v11236, 3
    %v11284 = vsel %vm4359, %v11281, %v11283
    %11285 = vrot.lane.b32.xlu0 %v11257, 125
    %v11286 = vpop.permute.xlu0 %11285
    %11287 = vrot.lane.b32.xlu0 %v11259, 125
    %v11288 = vpop.permute.xlu0 %11287
    %11289 = vrot.lane.b32.xlu0 %v11262, 125
    %v11290 = vpop.permute.xlu0 %11289
    %11291 = vrot.lane.b32.xlu0 %v11264, 125
    %v11292 = vpop.permute.xlu0 %11291
    %11293 = vrot.lane.b32.xlu0 %v11267, 125
    %v11294 = vpop.permute.xlu0 %11293
    %11295 = vrot.lane.b32.xlu0 %v11269, 125
    %v11296 = vpop.permute.xlu0 %11295
    %11297 = vrot.lane.b32.xlu0 %v11272, 125
    %v11298 = vpop.permute.xlu0 %11297
    %11299 = vrot.lane.b32.xlu0 %v11274, 125
    %v11300 = vpop.permute.xlu0 %11299
    %11301 = vrot.lane.b32.xlu0 %v11277, 125
    %v11302 = vpop.permute.xlu0 %11301
    %11303 = vrot.lane.b32.xlu0 %v11279, 125
    %v11304 = vpop.permute.xlu0 %11303
    %11305 = vrot.lane.b32.xlu0 %v11282, 125
    %v11306 = vpop.permute.xlu0 %11305
    %11307 = vrot.lane.b32.xlu0 %v11284, 125
    %v11308 = vpop.permute.xlu0 %11307
    %v11321 = vmul.f32 %v10690, %v11286
    %v11322 = vmul.f32 %v10705, %v11288
    %v11323 = vmul.f32 %v10720, %v11290
    %v11324 = vmul.f32 %v10735, %v11292
    %v11325 = vmul.f32 %v10750, %v11294
    %v11326 = vmul.f32 %v10765, %v11296
    %v11327 = vmul.f32 %v10780, %v11298
    %v11328 = vmul.f32 %v10795, %v11300
    %v11329 = vmul.f32 %v10810, %v11302
    %v11330 = vmul.f32 %v10825, %v11304
    %v11331 = vmul.f32 %v10840, %v11306
    %v11332 = vmul.f32 %v10855, %v11308
    %s11333 = scalar_lea.vmem [#allocation5], 48
    %11334 = vst.msk [vmem:[%s11333] sm:$0xff] %vm10952, %v11321
    %11335 = vst.msk [vmem:[%s11333 + $0x8] sm:$0xff] %vm10952, %v11322
    %11336 = vst.msk [vmem:[%s11333 + $0x40] sm:$0xff] %vm10952, %v11323
    %11337 = vst.msk [vmem:[%s11333 + $0x48] sm:$0xff] %vm10952, %v11324
    %11338 = vst.msk [vmem:[%s11333 + $0x80] sm:$0xff] %vm10952, %v11325
    %11339 = vst.msk [vmem:[%s11333 + $0x88] sm:$0xff] %vm10952, %v11326
    %11340 = vst.msk [vmem:[%s11333 + $0xc0] sm:$0xff] %vm10952, %v11327
    %11341 = vst.msk [vmem:[%s11333 + $0xc8] sm:$0xff] %vm10952, %v11328
    %11342 = vst.msk [vmem:[%s11333 + $0x100] sm:$0xff] %vm10952, %v11329
    %11343 = vst.msk [vmem:[%s11333 + $0x108] sm:$0xff] %vm10952, %v11330
    %11344 = vst.msk [vmem:[%s11333 + $0x140] sm:$0xff] %vm10952, %v11331
    %11345 = vst.msk [vmem:[%s11333 + $0x148] sm:$0xff] %vm10952, %v11332
    // Predicated region
    $region14: #{tpu_custom_call.1} parent=1 // pred_check
      _
    $region15: #{tpu_custom_call.1} parent=1 // pred_check_branch
      %11347 = sbr.rel (0) target = $region17
    $region16: #{tpu_custom_call.1} parent=1 // pred_region
      %11349 = vsyncadd [#allocation3], 0
      %s11350 = sshll.u32 [#allocation5], 4
      %s11351 = int_to_ptr.vmem [resolvable:$true] %s11350
      %s11352 = sshll.u32 %s2, 4
      %s11353 = int_to_ptr.hbm [resolvable:$true] %s11352
      %11358 = dma.vmem_to_hbm [thread:$0]  %s11351, 6144, %s11353, [#allocation3], 128, 128, 8
    $region17: #{tpu_custom_call.1} parent=1 // pred_fallthru
      _
    // Predicated region
    $region18: #{tpu_custom_call.1} parent=1 // pred_check
      _
    $region19: #{tpu_custom_call.1} parent=1 // pred_check_branch
      %11360 = sbr.rel (0) target = $region21
    $region20: #{tpu_custom_call.1} parent=1 // pred_region
      %11362 = dma.done [#allocation3], 6144
    $region21: #{tpu_custom_call.1} parent=1 // pred_fallthru
      _
    %11363 = vsyncpa [#allocation3], 1
    %11364 = vsyncpa [#allocation4], 1

</llo_original>
